<compile_context>
chip_gen: v6e
topology: v6e:2x2x1
jax: 0.10.0
libtpu: 0.0.40
codegen_flags: <defaults>
</compile_context>

<pallas_src>
import functools

import jax
import jax.numpy as jnp
from jax.experimental import pallas as pl
from jax.experimental.pallas import tpu as pltpu


# ---------------------------------------------------------------------------
# Pallas kernel: one batch element per grid step.
# ---------------------------------------------------------------------------
def _up_double_conv_kernel(
    x1_ref,      # (1, H1*W1, C1)       flattened decoder feature
    x2_ref,      # (1, H2, W2, C2)      skip connection (NHWC)
    mup_ref,     # (H2*W2, H1*W1)       upsample(+pad) interpolation matrix
    w1_ref,      # (3, 3, C_in, C_mid)  conv1 weights (HWIO)
    s1_ref,      # (1, C_mid)           folded scale (BN1)
    b1_ref,      # (1, C_mid)           folded bias  (conv1 bias + BN1)
    w2_ref,      # (3, 3, C_mid, C_out) conv2 weights (HWIO)
    s2_ref,      # (1, C_out)
    b2_ref,      # (1, C_out)
    out_ref,     # (1, H2*W2, C_out)
    pad1_ref,    # VMEM (H2+2, W2+2, C_in)  zero-padded conv1 input
    pad2_ref,    # VMEM (H2+2, W2+2, C_mid) zero-padded conv2 input
    *,
    H2, W2, C1, C2, C_in, C_mid, C_out,
):
    f32 = jnp.float32

    # --- bilinear upsample (align_corners=True) + F.pad as one matmul -------
    x1 = x1_ref[0].astype(f32)                                    # (H1*W1, C1)
    up = jnp.dot(mup_ref[...].astype(f32), x1,
                 preferred_element_type=f32)                      # (H2*W2, C1)

    # --- concat([x2, up], channel) written directly into the zero-padded
    #     conv1 input buffer --------------------------------------------------
    pad1_ref[...] = jnp.zeros(pad1_ref.shape, f32)
    pad1_ref[1:H2 + 1, 1:W2 + 1, 0:C2] = x2_ref[0].astype(f32)
    pad1_ref[1:H2 + 1, 1:W2 + 1, C2:C_in] = up.reshape(H2, W2, C1)

    # --- conv1 (3x3, pad 1) + folded BatchNorm + ReLU -----------------------
    acc1 = jnp.zeros((H2 * W2, C_mid), f32)
    for ky in range(3):
        for kx in range(3):
            win = pad1_ref[ky:ky + H2, kx:kx + W2, :].reshape(H2 * W2, C_in)
            acc1 = acc1 + jnp.dot(win, w1_ref[ky, kx].astype(f32),
                                  preferred_element_type=f32)
    y = jnp.maximum(acc1 * s1_ref[...] + b1_ref[...], 0.0)        # (H2*W2, C_mid)

    # --- conv2 (3x3, pad 1) + folded BatchNorm + ReLU -----------------------
    pad2_ref[...] = jnp.zeros(pad2_ref.shape, f32)
    pad2_ref[1:H2 + 1, 1:W2 + 1, :] = y.reshape(H2, W2, C_mid)
    acc2 = jnp.zeros((H2 * W2, C_out), f32)
    for ky in range(3):
        for kx in range(3):
            win = pad2_ref[ky:ky + H2, kx:kx + W2, :].reshape(H2 * W2, C_mid)
            acc2 = acc2 + jnp.dot(win, w2_ref[ky, kx].astype(f32),
                                  preferred_element_type=f32)
    z = jnp.maximum(acc2 * s2_ref[...] + b2_ref[...], 0.0)        # (H2*W2, C_out)

    out_ref[0] = z.astype(out_ref.dtype)


# ---------------------------------------------------------------------------
# Wrapper-side helpers (small static matrices, layout plumbing, BN folding).
# ---------------------------------------------------------------------------
def _interp_matrix(n_in: int, n_out: int) -> jax.Array:
    """Bilinear interpolation matrix (align_corners=True), shape (n_out, n_in)."""
    if n_in == 1:
        return jnp.ones((n_out, 1), jnp.float32)
    src = jnp.arange(n_out, dtype=jnp.float32) * (n_in - 1) / max(n_out - 1, 1)
    i0 = jnp.clip(jnp.floor(src).astype(jnp.int32), 0, n_in - 1)
    i1 = jnp.clip(i0 + 1, 0, n_in - 1)
    frac = src - i0.astype(jnp.float32)
    cols = jnp.arange(n_in)
    m = ((cols[None, :] == i0[:, None]) * (1.0 - frac)[:, None]
         + (cols[None, :] == i1[:, None]) * frac[:, None])
    return m.astype(jnp.float32)


def _upsample_pad_matrix(n_in: int, n_out: int) -> jax.Array:
    """x2 bilinear upsample embedded (zero-padded) into an n_out-long output axis."""
    n_up = 2 * n_in
    diff = n_out - n_up
    assert diff >= 0, "skip connection must be at least as large as upsampled input"
    lo = diff // 2
    m = jnp.zeros((n_out, n_in), jnp.float32)
    return m.at[lo:lo + n_up, :].set(_interp_matrix(n_in, n_up))


def up_forward(x1, x2, params, eps: float = 1e-5):
    """Pallas equivalent of Up(in_channels, out_channels, bilinear=True).forward(x1, x2)."""
    B, C1, H1, W1 = x1.shape
    B2, C2, H2, W2 = x2.shape
    assert B == B2
    C_in = C1 + C2
    w1, w2 = params["w1"], params["w2"]
    C_mid, C_out = w1.shape[-1], w2.shape[-1]
    assert w1.shape == (3, 3, C_in, C_mid)
    assert w2.shape == (3, 3, C_mid, C_out)

    # Fold conv bias + eval-mode BatchNorm into per-channel scale/bias.
    s1 = params["gamma1"] / jnp.sqrt(params["var1"] + eps)
    fb1 = params["beta1"] + (params["b1"] - params["mean1"]) * s1
    s2 = params["gamma2"] / jnp.sqrt(params["var2"] + eps)
    fb2 = params["beta2"] + (params["b2"] - params["mean2"]) * s2

    # Separable bilinear-upsample + F.pad -> one (H2*W2, H1*W1) matrix.
    m_up = jnp.kron(_upsample_pad_matrix(H1, H2), _upsample_pad_matrix(W1, W2))

    # Layout plumbing: channels-last so channels sit on the lane dim in-kernel.
    x1_flat = jnp.transpose(x1, (0, 2, 3, 1)).reshape(B, H1 * W1, C1)
    x2_nhwc = jnp.transpose(x2, (0, 2, 3, 1))

    kernel = functools.partial(
        _up_double_conv_kernel,
        H2=H2, W2=W2, C1=C1, C2=C2, C_in=C_in, C_mid=C_mid, C_out=C_out)

    out = pl.pallas_call(
        kernel,
        out_shape=jax.ShapeDtypeStruct((B, H2 * W2, C_out), x1.dtype),
        grid_spec=pltpu.PrefetchScalarGridSpec(
            num_scalar_prefetch=0,
            grid=(B,),
            in_specs=[
                pl.BlockSpec((1, H1 * W1, C1), lambda b: (b, 0, 0)),
                pl.BlockSpec((1, H2, W2, C2), lambda b: (b, 0, 0, 0)),
                pl.BlockSpec((H2 * W2, H1 * W1), lambda b: (0, 0)),
                pl.BlockSpec((3, 3, C_in, C_mid), lambda b: (0, 0, 0, 0)),
                pl.BlockSpec((1, C_mid), lambda b: (0, 0)),
                pl.BlockSpec((1, C_mid), lambda b: (0, 0)),
                pl.BlockSpec((3, 3, C_mid, C_out), lambda b: (0, 0, 0, 0)),
                pl.BlockSpec((1, C_out), lambda b: (0, 0)),
                pl.BlockSpec((1, C_out), lambda b: (0, 0)),
            ],
            out_specs=pl.BlockSpec((1, H2 * W2, C_out), lambda b: (b, 0, 0)),
            scratch_shapes=[
                pltpu.VMEM((H2 + 2, W2 + 2, C_in), jnp.float32),
                pltpu.VMEM((H2 + 2, W2 + 2, C_mid), jnp.float32),
            ],
        ),
        compiler_params=pltpu.CompilerParams(
            dimension_semantics=("parallel",),
        ),
    )(x1_flat, x2_nhwc, m_up,
      w1.astype(jnp.float32),
      s1.reshape(1, C_mid).astype(jnp.float32),
      fb1.reshape(1, C_mid).astype(jnp.float32),
      w2.astype(jnp.float32),
      s2.reshape(1, C_out).astype(jnp.float32),
      fb2.reshape(1, C_out).astype(jnp.float32))

    return jnp.transpose(out.reshape(B, H2, W2, C_out), (0, 3, 1, 2))


# ---------------------------------------------------------------------------
# Pure-JAX reference (independent code path) for the correctness check.
# ---------------------------------------------------------------------------
def _bilinear_up2_ref(x):
    B, C, H, W = x.shape
    Ho, Wo = 2 * H, 2 * W
    sy = jnp.arange(Ho, dtype=jnp.float32) * (H - 1) / (Ho - 1)
    sx = jnp.arange(Wo, dtype=jnp.float32) * (W - 1) / (Wo - 1)
    y0 = jnp.clip(jnp.floor(sy).astype(jnp.int32), 0, H - 1)
    y1 = jnp.clip(y0 + 1, 0, H - 1)
    fy = sy - y0.astype(jnp.float32)
    x0 = jnp.clip(jnp.floor(sx).astype(jnp.int32), 0, W - 1)
    x1 = jnp.clip(x0 + 1, 0, W - 1)
    fx = sx - x0.astype(jnp.float32)
    top = x[:, :, y0, :] * (1 - fy)[None, None, :, None] + x[:, :, y1, :] * fy[None, None, :, None]
    return top[:, :, :, x0] * (1 - fx) + top[:, :, :, x1] * fx


def up_forward_ref(x1, x2, params, eps: float = 1e-5):
    x1u = _bilinear_up2_ref(x1)
    dy = x2.shape[2] - x1u.shape[2]
    dx = x2.shape[3] - x1u.shape[3]
    x1p = jnp.pad(x1u, ((0, 0), (0, 0), (dy // 2, dy - dy // 2), (dx // 2, dx - dx // 2)))
    x = jnp.concatenate([x2, x1p], axis=1)

    def conv_bn_relu(x, w, b, gamma, beta, mean, var):
        z = jax.lax.conv_general_dilated(
            x, w, window_strides=(1, 1), padding="SAME",
            dimension_numbers=("NCHW", "HWIO", "NCHW"),
            precision=jax.lax.Precision.HIGHEST)
        z = z + b[None, :, None, None]
        z = ((z - mean[None, :, None, None]) / jnp.sqrt(var + eps)[None, :, None, None]
             * gamma[None, :, None, None] + beta[None, :, None, None])
        return jnp.maximum(z, 0.0)

    y = conv_bn_relu(x, params["w1"], params["b1"], params["gamma1"],
                     params["beta1"], params["mean1"], params["var1"])
    return conv_bn_relu(y, params["w2"], params["b2"], params["gamma2"],
                        params["beta2"], params["mean2"], params["var2"])


if __name__ == "__main__":
    key = jax.random.PRNGKey(0)
    ks = jax.random.split(key, 14)

    # Shapes implied by Up(in_channels=8, out_channels=4, bilinear=True):
    # x1: decoder feature (upsampled x2), x2: skip connection.
    B = 2
    C1, H1, W1 = 4, 8, 8
    C2, H2, W2 = 4, 16, 16
    in_ch = C1 + C2          # 8
    out_ch = in_ch // 2      # 4; must equal mid_channels for the module's BatchNorm wiring
    mid_ch = out_ch

    x1 = jax.random.normal(ks[0], (B, C1, H1, W1), jnp.float32)
    x2 = jax.random.normal(ks[1], (B, C2, H2, W2), jnp.float32)

    params = {
        # conv weights in HWIO
        "w1": jax.random.normal(ks[2], (3, 3, in_ch, mid_ch), jnp.float32)
              * jnp.sqrt(2.0 / (9 * in_ch)),
        "b1": jax.random.normal(ks[3], (mid_ch,), jnp.float32) * 0.1,
        "gamma1": jax.random.uniform(ks[4], (mid_ch,), jnp.float32, 0.5, 1.5),
        "beta1": jax.random.normal(ks[5], (mid_ch,), jnp.float32) * 0.1,
        "mean1": jax.random.normal(ks[6], (mid_ch,), jnp.float32) * 0.1,
        "var1": jax.random.uniform(ks[7], (mid_ch,), jnp.float32, 0.5, 1.5),
        "w2": jax.random.normal(ks[8], (3, 3, mid_ch, out_ch), jnp.float32)
              * jnp.sqrt(2.0 / (9 * mid_ch)),
        "b2": jax.random.normal(ks[9], (out_ch,), jnp.float32) * 0.1,
        "gamma2": jax.random.uniform(ks[10], (out_ch,), jnp.float32, 0.5, 1.5),
        "beta2": jax.random.normal(ks[11], (out_ch,), jnp.float32) * 0.1,
        "mean2": jax.random.normal(ks[12], (out_ch,), jnp.float32) * 0.1,
        "var2": jax.random.uniform(ks[13], (out_ch,), jnp.float32, 0.5, 1.5),
    }

    out = jax.block_until_ready(up_forward(x1, x2, params))
    ref = up_forward_ref(x1, x2, params)

    assert out.shape == ref.shape == (B, out_ch, H2, W2), (out.shape, ref.shape)
    assert jnp.allclose(out, ref, rtol=1e-3, atol=1e-3), float(jnp.max(jnp.abs(out - ref)))
    print("KERNEL_OK")
</pallas_src>

<mosaic_0001>
module attributes {stable_mosaic.version = 11 : i64} {
  func.func @_up_double_conv_kernel(%arg0: i32, %arg1: memref<1x64x4xf32, #tpu.memory_space<vmem>>, %arg2: memref<1x16x16x4xf32, #tpu.memory_space<vmem>>, %arg3: memref<256x64xf32, #tpu.memory_space<vmem>>, %arg4: memref<3x3x8x4xf32, #tpu.memory_space<vmem>>, %arg5: memref<1x4xf32, #tpu.memory_space<vmem>>, %arg6: memref<1x4xf32, #tpu.memory_space<vmem>>, %arg7: memref<3x3x4x4xf32, #tpu.memory_space<vmem>>, %arg8: memref<1x4xf32, #tpu.memory_space<vmem>>, %arg9: memref<1x4xf32, #tpu.memory_space<vmem>>, %arg10: memref<1x256x4xf32, #tpu.memory_space<vmem>>, %arg11: memref<18x18x8xf32, #tpu.memory_space<vmem>>, %arg12: memref<18x18x4xf32, #tpu.memory_space<vmem>>) attributes {dimension_semantics = [#tpu.dimension_semantics<parallel>], iteration_bounds = array<i64: 2>, scalar_prefetch = 0 : i64, scratch_operands = 2 : i64, tpu.core_type = #tpu.core_type<tc>, window_params = [{transform_indices = @transform_0, window_bounds = array<i64: 1, 64, 4>}, {transform_indices = @transform_1, window_bounds = array<i64: 1, 16, 16, 4>}, {pipeline_mode = #tpu.pipeline_mode<synchronous>, transform_indices = @transform_2, window_bounds = array<i64: 256, 64>}, {pipeline_mode = #tpu.pipeline_mode<synchronous>, transform_indices = @transform_3, window_bounds = array<i64: 3, 3, 8, 4>}, {pipeline_mode = #tpu.pipeline_mode<synchronous>, transform_indices = @transform_4, window_bounds = array<i64: 1, 4>}, {pipeline_mode = #tpu.pipeline_mode<synchronous>, transform_indices = @transform_5, window_bounds = array<i64: 1, 4>}, {pipeline_mode = #tpu.pipeline_mode<synchronous>, transform_indices = @transform_6, window_bounds = array<i64: 3, 3, 4, 4>}, {pipeline_mode = #tpu.pipeline_mode<synchronous>, transform_indices = @transform_7, window_bounds = array<i64: 1, 4>}, {pipeline_mode = #tpu.pipeline_mode<synchronous>, transform_indices = @transform_8, window_bounds = array<i64: 1, 4>}, {transform_indices = @transform_9, window_bounds = array<i64: 1, 256, 4>}]} {
    %c0 = arith.constant 0 : index
    %c0_0 = arith.constant 0 : index
    %c0_1 = arith.constant 0 : index
    %0 = vector.load %arg1[%c0, %c0_0, %c0_1] : memref<1x64x4xf32, #tpu.memory_space<vmem>>, vector<1x64x4xf32>
    %1 = vector.shape_cast %0 : vector<1x64x4xf32> to vector<64x4xf32>
    %c0_2 = arith.constant 0 : index
    %c0_3 = arith.constant 0 : index
    %2 = vector.load %arg3[%c0_2, %c0_3] : memref<256x64xf32, #tpu.memory_space<vmem>>, vector<256x64xf32>
    %cst = arith.constant dense<0.000000e+00> : vector<256x4xf32>
    %3 = tpu.matmul %2, %1, %cst {dimension_numbers = #tpu.dot_dimension_numbers<[1], [0], [0], [1], [0, 0, 1, 1], [], []>} : vector<256x64xf32>, vector<64x4xf32>, vector<256x4xf32> -> vector<256x4xf32>
    %cst_4 = arith.constant 0.000000e+00 : f32
    %4 = vector.broadcast %cst_4 : f32 to vector<18x18x8xf32>
    %c0_5 = arith.constant 0 : index
    %c0_6 = arith.constant 0 : index
    %c0_7 = arith.constant 0 : index
    %5 = vector.load %arg11[%c0_5, %c0_6, %c0_7] : memref<18x18x8xf32, #tpu.memory_space<vmem>>, vector<18x18x8xf32>
    tpu.vector_store %arg11[%c0_5, %c0_6, %c0_7], %4 {strides = array<i32>} : memref<18x18x8xf32, #tpu.memory_space<vmem>>, vector<18x18x8xf32>,
    %c0_8 = arith.constant 0 : index
    %c0_9 = arith.constant 0 : index
    %c0_10 = arith.constant 0 : index
    %c0_11 = arith.constant 0 : index
    %6 = vector.load %arg2[%c0_8, %c0_9, %c0_10, %c0_11] : memref<1x16x16x4xf32, #tpu.memory_space<vmem>>, vector<1x16x16x4xf32>
    %7 = vector.shape_cast %6 : vector<1x16x16x4xf32> to vector<16x16x4xf32>
    %c1 = arith.constant 1 : index
    %c1_12 = arith.constant 1 : index
    %c0_13 = arith.constant 0 : index
    %8 = vector.load %arg11[%c1, %c1_12, %c0_13] : memref<18x18x8xf32, #tpu.memory_space<vmem>>, vector<16x16x4xf32>
    tpu.vector_store %arg11[%c1, %c1_12, %c0_13], %7 {strides = array<i32>} : memref<18x18x8xf32, #tpu.memory_space<vmem>>, vector<16x16x4xf32>,
    %9 = vector.shape_cast %3 : vector<256x4xf32> to vector<16x16x4xf32>
    %c1_14 = arith.constant 1 : index
    %c1_15 = arith.constant 1 : index
    %c4 = arith.constant 4 : index
    %10 = vector.load %arg11[%c1_14, %c1_15, %c4] : memref<18x18x8xf32, #tpu.memory_space<vmem>>, vector<16x16x4xf32>
    tpu.vector_store %arg11[%c1_14, %c1_15, %c4], %9 {strides = array<i32>} : memref<18x18x8xf32, #tpu.memory_space<vmem>>, vector<16x16x4xf32>,
    %cst_16 = arith.constant 0.000000e+00 : f32
    %11 = vector.broadcast %cst_16 : f32 to vector<256x4xf32>
    %c0_17 = arith.constant 0 : index
    %c0_18 = arith.constant 0 : index
    %c0_19 = arith.constant 0 : index
    %12 = vector.load %arg11[%c0_17, %c0_18, %c0_19] : memref<18x18x8xf32, #tpu.memory_space<vmem>>, vector<16x16x8xf32>
    %13 = vector.shape_cast %12 : vector<16x16x8xf32> to vector<256x8xf32>
    %c0_20 = arith.constant 0 : index
    %c0_21 = arith.constant 0 : index
    %c0_22 = arith.constant 0 : index
    %c0_23 = arith.constant 0 : index
    %14 = vector.load %arg4[%c0_20, %c0_21, %c0_22, %c0_23] : memref<3x3x8x4xf32, #tpu.memory_space<vmem>>, vector<1x1x8x4xf32>
    %15 = vector.shape_cast %14 : vector<1x1x8x4xf32> to vector<8x4xf32>
    %cst_24 = arith.constant dense<0.000000e+00> : vector<256x4xf32>
    %16 = tpu.matmul %13, %15, %cst_24 {dimension_numbers = #tpu.dot_dimension_numbers<[1], [0], [0], [1], [0, 0, 1, 1], [], []>} : vector<256x8xf32>, vector<8x4xf32>, vector<256x4xf32> -> vector<256x4xf32>
    %17 = arith.addf %11, %16 : vector<256x4xf32>
    %c0_25 = arith.constant 0 : index
    %c1_26 = arith.constant 1 : index
    %c0_27 = arith.constant 0 : index
    %18 = vector.load %arg11[%c0_25, %c1_26, %c0_27] : memref<18x18x8xf32, #tpu.memory_space<vmem>>, vector<16x16x8xf32>
    %19 = vector.shape_cast %18 : vector<16x16x8xf32> to vector<256x8xf32>
    %c0_28 = arith.constant 0 : index
    %c1_29 = arith.constant 1 : index
    %c0_30 = arith.constant 0 : index
    %c0_31 = arith.constant 0 : index
    %20 = vector.load %arg4[%c0_28, %c1_29, %c0_30, %c0_31] : memref<3x3x8x4xf32, #tpu.memory_space<vmem>>, vector<1x1x8x4xf32>
    %21 = vector.shape_cast %20 : vector<1x1x8x4xf32> to vector<8x4xf32>
    %cst_32 = arith.constant dense<0.000000e+00> : vector<256x4xf32>
    %22 = tpu.matmul %19, %21, %cst_32 {dimension_numbers = #tpu.dot_dimension_numbers<[1], [0], [0], [1], [0, 0, 1, 1], [], []>} : vector<256x8xf32>, vector<8x4xf32>, vector<256x4xf32> -> vector<256x4xf32>
    %23 = arith.addf %17, %22 : vector<256x4xf32>
    %c0_33 = arith.constant 0 : index
    %c2 = arith.constant 2 : index
    %c0_34 = arith.constant 0 : index
    %24 = vector.load %arg11[%c0_33, %c2, %c0_34] : memref<18x18x8xf32, #tpu.memory_space<vmem>>, vector<16x16x8xf32>
    %25 = vector.shape_cast %24 : vector<16x16x8xf32> to vector<256x8xf32>
    %c0_35 = arith.constant 0 : index
    %c2_36 = arith.constant 2 : index
    %c0_37 = arith.constant 0 : index
    %c0_38 = arith.constant 0 : index
    %26 = vector.load %arg4[%c0_35, %c2_36, %c0_37, %c0_38] : memref<3x3x8x4xf32, #tpu.memory_space<vmem>>, vector<1x1x8x4xf32>
    %27 = vector.shape_cast %26 : vector<1x1x8x4xf32> to vector<8x4xf32>
    %cst_39 = arith.constant dense<0.000000e+00> : vector<256x4xf32>
    %28 = tpu.matmul %25, %27, %cst_39 {dimension_numbers = #tpu.dot_dimension_numbers<[1], [0], [0], [1], [0, 0, 1, 1], [], []>} : vector<256x8xf32>, vector<8x4xf32>, vector<256x4xf32> -> vector<256x4xf32>
    %29 = arith.addf %23, %28 : vector<256x4xf32>
    %c1_40 = arith.constant 1 : index
    %c0_41 = arith.constant 0 : index
    %c0_42 = arith.constant 0 : index
    %30 = vector.load %arg11[%c1_40, %c0_41, %c0_42] : memref<18x18x8xf32, #tpu.memory_space<vmem>>, vector<16x16x8xf32>
    %31 = vector.shape_cast %30 : vector<16x16x8xf32> to vector<256x8xf32>
    %c1_43 = arith.constant 1 : index
    %c0_44 = arith.constant 0 : index
    %c0_45 = arith.constant 0 : index
    %c0_46 = arith.constant 0 : index
    %32 = vector.load %arg4[%c1_43, %c0_44, %c0_45, %c0_46] : memref<3x3x8x4xf32, #tpu.memory_space<vmem>>, vector<1x1x8x4xf32>
    %33 = vector.shape_cast %32 : vector<1x1x8x4xf32> to vector<8x4xf32>
    %cst_47 = arith.constant dense<0.000000e+00> : vector<256x4xf32>
    %34 = tpu.matmul %31, %33, %cst_47 {dimension_numbers = #tpu.dot_dimension_numbers<[1], [0], [0], [1], [0, 0, 1, 1], [], []>} : vector<256x8xf32>, vector<8x4xf32>, vector<256x4xf32> -> vector<256x4xf32>
    %35 = arith.addf %29, %34 : vector<256x4xf32>
    %c1_48 = arith.constant 1 : index
    %c1_49 = arith.constant 1 : index
    %c0_50 = arith.constant 0 : index
    %36 = vector.load %arg11[%c1_48, %c1_49, %c0_50] : memref<18x18x8xf32, #tpu.memory_space<vmem>>, vector<16x16x8xf32>
    %37 = vector.shape_cast %36 : vector<16x16x8xf32> to vector<256x8xf32>
    %c1_51 = arith.constant 1 : index
    %c1_52 = arith.constant 1 : index
    %c0_53 = arith.constant 0 : index
    %c0_54 = arith.constant 0 : index
    %38 = vector.load %arg4[%c1_51, %c1_52, %c0_53, %c0_54] : memref<3x3x8x4xf32, #tpu.memory_space<vmem>>, vector<1x1x8x4xf32>
    %39 = vector.shape_cast %38 : vector<1x1x8x4xf32> to vector<8x4xf32>
    %cst_55 = arith.constant dense<0.000000e+00> : vector<256x4xf32>
    %40 = tpu.matmul %37, %39, %cst_55 {dimension_numbers = #tpu.dot_dimension_numbers<[1], [0], [0], [1], [0, 0, 1, 1], [], []>} : vector<256x8xf32>, vector<8x4xf32>, vector<256x4xf32> -> vector<256x4xf32>
    %41 = arith.addf %35, %40 : vector<256x4xf32>
    %c1_56 = arith.constant 1 : index
    %c2_57 = arith.constant 2 : index
    %c0_58 = arith.constant 0 : index
    %42 = vector.load %arg11[%c1_56, %c2_57, %c0_58] : memref<18x18x8xf32, #tpu.memory_space<vmem>>, vector<16x16x8xf32>
    %43 = vector.shape_cast %42 : vector<16x16x8xf32> to vector<256x8xf32>
    %c1_59 = arith.constant 1 : index
    %c2_60 = arith.constant 2 : index
    %c0_61 = arith.constant 0 : index
    %c0_62 = arith.constant 0 : index
    %44 = vector.load %arg4[%c1_59, %c2_60, %c0_61, %c0_62] : memref<3x3x8x4xf32, #tpu.memory_space<vmem>>, vector<1x1x8x4xf32>
    %45 = vector.shape_cast %44 : vector<1x1x8x4xf32> to vector<8x4xf32>
    %cst_63 = arith.constant dense<0.000000e+00> : vector<256x4xf32>
    %46 = tpu.matmul %43, %45, %cst_63 {dimension_numbers = #tpu.dot_dimension_numbers<[1], [0], [0], [1], [0, 0, 1, 1], [], []>} : vector<256x8xf32>, vector<8x4xf32>, vector<256x4xf32> -> vector<256x4xf32>
    %47 = arith.addf %41, %46 : vector<256x4xf32>
    %c2_64 = arith.constant 2 : index
    %c0_65 = arith.constant 0 : index
    %c0_66 = arith.constant 0 : index
    %48 = vector.load %arg11[%c2_64, %c0_65, %c0_66] : memref<18x18x8xf32, #tpu.memory_space<vmem>>, vector<16x16x8xf32>
    %49 = vector.shape_cast %48 : vector<16x16x8xf32> to vector<256x8xf32>
    %c2_67 = arith.constant 2 : index
    %c0_68 = arith.constant 0 : index
    %c0_69 = arith.constant 0 : index
    %c0_70 = arith.constant 0 : index
    %50 = vector.load %arg4[%c2_67, %c0_68, %c0_69, %c0_70] : memref<3x3x8x4xf32, #tpu.memory_space<vmem>>, vector<1x1x8x4xf32>
    %51 = vector.shape_cast %50 : vector<1x1x8x4xf32> to vector<8x4xf32>
    %cst_71 = arith.constant dense<0.000000e+00> : vector<256x4xf32>
    %52 = tpu.matmul %49, %51, %cst_71 {dimension_numbers = #tpu.dot_dimension_numbers<[1], [0], [0], [1], [0, 0, 1, 1], [], []>} : vector<256x8xf32>, vector<8x4xf32>, vector<256x4xf32> -> vector<256x4xf32>
    %53 = arith.addf %47, %52 : vector<256x4xf32>
    %c2_72 = arith.constant 2 : index
    %c1_73 = arith.constant 1 : index
    %c0_74 = arith.constant 0 : index
    %54 = vector.load %arg11[%c2_72, %c1_73, %c0_74] : memref<18x18x8xf32, #tpu.memory_space<vmem>>, vector<16x16x8xf32>
    %55 = vector.shape_cast %54 : vector<16x16x8xf32> to vector<256x8xf32>
    %c2_75 = arith.constant 2 : index
    %c1_76 = arith.constant 1 : index
    %c0_77 = arith.constant 0 : index
    %c0_78 = arith.constant 0 : index
    %56 = vector.load %arg4[%c2_75, %c1_76, %c0_77, %c0_78] : memref<3x3x8x4xf32, #tpu.memory_space<vmem>>, vector<1x1x8x4xf32>
    %57 = vector.shape_cast %56 : vector<1x1x8x4xf32> to vector<8x4xf32>
    %cst_79 = arith.constant dense<0.000000e+00> : vector<256x4xf32>
    %58 = tpu.matmul %55, %57, %cst_79 {dimension_numbers = #tpu.dot_dimension_numbers<[1], [0], [0], [1], [0, 0, 1, 1], [], []>} : vector<256x8xf32>, vector<8x4xf32>, vector<256x4xf32> -> vector<256x4xf32>
    %59 = arith.addf %53, %58 : vector<256x4xf32>
    %c2_80 = arith.constant 2 : index
    %c2_81 = arith.constant 2 : index
    %c0_82 = arith.constant 0 : index
    %60 = vector.load %arg11[%c2_80, %c2_81, %c0_82] : memref<18x18x8xf32, #tpu.memory_space<vmem>>, vector<16x16x8xf32>
    %61 = vector.shape_cast %60 : vector<16x16x8xf32> to vector<256x8xf32>
    %c2_83 = arith.constant 2 : index
    %c2_84 = arith.constant 2 : index
    %c0_85 = arith.constant 0 : index
    %c0_86 = arith.constant 0 : index
    %62 = vector.load %arg4[%c2_83, %c2_84, %c0_85, %c0_86] : memref<3x3x8x4xf32, #tpu.memory_space<vmem>>, vector<1x1x8x4xf32>
    %63 = vector.shape_cast %62 : vector<1x1x8x4xf32> to vector<8x4xf32>
    %cst_87 = arith.constant dense<0.000000e+00> : vector<256x4xf32>
    %64 = tpu.matmul %61, %63, %cst_87 {dimension_numbers = #tpu.dot_dimension_numbers<[1], [0], [0], [1], [0, 0, 1, 1], [], []>} : vector<256x8xf32>, vector<8x4xf32>, vector<256x4xf32> -> vector<256x4xf32>
    %65 = arith.addf %59, %64 : vector<256x4xf32>
    %c0_88 = arith.constant 0 : index
    %c0_89 = arith.constant 0 : index
    %66 = vector.load %arg5[%c0_88, %c0_89] : memref<1x4xf32, #tpu.memory_space<vmem>>, vector<1x4xf32>
    %67 = vector.broadcast %66 : vector<1x4xf32> to vector<256x4xf32>
    %68 = arith.mulf %65, %67 : vector<256x4xf32>
    %c0_90 = arith.constant 0 : index
    %c0_91 = arith.constant 0 : index
    %69 = vector.load %arg6[%c0_90, %c0_91] : memref<1x4xf32, #tpu.memory_space<vmem>>, vector<1x4xf32>
    %70 = vector.broadcast %69 : vector<1x4xf32> to vector<256x4xf32>
    %71 = arith.addf %68, %70 : vector<256x4xf32>
    %cst_92 = arith.constant 0.000000e+00 : f32
    %72 = vector.broadcast %cst_92 : f32 to vector<256x4xf32>
    %73 = arith.maximumf %71, %72 : vector<256x4xf32>
    %cst_93 = arith.constant 0.000000e+00 : f32
    %74 = vector.broadcast %cst_93 : f32 to vector<18x18x4xf32>
    %c0_94 = arith.constant 0 : index
    %c0_95 = arith.constant 0 : index
    %c0_96 = arith.constant 0 : index
    %75 = vector.load %arg12[%c0_94, %c0_95, %c0_96] : memref<18x18x4xf32, #tpu.memory_space<vmem>>, vector<18x18x4xf32>
    tpu.vector_store %arg12[%c0_94, %c0_95, %c0_96], %74 {strides = array<i32>} : memref<18x18x4xf32, #tpu.memory_space<vmem>>, vector<18x18x4xf32>,
    %76 = vector.shape_cast %73 : vector<256x4xf32> to vector<16x16x4xf32>
    %c1_97 = arith.constant 1 : index
    %c1_98 = arith.constant 1 : index
    %c0_99 = arith.constant 0 : index
    %77 = vector.load %arg12[%c1_97, %c1_98, %c0_99] : memref<18x18x4xf32, #tpu.memory_space<vmem>>, vector<16x16x4xf32>
    tpu.vector_store %arg12[%c1_97, %c1_98, %c0_99], %76 {strides = array<i32>} : memref<18x18x4xf32, #tpu.memory_space<vmem>>, vector<16x16x4xf32>,
    %cst_100 = arith.constant 0.000000e+00 : f32
    %78 = vector.broadcast %cst_100 : f32 to vector<256x4xf32>
    %c0_101 = arith.constant 0 : index
    %c0_102 = arith.constant 0 : index
    %c0_103 = arith.constant 0 : index
    %79 = vector.load %arg12[%c0_101, %c0_102, %c0_103] : memref<18x18x4xf32, #tpu.memory_space<vmem>>, vector<16x16x4xf32>
    %80 = vector.shape_cast %79 : vector<16x16x4xf32> to vector<256x4xf32>
    %c0_104 = arith.constant 0 : index
    %c0_105 = arith.constant 0 : index
    %c0_106 = arith.constant 0 : index
    %c0_107 = arith.constant 0 : index
    %81 = vector.load %arg7[%c0_104, %c0_105, %c0_106, %c0_107] : memref<3x3x4x4xf32, #tpu.memory_space<vmem>>, vector<1x1x4x4xf32>
    %82 = vector.shape_cast %81 : vector<1x1x4x4xf32> to vector<4x4xf32>
    %cst_108 = arith.constant dense<0.000000e+00> : vector<256x4xf32>
    %83 = tpu.matmul %80, %82, %cst_108 {dimension_numbers = #tpu.dot_dimension_numbers<[1], [0], [0], [1], [0, 0, 1, 1], [], []>} : vector<256x4xf32>, vector<4x4xf32>, vector<256x4xf32> -> vector<256x4xf32>
    %84 = arith.addf %78, %83 : vector<256x4xf32>
    %c0_109 = arith.constant 0 : index
    %c1_110 = arith.constant 1 : index
    %c0_111 = arith.constant 0 : index
    %85 = vector.load %arg12[%c0_109, %c1_110, %c0_111] : memref<18x18x4xf32, #tpu.memory_space<vmem>>, vector<16x16x4xf32>
    %86 = vector.shape_cast %85 : vector<16x16x4xf32> to vector<256x4xf32>
    %c0_112 = arith.constant 0 : index
    %c1_113 = arith.constant 1 : index
    %c0_114 = arith.constant 0 : index
    %c0_115 = arith.constant 0 : index
    %87 = vector.load %arg7[%c0_112, %c1_113, %c0_114, %c0_115] : memref<3x3x4x4xf32, #tpu.memory_space<vmem>>, vector<1x1x4x4xf32>
    %88 = vector.shape_cast %87 : vector<1x1x4x4xf32> to vector<4x4xf32>
    %cst_116 = arith.constant dense<0.000000e+00> : vector<256x4xf32>
    %89 = tpu.matmul %86, %88, %cst_116 {dimension_numbers = #tpu.dot_dimension_numbers<[1], [0], [0], [1], [0, 0, 1, 1], [], []>} : vector<256x4xf32>, vector<4x4xf32>, vector<256x4xf32> -> vector<256x4xf32>
    %90 = arith.addf %84, %89 : vector<256x4xf32>
    %c0_117 = arith.constant 0 : index
    %c2_118 = arith.constant 2 : index
    %c0_119 = arith.constant 0 : index
    %91 = vector.load %arg12[%c0_117, %c2_118, %c0_119] : memref<18x18x4xf32, #tpu.memory_space<vmem>>, vector<16x16x4xf32>
    %92 = vector.shape_cast %91 : vector<16x16x4xf32> to vector<256x4xf32>
    %c0_120 = arith.constant 0 : index
    %c2_121 = arith.constant 2 : index
    %c0_122 = arith.constant 0 : index
    %c0_123 = arith.constant 0 : index
    %93 = vector.load %arg7[%c0_120, %c2_121, %c0_122, %c0_123] : memref<3x3x4x4xf32, #tpu.memory_space<vmem>>, vector<1x1x4x4xf32>
    %94 = vector.shape_cast %93 : vector<1x1x4x4xf32> to vector<4x4xf32>
    %cst_124 = arith.constant dense<0.000000e+00> : vector<256x4xf32>
    %95 = tpu.matmul %92, %94, %cst_124 {dimension_numbers = #tpu.dot_dimension_numbers<[1], [0], [0], [1], [0, 0, 1, 1], [], []>} : vector<256x4xf32>, vector<4x4xf32>, vector<256x4xf32> -> vector<256x4xf32>
    %96 = arith.addf %90, %95 : vector<256x4xf32>
    %c1_125 = arith.constant 1 : index
    %c0_126 = arith.constant 0 : index
    %c0_127 = arith.constant 0 : index
    %97 = vector.load %arg12[%c1_125, %c0_126, %c0_127] : memref<18x18x4xf32, #tpu.memory_space<vmem>>, vector<16x16x4xf32>
    %98 = vector.shape_cast %97 : vector<16x16x4xf32> to vector<256x4xf32>
    %c1_128 = arith.constant 1 : index
    %c0_129 = arith.constant 0 : index
    %c0_130 = arith.constant 0 : index
    %c0_131 = arith.constant 0 : index
    %99 = vector.load %arg7[%c1_128, %c0_129, %c0_130, %c0_131] : memref<3x3x4x4xf32, #tpu.memory_space<vmem>>, vector<1x1x4x4xf32>
    %100 = vector.shape_cast %99 : vector<1x1x4x4xf32> to vector<4x4xf32>
    %cst_132 = arith.constant dense<0.000000e+00> : vector<256x4xf32>
    %101 = tpu.matmul %98, %100, %cst_132 {dimension_numbers = #tpu.dot_dimension_numbers<[1], [0], [0], [1], [0, 0, 1, 1], [], []>} : vector<256x4xf32>, vector<4x4xf32>, vector<256x4xf32> -> vector<256x4xf32>
    %102 = arith.addf %96, %101 : vector<256x4xf32>
    %c1_133 = arith.constant 1 : index
    %c1_134 = arith.constant 1 : index
    %c0_135 = arith.constant 0 : index
    %103 = vector.load %arg12[%c1_133, %c1_134, %c0_135] : memref<18x18x4xf32, #tpu.memory_space<vmem>>, vector<16x16x4xf32>
    %104 = vector.shape_cast %103 : vector<16x16x4xf32> to vector<256x4xf32>
    %c1_136 = arith.constant 1 : index
    %c1_137 = arith.constant 1 : index
    %c0_138 = arith.constant 0 : index
    %c0_139 = arith.constant 0 : index
    %105 = vector.load %arg7[%c1_136, %c1_137, %c0_138, %c0_139] : memref<3x3x4x4xf32, #tpu.memory_space<vmem>>, vector<1x1x4x4xf32>
    %106 = vector.shape_cast %105 : vector<1x1x4x4xf32> to vector<4x4xf32>
    %cst_140 = arith.constant dense<0.000000e+00> : vector<256x4xf32>
    %107 = tpu.matmul %104, %106, %cst_140 {dimension_numbers = #tpu.dot_dimension_numbers<[1], [0], [0], [1], [0, 0, 1, 1], [], []>} : vector<256x4xf32>, vector<4x4xf32>, vector<256x4xf32> -> vector<256x4xf32>
    %108 = arith.addf %102, %107 : vector<256x4xf32>
    %c1_141 = arith.constant 1 : index
    %c2_142 = arith.constant 2 : index
    %c0_143 = arith.constant 0 : index
    %109 = vector.load %arg12[%c1_141, %c2_142, %c0_143] : memref<18x18x4xf32, #tpu.memory_space<vmem>>, vector<16x16x4xf32>
    %110 = vector.shape_cast %109 : vector<16x16x4xf32> to vector<256x4xf32>
    %c1_144 = arith.constant 1 : index
    %c2_145 = arith.constant 2 : index
    %c0_146 = arith.constant 0 : index
    %c0_147 = arith.constant 0 : index
    %111 = vector.load %arg7[%c1_144, %c2_145, %c0_146, %c0_147] : memref<3x3x4x4xf32, #tpu.memory_space<vmem>>, vector<1x1x4x4xf32>
    %112 = vector.shape_cast %111 : vector<1x1x4x4xf32> to vector<4x4xf32>
    %cst_148 = arith.constant dense<0.000000e+00> : vector<256x4xf32>
    %113 = tpu.matmul %110, %112, %cst_148 {dimension_numbers = #tpu.dot_dimension_numbers<[1], [0], [0], [1], [0, 0, 1, 1], [], []>} : vector<256x4xf32>, vector<4x4xf32>, vector<256x4xf32> -> vector<256x4xf32>
    %114 = arith.addf %108, %113 : vector<256x4xf32>
    %c2_149 = arith.constant 2 : index
    %c0_150 = arith.constant 0 : index
    %c0_151 = arith.constant 0 : index
    %115 = vector.load %arg12[%c2_149, %c0_150, %c0_151] : memref<18x18x4xf32, #tpu.memory_space<vmem>>, vector<16x16x4xf32>
    %116 = vector.shape_cast %115 : vector<16x16x4xf32> to vector<256x4xf32>
    %c2_152 = arith.constant 2 : index
    %c0_153 = arith.constant 0 : index
    %c0_154 = arith.constant 0 : index
    %c0_155 = arith.constant 0 : index
    %117 = vector.load %arg7[%c2_152, %c0_153, %c0_154, %c0_155] : memref<3x3x4x4xf32, #tpu.memory_space<vmem>>, vector<1x1x4x4xf32>
    %118 = vector.shape_cast %117 : vector<1x1x4x4xf32> to vector<4x4xf32>
    %cst_156 = arith.constant dense<0.000000e+00> : vector<256x4xf32>
    %119 = tpu.matmul %116, %118, %cst_156 {dimension_numbers = #tpu.dot_dimension_numbers<[1], [0], [0], [1], [0, 0, 1, 1], [], []>} : vector<256x4xf32>, vector<4x4xf32>, vector<256x4xf32> -> vector<256x4xf32>
    %120 = arith.addf %114, %119 : vector<256x4xf32>
    %c2_157 = arith.constant 2 : index
    %c1_158 = arith.constant 1 : index
    %c0_159 = arith.constant 0 : index
    %121 = vector.load %arg12[%c2_157, %c1_158, %c0_159] : memref<18x18x4xf32, #tpu.memory_space<vmem>>, vector<16x16x4xf32>
    %122 = vector.shape_cast %121 : vector<16x16x4xf32> to vector<256x4xf32>
    %c2_160 = arith.constant 2 : index
    %c1_161 = arith.constant 1 : index
    %c0_162 = arith.constant 0 : index
    %c0_163 = arith.constant 0 : index
    %123 = vector.load %arg7[%c2_160, %c1_161, %c0_162, %c0_163] : memref<3x3x4x4xf32, #tpu.memory_space<vmem>>, vector<1x1x4x4xf32>
    %124 = vector.shape_cast %123 : vector<1x1x4x4xf32> to vector<4x4xf32>
    %cst_164 = arith.constant dense<0.000000e+00> : vector<256x4xf32>
    %125 = tpu.matmul %122, %124, %cst_164 {dimension_numbers = #tpu.dot_dimension_numbers<[1], [0], [0], [1], [0, 0, 1, 1], [], []>} : vector<256x4xf32>, vector<4x4xf32>, vector<256x4xf32> -> vector<256x4xf32>
    %126 = arith.addf %120, %125 : vector<256x4xf32>
    %c2_165 = arith.constant 2 : index
    %c2_166 = arith.constant 2 : index
    %c0_167 = arith.constant 0 : index
    %127 = vector.load %arg12[%c2_165, %c2_166, %c0_167] : memref<18x18x4xf32, #tpu.memory_space<vmem>>, vector<16x16x4xf32>
    %128 = vector.shape_cast %127 : vector<16x16x4xf32> to vector<256x4xf32>
    %c2_168 = arith.constant 2 : index
    %c2_169 = arith.constant 2 : index
    %c0_170 = arith.constant 0 : index
    %c0_171 = arith.constant 0 : index
    %129 = vector.load %arg7[%c2_168, %c2_169, %c0_170, %c0_171] : memref<3x3x4x4xf32, #tpu.memory_space<vmem>>, vector<1x1x4x4xf32>
    %130 = vector.shape_cast %129 : vector<1x1x4x4xf32> to vector<4x4xf32>
    %cst_172 = arith.constant dense<0.000000e+00> : vector<256x4xf32>
    %131 = tpu.matmul %128, %130, %cst_172 {dimension_numbers = #tpu.dot_dimension_numbers<[1], [0], [0], [1], [0, 0, 1, 1], [], []>} : vector<256x4xf32>, vector<4x4xf32>, vector<256x4xf32> -> vector<256x4xf32>
    %132 = arith.addf %126, %131 : vector<256x4xf32>
    %c0_173 = arith.constant 0 : index
    %c0_174 = arith.constant 0 : index
    %133 = vector.load %arg8[%c0_173, %c0_174] : memref<1x4xf32, #tpu.memory_space<vmem>>, vector<1x4xf32>
    %134 = vector.broadcast %133 : vector<1x4xf32> to vector<256x4xf32>
    %135 = arith.mulf %132, %134 : vector<256x4xf32>
    %c0_175 = arith.constant 0 : index
    %c0_176 = arith.constant 0 : index
    %136 = vector.load %arg9[%c0_175, %c0_176] : memref<1x4xf32, #tpu.memory_space<vmem>>, vector<1x4xf32>
    %137 = vector.broadcast %136 : vector<1x4xf32> to vector<256x4xf32>
    %138 = arith.addf %135, %137 : vector<256x4xf32>
    %cst_177 = arith.constant 0.000000e+00 : f32
    %139 = vector.broadcast %cst_177 : f32 to vector<256x4xf32>
    %140 = arith.maximumf %138, %139 : vector<256x4xf32>
    %c0_178 = arith.constant 0 : index
    %c0_179 = arith.constant 0 : index
    %c0_180 = arith.constant 0 : index
    %141 = vector.load %arg10[%c0_178, %c0_179, %c0_180] : memref<1x256x4xf32, #tpu.memory_space<vmem>>, vector<1x256x4xf32>
    %142 = vector.shape_cast %141 : vector<1x256x4xf32> to vector<256x4xf32>
    %143 = vector.shape_cast %140 : vector<256x4xf32> to vector<1x256x4xf32>
    tpu.vector_store %arg10[%c0_178, %c0_179, %c0_180], %143 {strides = array<i32>} : memref<1x256x4xf32, #tpu.memory_space<vmem>>, vector<1x256x4xf32>,
    return
  }
  func.func @transform_0(%arg0: i32) -> (i32, i32, i32) {
    %c0_i32 = arith.constant 0 : i32
    %c0_i32_0 = arith.constant 0 : i32
    %c0_i32_1 = arith.constant 0 : i32
    return %arg0, %c0_i32, %c0_i32_0 : i32, i32, i32
  }
  func.func @transform_1(%arg0: i32) -> (i32, i32, i32, i32) {
    %c0_i32 = arith.constant 0 : i32
    %c0_i32_0 = arith.constant 0 : i32
    %c0_i32_1 = arith.constant 0 : i32
    %c0_i32_2 = arith.constant 0 : i32
    return %arg0, %c0_i32, %c0_i32_0, %c0_i32_1 : i32, i32, i32, i32
  }
  func.func @transform_2(%arg0: i32) -> (i32, i32) {
    %c0_i32 = arith.constant 0 : i32
    %c0_i32_0 = arith.constant 0 : i32
    %c0_i32_1 = arith.constant 0 : i32
    return %c0_i32, %c0_i32_0 : i32, i32
  }
  func.func @transform_3(%arg0: i32) -> (i32, i32, i32, i32) {
    %c0_i32 = arith.constant 0 : i32
    %c0_i32_0 = arith.constant 0 : i32
    %c0_i32_1 = arith.constant 0 : i32
    %c0_i32_2 = arith.constant 0 : i32
    %c0_i32_3 = arith.constant 0 : i32
    return %c0_i32, %c0_i32_0, %c0_i32_1, %c0_i32_2 : i32, i32, i32, i32
  }
  func.func @transform_4(%arg0: i32) -> (i32, i32) {
    %c0_i32 = arith.constant 0 : i32
    %c0_i32_0 = arith.constant 0 : i32
    %c0_i32_1 = arith.constant 0 : i32
    return %c0_i32, %c0_i32_0 : i32, i32
  }
  func.func @transform_5(%arg0: i32) -> (i32, i32) {
    %c0_i32 = arith.constant 0 : i32
    %c0_i32_0 = arith.constant 0 : i32
    %c0_i32_1 = arith.constant 0 : i32
    return %c0_i32, %c0_i32_0 : i32, i32
  }
  func.func @transform_6(%arg0: i32) -> (i32, i32, i32, i32) {
    %c0_i32 = arith.constant 0 : i32
    %c0_i32_0 = arith.constant 0 : i32
    %c0_i32_1 = arith.constant 0 : i32
    %c0_i32_2 = arith.constant 0 : i32
    %c0_i32_3 = arith.constant 0 : i32
    return %c0_i32, %c0_i32_0, %c0_i32_1, %c0_i32_2 : i32, i32, i32, i32
  }
  func.func @transform_7(%arg0: i32) -> (i32, i32) {
    %c0_i32 = arith.constant 0 : i32
    %c0_i32_0 = arith.constant 0 : i32
    %c0_i32_1 = arith.constant 0 : i32
    return %c0_i32, %c0_i32_0 : i32, i32
  }
  func.func @transform_8(%arg0: i32) -> (i32, i32) {
    %c0_i32 = arith.constant 0 : i32
    %c0_i32_0 = arith.constant 0 : i32
    %c0_i32_1 = arith.constant 0 : i32
    return %c0_i32, %c0_i32_0 : i32, i32
  }
  func.func @transform_9(%arg0: i32) -> (i32, i32, i32) {
    %c0_i32 = arith.constant 0 : i32
    %c0_i32_0 = arith.constant 0 : i32
    %c0_i32_1 = arith.constant 0 : i32
    return %arg0, %c0_i32, %c0_i32_0 : i32, i32, i32
  }
}

</mosaic_0001>

<llo_original>
// kernel: tpu_custom_call.1
$region0: #{tpu_custom_call.1}
  #allocation0 [shape = 'u32[]', space=smem, size = 0x4, offset = 0x4, fixed_abs, tag = 'smem constant byte address 0x4 - core index']
  #allocation1 [shape = 'u32[144,128]{1,0:T(1,128)}', space=vmem, size = 0x12000, scoped, tag = 'internal scratch']
  #allocation2 [shape = 'f32[18,18,8]{2,1,0:T(8,128)}', space=vmem, size = 0x36000, scoped, tag = 'scratch operand']
  #allocation3 [shape = 'f32[18,18,4]{2,1,0:T(8,128)}', space=vmem, size = 0x36000, scoped, tag = 'scratch operand']
  %s0 = inlined_call_operand.vmem [shape: f32[2,64,4], index: 0, kind: input, shape index: {}]
  %s1 = inlined_call_operand.vmem [shape: f32[2,16,16,4], index: 1, kind: input, shape index: {}]
  %s2 = inlined_call_operand.vmem [shape: f32[256,64], index: 2, kind: input, shape index: {}]
  %s3 = inlined_call_operand.vmem [shape: f32[3,3,8,4], index: 3, kind: input, shape index: {}]
  %s4 = inlined_call_operand.vmem [shape: f32[1,4], index: 4, kind: input, shape index: {}]
  %s5 = inlined_call_operand.vmem [shape: f32[1,4], index: 5, kind: input, shape index: {}]
  %s6 = inlined_call_operand.vmem [shape: f32[3,3,4,4], index: 6, kind: input, shape index: {}]
  %s7 = inlined_call_operand.vmem [shape: f32[1,4], index: 7, kind: input, shape index: {}]
  %s8 = inlined_call_operand.vmem [shape: f32[1,4], index: 8, kind: input, shape index: {}]
  %s9 = inlined_call_operand.vmem [shape: f32[2,256,4], index: 9, kind: output, shape index: {}]
  %s10 = sld [smem:[#allocation0]]
  $region69: #{tpu_custom_call.1} parent=0
    _
  %s12 = ssub.s32 1, %s10
  %s13 = scalar_select 0, %s12, %s10
  loop: start=0, step=1, limit=4
  $region2: #{tpu_custom_call.1} parent=0 // loop_pre_header
    _
  $region3: #{tpu_custom_call.1} parent=0 // loop_header
    %s15 = sphi 0, %s19
    %p16 = scmp.ge.s32.totalorder %s15, 4
    %s25 = sphi 0, %s27
    %s28 = sphi 0, %s25
    %s29 = sphi 0, %s28
    %s45 = sphi 0, %s29
    %s51 = sphi 0, %s53
    %s54 = sphi 0, %s51
    %s55 = sphi 0, %s54
    %s71 = sphi 0, %s55
    %s75 = sphi 0, %s75
    %s77 = sphi 0, %s75
    %s78 = sphi 0, %s77
    %s92 = sphi 0, %s78
    %s96 = sphi 0, %s96
    %s98 = sphi 0, %s96
    %s99 = sphi 0, %s98
    %s113 = sphi 0, %s99
    %s117 = sphi 0, %s117
    %s119 = sphi 0, %s117
    %s120 = sphi 0, %s119
    %s134 = sphi 0, %s120
    %s138 = sphi 0, %s138
    %s140 = sphi 0, %s138
    %s141 = sphi 0, %s140
    %s155 = sphi 0, %s141
    %s159 = sphi 0, %s159
    %s161 = sphi 0, %s159
    %s162 = sphi 0, %s161
    %s176 = sphi 0, %s162
    %s180 = sphi 0, %s180
    %s182 = sphi 0, %s180
    %s183 = sphi 0, %s182
    %s197 = sphi 0, %s183
    %s201 = sphi 0, %s201
    %s203 = sphi 0, %s201
    %s204 = sphi 0, %s203
    %s218 = sphi 0, %s204
    %s224 = sphi 0, %s226
    %s227 = sphi 0, %s224
    %s228 = sphi 0, %s227
    %s244 = sphi 0, %s228
  $region4: #{tpu_custom_call.1} parent=0 // loop_header_branch
    %18 = sbr.rel (%p16) target = $region8
  $region5: #{tpu_custom_call.1} parent=0 // loop_body
    %s20 = ssub.s32 %s15, 1
    %s21 = ssub.s32 %s15, 2
    %s22 = sadd.s32 %s15, 1
    %s23 = ssub.s32 %s15, %s22
    %p24 = scmp.eq.s32.totalorder %s23, 0
    %s26 = sadd.s32 %s25, 1
    %s27 = scalar_select %p24, %s25, %s26
    %p30 = pneg %p24
    %p31 = scmp.eq.s32.totalorder %s15, 1
    %p32 = por %p30, %p31
    %p33 = scmp.ne.s32.totalorder %s25, %s28
    %p34 = scmp.eq.s32.totalorder %s15, 0
    %p35 = por %p33, %p34
    %p36 = scmp.ne.s32.totalorder %s25, %s28
    %p37 = scmp.eq.s32.totalorder %s20, 1
    %p38 = por %p36, %p37
    %p39 = scmp.ne.s32.totalorder %s28, %s29
    %p40 = scmp.eq.s32.totalorder %s20, 0
    %p41 = por %p39, %p40
    %p42 = scmp.ne.s32.totalorder %s28, %s29
    %p43 = scmp.eq.s32.totalorder %s21, 1
    %p44 = por %p42, %p43
    %p46 = scmp.ne.s32.totalorder %s29, %s45
    %p47 = scmp.eq.s32.totalorder %s21, 0
    %p48 = por %p46, %p47
    %s49 = ssub.s32 %s15, %s22
    %p50 = scmp.eq.s32.totalorder %s49, 0
    %s52 = sadd.s32 %s51, 1
    %s53 = scalar_select %p50, %s51, %s52
    %p56 = pneg %p50
    %p57 = scmp.eq.s32.totalorder %s15, 1
    %p58 = por %p56, %p57
    %p59 = scmp.ne.s32.totalorder %s51, %s54
    %p60 = scmp.eq.s32.totalorder %s15, 0
    %p61 = por %p59, %p60
    %p62 = scmp.ne.s32.totalorder %s51, %s54
    %p63 = scmp.eq.s32.totalorder %s20, 1
    %p64 = por %p62, %p63
    %p65 = scmp.ne.s32.totalorder %s54, %s55
    %p66 = scmp.eq.s32.totalorder %s20, 0
    %p67 = por %p65, %p66
    %p68 = scmp.ne.s32.totalorder %s54, %s55
    %p69 = scmp.eq.s32.totalorder %s21, 1
    %p70 = por %p68, %p69
    %p72 = scmp.ne.s32.totalorder %s55, %s71
    %p73 = scmp.eq.s32.totalorder %s21, 0
    %p74 = por %p72, %p73
    %s76 = sadd.s32 %s75, 1
    %p79 = scmp.eq.s32.totalorder %s15, 1
    %p80 = scmp.ne.s32.totalorder %s75, %s77
    %p81 = scmp.eq.s32.totalorder %s15, 0
    %p82 = por %p80, %p81
    %p83 = scmp.ne.s32.totalorder %s75, %s77
    %p84 = scmp.eq.s32.totalorder %s20, 1
    %p85 = por %p83, %p84
    %p86 = scmp.ne.s32.totalorder %s77, %s78
    %p87 = scmp.eq.s32.totalorder %s20, 0
    %p88 = por %p86, %p87
    %p89 = scmp.ne.s32.totalorder %s77, %s78
    %p90 = scmp.eq.s32.totalorder %s21, 1
    %p91 = por %p89, %p90
    %p93 = scmp.ne.s32.totalorder %s78, %s92
    %p94 = scmp.eq.s32.totalorder %s21, 0
    %p95 = por %p93, %p94
    %s97 = sadd.s32 %s96, 1
    %p100 = scmp.eq.s32.totalorder %s15, 1
    %p101 = scmp.ne.s32.totalorder %s96, %s98
    %p102 = scmp.eq.s32.totalorder %s15, 0
    %p103 = por %p101, %p102
    %p104 = scmp.ne.s32.totalorder %s96, %s98
    %p105 = scmp.eq.s32.totalorder %s20, 1
    %p106 = por %p104, %p105
    %p107 = scmp.ne.s32.totalorder %s98, %s99
    %p108 = scmp.eq.s32.totalorder %s20, 0
    %p109 = por %p107, %p108
    %p110 = scmp.ne.s32.totalorder %s98, %s99
    %p111 = scmp.eq.s32.totalorder %s21, 1
    %p112 = por %p110, %p111
    %p114 = scmp.ne.s32.totalorder %s99, %s113
    %p115 = scmp.eq.s32.totalorder %s21, 0
    %p116 = por %p114, %p115
    %s118 = sadd.s32 %s117, 1
    %p121 = scmp.eq.s32.totalorder %s15, 1
    %p122 = scmp.ne.s32.totalorder %s117, %s119
    %p123 = scmp.eq.s32.totalorder %s15, 0
    %p124 = por %p122, %p123
    %p125 = scmp.ne.s32.totalorder %s117, %s119
    %p126 = scmp.eq.s32.totalorder %s20, 1
    %p127 = por %p125, %p126
    %p128 = scmp.ne.s32.totalorder %s119, %s120
    %p129 = scmp.eq.s32.totalorder %s20, 0
    %p130 = por %p128, %p129
    %p131 = scmp.ne.s32.totalorder %s119, %s120
    %p132 = scmp.eq.s32.totalorder %s21, 1
    %p133 = por %p131, %p132
    %p135 = scmp.ne.s32.totalorder %s120, %s134
    %p136 = scmp.eq.s32.totalorder %s21, 0
    %p137 = por %p135, %p136
    %s139 = sadd.s32 %s138, 1
    %p142 = scmp.eq.s32.totalorder %s15, 1
    %p143 = scmp.ne.s32.totalorder %s138, %s140
    %p144 = scmp.eq.s32.totalorder %s15, 0
    %p145 = por %p143, %p144
    %p146 = scmp.ne.s32.totalorder %s138, %s140
    %p147 = scmp.eq.s32.totalorder %s20, 1
    %p148 = por %p146, %p147
    %p149 = scmp.ne.s32.totalorder %s140, %s141
    %p150 = scmp.eq.s32.totalorder %s20, 0
    %p151 = por %p149, %p150
    %p152 = scmp.ne.s32.totalorder %s140, %s141
    %p153 = scmp.eq.s32.totalorder %s21, 1
    %p154 = por %p152, %p153
    %p156 = scmp.ne.s32.totalorder %s141, %s155
    %p157 = scmp.eq.s32.totalorder %s21, 0
    %p158 = por %p156, %p157
    %s160 = sadd.s32 %s159, 1
    %p163 = scmp.eq.s32.totalorder %s15, 1
    %p164 = scmp.ne.s32.totalorder %s159, %s161
    %p165 = scmp.eq.s32.totalorder %s15, 0
    %p166 = por %p164, %p165
    %p167 = scmp.ne.s32.totalorder %s159, %s161
    %p168 = scmp.eq.s32.totalorder %s20, 1
    %p169 = por %p167, %p168
    %p170 = scmp.ne.s32.totalorder %s161, %s162
    %p171 = scmp.eq.s32.totalorder %s20, 0
    %p172 = por %p170, %p171
    %p173 = scmp.ne.s32.totalorder %s161, %s162
    %p174 = scmp.eq.s32.totalorder %s21, 1
    %p175 = por %p173, %p174
    %p177 = scmp.ne.s32.totalorder %s162, %s176
    %p178 = scmp.eq.s32.totalorder %s21, 0
    %p179 = por %p177, %p178
    %s181 = sadd.s32 %s180, 1
    %p184 = scmp.eq.s32.totalorder %s15, 1
    %p185 = scmp.ne.s32.totalorder %s180, %s182
    %p186 = scmp.eq.s32.totalorder %s15, 0
    %p187 = por %p185, %p186
    %p188 = scmp.ne.s32.totalorder %s180, %s182
    %p189 = scmp.eq.s32.totalorder %s20, 1
    %p190 = por %p188, %p189
    %p191 = scmp.ne.s32.totalorder %s182, %s183
    %p192 = scmp.eq.s32.totalorder %s20, 0
    %p193 = por %p191, %p192
    %p194 = scmp.ne.s32.totalorder %s182, %s183
    %p195 = scmp.eq.s32.totalorder %s21, 1
    %p196 = por %p194, %p195
    %p198 = scmp.ne.s32.totalorder %s183, %s197
    %p199 = scmp.eq.s32.totalorder %s21, 0
    %p200 = por %p198, %p199
    %s202 = sadd.s32 %s201, 1
    %p205 = scmp.eq.s32.totalorder %s15, 1
    %p206 = scmp.ne.s32.totalorder %s201, %s203
    %p207 = scmp.eq.s32.totalorder %s15, 0
    %p208 = por %p206, %p207
    %p209 = scmp.ne.s32.totalorder %s201, %s203
    %p210 = scmp.eq.s32.totalorder %s20, 1
    %p211 = por %p209, %p210
    %p212 = scmp.ne.s32.totalorder %s203, %s204
    %p213 = scmp.eq.s32.totalorder %s20, 0
    %p214 = por %p212, %p213
    %p215 = scmp.ne.s32.totalorder %s203, %s204
    %p216 = scmp.eq.s32.totalorder %s21, 1
    %p217 = por %p215, %p216
    %p219 = scmp.ne.s32.totalorder %s204, %s218
    %p220 = scmp.eq.s32.totalorder %s21, 0
    %p221 = por %p219, %p220
    %s222 = ssub.s32 %s15, %s22
    %p223 = scmp.eq.s32.totalorder %s222, 0
    %s225 = sadd.s32 %s224, 1
    %s226 = scalar_select %p223, %s224, %s225
    %p229 = pneg %p223
    %p230 = scmp.eq.s32.totalorder %s15, 1
    %p231 = por %p229, %p230
    %p232 = scmp.ne.s32.totalorder %s224, %s227
    %p233 = scmp.eq.s32.totalorder %s15, 0
    %p234 = por %p232, %p233
    %p235 = scmp.ne.s32.totalorder %s224, %s227
    %p236 = scmp.eq.s32.totalorder %s20, 1
    %p237 = por %p235, %p236
    %p238 = scmp.ne.s32.totalorder %s227, %s228
    %p239 = scmp.eq.s32.totalorder %s20, 0
    %p240 = por %p238, %p239
    %p241 = scmp.ne.s32.totalorder %s227, %s228
    %p242 = scmp.eq.s32.totalorder %s21, 1
    %p243 = por %p241, %p242
    %p245 = scmp.ne.s32.totalorder %s228, %s244
    %p246 = scmp.eq.s32.totalorder %s21, 0
    %p247 = por %p245, %p246
    %p248 = scmp.le.s32.totalorder 1, %s15
    %p249 = scmp.lt.s32.totalorder %s15, 3
    %p250 = pnand %p248, %p249
    %p251 = pneg %p250
    // Predicated region
    $region9: #{tpu_custom_call.1} parent=5 // pred_check
      _
    $region10: #{tpu_custom_call.1} parent=5 // pred_check_branch
      %253 = sbr.rel (%p250) target = $region12
    $region11: #{tpu_custom_call.1} parent=5 // pred_region
      %s254 = ssub.s32 %s15, 1
      // Predicated region
      $region13: #{tpu_custom_call.1} parent=11 // pred_check
        %p255 = pneg %p88
      $region14: #{tpu_custom_call.1} parent=11 // pred_check_branch
        %257 = sbr.rel (%p255) target = $region16
      $region15: #{tpu_custom_call.1} parent=11 // pred_region
        _
      $region16: #{tpu_custom_call.1} parent=11 // pred_fallthru
        _
      // Predicated region
      $region17: #{tpu_custom_call.1} parent=11 // pred_check
        %p258 = pneg %p109
      $region18: #{tpu_custom_call.1} parent=11 // pred_check_branch
        %260 = sbr.rel (%p258) target = $region20
      $region19: #{tpu_custom_call.1} parent=11 // pred_region
        _
      $region20: #{tpu_custom_call.1} parent=11 // pred_fallthru
        _
      // Predicated region
      $region21: #{tpu_custom_call.1} parent=11 // pred_check
        %p261 = pneg %p130
      $region22: #{tpu_custom_call.1} parent=11 // pred_check_branch
        %263 = sbr.rel (%p261) target = $region24
      $region23: #{tpu_custom_call.1} parent=11 // pred_region
        _
      $region24: #{tpu_custom_call.1} parent=11 // pred_fallthru
        _
      // Predicated region
      $region25: #{tpu_custom_call.1} parent=11 // pred_check
        %p264 = pneg %p151
      $region26: #{tpu_custom_call.1} parent=11 // pred_check_branch
        %266 = sbr.rel (%p264) target = $region28
      $region27: #{tpu_custom_call.1} parent=11 // pred_region
        _
      $region28: #{tpu_custom_call.1} parent=11 // pred_fallthru
        _
      // Predicated region
      $region29: #{tpu_custom_call.1} parent=11 // pred_check
        %p267 = pneg %p172
      $region30: #{tpu_custom_call.1} parent=11 // pred_check_branch
        %269 = sbr.rel (%p267) target = $region32
      $region31: #{tpu_custom_call.1} parent=11 // pred_region
        _
      $region32: #{tpu_custom_call.1} parent=11 // pred_fallthru
        _
      // Predicated region
      $region33: #{tpu_custom_call.1} parent=11 // pred_check
        %p270 = pneg %p193
      $region34: #{tpu_custom_call.1} parent=11 // pred_check_branch
        %272 = sbr.rel (%p270) target = $region36
      $region35: #{tpu_custom_call.1} parent=11 // pred_region
        _
      $region36: #{tpu_custom_call.1} parent=11 // pred_fallthru
        _
      // Predicated region
      $region37: #{tpu_custom_call.1} parent=11 // pred_check
        %p273 = pneg %p214
      $region38: #{tpu_custom_call.1} parent=11 // pred_check_branch
        %275 = sbr.rel (%p273) target = $region40
      $region39: #{tpu_custom_call.1} parent=11 // pred_region
        _
      $region40: #{tpu_custom_call.1} parent=11 // pred_fallthru
        _
    $region12: #{tpu_custom_call.1} parent=5 // pred_fallthru
      _
    %p276 = scmp.lt.s32.totalorder %s15, 2
    // Predicated region
    $region41: #{tpu_custom_call.1} parent=5 // pred_check
      %p277 = pneg %p276
    $region42: #{tpu_custom_call.1} parent=5 // pred_check_branch
      %279 = sbr.rel (%p277) target = $region44
    $region43: #{tpu_custom_call.1} parent=5 // pred_region
      // Predicated region
      $region45: #{tpu_custom_call.1} parent=43 // pred_check
        %p280 = pneg %p35
      $region46: #{tpu_custom_call.1} parent=43 // pred_check_branch
        %282 = sbr.rel (%p280) target = $region48
      $region47: #{tpu_custom_call.1} parent=43 // pred_region
        %p283 = scmp.lt.s32.totalorder %s15, 1
        %s284 = scalar_select %p283, %s15, 1
        %s285 = smul.addr %s284, 8
        %s286 = smul.addr %s285, 8
        %s287 = scalar_lea.vmem %s0, %s286
      $region48: #{tpu_custom_call.1} parent=43 // pred_fallthru
        _
      // Predicated region
      $region49: #{tpu_custom_call.1} parent=43 // pred_check
        %p288 = pneg %p61
      $region50: #{tpu_custom_call.1} parent=43 // pred_check_branch
        %290 = sbr.rel (%p288) target = $region52
      $region51: #{tpu_custom_call.1} parent=43 // pred_region
        %p291 = scmp.lt.s32.totalorder %s15, 1
        %s292 = scalar_select %p291, %s15, 1
        %s293 = smul.addr %s292, 32
        %s294 = smul.addr %s293, 8
        %s295 = scalar_lea.vmem %s1, %s294
      $region52: #{tpu_custom_call.1} parent=43 // pred_fallthru
        _
    $region44: #{tpu_custom_call.1} parent=5 // pred_fallthru
      _
    %p296 = scmp.le.s32.totalorder 1, %s15
    %p297 = scmp.lt.s32.totalorder %s15, 3
    %p298 = pnand %p296, %p297
    %p299 = pneg %p298
    // Predicated region
    $region53: #{tpu_custom_call.1} parent=5 // pred_check
      _
    $region54: #{tpu_custom_call.1} parent=5 // pred_check_branch
      %301 = sbr.rel (%p298) target = $region56
    $region55: #{tpu_custom_call.1} parent=5 // pred_region
      %s302 = ssub.s32 %s15, 1
      %p303 = scmp.lt.s32.totalorder %s20, 1
      %s304 = scalar_select %p303, %s20, 1
      %s305 = smul.addr %s304, 8
      %s306 = smul.addr %s305, 8
      %s307 = scalar_lea.vmem %s0, %s306
      %p308 = pneg %p41
      %p309 = pneg %p38
      %p310 = scmp.lt.s32.totalorder %s20, 1
      %s311 = scalar_select %p310, %s20, 1
      %s312 = smul.addr %s311, 32
      %s313 = smul.addr %s312, 8
      %s314 = scalar_lea.vmem %s1, %s313
      %p315 = pneg %p67
      %p316 = pneg %p64
      %p317 = pneg %p88
      %p318 = pneg %p85
      %p319 = pneg %p109
      %p320 = pneg %p106
      %p321 = pneg %p130
      %p322 = pneg %p127
      %p323 = pneg %p151
      %p324 = pneg %p148
      %p325 = pneg %p172
      %p326 = pneg %p169
      %p327 = pneg %p193
      %p328 = pneg %p190
      %p329 = pneg %p214
      %p330 = pneg %p211
      %p331 = pneg %p240
      %p332 = pneg %p237
      %p333 = scmp.lt.s32.totalorder %s20, 1
      %s334 = scalar_select %p333, %s20, 1
      %s335 = smul.addr %s334, 32
      %s336 = smul.addr %s335, 8
      %s337 = scalar_lea.vmem %s9, %s336
      %p338 = scmp.lt.s32.totalorder %s20, 1
      %s339 = scalar_select %p338, %s20, 1
      %s340 = smul.addr %s339, 8
      %s341 = smul.addr %s340, 8
      %s342 = scalar_lea.vmem %s0, %s341
      %p343 = scmp.lt.s32.totalorder %s20, 1
      %s344 = scalar_select %p343, %s20, 1
      %s345 = smul.addr %s344, 32
      %s346 = smul.addr %s345, 8
      %s347 = scalar_lea.vmem %s1, %s346
      %p348 = scmp.lt.s32.totalorder %s20, 1
      %s349 = scalar_select %p348, %s20, 1
      %s350 = smul.addr %s349, 32
      %s351 = smul.addr %s350, 8
      %s352 = scalar_lea.vmem %s9, %s351
      %v353 = vld [vmem:[%s342] sm:$0xff]
      %v354 = vld [vmem:[%s342 + $0x8] sm:$0xff]
      %v355 = vld [vmem:[%s342 + $0x10] sm:$0xff]
      %v356 = vld [vmem:[%s342 + $0x18] sm:$0xff]
      %v357 = vld [vmem:[%s342 + $0x20] sm:$0xff]
      %v358 = vld [vmem:[%s342 + $0x28] sm:$0xff]
      %v359 = vld [vmem:[%s342 + $0x30] sm:$0xff]
      %v360 = vld [vmem:[%s342 + $0x38] sm:$0xff]
      %v361 = vld [vmem:[%s2] sm:$0xff]
      %v362 = vld [vmem:[%s2 + $0x8] sm:$0xff]
      %v363 = vld [vmem:[%s2 + $0x10] sm:$0xff]
      %v364 = vld [vmem:[%s2 + $0x18] sm:$0xff]
      %v365 = vld [vmem:[%s2 + $0x20] sm:$0xff]
      %v366 = vld [vmem:[%s2 + $0x28] sm:$0xff]
      %v367 = vld [vmem:[%s2 + $0x30] sm:$0xff]
      %v368 = vld [vmem:[%s2 + $0x38] sm:$0xff]
      %v369 = vld [vmem:[%s2 + $0x40] sm:$0xff]
      %v370 = vld [vmem:[%s2 + $0x48] sm:$0xff]
      %v371 = vld [vmem:[%s2 + $0x50] sm:$0xff]
      %v372 = vld [vmem:[%s2 + $0x58] sm:$0xff]
      %v373 = vld [vmem:[%s2 + $0x60] sm:$0xff]
      %v374 = vld [vmem:[%s2 + $0x68] sm:$0xff]
      %v375 = vld [vmem:[%s2 + $0x70] sm:$0xff]
      %v376 = vld [vmem:[%s2 + $0x78] sm:$0xff]
      %v377 = vld [vmem:[%s2 + $0x80] sm:$0xff]
      %v378 = vld [vmem:[%s2 + $0x88] sm:$0xff]
      %v379 = vld [vmem:[%s2 + $0x90] sm:$0xff]
      %v380 = vld [vmem:[%s2 + $0x98] sm:$0xff]
      %v381 = vld [vmem:[%s2 + $0xa0] sm:$0xff]
      %v382 = vld [vmem:[%s2 + $0xa8] sm:$0xff]
      %v383 = vld [vmem:[%s2 + $0xb0] sm:$0xff]
      %v384 = vld [vmem:[%s2 + $0xb8] sm:$0xff]
      %v385 = vld [vmem:[%s2 + $0xc0] sm:$0xff]
      %v386 = vld [vmem:[%s2 + $0xc8] sm:$0xff]
      %v387 = vld [vmem:[%s2 + $0xd0] sm:$0xff]
      %v388 = vld [vmem:[%s2 + $0xd8] sm:$0xff]
      %v389 = vld [vmem:[%s2 + $0xe0] sm:$0xff]
      %v390 = vld [vmem:[%s2 + $0xe8] sm:$0xff]
      %v391 = vld [vmem:[%s2 + $0xf0] sm:$0xff]
      %v392 = vld [vmem:[%s2 + $0xf8] sm:$0xff]
      %vm393 = vcmask 523264
      %v395 = vsel %vm393, %v361, 0
      %v398 = vsel %vm393, %v362, 0
      %v401 = vsel %vm393, %v363, 0
      %v404 = vsel %vm393, %v364, 0
      %v407 = vsel %vm393, %v365, 0
      %v410 = vsel %vm393, %v366, 0
      %v413 = vsel %vm393, %v367, 0
      %v416 = vsel %vm393, %v368, 0
      %v419 = vsel %vm393, %v369, 0
      %v422 = vsel %vm393, %v370, 0
      %v425 = vsel %vm393, %v371, 0
      %v428 = vsel %vm393, %v372, 0
      %v431 = vsel %vm393, %v373, 0
      %v434 = vsel %vm393, %v374, 0
      %v437 = vsel %vm393, %v375, 0
      %v440 = vsel %vm393, %v376, 0
      %v443 = vsel %vm393, %v377, 0
      %v446 = vsel %vm393, %v378, 0
      %v449 = vsel %vm393, %v379, 0
      %v452 = vsel %vm393, %v380, 0
      %v455 = vsel %vm393, %v381, 0
      %v458 = vsel %vm393, %v382, 0
      %v461 = vsel %vm393, %v383, 0
      %v464 = vsel %vm393, %v384, 0
      %v467 = vsel %vm393, %v385, 0
      %v470 = vsel %vm393, %v386, 0
      %v473 = vsel %vm393, %v387, 0
      %v476 = vsel %vm393, %v388, 0
      %v479 = vsel %vm393, %v389, 0
      %v482 = vsel %vm393, %v390, 0
      %v485 = vsel %vm393, %v391, 0
      %v488 = vsel %vm393, %v392, 0
      %490 = vmatprep.subr.mxu0 0.0
      %491 = vmatpush1.msra.mxu0 0.0
      %492 = vmatprep.subr.mxu0 0.0
      %493 = vmatpush1.msra.mxu0 0.0
      %494 = vmatprep.subr.mxu0 0.0
      %495 = vmatpush1.msra.mxu0 0.0
      %496 = vmatprep.subr.mxu0 0.0
      %497 = vmatpush1.msra.mxu0 0.0
      %498 = vmatprep.subr.mxu0 0.0
      %499 = vmatpush1.msra.mxu0 0.0
      %500 = vmatprep.subr.mxu0 0.0
      %501 = vmatpush1.msra.mxu0 0.0
      %502 = vmatprep.subr.mxu0 0.0
      %503 = vmatpush1.msra.mxu0 0.0
      %504 = vmatprep.subr.mxu0 0.0
      %505 = vmatpush1.msra.mxu0 0.0
      %506 = vmatprep.subr.mxu0 0.0
      %507 = vmatpush1.msra.mxu0 %v360
      %508 = vmatprep.subr.mxu0 0.0
      %509 = vmatpush1.msra.mxu0 %v359
      %510 = vmatprep.subr.mxu0 0.0
      %511 = vmatpush1.msra.mxu0 %v358
      %512 = vmatprep.subr.mxu0 0.0
      %513 = vmatpush1.msra.mxu0 %v357
      %514 = vmatprep.subr.mxu0 0.0
      %515 = vmatpush1.msra.mxu0 %v356
      %516 = vmatprep.subr.mxu0 0.0
      %517 = vmatpush1.msra.mxu0 %v355
      %518 = vmatprep.subr.mxu0 0.0
      %519 = vmatpush1.msra.mxu0 %v354
      %520 = vmatprep.subr.mxu0 0.0
      %521 = vmatpush1.msra.mxu0 %v353
      %522 = vmatprep.subr.mxu0 0.0
      %523 = vmatpush2.msra.mxu0 0.0
      %524 = vmatprep.subr.mxu0 0.0
      %525 = vmatpush2.msra.mxu0 0.0
      %526 = vmatprep.subr.mxu0 0.0
      %527 = vmatpush2.msra.mxu0 0.0
      %528 = vmatprep.subr.mxu0 0.0
      %529 = vmatpush2.msra.mxu0 0.0
      %530 = vmatprep.subr.mxu0 0.0
      %531 = vmatpush2.msra.mxu0 0.0
      %532 = vmatprep.subr.mxu0 0.0
      %533 = vmatpush2.msra.mxu0 0.0
      %534 = vmatprep.subr.mxu0 0.0
      %535 = vmatpush2.msra.mxu0 0.0
      %536 = vmatprep.subr.mxu0 0.0
      %537 = vmatpush2.msra.mxu0 0.0
      %538 = vmatprep.subr.mxu0 0.0
      %539 = vmatpush2.msra.mxu0 0.0
      %540 = vmatprep.subr.mxu0 0.0
      %541 = vmatpush2.msra.mxu0 0.0
      %542 = vmatprep.subr.mxu0 0.0
      %543 = vmatpush2.msra.mxu0 0.0
      %544 = vmatprep.subr.mxu0 0.0
      %545 = vmatpush2.msra.mxu0 0.0
      %546 = vmatprep.subr.mxu0 0.0
      %547 = vmatpush2.msra.mxu0 0.0
      %548 = vmatprep.subr.mxu0 0.0
      %549 = vmatpush2.msra.mxu0 0.0
      %550 = vmatprep.subr.mxu0 0.0
      %551 = vmatpush2.msra.mxu0 0.0
      %552 = vmatprep.subr.mxu0 0.0
      %553 = vmatpush2.msra.mxu0 0.0
      %554 = vmatprep.mubr.f32.mxu0 0.0
      %555 = vmatmul.mubr.f32.gmra.mxu0 %v395
      %v556 = vpop.f32.mrf.mxu0
      %v557 = vadd.f32 0.0, %v556
      %v558 = vpop.f32.mrf.mxu0
      %559 = vmatprep.mubr.f32.mxu0 0.0
      %560 = vmatmul.mubr.f32.gmra.mxu0 %v398
      %v561 = vpop.f32.mrf.mxu0
      %v562 = vadd.f32 0.0, %v561
      %v563 = vpop.f32.mrf.mxu0
      %564 = vmatprep.mubr.f32.mxu0 0.0
      %565 = vmatmul.mubr.f32.gmra.mxu0 %v401
      %v566 = vpop.f32.mrf.mxu0
      %v567 = vadd.f32 0.0, %v566
      %v568 = vpop.f32.mrf.mxu0
      %569 = vmatprep.mubr.f32.mxu0 0.0
      %570 = vmatmul.mubr.f32.gmra.mxu0 %v404
      %v571 = vpop.f32.mrf.mxu0
      %v572 = vadd.f32 0.0, %v571
      %v573 = vpop.f32.mrf.mxu0
      %574 = vmatprep.mubr.f32.mxu0 0.0
      %575 = vmatmul.mubr.f32.gmra.mxu0 %v407
      %v576 = vpop.f32.mrf.mxu0
      %v577 = vadd.f32 0.0, %v576
      %v578 = vpop.f32.mrf.mxu0
      %579 = vmatprep.mubr.f32.mxu0 0.0
      %580 = vmatmul.mubr.f32.gmra.mxu0 %v410
      %v581 = vpop.f32.mrf.mxu0
      %v582 = vadd.f32 0.0, %v581
      %v583 = vpop.f32.mrf.mxu0
      %584 = vmatprep.mubr.f32.mxu0 0.0
      %585 = vmatmul.mubr.f32.gmra.mxu0 %v413
      %v586 = vpop.f32.mrf.mxu0
      %v587 = vadd.f32 0.0, %v586
      %v588 = vpop.f32.mrf.mxu0
      %589 = vmatprep.mubr.f32.mxu0 0.0
      %590 = vmatmul.mubr.f32.gmra.mxu0 %v416
      %v591 = vpop.f32.mrf.mxu0
      %v592 = vadd.f32 0.0, %v591
      %v593 = vpop.f32.mrf.mxu0
      %594 = vmatprep.mubr.f32.mxu0 0.0
      %595 = vmatmul.mubr.f32.gmra.mxu0 %v419
      %v596 = vpop.f32.mrf.mxu0
      %v597 = vadd.f32 0.0, %v596
      %v598 = vpop.f32.mrf.mxu0
      %599 = vmatprep.mubr.f32.mxu0 0.0
      %600 = vmatmul.mubr.f32.gmra.mxu0 %v422
      %v601 = vpop.f32.mrf.mxu0
      %v602 = vadd.f32 0.0, %v601
      %v603 = vpop.f32.mrf.mxu0
      %604 = vmatprep.mubr.f32.mxu0 0.0
      %605 = vmatmul.mubr.f32.gmra.mxu0 %v425
      %v606 = vpop.f32.mrf.mxu0
      %v607 = vadd.f32 0.0, %v606
      %v608 = vpop.f32.mrf.mxu0
      %609 = vmatprep.mubr.f32.mxu0 0.0
      %610 = vmatmul.mubr.f32.gmra.mxu0 %v428
      %v611 = vpop.f32.mrf.mxu0
      %v612 = vadd.f32 0.0, %v611
      %v613 = vpop.f32.mrf.mxu0
      %614 = vmatprep.mubr.f32.mxu0 0.0
      %615 = vmatmul.mubr.f32.gmra.mxu0 %v431
      %v616 = vpop.f32.mrf.mxu0
      %v617 = vadd.f32 0.0, %v616
      %v618 = vpop.f32.mrf.mxu0
      %619 = vmatprep.mubr.f32.mxu0 0.0
      %620 = vmatmul.mubr.f32.gmra.mxu0 %v434
      %v621 = vpop.f32.mrf.mxu0
      %v622 = vadd.f32 0.0, %v621
      %v623 = vpop.f32.mrf.mxu0
      %624 = vmatprep.mubr.f32.mxu0 0.0
      %625 = vmatmul.mubr.f32.gmra.mxu0 %v437
      %v626 = vpop.f32.mrf.mxu0
      %v627 = vadd.f32 0.0, %v626
      %v628 = vpop.f32.mrf.mxu0
      %629 = vmatprep.mubr.f32.mxu0 0.0
      %630 = vmatmul.mubr.f32.gmra.mxu0 %v440
      %v631 = vpop.f32.mrf.mxu0
      %v632 = vadd.f32 0.0, %v631
      %v633 = vpop.f32.mrf.mxu0
      %634 = vmatprep.mubr.f32.mxu0 0.0
      %635 = vmatmul.mubr.f32.gmra.mxu0 %v443
      %v636 = vpop.f32.mrf.mxu0
      %v637 = vadd.f32 0.0, %v636
      %v638 = vpop.f32.mrf.mxu0
      %639 = vmatprep.mubr.f32.mxu0 0.0
      %640 = vmatmul.mubr.f32.gmra.mxu0 %v446
      %v641 = vpop.f32.mrf.mxu0
      %v642 = vadd.f32 0.0, %v641
      %v643 = vpop.f32.mrf.mxu0
      %644 = vmatprep.mubr.f32.mxu0 0.0
      %645 = vmatmul.mubr.f32.gmra.mxu0 %v449
      %v646 = vpop.f32.mrf.mxu0
      %v647 = vadd.f32 0.0, %v646
      %v648 = vpop.f32.mrf.mxu0
      %649 = vmatprep.mubr.f32.mxu0 0.0
      %650 = vmatmul.mubr.f32.gmra.mxu0 %v452
      %v651 = vpop.f32.mrf.mxu0
      %v652 = vadd.f32 0.0, %v651
      %v653 = vpop.f32.mrf.mxu0
      %654 = vmatprep.mubr.f32.mxu0 0.0
      %655 = vmatmul.mubr.f32.gmra.mxu0 %v455
      %v656 = vpop.f32.mrf.mxu0
      %v657 = vadd.f32 0.0, %v656
      %v658 = vpop.f32.mrf.mxu0
      %659 = vmatprep.mubr.f32.mxu0 0.0
      %660 = vmatmul.mubr.f32.gmra.mxu0 %v458
      %v661 = vpop.f32.mrf.mxu0
      %v662 = vadd.f32 0.0, %v661
      %v663 = vpop.f32.mrf.mxu0
      %664 = vmatprep.mubr.f32.mxu0 0.0
      %665 = vmatmul.mubr.f32.gmra.mxu0 %v461
      %v666 = vpop.f32.mrf.mxu0
      %v667 = vadd.f32 0.0, %v666
      %v668 = vpop.f32.mrf.mxu0
      %669 = vmatprep.mubr.f32.mxu0 0.0
      %670 = vmatmul.mubr.f32.gmra.mxu0 %v464
      %v671 = vpop.f32.mrf.mxu0
      %v672 = vadd.f32 0.0, %v671
      %v673 = vpop.f32.mrf.mxu0
      %674 = vmatprep.mubr.f32.mxu0 0.0
      %675 = vmatmul.mubr.f32.gmra.mxu0 %v467
      %v676 = vpop.f32.mrf.mxu0
      %v677 = vadd.f32 0.0, %v676
      %v678 = vpop.f32.mrf.mxu0
      %679 = vmatprep.mubr.f32.mxu0 0.0
      %680 = vmatmul.mubr.f32.gmra.mxu0 %v470
      %v681 = vpop.f32.mrf.mxu0
      %v682 = vadd.f32 0.0, %v681
      %v683 = vpop.f32.mrf.mxu0
      %684 = vmatprep.mubr.f32.mxu0 0.0
      %685 = vmatmul.mubr.f32.gmra.mxu0 %v473
      %v686 = vpop.f32.mrf.mxu0
      %v687 = vadd.f32 0.0, %v686
      %v688 = vpop.f32.mrf.mxu0
      %689 = vmatprep.mubr.f32.mxu0 0.0
      %690 = vmatmul.mubr.f32.gmra.mxu0 %v476
      %v691 = vpop.f32.mrf.mxu0
      %v692 = vadd.f32 0.0, %v691
      %v693 = vpop.f32.mrf.mxu0
      %694 = vmatprep.mubr.f32.mxu0 0.0
      %695 = vmatmul.mubr.f32.gmra.mxu0 %v479
      %v696 = vpop.f32.mrf.mxu0
      %v697 = vadd.f32 0.0, %v696
      %v698 = vpop.f32.mrf.mxu0
      %699 = vmatprep.mubr.f32.mxu0 0.0
      %700 = vmatmul.mubr.f32.gmra.mxu0 %v482
      %v701 = vpop.f32.mrf.mxu0
      %v702 = vadd.f32 0.0, %v701
      %v703 = vpop.f32.mrf.mxu0
      %704 = vmatprep.mubr.f32.mxu0 0.0
      %705 = vmatmul.mubr.f32.gmra.mxu0 %v485
      %v706 = vpop.f32.mrf.mxu0
      %v707 = vadd.f32 0.0, %v706
      %v708 = vpop.f32.mrf.mxu0
      %709 = vmatprep.mubr.f32.mxu0 0.0
      %710 = vmatmul.mubr.f32.gmra.mxu0 %v488
      %v711 = vpop.f32.mrf.mxu0
      %v712 = vadd.f32 0.0, %v711
      %v713 = vpop.f32.mrf.mxu0
      %714 = vdwg.mxu0
      %vm715 = vcmask 64512
      %716 = vst.msk [vmem:[#allocation2] sm:$0xff] %vm715, 0.0
      %717 = vst.msk [vmem:[#allocation2 + $0x8] sm:$0xff] %vm715, 0.0
      %vm718 = vcmask 58368
      %719 = vst.msk [vmem:[#allocation2 + $0x10] sm:$0x3] %vm718, 0.0
      %720 = vst.msk [vmem:[#allocation2 + $0x18] sm:$0xff] %vm715, 0.0
      %721 = vst.msk [vmem:[#allocation2 + $0x20] sm:$0xff] %vm715, 0.0
      %722 = vst.msk [vmem:[#allocation2 + $0x28] sm:$0x3] %vm718, 0.0
      %723 = vst.msk [vmem:[#allocation2 + $0x30] sm:$0xff] %vm715, 0.0
      %724 = vst.msk [vmem:[#allocation2 + $0x38] sm:$0xff] %vm715, 0.0
      %725 = vst.msk [vmem:[#allocation2 + $0x40] sm:$0x3] %vm718, 0.0
      %726 = vst.msk [vmem:[#allocation2 + $0x48] sm:$0xff] %vm715, 0.0
      %727 = vst.msk [vmem:[#allocation2 + $0x50] sm:$0xff] %vm715, 0.0
      %728 = vst.msk [vmem:[#allocation2 + $0x58] sm:$0x3] %vm718, 0.0
      %729 = vst.msk [vmem:[#allocation2 + $0x60] sm:$0xff] %vm715, 0.0
      %730 = vst.msk [vmem:[#allocation2 + $0x68] sm:$0xff] %vm715, 0.0
      %731 = vst.msk [vmem:[#allocation2 + $0x70] sm:$0x3] %vm718, 0.0
      %732 = vst.msk [vmem:[#allocation2 + $0x78] sm:$0xff] %vm715, 0.0
      %733 = vst.msk [vmem:[#allocation2 + $0x80] sm:$0xff] %vm715, 0.0
      %734 = vst.msk [vmem:[#allocation2 + $0x88] sm:$0x3] %vm718, 0.0
      %735 = vst.msk [vmem:[#allocation2 + $0x90] sm:$0xff] %vm715, 0.0
      %736 = vst.msk [vmem:[#allocation2 + $0x98] sm:$0xff] %vm715, 0.0
      %737 = vst.msk [vmem:[#allocation2 + $0xa0] sm:$0x3] %vm718, 0.0
      %738 = vst.msk [vmem:[#allocation2 + $0xa8] sm:$0xff] %vm715, 0.0
      %739 = vst.msk [vmem:[#allocation2 + $0xb0] sm:$0xff] %vm715, 0.0
      %740 = vst.msk [vmem:[#allocation2 + $0xb8] sm:$0x3] %vm718, 0.0
      %741 = vst.msk [vmem:[#allocation2 + $0xc0] sm:$0xff] %vm715, 0.0
      %742 = vst.msk [vmem:[#allocation2 + $0xc8] sm:$0xff] %vm715, 0.0
      %743 = vst.msk [vmem:[#allocation2 + $0xd0] sm:$0x3] %vm718, 0.0
      %744 = vst.msk [vmem:[#allocation2 + $0xd8] sm:$0xff] %vm715, 0.0
      %745 = vst.msk [vmem:[#allocation2 + $0xe0] sm:$0xff] %vm715, 0.0
      %746 = vst.msk [vmem:[#allocation2 + $0xe8] sm:$0x3] %vm718, 0.0
      %747 = vst.msk [vmem:[#allocation2 + $0xf0] sm:$0xff] %vm715, 0.0
      %748 = vst.msk [vmem:[#allocation2 + $0xf8] sm:$0xff] %vm715, 0.0
      %749 = vst.msk [vmem:[#allocation2 + $0x100] sm:$0x3] %vm718, 0.0
      %750 = vst.msk [vmem:[#allocation2 + $0x108] sm:$0xff] %vm715, 0.0
      %751 = vst.msk [vmem:[#allocation2 + $0x110] sm:$0xff] %vm715, 0.0
      %752 = vst.msk [vmem:[#allocation2 + $0x118] sm:$0x3] %vm718, 0.0
      %753 = vst.msk [vmem:[#allocation2 + $0x120] sm:$0xff] %vm715, 0.0
      %754 = vst.msk [vmem:[#allocation2 + $0x128] sm:$0xff] %vm715, 0.0
      %755 = vst.msk [vmem:[#allocation2 + $0x130] sm:$0x3] %vm718, 0.0
      %756 = vst.msk [vmem:[#allocation2 + $0x138] sm:$0xff] %vm715, 0.0
      %757 = vst.msk [vmem:[#allocation2 + $0x140] sm:$0xff] %vm715, 0.0
      %758 = vst.msk [vmem:[#allocation2 + $0x148] sm:$0x3] %vm718, 0.0
      %759 = vst.msk [vmem:[#allocation2 + $0x150] sm:$0xff] %vm715, 0.0
      %760 = vst.msk [vmem:[#allocation2 + $0x158] sm:$0xff] %vm715, 0.0
      %761 = vst.msk [vmem:[#allocation2 + $0x160] sm:$0x3] %vm718, 0.0
      %762 = vst.msk [vmem:[#allocation2 + $0x168] sm:$0xff] %vm715, 0.0
      %763 = vst.msk [vmem:[#allocation2 + $0x170] sm:$0xff] %vm715, 0.0
      %764 = vst.msk [vmem:[#allocation2 + $0x178] sm:$0x3] %vm718, 0.0
      %765 = vst.msk [vmem:[#allocation2 + $0x180] sm:$0xff] %vm715, 0.0
      %766 = vst.msk [vmem:[#allocation2 + $0x188] sm:$0xff] %vm715, 0.0
      %767 = vst.msk [vmem:[#allocation2 + $0x190] sm:$0x3] %vm718, 0.0
      %768 = vst.msk [vmem:[#allocation2 + $0x198] sm:$0xff] %vm715, 0.0
      %769 = vst.msk [vmem:[#allocation2 + $0x1a0] sm:$0xff] %vm715, 0.0
      %770 = vst.msk [vmem:[#allocation2 + $0x1a8] sm:$0x3] %vm718, 0.0
      %v771 = vld [vmem:[%s347] sm:$0xff]
      %v772 = vld [vmem:[%s347 + $0x8] sm:$0xff]
      %v773 = vld [vmem:[%s347 + $0x10] sm:$0xff]
      %v774 = vld [vmem:[%s347 + $0x18] sm:$0xff]
      %v775 = vld [vmem:[%s347 + $0x20] sm:$0xff]
      %v776 = vld [vmem:[%s347 + $0x28] sm:$0xff]
      %v777 = vld [vmem:[%s347 + $0x30] sm:$0xff]
      %v778 = vld [vmem:[%s347 + $0x38] sm:$0xff]
      %v779 = vld [vmem:[%s347 + $0x40] sm:$0xff]
      %v780 = vld [vmem:[%s347 + $0x48] sm:$0xff]
      %v781 = vld [vmem:[%s347 + $0x50] sm:$0xff]
      %v782 = vld [vmem:[%s347 + $0x58] sm:$0xff]
      %v783 = vld [vmem:[%s347 + $0x60] sm:$0xff]
      %v784 = vld [vmem:[%s347 + $0x68] sm:$0xff]
      %v785 = vld [vmem:[%s347 + $0x70] sm:$0xff]
      %v786 = vld [vmem:[%s347 + $0x78] sm:$0xff]
      %v787 = vld [vmem:[%s347 + $0x80] sm:$0xff]
      %v788 = vld [vmem:[%s347 + $0x88] sm:$0xff]
      %v789 = vld [vmem:[%s347 + $0x90] sm:$0xff]
      %v790 = vld [vmem:[%s347 + $0x98] sm:$0xff]
      %v791 = vld [vmem:[%s347 + $0xa0] sm:$0xff]
      %v792 = vld [vmem:[%s347 + $0xa8] sm:$0xff]
      %v793 = vld [vmem:[%s347 + $0xb0] sm:$0xff]
      %v794 = vld [vmem:[%s347 + $0xb8] sm:$0xff]
      %v795 = vld [vmem:[%s347 + $0xc0] sm:$0xff]
      %v796 = vld [vmem:[%s347 + $0xc8] sm:$0xff]
      %v797 = vld [vmem:[%s347 + $0xd0] sm:$0xff]
      %v798 = vld [vmem:[%s347 + $0xd8] sm:$0xff]
      %v799 = vld [vmem:[%s347 + $0xe0] sm:$0xff]
      %v800 = vld [vmem:[%s347 + $0xe8] sm:$0xff]
      %v801 = vld [vmem:[%s347 + $0xf0] sm:$0xff]
      %v802 = vld [vmem:[%s347 + $0xf8] sm:$0xff]
      %s803 = scalar_lea.vmem [#allocation2], 24
      %vm804 = vcmask 31744
      %805 = vst.msk [vmem:[%s803 + $0x1] sm:$0xff] %vm804, %v771
      %806 = vst.msk [vmem:[%s803 + $0x9] sm:$0xff] %vm804, %v772
      %807 = vst.msk [vmem:[%s803 + $0x19] sm:$0xff] %vm804, %v773
      %808 = vst.msk [vmem:[%s803 + $0x21] sm:$0xff] %vm804, %v774
      %809 = vst.msk [vmem:[%s803 + $0x31] sm:$0xff] %vm804, %v775
      %810 = vst.msk [vmem:[%s803 + $0x39] sm:$0xff] %vm804, %v776
      %811 = vst.msk [vmem:[%s803 + $0x49] sm:$0xff] %vm804, %v777
      %812 = vst.msk [vmem:[%s803 + $0x51] sm:$0xff] %vm804, %v778
      %813 = vst.msk [vmem:[%s803 + $0x61] sm:$0xff] %vm804, %v779
      %814 = vst.msk [vmem:[%s803 + $0x69] sm:$0xff] %vm804, %v780
      %815 = vst.msk [vmem:[%s803 + $0x79] sm:$0xff] %vm804, %v781
      %816 = vst.msk [vmem:[%s803 + $0x81] sm:$0xff] %vm804, %v782
      %817 = vst.msk [vmem:[%s803 + $0x91] sm:$0xff] %vm804, %v783
      %818 = vst.msk [vmem:[%s803 + $0x99] sm:$0xff] %vm804, %v784
      %819 = vst.msk [vmem:[%s803 + $0xa9] sm:$0xff] %vm804, %v785
      %820 = vst.msk [vmem:[%s803 + $0xb1] sm:$0xff] %vm804, %v786
      %821 = vst.msk [vmem:[%s803 + $0xc1] sm:$0xff] %vm804, %v787
      %822 = vst.msk [vmem:[%s803 + $0xc9] sm:$0xff] %vm804, %v788
      %823 = vst.msk [vmem:[%s803 + $0xd9] sm:$0xff] %vm804, %v789
      %824 = vst.msk [vmem:[%s803 + $0xe1] sm:$0xff] %vm804, %v790
      %825 = vst.msk [vmem:[%s803 + $0xf1] sm:$0xff] %vm804, %v791
      %826 = vst.msk [vmem:[%s803 + $0xf9] sm:$0xff] %vm804, %v792
      %827 = vst.msk [vmem:[%s803 + $0x109] sm:$0xff] %vm804, %v793
      %828 = vst.msk [vmem:[%s803 + $0x111] sm:$0xff] %vm804, %v794
      %829 = vst.msk [vmem:[%s803 + $0x121] sm:$0xff] %vm804, %v795
      %830 = vst.msk [vmem:[%s803 + $0x129] sm:$0xff] %vm804, %v796
      %831 = vst.msk [vmem:[%s803 + $0x139] sm:$0xff] %vm804, %v797
      %832 = vst.msk [vmem:[%s803 + $0x141] sm:$0xff] %vm804, %v798
      %833 = vst.msk [vmem:[%s803 + $0x151] sm:$0xff] %vm804, %v799
      %834 = vst.msk [vmem:[%s803 + $0x159] sm:$0xff] %vm804, %v800
      %835 = vst.msk [vmem:[%s803 + $0x169] sm:$0xff] %vm804, %v801
      %836 = vst.msk [vmem:[%s803 + $0x171] sm:$0xff] %vm804, %v802
      %869 = vrot.lane.b32.xlu0 %v557, 4
      %v870 = vpop.permute.xlu0 %869
      %871 = vrot.lane.b32.xlu0 %v562, 4
      %v872 = vpop.permute.xlu0 %871
      %873 = vrot.lane.b32.xlu0 %v567, 4
      %v874 = vpop.permute.xlu0 %873
      %875 = vrot.lane.b32.xlu0 %v572, 4
      %v876 = vpop.permute.xlu0 %875
      %877 = vrot.lane.b32.xlu0 %v577, 4
      %v878 = vpop.permute.xlu0 %877
      %879 = vrot.lane.b32.xlu0 %v582, 4
      %v880 = vpop.permute.xlu0 %879
      %881 = vrot.lane.b32.xlu0 %v587, 4
      %v882 = vpop.permute.xlu0 %881
      %883 = vrot.lane.b32.xlu0 %v592, 4
      %v884 = vpop.permute.xlu0 %883
      %885 = vrot.lane.b32.xlu0 %v597, 4
      %v886 = vpop.permute.xlu0 %885
      %887 = vrot.lane.b32.xlu0 %v602, 4
      %v888 = vpop.permute.xlu0 %887
      %889 = vrot.lane.b32.xlu0 %v607, 4
      %v890 = vpop.permute.xlu0 %889
      %891 = vrot.lane.b32.xlu0 %v612, 4
      %v892 = vpop.permute.xlu0 %891
      %893 = vrot.lane.b32.xlu0 %v617, 4
      %v894 = vpop.permute.xlu0 %893
      %895 = vrot.lane.b32.xlu0 %v622, 4
      %v896 = vpop.permute.xlu0 %895
      %897 = vrot.lane.b32.xlu0 %v627, 4
      %v898 = vpop.permute.xlu0 %897
      %899 = vrot.lane.b32.xlu0 %v632, 4
      %v900 = vpop.permute.xlu0 %899
      %901 = vrot.lane.b32.xlu0 %v637, 4
      %v902 = vpop.permute.xlu0 %901
      %903 = vrot.lane.b32.xlu0 %v642, 4
      %v904 = vpop.permute.xlu0 %903
      %905 = vrot.lane.b32.xlu0 %v647, 4
      %v906 = vpop.permute.xlu0 %905
      %907 = vrot.lane.b32.xlu0 %v652, 4
      %v908 = vpop.permute.xlu0 %907
      %909 = vrot.lane.b32.xlu0 %v657, 4
      %v910 = vpop.permute.xlu0 %909
      %911 = vrot.lane.b32.xlu0 %v662, 4
      %v912 = vpop.permute.xlu0 %911
      %913 = vrot.lane.b32.xlu0 %v667, 4
      %v914 = vpop.permute.xlu0 %913
      %915 = vrot.lane.b32.xlu0 %v672, 4
      %v916 = vpop.permute.xlu0 %915
      %917 = vrot.lane.b32.xlu0 %v677, 4
      %v918 = vpop.permute.xlu0 %917
      %919 = vrot.lane.b32.xlu0 %v682, 4
      %v920 = vpop.permute.xlu0 %919
      %921 = vrot.lane.b32.xlu0 %v687, 4
      %v922 = vpop.permute.xlu0 %921
      %923 = vrot.lane.b32.xlu0 %v692, 4
      %v924 = vpop.permute.xlu0 %923
      %925 = vrot.lane.b32.xlu0 %v697, 4
      %v926 = vpop.permute.xlu0 %925
      %927 = vrot.lane.b32.xlu0 %v702, 4
      %v928 = vpop.permute.xlu0 %927
      %929 = vrot.lane.b32.xlu0 %v707, 4
      %v930 = vpop.permute.xlu0 %929
      %931 = vrot.lane.b32.xlu0 %v712, 4
      %v932 = vpop.permute.xlu0 %931
      %vm965 = vcmask 64544
      %966 = vst.msk [vmem:[%s803 + $0x1] sm:$0xff] %vm965, %v870
      %967 = vst.msk [vmem:[%s803 + $0x9] sm:$0xff] %vm965, %v872
      %968 = vst.msk [vmem:[%s803 + $0x19] sm:$0xff] %vm965, %v874
      %969 = vst.msk [vmem:[%s803 + $0x21] sm:$0xff] %vm965, %v876
      %970 = vst.msk [vmem:[%s803 + $0x31] sm:$0xff] %vm965, %v878
      %971 = vst.msk [vmem:[%s803 + $0x39] sm:$0xff] %vm965, %v880
      %972 = vst.msk [vmem:[%s803 + $0x49] sm:$0xff] %vm965, %v882
      %973 = vst.msk [vmem:[%s803 + $0x51] sm:$0xff] %vm965, %v884
      %974 = vst.msk [vmem:[%s803 + $0x61] sm:$0xff] %vm965, %v886
      %975 = vst.msk [vmem:[%s803 + $0x69] sm:$0xff] %vm965, %v888
      %976 = vst.msk [vmem:[%s803 + $0x79] sm:$0xff] %vm965, %v890
      %977 = vst.msk [vmem:[%s803 + $0x81] sm:$0xff] %vm965, %v892
      %978 = vst.msk [vmem:[%s803 + $0x91] sm:$0xff] %vm965, %v894
      %979 = vst.msk [vmem:[%s803 + $0x99] sm:$0xff] %vm965, %v896
      %980 = vst.msk [vmem:[%s803 + $0xa9] sm:$0xff] %vm965, %v898
      %981 = vst.msk [vmem:[%s803 + $0xb1] sm:$0xff] %vm965, %v900
      %982 = vst.msk [vmem:[%s803 + $0xc1] sm:$0xff] %vm965, %v902
      %983 = vst.msk [vmem:[%s803 + $0xc9] sm:$0xff] %vm965, %v904
      %984 = vst.msk [vmem:[%s803 + $0xd9] sm:$0xff] %vm965, %v906
      %985 = vst.msk [vmem:[%s803 + $0xe1] sm:$0xff] %vm965, %v908
      %986 = vst.msk [vmem:[%s803 + $0xf1] sm:$0xff] %vm965, %v910
      %987 = vst.msk [vmem:[%s803 + $0xf9] sm:$0xff] %vm965, %v912
      %988 = vst.msk [vmem:[%s803 + $0x109] sm:$0xff] %vm965, %v914
      %989 = vst.msk [vmem:[%s803 + $0x111] sm:$0xff] %vm965, %v916
      %990 = vst.msk [vmem:[%s803 + $0x121] sm:$0xff] %vm965, %v918
      %991 = vst.msk [vmem:[%s803 + $0x129] sm:$0xff] %vm965, %v920
      %992 = vst.msk [vmem:[%s803 + $0x139] sm:$0xff] %vm965, %v922
      %993 = vst.msk [vmem:[%s803 + $0x141] sm:$0xff] %vm965, %v924
      %994 = vst.msk [vmem:[%s803 + $0x151] sm:$0xff] %vm965, %v926
      %995 = vst.msk [vmem:[%s803 + $0x159] sm:$0xff] %vm965, %v928
      %996 = vst.msk [vmem:[%s803 + $0x169] sm:$0xff] %vm965, %v930
      %997 = vst.msk [vmem:[%s803 + $0x171] sm:$0xff] %vm965, %v932
      %v998 = vld [vmem:[#allocation2] sm:$0xff]
      %v999 = vld [vmem:[#allocation2 + $0x8] sm:$0xff]
      %v1000 = vld [vmem:[#allocation2 + $0x18] sm:$0xff]
      %v1001 = vld [vmem:[#allocation2 + $0x20] sm:$0xff]
      %v1002 = vld [vmem:[#allocation2 + $0x30] sm:$0xff]
      %v1003 = vld [vmem:[#allocation2 + $0x38] sm:$0xff]
      %v1004 = vld [vmem:[#allocation2 + $0x48] sm:$0xff]
      %v1005 = vld [vmem:[#allocation2 + $0x50] sm:$0xff]
      %v1006 = vld [vmem:[#allocation2 + $0x60] sm:$0xff]
      %v1007 = vld [vmem:[#allocation2 + $0x68] sm:$0xff]
      %v1008 = vld [vmem:[#allocation2 + $0x78] sm:$0xff]
      %v1009 = vld [vmem:[#allocation2 + $0x80] sm:$0xff]
      %v1010 = vld [vmem:[#allocation2 + $0x90] sm:$0xff]
      %v1011 = vld [vmem:[#allocation2 + $0x98] sm:$0xff]
      %v1012 = vld [vmem:[#allocation2 + $0xa8] sm:$0xff]
      %v1013 = vld [vmem:[#allocation2 + $0xb0] sm:$0xff]
      %v1014 = vld [vmem:[#allocation2 + $0xc0] sm:$0xff]
      %v1015 = vld [vmem:[#allocation2 + $0xc8] sm:$0xff]
      %v1016 = vld [vmem:[#allocation2 + $0xd8] sm:$0xff]
      %v1017 = vld [vmem:[#allocation2 + $0xe0] sm:$0xff]
      %v1018 = vld [vmem:[#allocation2 + $0xf0] sm:$0xff]
      %v1019 = vld [vmem:[#allocation2 + $0xf8] sm:$0xff]
      %v1020 = vld [vmem:[#allocation2 + $0x108] sm:$0xff]
      %v1021 = vld [vmem:[#allocation2 + $0x110] sm:$0xff]
      %v1022 = vld [vmem:[#allocation2 + $0x120] sm:$0xff]
      %v1023 = vld [vmem:[#allocation2 + $0x128] sm:$0xff]
      %v1024 = vld [vmem:[#allocation2 + $0x138] sm:$0xff]
      %v1025 = vld [vmem:[#allocation2 + $0x140] sm:$0xff]
      %v1026 = vld [vmem:[#allocation2 + $0x150] sm:$0xff]
      %v1027 = vld [vmem:[#allocation2 + $0x158] sm:$0xff]
      %v1028 = vld [vmem:[#allocation2 + $0x168] sm:$0xff]
      %v1029 = vld [vmem:[#allocation2 + $0x170] sm:$0xff]
      %v1030 = vld [vmem:[%s3] sm:$0xff]
      %v1031 = vld [vmem:[#allocation2 + $0x1] sm:$0xff]
      %v1032 = vld [vmem:[#allocation2 + $0x9] sm:$0xff]
      %v1033 = vld [vmem:[#allocation2 + $0x19] sm:$0xff]
      %v1034 = vld [vmem:[#allocation2 + $0x21] sm:$0xff]
      %v1035 = vld [vmem:[#allocation2 + $0x31] sm:$0xff]
      %v1036 = vld [vmem:[#allocation2 + $0x39] sm:$0xff]
      %v1037 = vld [vmem:[#allocation2 + $0x49] sm:$0xff]
      %v1038 = vld [vmem:[#allocation2 + $0x51] sm:$0xff]
      %v1039 = vld [vmem:[#allocation2 + $0x61] sm:$0xff]
      %v1040 = vld [vmem:[#allocation2 + $0x69] sm:$0xff]
      %v1041 = vld [vmem:[#allocation2 + $0x79] sm:$0xff]
      %v1042 = vld [vmem:[#allocation2 + $0x81] sm:$0xff]
      %v1043 = vld [vmem:[#allocation2 + $0x91] sm:$0xff]
      %v1044 = vld [vmem:[#allocation2 + $0x99] sm:$0xff]
      %v1045 = vld [vmem:[#allocation2 + $0xa9] sm:$0xff]
      %v1046 = vld [vmem:[#allocation2 + $0xb1] sm:$0xff]
      %v1047 = vld [vmem:[#allocation2 + $0xc1] sm:$0xff]
      %v1048 = vld [vmem:[#allocation2 + $0xc9] sm:$0xff]
      %v1049 = vld [vmem:[#allocation2 + $0xd9] sm:$0xff]
      %v1050 = vld [vmem:[#allocation2 + $0xe1] sm:$0xff]
      %v1051 = vld [vmem:[#allocation2 + $0xf1] sm:$0xff]
      %v1052 = vld [vmem:[#allocation2 + $0xf9] sm:$0xff]
      %v1053 = vld [vmem:[#allocation2 + $0x109] sm:$0xff]
      %v1054 = vld [vmem:[#allocation2 + $0x111] sm:$0xff]
      %v1055 = vld [vmem:[#allocation2 + $0x121] sm:$0xff]
      %v1056 = vld [vmem:[#allocation2 + $0x129] sm:$0xff]
      %v1057 = vld [vmem:[#allocation2 + $0x139] sm:$0xff]
      %v1058 = vld [vmem:[#allocation2 + $0x141] sm:$0xff]
      %v1059 = vld [vmem:[#allocation2 + $0x151] sm:$0xff]
      %v1060 = vld [vmem:[#allocation2 + $0x159] sm:$0xff]
      %v1061 = vld [vmem:[#allocation2 + $0x169] sm:$0xff]
      %v1062 = vld [vmem:[#allocation2 + $0x171] sm:$0xff]
      %s1063 = scalar_lea.vmem %s3, 8
      %v1064 = vld [vmem:[%s1063] sm:$0xff]
      %v1066 = vsel %vm715, %v1031, 0
      %v1069 = vsel %vm715, %v1032, 0
      %v1072 = vsel %vm715, %v1033, 0
      %v1075 = vsel %vm715, %v1034, 0
      %v1078 = vsel %vm715, %v1035, 0
      %v1081 = vsel %vm715, %v1036, 0
      %v1084 = vsel %vm715, %v1037, 0
      %v1087 = vsel %vm715, %v1038, 0
      %v1090 = vsel %vm715, %v1039, 0
      %v1093 = vsel %vm715, %v1040, 0
      %v1096 = vsel %vm715, %v1041, 0
      %v1099 = vsel %vm715, %v1042, 0
      %v1102 = vsel %vm715, %v1043, 0
      %v1105 = vsel %vm715, %v1044, 0
      %v1108 = vsel %vm715, %v1045, 0
      %v1111 = vsel %vm715, %v1046, 0
      %v1114 = vsel %vm715, %v1047, 0
      %v1117 = vsel %vm715, %v1048, 0
      %v1120 = vsel %vm715, %v1049, 0
      %v1123 = vsel %vm715, %v1050, 0
      %v1126 = vsel %vm715, %v1051, 0
      %v1129 = vsel %vm715, %v1052, 0
      %v1132 = vsel %vm715, %v1053, 0
      %v1135 = vsel %vm715, %v1054, 0
      %v1138 = vsel %vm715, %v1055, 0
      %v1141 = vsel %vm715, %v1056, 0
      %v1144 = vsel %vm715, %v1057, 0
      %v1147 = vsel %vm715, %v1058, 0
      %v1150 = vsel %vm715, %v1059, 0
      %v1153 = vsel %vm715, %v1060, 0
      %v1156 = vsel %vm715, %v1061, 0
      %v1159 = vsel %vm715, %v1062, 0
      %1161 = vmatprep.subr.mxu0 0.0
      %1162 = vmatpush1.msra.mxu0 0.0
      %1163 = vmatprep.subr.mxu0 0.0
      %1164 = vmatpush1.msra.mxu0 0.0
      %1165 = vmatprep.subr.mxu0 0.0
      %1166 = vmatpush1.msra.mxu0 0.0
      %1167 = vmatprep.subr.mxu0 0.0
      %1168 = vmatpush1.msra.mxu0 0.0
      %1169 = vmatprep.subr.mxu0 0.0
      %1170 = vmatpush1.msra.mxu0 0.0
      %1171 = vmatprep.subr.mxu0 0.0
      %1172 = vmatpush1.msra.mxu0 0.0
      %1173 = vmatprep.subr.mxu0 0.0
      %1174 = vmatpush1.msra.mxu0 0.0
      %1175 = vmatprep.subr.mxu0 0.0
      %1176 = vmatpush1.msra.mxu0 0.0
      %1177 = vmatprep.subr.mxu0 0.0
      %1178 = vmatpush1.msra.mxu0 0.0
      %1179 = vmatprep.subr.mxu0 0.0
      %1180 = vmatpush1.msra.mxu0 0.0
      %1181 = vmatprep.subr.mxu0 0.0
      %1182 = vmatpush1.msra.mxu0 0.0
      %1183 = vmatprep.subr.mxu0 0.0
      %1184 = vmatpush1.msra.mxu0 0.0
      %1185 = vmatprep.subr.mxu0 0.0
      %1186 = vmatpush1.msra.mxu0 0.0
      %1187 = vmatprep.subr.mxu0 0.0
      %1188 = vmatpush1.msra.mxu0 0.0
      %1189 = vmatprep.subr.mxu0 0.0
      %1190 = vmatpush1.msra.mxu0 0.0
      %1191 = vmatprep.subr.mxu0 0.0
      %1192 = vmatpush1.msra.mxu0 %v1064
      %1193 = vmatprep.subr.mxu0 0.0
      %1194 = vmatpush2.msra.mxu0 0.0
      %1195 = vmatprep.subr.mxu0 0.0
      %1196 = vmatpush2.msra.mxu0 0.0
      %1197 = vmatprep.subr.mxu0 0.0
      %1198 = vmatpush2.msra.mxu0 0.0
      %1199 = vmatprep.subr.mxu0 0.0
      %1200 = vmatpush2.msra.mxu0 0.0
      %1201 = vmatprep.subr.mxu0 0.0
      %1202 = vmatpush2.msra.mxu0 0.0
      %1203 = vmatprep.subr.mxu0 0.0
      %1204 = vmatpush2.msra.mxu0 0.0
      %1205 = vmatprep.subr.mxu0 0.0
      %1206 = vmatpush2.msra.mxu0 0.0
      %1207 = vmatprep.subr.mxu0 0.0
      %1208 = vmatpush2.msra.mxu0 0.0
      %1209 = vmatprep.subr.mxu0 0.0
      %1210 = vmatpush2.msra.mxu0 0.0
      %1211 = vmatprep.subr.mxu0 0.0
      %1212 = vmatpush2.msra.mxu0 0.0
      %1213 = vmatprep.subr.mxu0 0.0
      %1214 = vmatpush2.msra.mxu0 0.0
      %1215 = vmatprep.subr.mxu0 0.0
      %1216 = vmatpush2.msra.mxu0 0.0
      %1217 = vmatprep.subr.mxu0 0.0
      %1218 = vmatpush2.msra.mxu0 0.0
      %1219 = vmatprep.subr.mxu0 0.0
      %1220 = vmatpush2.msra.mxu0 0.0
      %1221 = vmatprep.subr.mxu0 0.0
      %1222 = vmatpush2.msra.mxu0 0.0
      %1223 = vmatprep.subr.mxu0 0.0
      %1224 = vmatpush2.msra.mxu0 0.0
      %1225 = vmatprep.mubr.f32.mxu0 0.0
      %1226 = vmatmul.mubr.f32.gmra.mxu0 %v1066
      %v1227 = vpop.f32.mrf.mxu0
      %v1228 = vadd.f32 0.0, %v1227
      %v1229 = vpop.f32.mrf.mxu0
      %1230 = vmatprep.mubr.f32.mxu0 0.0
      %1231 = vmatmul.mubr.f32.gmra.mxu0 %v1069
      %v1232 = vpop.f32.mrf.mxu0
      %v1233 = vadd.f32 0.0, %v1232
      %v1234 = vpop.f32.mrf.mxu0
      %1235 = vmatprep.mubr.f32.mxu0 0.0
      %1236 = vmatmul.mubr.f32.gmra.mxu0 %v1072
      %v1237 = vpop.f32.mrf.mxu0
      %v1238 = vadd.f32 0.0, %v1237
      %v1239 = vpop.f32.mrf.mxu0
      %1240 = vmatprep.mubr.f32.mxu0 0.0
      %1241 = vmatmul.mubr.f32.gmra.mxu0 %v1075
      %v1242 = vpop.f32.mrf.mxu0
      %v1243 = vadd.f32 0.0, %v1242
      %v1244 = vpop.f32.mrf.mxu0
      %1245 = vmatprep.mubr.f32.mxu0 0.0
      %1246 = vmatmul.mubr.f32.gmra.mxu0 %v1078
      %v1247 = vpop.f32.mrf.mxu0
      %v1248 = vadd.f32 0.0, %v1247
      %v1249 = vpop.f32.mrf.mxu0
      %1250 = vmatprep.mubr.f32.mxu0 0.0
      %1251 = vmatmul.mubr.f32.gmra.mxu0 %v1081
      %v1252 = vpop.f32.mrf.mxu0
      %v1253 = vadd.f32 0.0, %v1252
      %v1254 = vpop.f32.mrf.mxu0
      %1255 = vmatprep.mubr.f32.mxu0 0.0
      %1256 = vmatmul.mubr.f32.gmra.mxu0 %v1084
      %v1257 = vpop.f32.mrf.mxu0
      %v1258 = vadd.f32 0.0, %v1257
      %v1259 = vpop.f32.mrf.mxu0
      %1260 = vmatprep.mubr.f32.mxu0 0.0
      %1261 = vmatmul.mubr.f32.gmra.mxu0 %v1087
      %v1262 = vpop.f32.mrf.mxu0
      %v1263 = vadd.f32 0.0, %v1262
      %v1264 = vpop.f32.mrf.mxu0
      %1265 = vmatprep.mubr.f32.mxu0 0.0
      %1266 = vmatmul.mubr.f32.gmra.mxu0 %v1090
      %v1267 = vpop.f32.mrf.mxu0
      %v1268 = vadd.f32 0.0, %v1267
      %v1269 = vpop.f32.mrf.mxu0
      %1270 = vmatprep.mubr.f32.mxu0 0.0
      %1271 = vmatmul.mubr.f32.gmra.mxu0 %v1093
      %v1272 = vpop.f32.mrf.mxu0
      %v1273 = vadd.f32 0.0, %v1272
      %v1274 = vpop.f32.mrf.mxu0
      %1275 = vmatprep.mubr.f32.mxu0 0.0
      %1276 = vmatmul.mubr.f32.gmra.mxu0 %v1096
      %v1277 = vpop.f32.mrf.mxu0
      %v1278 = vadd.f32 0.0, %v1277
      %v1279 = vpop.f32.mrf.mxu0
      %1280 = vmatprep.mubr.f32.mxu0 0.0
      %1281 = vmatmul.mubr.f32.gmra.mxu0 %v1099
      %v1282 = vpop.f32.mrf.mxu0
      %v1283 = vadd.f32 0.0, %v1282
      %v1284 = vpop.f32.mrf.mxu0
      %1285 = vmatprep.mubr.f32.mxu0 0.0
      %1286 = vmatmul.mubr.f32.gmra.mxu0 %v1102
      %v1287 = vpop.f32.mrf.mxu0
      %v1288 = vadd.f32 0.0, %v1287
      %v1289 = vpop.f32.mrf.mxu0
      %1290 = vmatprep.mubr.f32.mxu0 0.0
      %1291 = vmatmul.mubr.f32.gmra.mxu0 %v1105
      %v1292 = vpop.f32.mrf.mxu0
      %v1293 = vadd.f32 0.0, %v1292
      %v1294 = vpop.f32.mrf.mxu0
      %1295 = vmatprep.mubr.f32.mxu0 0.0
      %1296 = vmatmul.mubr.f32.gmra.mxu0 %v1108
      %v1297 = vpop.f32.mrf.mxu0
      %v1298 = vadd.f32 0.0, %v1297
      %v1299 = vpop.f32.mrf.mxu0
      %1300 = vmatprep.mubr.f32.mxu0 0.0
      %1301 = vmatmul.mubr.f32.gmra.mxu0 %v1111
      %v1302 = vpop.f32.mrf.mxu0
      %v1303 = vadd.f32 0.0, %v1302
      %v1304 = vpop.f32.mrf.mxu0
      %1305 = vmatprep.mubr.f32.mxu0 0.0
      %1306 = vmatmul.mubr.f32.gmra.mxu0 %v1114
      %v1307 = vpop.f32.mrf.mxu0
      %v1308 = vadd.f32 0.0, %v1307
      %v1309 = vpop.f32.mrf.mxu0
      %1310 = vmatprep.mubr.f32.mxu0 0.0
      %1311 = vmatmul.mubr.f32.gmra.mxu0 %v1117
      %v1312 = vpop.f32.mrf.mxu0
      %v1313 = vadd.f32 0.0, %v1312
      %v1314 = vpop.f32.mrf.mxu0
      %1315 = vmatprep.mubr.f32.mxu0 0.0
      %1316 = vmatmul.mubr.f32.gmra.mxu0 %v1120
      %v1317 = vpop.f32.mrf.mxu0
      %v1318 = vadd.f32 0.0, %v1317
      %v1319 = vpop.f32.mrf.mxu0
      %1320 = vmatprep.mubr.f32.mxu0 0.0
      %1321 = vmatmul.mubr.f32.gmra.mxu0 %v1123
      %v1322 = vpop.f32.mrf.mxu0
      %v1323 = vadd.f32 0.0, %v1322
      %v1324 = vpop.f32.mrf.mxu0
      %1325 = vmatprep.mubr.f32.mxu0 0.0
      %1326 = vmatmul.mubr.f32.gmra.mxu0 %v1126
      %v1327 = vpop.f32.mrf.mxu0
      %v1328 = vadd.f32 0.0, %v1327
      %v1329 = vpop.f32.mrf.mxu0
      %1330 = vmatprep.mubr.f32.mxu0 0.0
      %1331 = vmatmul.mubr.f32.gmra.mxu0 %v1129
      %v1332 = vpop.f32.mrf.mxu0
      %v1333 = vadd.f32 0.0, %v1332
      %v1334 = vpop.f32.mrf.mxu0
      %1335 = vmatprep.mubr.f32.mxu0 0.0
      %1336 = vmatmul.mubr.f32.gmra.mxu0 %v1132
      %v1337 = vpop.f32.mrf.mxu0
      %v1338 = vadd.f32 0.0, %v1337
      %v1339 = vpop.f32.mrf.mxu0
      %1340 = vmatprep.mubr.f32.mxu0 0.0
      %1341 = vmatmul.mubr.f32.gmra.mxu0 %v1135
      %v1342 = vpop.f32.mrf.mxu0
      %v1343 = vadd.f32 0.0, %v1342
      %v1344 = vpop.f32.mrf.mxu0
      %1345 = vmatprep.mubr.f32.mxu0 0.0
      %1346 = vmatmul.mubr.f32.gmra.mxu0 %v1138
      %v1347 = vpop.f32.mrf.mxu0
      %v1348 = vadd.f32 0.0, %v1347
      %v1349 = vpop.f32.mrf.mxu0
      %1350 = vmatprep.mubr.f32.mxu0 0.0
      %1351 = vmatmul.mubr.f32.gmra.mxu0 %v1141
      %v1352 = vpop.f32.mrf.mxu0
      %v1353 = vadd.f32 0.0, %v1352
      %v1354 = vpop.f32.mrf.mxu0
      %1355 = vmatprep.mubr.f32.mxu0 0.0
      %1356 = vmatmul.mubr.f32.gmra.mxu0 %v1144
      %v1357 = vpop.f32.mrf.mxu0
      %v1358 = vadd.f32 0.0, %v1357
      %v1359 = vpop.f32.mrf.mxu0
      %1360 = vmatprep.mubr.f32.mxu0 0.0
      %1361 = vmatmul.mubr.f32.gmra.mxu0 %v1147
      %v1362 = vpop.f32.mrf.mxu0
      %v1363 = vadd.f32 0.0, %v1362
      %v1364 = vpop.f32.mrf.mxu0
      %1365 = vmatprep.mubr.f32.mxu0 0.0
      %1366 = vmatmul.mubr.f32.gmra.mxu0 %v1150
      %v1367 = vpop.f32.mrf.mxu0
      %v1368 = vadd.f32 0.0, %v1367
      %v1369 = vpop.f32.mrf.mxu0
      %1370 = vmatprep.mubr.f32.mxu0 0.0
      %1371 = vmatmul.mubr.f32.gmra.mxu0 %v1153
      %v1372 = vpop.f32.mrf.mxu0
      %v1373 = vadd.f32 0.0, %v1372
      %v1374 = vpop.f32.mrf.mxu0
      %1375 = vmatprep.mubr.f32.mxu0 0.0
      %1376 = vmatmul.mubr.f32.gmra.mxu0 %v1156
      %v1377 = vpop.f32.mrf.mxu0
      %v1378 = vadd.f32 0.0, %v1377
      %v1379 = vpop.f32.mrf.mxu0
      %1380 = vmatprep.mubr.f32.mxu0 0.0
      %1381 = vmatmul.mubr.f32.gmra.mxu0 %v1159
      %v1382 = vpop.f32.mrf.mxu0
      %v1383 = vadd.f32 0.0, %v1382
      %v1384 = vpop.f32.mrf.mxu0
      %1385 = vdwg.mxu0
      %v1387 = vsel %vm715, %v998, 0
      %v1390 = vsel %vm715, %v999, 0
      %v1393 = vsel %vm715, %v1000, 0
      %v1396 = vsel %vm715, %v1001, 0
      %v1399 = vsel %vm715, %v1002, 0
      %v1402 = vsel %vm715, %v1003, 0
      %v1405 = vsel %vm715, %v1004, 0
      %v1408 = vsel %vm715, %v1005, 0
      %v1411 = vsel %vm715, %v1006, 0
      %v1414 = vsel %vm715, %v1007, 0
      %v1417 = vsel %vm715, %v1008, 0
      %v1420 = vsel %vm715, %v1009, 0
      %v1423 = vsel %vm715, %v1010, 0
      %v1426 = vsel %vm715, %v1011, 0
      %v1429 = vsel %vm715, %v1012, 0
      %v1432 = vsel %vm715, %v1013, 0
      %v1435 = vsel %vm715, %v1014, 0
      %v1438 = vsel %vm715, %v1015, 0
      %v1441 = vsel %vm715, %v1016, 0
      %v1444 = vsel %vm715, %v1017, 0
      %v1447 = vsel %vm715, %v1018, 0
      %v1450 = vsel %vm715, %v1019, 0
      %v1453 = vsel %vm715, %v1020, 0
      %v1456 = vsel %vm715, %v1021, 0
      %v1459 = vsel %vm715, %v1022, 0
      %v1462 = vsel %vm715, %v1023, 0
      %v1465 = vsel %vm715, %v1024, 0
      %v1468 = vsel %vm715, %v1025, 0
      %v1471 = vsel %vm715, %v1026, 0
      %v1474 = vsel %vm715, %v1027, 0
      %v1477 = vsel %vm715, %v1028, 0
      %v1480 = vsel %vm715, %v1029, 0
      %1482 = vmatprep.subr.mxu0 0.0
      %1483 = vmatpush1.msra.mxu0 0.0
      %1484 = vmatprep.subr.mxu0 0.0
      %1485 = vmatpush1.msra.mxu0 0.0
      %1486 = vmatprep.subr.mxu0 0.0
      %1487 = vmatpush1.msra.mxu0 0.0
      %1488 = vmatprep.subr.mxu0 0.0
      %1489 = vmatpush1.msra.mxu0 0.0
      %1490 = vmatprep.subr.mxu0 0.0
      %1491 = vmatpush1.msra.mxu0 0.0
      %1492 = vmatprep.subr.mxu0 0.0
      %1493 = vmatpush1.msra.mxu0 0.0
      %1494 = vmatprep.subr.mxu0 0.0
      %1495 = vmatpush1.msra.mxu0 0.0
      %1496 = vmatprep.subr.mxu0 0.0
      %1497 = vmatpush1.msra.mxu0 0.0
      %1498 = vmatprep.subr.mxu0 0.0
      %1499 = vmatpush1.msra.mxu0 0.0
      %1500 = vmatprep.subr.mxu0 0.0
      %1501 = vmatpush1.msra.mxu0 0.0
      %1502 = vmatprep.subr.mxu0 0.0
      %1503 = vmatpush1.msra.mxu0 0.0
      %1504 = vmatprep.subr.mxu0 0.0
      %1505 = vmatpush1.msra.mxu0 0.0
      %1506 = vmatprep.subr.mxu0 0.0
      %1507 = vmatpush1.msra.mxu0 0.0
      %1508 = vmatprep.subr.mxu0 0.0
      %1509 = vmatpush1.msra.mxu0 0.0
      %1510 = vmatprep.subr.mxu0 0.0
      %1511 = vmatpush1.msra.mxu0 0.0
      %1512 = vmatprep.subr.mxu0 0.0
      %1513 = vmatpush1.msra.mxu0 %v1030
      %1514 = vmatprep.subr.mxu0 0.0
      %1515 = vmatpush2.msra.mxu0 0.0
      %1516 = vmatprep.subr.mxu0 0.0
      %1517 = vmatpush2.msra.mxu0 0.0
      %1518 = vmatprep.subr.mxu0 0.0
      %1519 = vmatpush2.msra.mxu0 0.0
      %1520 = vmatprep.subr.mxu0 0.0
      %1521 = vmatpush2.msra.mxu0 0.0
      %1522 = vmatprep.subr.mxu0 0.0
      %1523 = vmatpush2.msra.mxu0 0.0
      %1524 = vmatprep.subr.mxu0 0.0
      %1525 = vmatpush2.msra.mxu0 0.0
      %1526 = vmatprep.subr.mxu0 0.0
      %1527 = vmatpush2.msra.mxu0 0.0
      %1528 = vmatprep.subr.mxu0 0.0
      %1529 = vmatpush2.msra.mxu0 0.0
      %1530 = vmatprep.subr.mxu0 0.0
      %1531 = vmatpush2.msra.mxu0 0.0
      %1532 = vmatprep.subr.mxu0 0.0
      %1533 = vmatpush2.msra.mxu0 0.0
      %1534 = vmatprep.subr.mxu0 0.0
      %1535 = vmatpush2.msra.mxu0 0.0
      %1536 = vmatprep.subr.mxu0 0.0
      %1537 = vmatpush2.msra.mxu0 0.0
      %1538 = vmatprep.subr.mxu0 0.0
      %1539 = vmatpush2.msra.mxu0 0.0
      %1540 = vmatprep.subr.mxu0 0.0
      %1541 = vmatpush2.msra.mxu0 0.0
      %1542 = vmatprep.subr.mxu0 0.0
      %1543 = vmatpush2.msra.mxu0 0.0
      %1544 = vmatprep.subr.mxu0 0.0
      %1545 = vmatpush2.msra.mxu0 0.0
      %1546 = vmatprep.mubr.f32.mxu0 0.0
      %1547 = vmatmul.mubr.f32.gmra.mxu0 %v1387
      %v1548 = vpop.f32.mrf.mxu0
      %v1549 = vadd.f32 %v1228, %v1548
      %v1550 = vpop.f32.mrf.mxu0
      %1551 = vmatprep.mubr.f32.mxu0 0.0
      %1552 = vmatmul.mubr.f32.gmra.mxu0 %v1390
      %v1553 = vpop.f32.mrf.mxu0
      %v1554 = vadd.f32 %v1233, %v1553
      %v1555 = vpop.f32.mrf.mxu0
      %1556 = vmatprep.mubr.f32.mxu0 0.0
      %1557 = vmatmul.mubr.f32.gmra.mxu0 %v1393
      %v1558 = vpop.f32.mrf.mxu0
      %v1559 = vadd.f32 %v1238, %v1558
      %v1560 = vpop.f32.mrf.mxu0
      %1561 = vmatprep.mubr.f32.mxu0 0.0
      %1562 = vmatmul.mubr.f32.gmra.mxu0 %v1396
      %v1563 = vpop.f32.mrf.mxu0
      %v1564 = vadd.f32 %v1243, %v1563
      %v1565 = vpop.f32.mrf.mxu0
      %1566 = vmatprep.mubr.f32.mxu0 0.0
      %1567 = vmatmul.mubr.f32.gmra.mxu0 %v1399
      %v1568 = vpop.f32.mrf.mxu0
      %v1569 = vadd.f32 %v1248, %v1568
      %v1570 = vpop.f32.mrf.mxu0
      %1571 = vmatprep.mubr.f32.mxu0 0.0
      %1572 = vmatmul.mubr.f32.gmra.mxu0 %v1402
      %v1573 = vpop.f32.mrf.mxu0
      %v1574 = vadd.f32 %v1253, %v1573
      %v1575 = vpop.f32.mrf.mxu0
      %1576 = vmatprep.mubr.f32.mxu0 0.0
      %1577 = vmatmul.mubr.f32.gmra.mxu0 %v1405
      %v1578 = vpop.f32.mrf.mxu0
      %v1579 = vadd.f32 %v1258, %v1578
      %v1580 = vpop.f32.mrf.mxu0
      %1581 = vmatprep.mubr.f32.mxu0 0.0
      %1582 = vmatmul.mubr.f32.gmra.mxu0 %v1408
      %v1583 = vpop.f32.mrf.mxu0
      %v1584 = vadd.f32 %v1263, %v1583
      %v1585 = vpop.f32.mrf.mxu0
      %1586 = vmatprep.mubr.f32.mxu0 0.0
      %1587 = vmatmul.mubr.f32.gmra.mxu0 %v1411
      %v1588 = vpop.f32.mrf.mxu0
      %v1589 = vadd.f32 %v1268, %v1588
      %v1590 = vpop.f32.mrf.mxu0
      %1591 = vmatprep.mubr.f32.mxu0 0.0
      %1592 = vmatmul.mubr.f32.gmra.mxu0 %v1414
      %v1593 = vpop.f32.mrf.mxu0
      %v1594 = vadd.f32 %v1273, %v1593
      %v1595 = vpop.f32.mrf.mxu0
      %1596 = vmatprep.mubr.f32.mxu0 0.0
      %1597 = vmatmul.mubr.f32.gmra.mxu0 %v1417
      %v1598 = vpop.f32.mrf.mxu0
      %v1599 = vadd.f32 %v1278, %v1598
      %v1600 = vpop.f32.mrf.mxu0
      %1601 = vmatprep.mubr.f32.mxu0 0.0
      %1602 = vmatmul.mubr.f32.gmra.mxu0 %v1420
      %v1603 = vpop.f32.mrf.mxu0
      %v1604 = vadd.f32 %v1283, %v1603
      %v1605 = vpop.f32.mrf.mxu0
      %1606 = vmatprep.mubr.f32.mxu0 0.0
      %1607 = vmatmul.mubr.f32.gmra.mxu0 %v1423
      %v1608 = vpop.f32.mrf.mxu0
      %v1609 = vadd.f32 %v1288, %v1608
      %v1610 = vpop.f32.mrf.mxu0
      %1611 = vmatprep.mubr.f32.mxu0 0.0
      %1612 = vmatmul.mubr.f32.gmra.mxu0 %v1426
      %v1613 = vpop.f32.mrf.mxu0
      %v1614 = vadd.f32 %v1293, %v1613
      %v1615 = vpop.f32.mrf.mxu0
      %1616 = vmatprep.mubr.f32.mxu0 0.0
      %1617 = vmatmul.mubr.f32.gmra.mxu0 %v1429
      %v1618 = vpop.f32.mrf.mxu0
      %v1619 = vadd.f32 %v1298, %v1618
      %v1620 = vpop.f32.mrf.mxu0
      %1621 = vmatprep.mubr.f32.mxu0 0.0
      %1622 = vmatmul.mubr.f32.gmra.mxu0 %v1432
      %v1623 = vpop.f32.mrf.mxu0
      %v1624 = vadd.f32 %v1303, %v1623
      %v1625 = vpop.f32.mrf.mxu0
      %1626 = vmatprep.mubr.f32.mxu0 0.0
      %1627 = vmatmul.mubr.f32.gmra.mxu0 %v1435
      %v1628 = vpop.f32.mrf.mxu0
      %v1629 = vadd.f32 %v1308, %v1628
      %v1630 = vpop.f32.mrf.mxu0
      %1631 = vmatprep.mubr.f32.mxu0 0.0
      %1632 = vmatmul.mubr.f32.gmra.mxu0 %v1438
      %v1633 = vpop.f32.mrf.mxu0
      %v1634 = vadd.f32 %v1313, %v1633
      %v1635 = vpop.f32.mrf.mxu0
      %1636 = vmatprep.mubr.f32.mxu0 0.0
      %1637 = vmatmul.mubr.f32.gmra.mxu0 %v1441
      %v1638 = vpop.f32.mrf.mxu0
      %v1639 = vadd.f32 %v1318, %v1638
      %v1640 = vpop.f32.mrf.mxu0
      %1641 = vmatprep.mubr.f32.mxu0 0.0
      %1642 = vmatmul.mubr.f32.gmra.mxu0 %v1444
      %v1643 = vpop.f32.mrf.mxu0
      %v1644 = vadd.f32 %v1323, %v1643
      %v1645 = vpop.f32.mrf.mxu0
      %1646 = vmatprep.mubr.f32.mxu0 0.0
      %1647 = vmatmul.mubr.f32.gmra.mxu0 %v1447
      %v1648 = vpop.f32.mrf.mxu0
      %v1649 = vadd.f32 %v1328, %v1648
      %v1650 = vpop.f32.mrf.mxu0
      %1651 = vmatprep.mubr.f32.mxu0 0.0
      %1652 = vmatmul.mubr.f32.gmra.mxu0 %v1450
      %v1653 = vpop.f32.mrf.mxu0
      %v1654 = vadd.f32 %v1333, %v1653
      %v1655 = vpop.f32.mrf.mxu0
      %1656 = vmatprep.mubr.f32.mxu0 0.0
      %1657 = vmatmul.mubr.f32.gmra.mxu0 %v1453
      %v1658 = vpop.f32.mrf.mxu0
      %v1659 = vadd.f32 %v1338, %v1658
      %v1660 = vpop.f32.mrf.mxu0
      %1661 = vmatprep.mubr.f32.mxu0 0.0
      %1662 = vmatmul.mubr.f32.gmra.mxu0 %v1456
      %v1663 = vpop.f32.mrf.mxu0
      %v1664 = vadd.f32 %v1343, %v1663
      %v1665 = vpop.f32.mrf.mxu0
      %1666 = vmatprep.mubr.f32.mxu0 0.0
      %1667 = vmatmul.mubr.f32.gmra.mxu0 %v1459
      %v1668 = vpop.f32.mrf.mxu0
      %v1669 = vadd.f32 %v1348, %v1668
      %v1670 = vpop.f32.mrf.mxu0
      %1671 = vmatprep.mubr.f32.mxu0 0.0
      %1672 = vmatmul.mubr.f32.gmra.mxu0 %v1462
      %v1673 = vpop.f32.mrf.mxu0
      %v1674 = vadd.f32 %v1353, %v1673
      %v1675 = vpop.f32.mrf.mxu0
      %1676 = vmatprep.mubr.f32.mxu0 0.0
      %1677 = vmatmul.mubr.f32.gmra.mxu0 %v1465
      %v1678 = vpop.f32.mrf.mxu0
      %v1679 = vadd.f32 %v1358, %v1678
      %v1680 = vpop.f32.mrf.mxu0
      %1681 = vmatprep.mubr.f32.mxu0 0.0
      %1682 = vmatmul.mubr.f32.gmra.mxu0 %v1468
      %v1683 = vpop.f32.mrf.mxu0
      %v1684 = vadd.f32 %v1363, %v1683
      %v1685 = vpop.f32.mrf.mxu0
      %1686 = vmatprep.mubr.f32.mxu0 0.0
      %1687 = vmatmul.mubr.f32.gmra.mxu0 %v1471
      %v1688 = vpop.f32.mrf.mxu0
      %v1689 = vadd.f32 %v1368, %v1688
      %v1690 = vpop.f32.mrf.mxu0
      %1691 = vmatprep.mubr.f32.mxu0 0.0
      %1692 = vmatmul.mubr.f32.gmra.mxu0 %v1474
      %v1693 = vpop.f32.mrf.mxu0
      %v1694 = vadd.f32 %v1373, %v1693
      %v1695 = vpop.f32.mrf.mxu0
      %1696 = vmatprep.mubr.f32.mxu0 0.0
      %1697 = vmatmul.mubr.f32.gmra.mxu0 %v1477
      %v1698 = vpop.f32.mrf.mxu0
      %v1699 = vadd.f32 %v1378, %v1698
      %v1700 = vpop.f32.mrf.mxu0
      %1701 = vmatprep.mubr.f32.mxu0 0.0
      %1702 = vmatmul.mubr.f32.gmra.mxu0 %v1480
      %v1703 = vpop.f32.mrf.mxu0
      %v1704 = vadd.f32 %v1383, %v1703
      %v1705 = vpop.f32.mrf.mxu0
      %1706 = vdwg.mxu0
      %v1707 = vld [vmem:[#allocation2 + $0x2] sm:$0xff]
      %v1708 = vld [vmem:[#allocation2 + $0xa] sm:$0xff]
      %v1709 = vld [vmem:[#allocation2 + $0x1a] sm:$0xff]
      %v1710 = vld [vmem:[#allocation2 + $0x22] sm:$0xff]
      %v1711 = vld [vmem:[#allocation2 + $0x32] sm:$0xff]
      %v1712 = vld [vmem:[#allocation2 + $0x3a] sm:$0xff]
      %v1713 = vld [vmem:[#allocation2 + $0x4a] sm:$0xff]
      %v1714 = vld [vmem:[#allocation2 + $0x52] sm:$0xff]
      %v1715 = vld [vmem:[#allocation2 + $0x62] sm:$0xff]
      %v1716 = vld [vmem:[#allocation2 + $0x6a] sm:$0xff]
      %v1717 = vld [vmem:[#allocation2 + $0x7a] sm:$0xff]
      %v1718 = vld [vmem:[#allocation2 + $0x82] sm:$0xff]
      %v1719 = vld [vmem:[#allocation2 + $0x92] sm:$0xff]
      %v1720 = vld [vmem:[#allocation2 + $0x9a] sm:$0xff]
      %v1721 = vld [vmem:[#allocation2 + $0xaa] sm:$0xff]
      %v1722 = vld [vmem:[#allocation2 + $0xb2] sm:$0xff]
      %v1723 = vld [vmem:[#allocation2 + $0xc2] sm:$0xff]
      %v1724 = vld [vmem:[#allocation2 + $0xca] sm:$0xff]
      %v1725 = vld [vmem:[#allocation2 + $0xda] sm:$0xff]
      %v1726 = vld [vmem:[#allocation2 + $0xe2] sm:$0xff]
      %v1727 = vld [vmem:[#allocation2 + $0xf2] sm:$0xff]
      %v1728 = vld [vmem:[#allocation2 + $0xfa] sm:$0xff]
      %v1729 = vld [vmem:[#allocation2 + $0x10a] sm:$0xff]
      %v1730 = vld [vmem:[#allocation2 + $0x112] sm:$0xff]
      %v1731 = vld [vmem:[#allocation2 + $0x122] sm:$0xff]
      %v1732 = vld [vmem:[#allocation2 + $0x12a] sm:$0xff]
      %v1733 = vld [vmem:[#allocation2 + $0x13a] sm:$0xff]
      %v1734 = vld [vmem:[#allocation2 + $0x142] sm:$0xff]
      %v1735 = vld [vmem:[#allocation2 + $0x152] sm:$0xff]
      %v1736 = vld [vmem:[#allocation2 + $0x15a] sm:$0xff]
      %v1737 = vld [vmem:[#allocation2 + $0x16a] sm:$0xff]
      %v1738 = vld [vmem:[#allocation2 + $0x172] sm:$0xff]
      %s1739 = scalar_lea.vmem %s3, 16
      %v1740 = vld [vmem:[%s1739] sm:$0xff]
      %v1742 = vsel %vm715, %v1707, 0
      %v1745 = vsel %vm715, %v1708, 0
      %v1748 = vsel %vm715, %v1709, 0
      %v1751 = vsel %vm715, %v1710, 0
      %v1754 = vsel %vm715, %v1711, 0
      %v1757 = vsel %vm715, %v1712, 0
      %v1760 = vsel %vm715, %v1713, 0
      %v1763 = vsel %vm715, %v1714, 0
      %v1766 = vsel %vm715, %v1715, 0
      %v1769 = vsel %vm715, %v1716, 0
      %v1772 = vsel %vm715, %v1717, 0
      %v1775 = vsel %vm715, %v1718, 0
      %v1778 = vsel %vm715, %v1719, 0
      %v1781 = vsel %vm715, %v1720, 0
      %v1784 = vsel %vm715, %v1721, 0
      %v1787 = vsel %vm715, %v1722, 0
      %v1790 = vsel %vm715, %v1723, 0
      %v1793 = vsel %vm715, %v1724, 0
      %v1796 = vsel %vm715, %v1725, 0
      %v1799 = vsel %vm715, %v1726, 0
      %v1802 = vsel %vm715, %v1727, 0
      %v1805 = vsel %vm715, %v1728, 0
      %v1808 = vsel %vm715, %v1729, 0
      %v1811 = vsel %vm715, %v1730, 0
      %v1814 = vsel %vm715, %v1731, 0
      %v1817 = vsel %vm715, %v1732, 0
      %v1820 = vsel %vm715, %v1733, 0
      %v1823 = vsel %vm715, %v1734, 0
      %v1826 = vsel %vm715, %v1735, 0
      %v1829 = vsel %vm715, %v1736, 0
      %v1832 = vsel %vm715, %v1737, 0
      %v1835 = vsel %vm715, %v1738, 0
      %1837 = vmatprep.subr.mxu0 0.0
      %1838 = vmatpush1.msra.mxu0 0.0
      %1839 = vmatprep.subr.mxu0 0.0
      %1840 = vmatpush1.msra.mxu0 0.0
      %1841 = vmatprep.subr.mxu0 0.0
      %1842 = vmatpush1.msra.mxu0 0.0
      %1843 = vmatprep.subr.mxu0 0.0
      %1844 = vmatpush1.msra.mxu0 0.0
      %1845 = vmatprep.subr.mxu0 0.0
      %1846 = vmatpush1.msra.mxu0 0.0
      %1847 = vmatprep.subr.mxu0 0.0
      %1848 = vmatpush1.msra.mxu0 0.0
      %1849 = vmatprep.subr.mxu0 0.0
      %1850 = vmatpush1.msra.mxu0 0.0
      %1851 = vmatprep.subr.mxu0 0.0
      %1852 = vmatpush1.msra.mxu0 0.0
      %1853 = vmatprep.subr.mxu0 0.0
      %1854 = vmatpush1.msra.mxu0 0.0
      %1855 = vmatprep.subr.mxu0 0.0
      %1856 = vmatpush1.msra.mxu0 0.0
      %1857 = vmatprep.subr.mxu0 0.0
      %1858 = vmatpush1.msra.mxu0 0.0
      %1859 = vmatprep.subr.mxu0 0.0
      %1860 = vmatpush1.msra.mxu0 0.0
      %1861 = vmatprep.subr.mxu0 0.0
      %1862 = vmatpush1.msra.mxu0 0.0
      %1863 = vmatprep.subr.mxu0 0.0
      %1864 = vmatpush1.msra.mxu0 0.0
      %1865 = vmatprep.subr.mxu0 0.0
      %1866 = vmatpush1.msra.mxu0 0.0
      %1867 = vmatprep.subr.mxu0 0.0
      %1868 = vmatpush1.msra.mxu0 %v1740
      %1869 = vmatprep.subr.mxu0 0.0
      %1870 = vmatpush2.msra.mxu0 0.0
      %1871 = vmatprep.subr.mxu0 0.0
      %1872 = vmatpush2.msra.mxu0 0.0
      %1873 = vmatprep.subr.mxu0 0.0
      %1874 = vmatpush2.msra.mxu0 0.0
      %1875 = vmatprep.subr.mxu0 0.0
      %1876 = vmatpush2.msra.mxu0 0.0
      %1877 = vmatprep.subr.mxu0 0.0
      %1878 = vmatpush2.msra.mxu0 0.0
      %1879 = vmatprep.subr.mxu0 0.0
      %1880 = vmatpush2.msra.mxu0 0.0
      %1881 = vmatprep.subr.mxu0 0.0
      %1882 = vmatpush2.msra.mxu0 0.0
      %1883 = vmatprep.subr.mxu0 0.0
      %1884 = vmatpush2.msra.mxu0 0.0
      %1885 = vmatprep.subr.mxu0 0.0
      %1886 = vmatpush2.msra.mxu0 0.0
      %1887 = vmatprep.subr.mxu0 0.0
      %1888 = vmatpush2.msra.mxu0 0.0
      %1889 = vmatprep.subr.mxu0 0.0
      %1890 = vmatpush2.msra.mxu0 0.0
      %1891 = vmatprep.subr.mxu0 0.0
      %1892 = vmatpush2.msra.mxu0 0.0
      %1893 = vmatprep.subr.mxu0 0.0
      %1894 = vmatpush2.msra.mxu0 0.0
      %1895 = vmatprep.subr.mxu0 0.0
      %1896 = vmatpush2.msra.mxu0 0.0
      %1897 = vmatprep.subr.mxu0 0.0
      %1898 = vmatpush2.msra.mxu0 0.0
      %1899 = vmatprep.subr.mxu0 0.0
      %1900 = vmatpush2.msra.mxu0 0.0
      %1901 = vmatprep.mubr.f32.mxu0 0.0
      %1902 = vmatmul.mubr.f32.gmra.mxu0 %v1742
      %v1903 = vpop.f32.mrf.mxu0
      %v1904 = vadd.f32 0.0, %v1903
      %v1905 = vpop.f32.mrf.mxu0
      %1906 = vmatprep.mubr.f32.mxu0 0.0
      %1907 = vmatmul.mubr.f32.gmra.mxu0 %v1745
      %v1908 = vpop.f32.mrf.mxu0
      %v1909 = vadd.f32 0.0, %v1908
      %v1910 = vpop.f32.mrf.mxu0
      %1911 = vmatprep.mubr.f32.mxu0 0.0
      %1912 = vmatmul.mubr.f32.gmra.mxu0 %v1748
      %v1913 = vpop.f32.mrf.mxu0
      %v1914 = vadd.f32 0.0, %v1913
      %v1915 = vpop.f32.mrf.mxu0
      %1916 = vmatprep.mubr.f32.mxu0 0.0
      %1917 = vmatmul.mubr.f32.gmra.mxu0 %v1751
      %v1918 = vpop.f32.mrf.mxu0
      %v1919 = vadd.f32 0.0, %v1918
      %v1920 = vpop.f32.mrf.mxu0
      %1921 = vmatprep.mubr.f32.mxu0 0.0
      %1922 = vmatmul.mubr.f32.gmra.mxu0 %v1754
      %v1923 = vpop.f32.mrf.mxu0
      %v1924 = vadd.f32 0.0, %v1923
      %v1925 = vpop.f32.mrf.mxu0
      %1926 = vmatprep.mubr.f32.mxu0 0.0
      %1927 = vmatmul.mubr.f32.gmra.mxu0 %v1757
      %v1928 = vpop.f32.mrf.mxu0
      %v1929 = vadd.f32 0.0, %v1928
      %v1930 = vpop.f32.mrf.mxu0
      %1931 = vmatprep.mubr.f32.mxu0 0.0
      %1932 = vmatmul.mubr.f32.gmra.mxu0 %v1760
      %v1933 = vpop.f32.mrf.mxu0
      %v1934 = vadd.f32 0.0, %v1933
      %v1935 = vpop.f32.mrf.mxu0
      %1936 = vmatprep.mubr.f32.mxu0 0.0
      %1937 = vmatmul.mubr.f32.gmra.mxu0 %v1763
      %v1938 = vpop.f32.mrf.mxu0
      %v1939 = vadd.f32 0.0, %v1938
      %v1940 = vpop.f32.mrf.mxu0
      %1941 = vmatprep.mubr.f32.mxu0 0.0
      %1942 = vmatmul.mubr.f32.gmra.mxu0 %v1766
      %v1943 = vpop.f32.mrf.mxu0
      %v1944 = vadd.f32 0.0, %v1943
      %v1945 = vpop.f32.mrf.mxu0
      %1946 = vmatprep.mubr.f32.mxu0 0.0
      %1947 = vmatmul.mubr.f32.gmra.mxu0 %v1769
      %v1948 = vpop.f32.mrf.mxu0
      %v1949 = vadd.f32 0.0, %v1948
      %v1950 = vpop.f32.mrf.mxu0
      %1951 = vmatprep.mubr.f32.mxu0 0.0
      %1952 = vmatmul.mubr.f32.gmra.mxu0 %v1772
      %v1953 = vpop.f32.mrf.mxu0
      %v1954 = vadd.f32 0.0, %v1953
      %v1955 = vpop.f32.mrf.mxu0
      %1956 = vmatprep.mubr.f32.mxu0 0.0
      %1957 = vmatmul.mubr.f32.gmra.mxu0 %v1775
      %v1958 = vpop.f32.mrf.mxu0
      %v1959 = vadd.f32 0.0, %v1958
      %v1960 = vpop.f32.mrf.mxu0
      %1961 = vmatprep.mubr.f32.mxu0 0.0
      %1962 = vmatmul.mubr.f32.gmra.mxu0 %v1778
      %v1963 = vpop.f32.mrf.mxu0
      %v1964 = vadd.f32 0.0, %v1963
      %v1965 = vpop.f32.mrf.mxu0
      %1966 = vmatprep.mubr.f32.mxu0 0.0
      %1967 = vmatmul.mubr.f32.gmra.mxu0 %v1781
      %v1968 = vpop.f32.mrf.mxu0
      %v1969 = vadd.f32 0.0, %v1968
      %v1970 = vpop.f32.mrf.mxu0
      %1971 = vmatprep.mubr.f32.mxu0 0.0
      %1972 = vmatmul.mubr.f32.gmra.mxu0 %v1784
      %v1973 = vpop.f32.mrf.mxu0
      %v1974 = vadd.f32 0.0, %v1973
      %v1975 = vpop.f32.mrf.mxu0
      %1976 = vmatprep.mubr.f32.mxu0 0.0
      %1977 = vmatmul.mubr.f32.gmra.mxu0 %v1787
      %v1978 = vpop.f32.mrf.mxu0
      %v1979 = vadd.f32 0.0, %v1978
      %v1980 = vpop.f32.mrf.mxu0
      %1981 = vmatprep.mubr.f32.mxu0 0.0
      %1982 = vmatmul.mubr.f32.gmra.mxu0 %v1790
      %v1983 = vpop.f32.mrf.mxu0
      %v1984 = vadd.f32 0.0, %v1983
      %v1985 = vpop.f32.mrf.mxu0
      %1986 = vmatprep.mubr.f32.mxu0 0.0
      %1987 = vmatmul.mubr.f32.gmra.mxu0 %v1793
      %v1988 = vpop.f32.mrf.mxu0
      %v1989 = vadd.f32 0.0, %v1988
      %v1990 = vpop.f32.mrf.mxu0
      %1991 = vmatprep.mubr.f32.mxu0 0.0
      %1992 = vmatmul.mubr.f32.gmra.mxu0 %v1796
      %v1993 = vpop.f32.mrf.mxu0
      %v1994 = vadd.f32 0.0, %v1993
      %v1995 = vpop.f32.mrf.mxu0
      %1996 = vmatprep.mubr.f32.mxu0 0.0
      %1997 = vmatmul.mubr.f32.gmra.mxu0 %v1799
      %v1998 = vpop.f32.mrf.mxu0
      %v1999 = vadd.f32 0.0, %v1998
      %v2000 = vpop.f32.mrf.mxu0
      %2001 = vmatprep.mubr.f32.mxu0 0.0
      %2002 = vmatmul.mubr.f32.gmra.mxu0 %v1802
      %v2003 = vpop.f32.mrf.mxu0
      %v2004 = vadd.f32 0.0, %v2003
      %v2005 = vpop.f32.mrf.mxu0
      %2006 = vmatprep.mubr.f32.mxu0 0.0
      %2007 = vmatmul.mubr.f32.gmra.mxu0 %v1805
      %v2008 = vpop.f32.mrf.mxu0
      %v2009 = vadd.f32 0.0, %v2008
      %v2010 = vpop.f32.mrf.mxu0
      %2011 = vmatprep.mubr.f32.mxu0 0.0
      %2012 = vmatmul.mubr.f32.gmra.mxu0 %v1808
      %v2013 = vpop.f32.mrf.mxu0
      %v2014 = vadd.f32 0.0, %v2013
      %v2015 = vpop.f32.mrf.mxu0
      %2016 = vmatprep.mubr.f32.mxu0 0.0
      %2017 = vmatmul.mubr.f32.gmra.mxu0 %v1811
      %v2018 = vpop.f32.mrf.mxu0
      %v2019 = vadd.f32 0.0, %v2018
      %v2020 = vpop.f32.mrf.mxu0
      %2021 = vmatprep.mubr.f32.mxu0 0.0
      %2022 = vmatmul.mubr.f32.gmra.mxu0 %v1814
      %v2023 = vpop.f32.mrf.mxu0
      %v2024 = vadd.f32 0.0, %v2023
      %v2025 = vpop.f32.mrf.mxu0
      %2026 = vmatprep.mubr.f32.mxu0 0.0
      %2027 = vmatmul.mubr.f32.gmra.mxu0 %v1817
      %v2028 = vpop.f32.mrf.mxu0
      %v2029 = vadd.f32 0.0, %v2028
      %v2030 = vpop.f32.mrf.mxu0
      %2031 = vmatprep.mubr.f32.mxu0 0.0
      %2032 = vmatmul.mubr.f32.gmra.mxu0 %v1820
      %v2033 = vpop.f32.mrf.mxu0
      %v2034 = vadd.f32 0.0, %v2033
      %v2035 = vpop.f32.mrf.mxu0
      %2036 = vmatprep.mubr.f32.mxu0 0.0
      %2037 = vmatmul.mubr.f32.gmra.mxu0 %v1823
      %v2038 = vpop.f32.mrf.mxu0
      %v2039 = vadd.f32 0.0, %v2038
      %v2040 = vpop.f32.mrf.mxu0
      %2041 = vmatprep.mubr.f32.mxu0 0.0
      %2042 = vmatmul.mubr.f32.gmra.mxu0 %v1826
      %v2043 = vpop.f32.mrf.mxu0
      %v2044 = vadd.f32 0.0, %v2043
      %v2045 = vpop.f32.mrf.mxu0
      %2046 = vmatprep.mubr.f32.mxu0 0.0
      %2047 = vmatmul.mubr.f32.gmra.mxu0 %v1829
      %v2048 = vpop.f32.mrf.mxu0
      %v2049 = vadd.f32 0.0, %v2048
      %v2050 = vpop.f32.mrf.mxu0
      %2051 = vmatprep.mubr.f32.mxu0 0.0
      %2052 = vmatmul.mubr.f32.gmra.mxu0 %v1832
      %v2053 = vpop.f32.mrf.mxu0
      %v2054 = vadd.f32 0.0, %v2053
      %v2055 = vpop.f32.mrf.mxu0
      %2056 = vmatprep.mubr.f32.mxu0 0.0
      %2057 = vmatmul.mubr.f32.gmra.mxu0 %v1835
      %v2058 = vpop.f32.mrf.mxu0
      %v2059 = vadd.f32 0.0, %v2058
      %v2060 = vpop.f32.mrf.mxu0
      %2061 = vdwg.mxu0
      %v2062 = vadd.f32 %v1549, %v1904
      %v2063 = vadd.f32 %v1554, %v1909
      %v2064 = vadd.f32 %v1559, %v1914
      %v2065 = vadd.f32 %v1564, %v1919
      %v2066 = vadd.f32 %v1569, %v1924
      %v2067 = vadd.f32 %v1574, %v1929
      %v2068 = vadd.f32 %v1579, %v1934
      %v2069 = vadd.f32 %v1584, %v1939
      %v2070 = vadd.f32 %v1589, %v1944
      %v2071 = vadd.f32 %v1594, %v1949
      %v2072 = vadd.f32 %v1599, %v1954
      %v2073 = vadd.f32 %v1604, %v1959
      %v2074 = vadd.f32 %v1609, %v1964
      %v2075 = vadd.f32 %v1614, %v1969
      %v2076 = vadd.f32 %v1619, %v1974
      %v2077 = vadd.f32 %v1624, %v1979
      %v2078 = vadd.f32 %v1629, %v1984
      %v2079 = vadd.f32 %v1634, %v1989
      %v2080 = vadd.f32 %v1639, %v1994
      %v2081 = vadd.f32 %v1644, %v1999
      %v2082 = vadd.f32 %v1649, %v2004
      %v2083 = vadd.f32 %v1654, %v2009
      %v2084 = vadd.f32 %v1659, %v2014
      %v2085 = vadd.f32 %v1664, %v2019
      %v2086 = vadd.f32 %v1669, %v2024
      %v2087 = vadd.f32 %v1674, %v2029
      %v2088 = vadd.f32 %v1679, %v2034
      %v2089 = vadd.f32 %v1684, %v2039
      %v2090 = vadd.f32 %v1689, %v2044
      %v2091 = vadd.f32 %v1694, %v2049
      %v2092 = vadd.f32 %v1699, %v2054
      %v2093 = vadd.f32 %v1704, %v2059
      %v2094 = vld [vmem:[%s803] sm:$0xff]
      %v2095 = vld [vmem:[%s803 + $0x8] sm:$0xff]
      %v2096 = vld [vmem:[%s803 + $0x18] sm:$0xff]
      %v2097 = vld [vmem:[%s803 + $0x20] sm:$0xff]
      %v2098 = vld [vmem:[%s803 + $0x30] sm:$0xff]
      %v2099 = vld [vmem:[%s803 + $0x38] sm:$0xff]
      %v2100 = vld [vmem:[%s803 + $0x48] sm:$0xff]
      %v2101 = vld [vmem:[%s803 + $0x50] sm:$0xff]
      %v2102 = vld [vmem:[%s803 + $0x60] sm:$0xff]
      %v2103 = vld [vmem:[%s803 + $0x68] sm:$0xff]
      %v2104 = vld [vmem:[%s803 + $0x78] sm:$0xff]
      %v2105 = vld [vmem:[%s803 + $0x80] sm:$0xff]
      %v2106 = vld [vmem:[%s803 + $0x90] sm:$0xff]
      %v2107 = vld [vmem:[%s803 + $0x98] sm:$0xff]
      %v2108 = vld [vmem:[%s803 + $0xa8] sm:$0xff]
      %v2109 = vld [vmem:[%s803 + $0xb0] sm:$0xff]
      %v2110 = vld [vmem:[%s803 + $0xc0] sm:$0xff]
      %v2111 = vld [vmem:[%s803 + $0xc8] sm:$0xff]
      %v2112 = vld [vmem:[%s803 + $0xd8] sm:$0xff]
      %v2113 = vld [vmem:[%s803 + $0xe0] sm:$0xff]
      %v2114 = vld [vmem:[%s803 + $0xf0] sm:$0xff]
      %v2115 = vld [vmem:[%s803 + $0xf8] sm:$0xff]
      %v2116 = vld [vmem:[%s803 + $0x108] sm:$0xff]
      %v2117 = vld [vmem:[%s803 + $0x110] sm:$0xff]
      %v2118 = vld [vmem:[%s803 + $0x120] sm:$0xff]
      %v2119 = vld [vmem:[%s803 + $0x128] sm:$0xff]
      %v2120 = vld [vmem:[%s803 + $0x138] sm:$0xff]
      %v2121 = vld [vmem:[%s803 + $0x140] sm:$0xff]
      %v2122 = vld [vmem:[%s803 + $0x150] sm:$0xff]
      %v2123 = vld [vmem:[%s803 + $0x158] sm:$0xff]
      %v2124 = vld [vmem:[%s803 + $0x168] sm:$0xff]
      %v2125 = vld [vmem:[%s803 + $0x170] sm:$0xff]
      %s2126 = scalar_lea.vmem %s3, 24
      %v2127 = vld [vmem:[%s2126] sm:$0xff]
      %v2129 = vsel %vm715, %v2094, 0
      %v2132 = vsel %vm715, %v2095, 0
      %v2135 = vsel %vm715, %v2096, 0
      %v2138 = vsel %vm715, %v2097, 0
      %v2141 = vsel %vm715, %v2098, 0
      %v2144 = vsel %vm715, %v2099, 0
      %v2147 = vsel %vm715, %v2100, 0
      %v2150 = vsel %vm715, %v2101, 0
      %v2153 = vsel %vm715, %v2102, 0
      %v2156 = vsel %vm715, %v2103, 0
      %v2159 = vsel %vm715, %v2104, 0
      %v2162 = vsel %vm715, %v2105, 0
      %v2165 = vsel %vm715, %v2106, 0
      %v2168 = vsel %vm715, %v2107, 0
      %v2171 = vsel %vm715, %v2108, 0
      %v2174 = vsel %vm715, %v2109, 0
      %v2177 = vsel %vm715, %v2110, 0
      %v2180 = vsel %vm715, %v2111, 0
      %v2183 = vsel %vm715, %v2112, 0
      %v2186 = vsel %vm715, %v2113, 0
      %v2189 = vsel %vm715, %v2114, 0
      %v2192 = vsel %vm715, %v2115, 0
      %v2195 = vsel %vm715, %v2116, 0
      %v2198 = vsel %vm715, %v2117, 0
      %v2201 = vsel %vm715, %v2118, 0
      %v2204 = vsel %vm715, %v2119, 0
      %v2207 = vsel %vm715, %v2120, 0
      %v2210 = vsel %vm715, %v2121, 0
      %v2213 = vsel %vm715, %v2122, 0
      %v2216 = vsel %vm715, %v2123, 0
      %v2219 = vsel %vm715, %v2124, 0
      %v2222 = vsel %vm715, %v2125, 0
      %2224 = vmatprep.subr.mxu0 0.0
      %2225 = vmatpush1.msra.mxu0 0.0
      %2226 = vmatprep.subr.mxu0 0.0
      %2227 = vmatpush1.msra.mxu0 0.0
      %2228 = vmatprep.subr.mxu0 0.0
      %2229 = vmatpush1.msra.mxu0 0.0
      %2230 = vmatprep.subr.mxu0 0.0
      %2231 = vmatpush1.msra.mxu0 0.0
      %2232 = vmatprep.subr.mxu0 0.0
      %2233 = vmatpush1.msra.mxu0 0.0
      %2234 = vmatprep.subr.mxu0 0.0
      %2235 = vmatpush1.msra.mxu0 0.0
      %2236 = vmatprep.subr.mxu0 0.0
      %2237 = vmatpush1.msra.mxu0 0.0
      %2238 = vmatprep.subr.mxu0 0.0
      %2239 = vmatpush1.msra.mxu0 0.0
      %2240 = vmatprep.subr.mxu0 0.0
      %2241 = vmatpush1.msra.mxu0 0.0
      %2242 = vmatprep.subr.mxu0 0.0
      %2243 = vmatpush1.msra.mxu0 0.0
      %2244 = vmatprep.subr.mxu0 0.0
      %2245 = vmatpush1.msra.mxu0 0.0
      %2246 = vmatprep.subr.mxu0 0.0
      %2247 = vmatpush1.msra.mxu0 0.0
      %2248 = vmatprep.subr.mxu0 0.0
      %2249 = vmatpush1.msra.mxu0 0.0
      %2250 = vmatprep.subr.mxu0 0.0
      %2251 = vmatpush1.msra.mxu0 0.0
      %2252 = vmatprep.subr.mxu0 0.0
      %2253 = vmatpush1.msra.mxu0 0.0
      %2254 = vmatprep.subr.mxu0 0.0
      %2255 = vmatpush1.msra.mxu0 %v2127
      %2256 = vmatprep.subr.mxu0 0.0
      %2257 = vmatpush2.msra.mxu0 0.0
      %2258 = vmatprep.subr.mxu0 0.0
      %2259 = vmatpush2.msra.mxu0 0.0
      %2260 = vmatprep.subr.mxu0 0.0
      %2261 = vmatpush2.msra.mxu0 0.0
      %2262 = vmatprep.subr.mxu0 0.0
      %2263 = vmatpush2.msra.mxu0 0.0
      %2264 = vmatprep.subr.mxu0 0.0
      %2265 = vmatpush2.msra.mxu0 0.0
      %2266 = vmatprep.subr.mxu0 0.0
      %2267 = vmatpush2.msra.mxu0 0.0
      %2268 = vmatprep.subr.mxu0 0.0
      %2269 = vmatpush2.msra.mxu0 0.0
      %2270 = vmatprep.subr.mxu0 0.0
      %2271 = vmatpush2.msra.mxu0 0.0
      %2272 = vmatprep.subr.mxu0 0.0
      %2273 = vmatpush2.msra.mxu0 0.0
      %2274 = vmatprep.subr.mxu0 0.0
      %2275 = vmatpush2.msra.mxu0 0.0
      %2276 = vmatprep.subr.mxu0 0.0
      %2277 = vmatpush2.msra.mxu0 0.0
      %2278 = vmatprep.subr.mxu0 0.0
      %2279 = vmatpush2.msra.mxu0 0.0
      %2280 = vmatprep.subr.mxu0 0.0
      %2281 = vmatpush2.msra.mxu0 0.0
      %2282 = vmatprep.subr.mxu0 0.0
      %2283 = vmatpush2.msra.mxu0 0.0
      %2284 = vmatprep.subr.mxu0 0.0
      %2285 = vmatpush2.msra.mxu0 0.0
      %2286 = vmatprep.subr.mxu0 0.0
      %2287 = vmatpush2.msra.mxu0 0.0
      %2288 = vmatprep.mubr.f32.mxu0 0.0
      %2289 = vmatmul.mubr.f32.gmra.mxu0 %v2129
      %v2290 = vpop.f32.mrf.mxu0
      %v2291 = vadd.f32 0.0, %v2290
      %v2292 = vpop.f32.mrf.mxu0
      %2293 = vmatprep.mubr.f32.mxu0 0.0
      %2294 = vmatmul.mubr.f32.gmra.mxu0 %v2132
      %v2295 = vpop.f32.mrf.mxu0
      %v2296 = vadd.f32 0.0, %v2295
      %v2297 = vpop.f32.mrf.mxu0
      %2298 = vmatprep.mubr.f32.mxu0 0.0
      %2299 = vmatmul.mubr.f32.gmra.mxu0 %v2135
      %v2300 = vpop.f32.mrf.mxu0
      %v2301 = vadd.f32 0.0, %v2300
      %v2302 = vpop.f32.mrf.mxu0
      %2303 = vmatprep.mubr.f32.mxu0 0.0
      %2304 = vmatmul.mubr.f32.gmra.mxu0 %v2138
      %v2305 = vpop.f32.mrf.mxu0
      %v2306 = vadd.f32 0.0, %v2305
      %v2307 = vpop.f32.mrf.mxu0
      %2308 = vmatprep.mubr.f32.mxu0 0.0
      %2309 = vmatmul.mubr.f32.gmra.mxu0 %v2141
      %v2310 = vpop.f32.mrf.mxu0
      %v2311 = vadd.f32 0.0, %v2310
      %v2312 = vpop.f32.mrf.mxu0
      %2313 = vmatprep.mubr.f32.mxu0 0.0
      %2314 = vmatmul.mubr.f32.gmra.mxu0 %v2144
      %v2315 = vpop.f32.mrf.mxu0
      %v2316 = vadd.f32 0.0, %v2315
      %v2317 = vpop.f32.mrf.mxu0
      %2318 = vmatprep.mubr.f32.mxu0 0.0
      %2319 = vmatmul.mubr.f32.gmra.mxu0 %v2147
      %v2320 = vpop.f32.mrf.mxu0
      %v2321 = vadd.f32 0.0, %v2320
      %v2322 = vpop.f32.mrf.mxu0
      %2323 = vmatprep.mubr.f32.mxu0 0.0
      %2324 = vmatmul.mubr.f32.gmra.mxu0 %v2150
      %v2325 = vpop.f32.mrf.mxu0
      %v2326 = vadd.f32 0.0, %v2325
      %v2327 = vpop.f32.mrf.mxu0
      %2328 = vmatprep.mubr.f32.mxu0 0.0
      %2329 = vmatmul.mubr.f32.gmra.mxu0 %v2153
      %v2330 = vpop.f32.mrf.mxu0
      %v2331 = vadd.f32 0.0, %v2330
      %v2332 = vpop.f32.mrf.mxu0
      %2333 = vmatprep.mubr.f32.mxu0 0.0
      %2334 = vmatmul.mubr.f32.gmra.mxu0 %v2156
      %v2335 = vpop.f32.mrf.mxu0
      %v2336 = vadd.f32 0.0, %v2335
      %v2337 = vpop.f32.mrf.mxu0
      %2338 = vmatprep.mubr.f32.mxu0 0.0
      %2339 = vmatmul.mubr.f32.gmra.mxu0 %v2159
      %v2340 = vpop.f32.mrf.mxu0
      %v2341 = vadd.f32 0.0, %v2340
      %v2342 = vpop.f32.mrf.mxu0
      %2343 = vmatprep.mubr.f32.mxu0 0.0
      %2344 = vmatmul.mubr.f32.gmra.mxu0 %v2162
      %v2345 = vpop.f32.mrf.mxu0
      %v2346 = vadd.f32 0.0, %v2345
      %v2347 = vpop.f32.mrf.mxu0
      %2348 = vmatprep.mubr.f32.mxu0 0.0
      %2349 = vmatmul.mubr.f32.gmra.mxu0 %v2165
      %v2350 = vpop.f32.mrf.mxu0
      %v2351 = vadd.f32 0.0, %v2350
      %v2352 = vpop.f32.mrf.mxu0
      %2353 = vmatprep.mubr.f32.mxu0 0.0
      %2354 = vmatmul.mubr.f32.gmra.mxu0 %v2168
      %v2355 = vpop.f32.mrf.mxu0
      %v2356 = vadd.f32 0.0, %v2355
      %v2357 = vpop.f32.mrf.mxu0
      %2358 = vmatprep.mubr.f32.mxu0 0.0
      %2359 = vmatmul.mubr.f32.gmra.mxu0 %v2171
      %v2360 = vpop.f32.mrf.mxu0
      %v2361 = vadd.f32 0.0, %v2360
      %v2362 = vpop.f32.mrf.mxu0
      %2363 = vmatprep.mubr.f32.mxu0 0.0
      %2364 = vmatmul.mubr.f32.gmra.mxu0 %v2174
      %v2365 = vpop.f32.mrf.mxu0
      %v2366 = vadd.f32 0.0, %v2365
      %v2367 = vpop.f32.mrf.mxu0
      %2368 = vmatprep.mubr.f32.mxu0 0.0
      %2369 = vmatmul.mubr.f32.gmra.mxu0 %v2177
      %v2370 = vpop.f32.mrf.mxu0
      %v2371 = vadd.f32 0.0, %v2370
      %v2372 = vpop.f32.mrf.mxu0
      %2373 = vmatprep.mubr.f32.mxu0 0.0
      %2374 = vmatmul.mubr.f32.gmra.mxu0 %v2180
      %v2375 = vpop.f32.mrf.mxu0
      %v2376 = vadd.f32 0.0, %v2375
      %v2377 = vpop.f32.mrf.mxu0
      %2378 = vmatprep.mubr.f32.mxu0 0.0
      %2379 = vmatmul.mubr.f32.gmra.mxu0 %v2183
      %v2380 = vpop.f32.mrf.mxu0
      %v2381 = vadd.f32 0.0, %v2380
      %v2382 = vpop.f32.mrf.mxu0
      %2383 = vmatprep.mubr.f32.mxu0 0.0
      %2384 = vmatmul.mubr.f32.gmra.mxu0 %v2186
      %v2385 = vpop.f32.mrf.mxu0
      %v2386 = vadd.f32 0.0, %v2385
      %v2387 = vpop.f32.mrf.mxu0
      %2388 = vmatprep.mubr.f32.mxu0 0.0
      %2389 = vmatmul.mubr.f32.gmra.mxu0 %v2189
      %v2390 = vpop.f32.mrf.mxu0
      %v2391 = vadd.f32 0.0, %v2390
      %v2392 = vpop.f32.mrf.mxu0
      %2393 = vmatprep.mubr.f32.mxu0 0.0
      %2394 = vmatmul.mubr.f32.gmra.mxu0 %v2192
      %v2395 = vpop.f32.mrf.mxu0
      %v2396 = vadd.f32 0.0, %v2395
      %v2397 = vpop.f32.mrf.mxu0
      %2398 = vmatprep.mubr.f32.mxu0 0.0
      %2399 = vmatmul.mubr.f32.gmra.mxu0 %v2195
      %v2400 = vpop.f32.mrf.mxu0
      %v2401 = vadd.f32 0.0, %v2400
      %v2402 = vpop.f32.mrf.mxu0
      %2403 = vmatprep.mubr.f32.mxu0 0.0
      %2404 = vmatmul.mubr.f32.gmra.mxu0 %v2198
      %v2405 = vpop.f32.mrf.mxu0
      %v2406 = vadd.f32 0.0, %v2405
      %v2407 = vpop.f32.mrf.mxu0
      %2408 = vmatprep.mubr.f32.mxu0 0.0
      %2409 = vmatmul.mubr.f32.gmra.mxu0 %v2201
      %v2410 = vpop.f32.mrf.mxu0
      %v2411 = vadd.f32 0.0, %v2410
      %v2412 = vpop.f32.mrf.mxu0
      %2413 = vmatprep.mubr.f32.mxu0 0.0
      %2414 = vmatmul.mubr.f32.gmra.mxu0 %v2204
      %v2415 = vpop.f32.mrf.mxu0
      %v2416 = vadd.f32 0.0, %v2415
      %v2417 = vpop.f32.mrf.mxu0
      %2418 = vmatprep.mubr.f32.mxu0 0.0
      %2419 = vmatmul.mubr.f32.gmra.mxu0 %v2207
      %v2420 = vpop.f32.mrf.mxu0
      %v2421 = vadd.f32 0.0, %v2420
      %v2422 = vpop.f32.mrf.mxu0
      %2423 = vmatprep.mubr.f32.mxu0 0.0
      %2424 = vmatmul.mubr.f32.gmra.mxu0 %v2210
      %v2425 = vpop.f32.mrf.mxu0
      %v2426 = vadd.f32 0.0, %v2425
      %v2427 = vpop.f32.mrf.mxu0
      %2428 = vmatprep.mubr.f32.mxu0 0.0
      %2429 = vmatmul.mubr.f32.gmra.mxu0 %v2213
      %v2430 = vpop.f32.mrf.mxu0
      %v2431 = vadd.f32 0.0, %v2430
      %v2432 = vpop.f32.mrf.mxu0
      %2433 = vmatprep.mubr.f32.mxu0 0.0
      %2434 = vmatmul.mubr.f32.gmra.mxu0 %v2216
      %v2435 = vpop.f32.mrf.mxu0
      %v2436 = vadd.f32 0.0, %v2435
      %v2437 = vpop.f32.mrf.mxu0
      %2438 = vmatprep.mubr.f32.mxu0 0.0
      %2439 = vmatmul.mubr.f32.gmra.mxu0 %v2219
      %v2440 = vpop.f32.mrf.mxu0
      %v2441 = vadd.f32 0.0, %v2440
      %v2442 = vpop.f32.mrf.mxu0
      %2443 = vmatprep.mubr.f32.mxu0 0.0
      %2444 = vmatmul.mubr.f32.gmra.mxu0 %v2222
      %v2445 = vpop.f32.mrf.mxu0
      %v2446 = vadd.f32 0.0, %v2445
      %v2447 = vpop.f32.mrf.mxu0
      %2448 = vdwg.mxu0
      %v2449 = vadd.f32 %v2062, %v2291
      %v2450 = vadd.f32 %v2063, %v2296
      %v2451 = vadd.f32 %v2064, %v2301
      %v2452 = vadd.f32 %v2065, %v2306
      %v2453 = vadd.f32 %v2066, %v2311
      %v2454 = vadd.f32 %v2067, %v2316
      %v2455 = vadd.f32 %v2068, %v2321
      %v2456 = vadd.f32 %v2069, %v2326
      %v2457 = vadd.f32 %v2070, %v2331
      %v2458 = vadd.f32 %v2071, %v2336
      %v2459 = vadd.f32 %v2072, %v2341
      %v2460 = vadd.f32 %v2073, %v2346
      %v2461 = vadd.f32 %v2074, %v2351
      %v2462 = vadd.f32 %v2075, %v2356
      %v2463 = vadd.f32 %v2076, %v2361
      %v2464 = vadd.f32 %v2077, %v2366
      %v2465 = vadd.f32 %v2078, %v2371
      %v2466 = vadd.f32 %v2079, %v2376
      %v2467 = vadd.f32 %v2080, %v2381
      %v2468 = vadd.f32 %v2081, %v2386
      %v2469 = vadd.f32 %v2082, %v2391
      %v2470 = vadd.f32 %v2083, %v2396
      %v2471 = vadd.f32 %v2084, %v2401
      %v2472 = vadd.f32 %v2085, %v2406
      %v2473 = vadd.f32 %v2086, %v2411
      %v2474 = vadd.f32 %v2087, %v2416
      %v2475 = vadd.f32 %v2088, %v2421
      %v2476 = vadd.f32 %v2089, %v2426
      %v2477 = vadd.f32 %v2090, %v2431
      %v2478 = vadd.f32 %v2091, %v2436
      %v2479 = vadd.f32 %v2092, %v2441
      %v2480 = vadd.f32 %v2093, %v2446
      %v2481 = vld [vmem:[%s803 + $0x1] sm:$0xff]
      %v2482 = vld [vmem:[%s803 + $0x9] sm:$0xff]
      %v2483 = vld [vmem:[%s803 + $0x19] sm:$0xff]
      %v2484 = vld [vmem:[%s803 + $0x21] sm:$0xff]
      %v2485 = vld [vmem:[%s803 + $0x31] sm:$0xff]
      %v2486 = vld [vmem:[%s803 + $0x39] sm:$0xff]
      %v2487 = vld [vmem:[%s803 + $0x49] sm:$0xff]
      %v2488 = vld [vmem:[%s803 + $0x51] sm:$0xff]
      %v2489 = vld [vmem:[%s803 + $0x61] sm:$0xff]
      %v2490 = vld [vmem:[%s803 + $0x69] sm:$0xff]
      %v2491 = vld [vmem:[%s803 + $0x79] sm:$0xff]
      %v2492 = vld [vmem:[%s803 + $0x81] sm:$0xff]
      %v2493 = vld [vmem:[%s803 + $0x91] sm:$0xff]
      %v2494 = vld [vmem:[%s803 + $0x99] sm:$0xff]
      %v2495 = vld [vmem:[%s803 + $0xa9] sm:$0xff]
      %v2496 = vld [vmem:[%s803 + $0xb1] sm:$0xff]
      %v2497 = vld [vmem:[%s803 + $0xc1] sm:$0xff]
      %v2498 = vld [vmem:[%s803 + $0xc9] sm:$0xff]
      %v2499 = vld [vmem:[%s803 + $0xd9] sm:$0xff]
      %v2500 = vld [vmem:[%s803 + $0xe1] sm:$0xff]
      %v2501 = vld [vmem:[%s803 + $0xf1] sm:$0xff]
      %v2502 = vld [vmem:[%s803 + $0xf9] sm:$0xff]
      %v2503 = vld [vmem:[%s803 + $0x109] sm:$0xff]
      %v2504 = vld [vmem:[%s803 + $0x111] sm:$0xff]
      %v2505 = vld [vmem:[%s803 + $0x121] sm:$0xff]
      %v2506 = vld [vmem:[%s803 + $0x129] sm:$0xff]
      %v2507 = vld [vmem:[%s803 + $0x139] sm:$0xff]
      %v2508 = vld [vmem:[%s803 + $0x141] sm:$0xff]
      %v2509 = vld [vmem:[%s803 + $0x151] sm:$0xff]
      %v2510 = vld [vmem:[%s803 + $0x159] sm:$0xff]
      %v2511 = vld [vmem:[%s803 + $0x169] sm:$0xff]
      %v2512 = vld [vmem:[%s803 + $0x171] sm:$0xff]
      %s2513 = scalar_lea.vmem %s3, 32
      %v2514 = vld [vmem:[%s2513] sm:$0xff]
      %v2516 = vsel %vm715, %v2481, 0
      %v2519 = vsel %vm715, %v2482, 0
      %v2522 = vsel %vm715, %v2483, 0
      %v2525 = vsel %vm715, %v2484, 0
      %v2528 = vsel %vm715, %v2485, 0
      %v2531 = vsel %vm715, %v2486, 0
      %v2534 = vsel %vm715, %v2487, 0
      %v2537 = vsel %vm715, %v2488, 0
      %v2540 = vsel %vm715, %v2489, 0
      %v2543 = vsel %vm715, %v2490, 0
      %v2546 = vsel %vm715, %v2491, 0
      %v2549 = vsel %vm715, %v2492, 0
      %v2552 = vsel %vm715, %v2493, 0
      %v2555 = vsel %vm715, %v2494, 0
      %v2558 = vsel %vm715, %v2495, 0
      %v2561 = vsel %vm715, %v2496, 0
      %v2564 = vsel %vm715, %v2497, 0
      %v2567 = vsel %vm715, %v2498, 0
      %v2570 = vsel %vm715, %v2499, 0
      %v2573 = vsel %vm715, %v2500, 0
      %v2576 = vsel %vm715, %v2501, 0
      %v2579 = vsel %vm715, %v2502, 0
      %v2582 = vsel %vm715, %v2503, 0
      %v2585 = vsel %vm715, %v2504, 0
      %v2588 = vsel %vm715, %v2505, 0
      %v2591 = vsel %vm715, %v2506, 0
      %v2594 = vsel %vm715, %v2507, 0
      %v2597 = vsel %vm715, %v2508, 0
      %v2600 = vsel %vm715, %v2509, 0
      %v2603 = vsel %vm715, %v2510, 0
      %v2606 = vsel %vm715, %v2511, 0
      %v2609 = vsel %vm715, %v2512, 0
      %2611 = vmatprep.subr.mxu0 0.0
      %2612 = vmatpush1.msra.mxu0 0.0
      %2613 = vmatprep.subr.mxu0 0.0
      %2614 = vmatpush1.msra.mxu0 0.0
      %2615 = vmatprep.subr.mxu0 0.0
      %2616 = vmatpush1.msra.mxu0 0.0
      %2617 = vmatprep.subr.mxu0 0.0
      %2618 = vmatpush1.msra.mxu0 0.0
      %2619 = vmatprep.subr.mxu0 0.0
      %2620 = vmatpush1.msra.mxu0 0.0
      %2621 = vmatprep.subr.mxu0 0.0
      %2622 = vmatpush1.msra.mxu0 0.0
      %2623 = vmatprep.subr.mxu0 0.0
      %2624 = vmatpush1.msra.mxu0 0.0
      %2625 = vmatprep.subr.mxu0 0.0
      %2626 = vmatpush1.msra.mxu0 0.0
      %2627 = vmatprep.subr.mxu0 0.0
      %2628 = vmatpush1.msra.mxu0 0.0
      %2629 = vmatprep.subr.mxu0 0.0
      %2630 = vmatpush1.msra.mxu0 0.0
      %2631 = vmatprep.subr.mxu0 0.0
      %2632 = vmatpush1.msra.mxu0 0.0
      %2633 = vmatprep.subr.mxu0 0.0
      %2634 = vmatpush1.msra.mxu0 0.0
      %2635 = vmatprep.subr.mxu0 0.0
      %2636 = vmatpush1.msra.mxu0 0.0
      %2637 = vmatprep.subr.mxu0 0.0
      %2638 = vmatpush1.msra.mxu0 0.0
      %2639 = vmatprep.subr.mxu0 0.0
      %2640 = vmatpush1.msra.mxu0 0.0
      %2641 = vmatprep.subr.mxu0 0.0
      %2642 = vmatpush1.msra.mxu0 %v2514
      %2643 = vmatprep.subr.mxu0 0.0
      %2644 = vmatpush2.msra.mxu0 0.0
      %2645 = vmatprep.subr.mxu0 0.0
      %2646 = vmatpush2.msra.mxu0 0.0
      %2647 = vmatprep.subr.mxu0 0.0
      %2648 = vmatpush2.msra.mxu0 0.0
      %2649 = vmatprep.subr.mxu0 0.0
      %2650 = vmatpush2.msra.mxu0 0.0
      %2651 = vmatprep.subr.mxu0 0.0
      %2652 = vmatpush2.msra.mxu0 0.0
      %2653 = vmatprep.subr.mxu0 0.0
      %2654 = vmatpush2.msra.mxu0 0.0
      %2655 = vmatprep.subr.mxu0 0.0
      %2656 = vmatpush2.msra.mxu0 0.0
      %2657 = vmatprep.subr.mxu0 0.0
      %2658 = vmatpush2.msra.mxu0 0.0
      %2659 = vmatprep.subr.mxu0 0.0
      %2660 = vmatpush2.msra.mxu0 0.0
      %2661 = vmatprep.subr.mxu0 0.0
      %2662 = vmatpush2.msra.mxu0 0.0
      %2663 = vmatprep.subr.mxu0 0.0
      %2664 = vmatpush2.msra.mxu0 0.0
      %2665 = vmatprep.subr.mxu0 0.0
      %2666 = vmatpush2.msra.mxu0 0.0
      %2667 = vmatprep.subr.mxu0 0.0
      %2668 = vmatpush2.msra.mxu0 0.0
      %2669 = vmatprep.subr.mxu0 0.0
      %2670 = vmatpush2.msra.mxu0 0.0
      %2671 = vmatprep.subr.mxu0 0.0
      %2672 = vmatpush2.msra.mxu0 0.0
      %2673 = vmatprep.subr.mxu0 0.0
      %2674 = vmatpush2.msra.mxu0 0.0
      %2675 = vmatprep.mubr.f32.mxu0 0.0
      %2676 = vmatmul.mubr.f32.gmra.mxu0 %v2516
      %v2677 = vpop.f32.mrf.mxu0
      %v2678 = vadd.f32 0.0, %v2677
      %v2679 = vpop.f32.mrf.mxu0
      %2680 = vmatprep.mubr.f32.mxu0 0.0
      %2681 = vmatmul.mubr.f32.gmra.mxu0 %v2519
      %v2682 = vpop.f32.mrf.mxu0
      %v2683 = vadd.f32 0.0, %v2682
      %v2684 = vpop.f32.mrf.mxu0
      %2685 = vmatprep.mubr.f32.mxu0 0.0
      %2686 = vmatmul.mubr.f32.gmra.mxu0 %v2522
      %v2687 = vpop.f32.mrf.mxu0
      %v2688 = vadd.f32 0.0, %v2687
      %v2689 = vpop.f32.mrf.mxu0
      %2690 = vmatprep.mubr.f32.mxu0 0.0
      %2691 = vmatmul.mubr.f32.gmra.mxu0 %v2525
      %v2692 = vpop.f32.mrf.mxu0
      %v2693 = vadd.f32 0.0, %v2692
      %v2694 = vpop.f32.mrf.mxu0
      %2695 = vmatprep.mubr.f32.mxu0 0.0
      %2696 = vmatmul.mubr.f32.gmra.mxu0 %v2528
      %v2697 = vpop.f32.mrf.mxu0
      %v2698 = vadd.f32 0.0, %v2697
      %v2699 = vpop.f32.mrf.mxu0
      %2700 = vmatprep.mubr.f32.mxu0 0.0
      %2701 = vmatmul.mubr.f32.gmra.mxu0 %v2531
      %v2702 = vpop.f32.mrf.mxu0
      %v2703 = vadd.f32 0.0, %v2702
      %v2704 = vpop.f32.mrf.mxu0
      %2705 = vmatprep.mubr.f32.mxu0 0.0
      %2706 = vmatmul.mubr.f32.gmra.mxu0 %v2534
      %v2707 = vpop.f32.mrf.mxu0
      %v2708 = vadd.f32 0.0, %v2707
      %v2709 = vpop.f32.mrf.mxu0
      %2710 = vmatprep.mubr.f32.mxu0 0.0
      %2711 = vmatmul.mubr.f32.gmra.mxu0 %v2537
      %v2712 = vpop.f32.mrf.mxu0
      %v2713 = vadd.f32 0.0, %v2712
      %v2714 = vpop.f32.mrf.mxu0
      %2715 = vmatprep.mubr.f32.mxu0 0.0
      %2716 = vmatmul.mubr.f32.gmra.mxu0 %v2540
      %v2717 = vpop.f32.mrf.mxu0
      %v2718 = vadd.f32 0.0, %v2717
      %v2719 = vpop.f32.mrf.mxu0
      %2720 = vmatprep.mubr.f32.mxu0 0.0
      %2721 = vmatmul.mubr.f32.gmra.mxu0 %v2543
      %v2722 = vpop.f32.mrf.mxu0
      %v2723 = vadd.f32 0.0, %v2722
      %v2724 = vpop.f32.mrf.mxu0
      %2725 = vmatprep.mubr.f32.mxu0 0.0
      %2726 = vmatmul.mubr.f32.gmra.mxu0 %v2546
      %v2727 = vpop.f32.mrf.mxu0
      %v2728 = vadd.f32 0.0, %v2727
      %v2729 = vpop.f32.mrf.mxu0
      %2730 = vmatprep.mubr.f32.mxu0 0.0
      %2731 = vmatmul.mubr.f32.gmra.mxu0 %v2549
      %v2732 = vpop.f32.mrf.mxu0
      %v2733 = vadd.f32 0.0, %v2732
      %v2734 = vpop.f32.mrf.mxu0
      %2735 = vmatprep.mubr.f32.mxu0 0.0
      %2736 = vmatmul.mubr.f32.gmra.mxu0 %v2552
      %v2737 = vpop.f32.mrf.mxu0
      %v2738 = vadd.f32 0.0, %v2737
      %v2739 = vpop.f32.mrf.mxu0
      %2740 = vmatprep.mubr.f32.mxu0 0.0
      %2741 = vmatmul.mubr.f32.gmra.mxu0 %v2555
      %v2742 = vpop.f32.mrf.mxu0
      %v2743 = vadd.f32 0.0, %v2742
      %v2744 = vpop.f32.mrf.mxu0
      %2745 = vmatprep.mubr.f32.mxu0 0.0
      %2746 = vmatmul.mubr.f32.gmra.mxu0 %v2558
      %v2747 = vpop.f32.mrf.mxu0
      %v2748 = vadd.f32 0.0, %v2747
      %v2749 = vpop.f32.mrf.mxu0
      %2750 = vmatprep.mubr.f32.mxu0 0.0
      %2751 = vmatmul.mubr.f32.gmra.mxu0 %v2561
      %v2752 = vpop.f32.mrf.mxu0
      %v2753 = vadd.f32 0.0, %v2752
      %v2754 = vpop.f32.mrf.mxu0
      %2755 = vmatprep.mubr.f32.mxu0 0.0
      %2756 = vmatmul.mubr.f32.gmra.mxu0 %v2564
      %v2757 = vpop.f32.mrf.mxu0
      %v2758 = vadd.f32 0.0, %v2757
      %v2759 = vpop.f32.mrf.mxu0
      %2760 = vmatprep.mubr.f32.mxu0 0.0
      %2761 = vmatmul.mubr.f32.gmra.mxu0 %v2567
      %v2762 = vpop.f32.mrf.mxu0
      %v2763 = vadd.f32 0.0, %v2762
      %v2764 = vpop.f32.mrf.mxu0
      %2765 = vmatprep.mubr.f32.mxu0 0.0
      %2766 = vmatmul.mubr.f32.gmra.mxu0 %v2570
      %v2767 = vpop.f32.mrf.mxu0
      %v2768 = vadd.f32 0.0, %v2767
      %v2769 = vpop.f32.mrf.mxu0
      %2770 = vmatprep.mubr.f32.mxu0 0.0
      %2771 = vmatmul.mubr.f32.gmra.mxu0 %v2573
      %v2772 = vpop.f32.mrf.mxu0
      %v2773 = vadd.f32 0.0, %v2772
      %v2774 = vpop.f32.mrf.mxu0
      %2775 = vmatprep.mubr.f32.mxu0 0.0
      %2776 = vmatmul.mubr.f32.gmra.mxu0 %v2576
      %v2777 = vpop.f32.mrf.mxu0
      %v2778 = vadd.f32 0.0, %v2777
      %v2779 = vpop.f32.mrf.mxu0
      %2780 = vmatprep.mubr.f32.mxu0 0.0
      %2781 = vmatmul.mubr.f32.gmra.mxu0 %v2579
      %v2782 = vpop.f32.mrf.mxu0
      %v2783 = vadd.f32 0.0, %v2782
      %v2784 = vpop.f32.mrf.mxu0
      %2785 = vmatprep.mubr.f32.mxu0 0.0
      %2786 = vmatmul.mubr.f32.gmra.mxu0 %v2582
      %v2787 = vpop.f32.mrf.mxu0
      %v2788 = vadd.f32 0.0, %v2787
      %v2789 = vpop.f32.mrf.mxu0
      %2790 = vmatprep.mubr.f32.mxu0 0.0
      %2791 = vmatmul.mubr.f32.gmra.mxu0 %v2585
      %v2792 = vpop.f32.mrf.mxu0
      %v2793 = vadd.f32 0.0, %v2792
      %v2794 = vpop.f32.mrf.mxu0
      %2795 = vmatprep.mubr.f32.mxu0 0.0
      %2796 = vmatmul.mubr.f32.gmra.mxu0 %v2588
      %v2797 = vpop.f32.mrf.mxu0
      %v2798 = vadd.f32 0.0, %v2797
      %v2799 = vpop.f32.mrf.mxu0
      %2800 = vmatprep.mubr.f32.mxu0 0.0
      %2801 = vmatmul.mubr.f32.gmra.mxu0 %v2591
      %v2802 = vpop.f32.mrf.mxu0
      %v2803 = vadd.f32 0.0, %v2802
      %v2804 = vpop.f32.mrf.mxu0
      %2805 = vmatprep.mubr.f32.mxu0 0.0
      %2806 = vmatmul.mubr.f32.gmra.mxu0 %v2594
      %v2807 = vpop.f32.mrf.mxu0
      %v2808 = vadd.f32 0.0, %v2807
      %v2809 = vpop.f32.mrf.mxu0
      %2810 = vmatprep.mubr.f32.mxu0 0.0
      %2811 = vmatmul.mubr.f32.gmra.mxu0 %v2597
      %v2812 = vpop.f32.mrf.mxu0
      %v2813 = vadd.f32 0.0, %v2812
      %v2814 = vpop.f32.mrf.mxu0
      %2815 = vmatprep.mubr.f32.mxu0 0.0
      %2816 = vmatmul.mubr.f32.gmra.mxu0 %v2600
      %v2817 = vpop.f32.mrf.mxu0
      %v2818 = vadd.f32 0.0, %v2817
      %v2819 = vpop.f32.mrf.mxu0
      %2820 = vmatprep.mubr.f32.mxu0 0.0
      %2821 = vmatmul.mubr.f32.gmra.mxu0 %v2603
      %v2822 = vpop.f32.mrf.mxu0
      %v2823 = vadd.f32 0.0, %v2822
      %v2824 = vpop.f32.mrf.mxu0
      %2825 = vmatprep.mubr.f32.mxu0 0.0
      %2826 = vmatmul.mubr.f32.gmra.mxu0 %v2606
      %v2827 = vpop.f32.mrf.mxu0
      %v2828 = vadd.f32 0.0, %v2827
      %v2829 = vpop.f32.mrf.mxu0
      %2830 = vmatprep.mubr.f32.mxu0 0.0
      %2831 = vmatmul.mubr.f32.gmra.mxu0 %v2609
      %v2832 = vpop.f32.mrf.mxu0
      %v2833 = vadd.f32 0.0, %v2832
      %v2834 = vpop.f32.mrf.mxu0
      %2835 = vdwg.mxu0
      %v2836 = vadd.f32 %v2449, %v2678
      %v2837 = vadd.f32 %v2450, %v2683
      %v2838 = vadd.f32 %v2451, %v2688
      %v2839 = vadd.f32 %v2452, %v2693
      %v2840 = vadd.f32 %v2453, %v2698
      %v2841 = vadd.f32 %v2454, %v2703
      %v2842 = vadd.f32 %v2455, %v2708
      %v2843 = vadd.f32 %v2456, %v2713
      %v2844 = vadd.f32 %v2457, %v2718
      %v2845 = vadd.f32 %v2458, %v2723
      %v2846 = vadd.f32 %v2459, %v2728
      %v2847 = vadd.f32 %v2460, %v2733
      %v2848 = vadd.f32 %v2461, %v2738
      %v2849 = vadd.f32 %v2462, %v2743
      %v2850 = vadd.f32 %v2463, %v2748
      %v2851 = vadd.f32 %v2464, %v2753
      %v2852 = vadd.f32 %v2465, %v2758
      %v2853 = vadd.f32 %v2466, %v2763
      %v2854 = vadd.f32 %v2467, %v2768
      %v2855 = vadd.f32 %v2468, %v2773
      %v2856 = vadd.f32 %v2469, %v2778
      %v2857 = vadd.f32 %v2470, %v2783
      %v2858 = vadd.f32 %v2471, %v2788
      %v2859 = vadd.f32 %v2472, %v2793
      %v2860 = vadd.f32 %v2473, %v2798
      %v2861 = vadd.f32 %v2474, %v2803
      %v2862 = vadd.f32 %v2475, %v2808
      %v2863 = vadd.f32 %v2476, %v2813
      %v2864 = vadd.f32 %v2477, %v2818
      %v2865 = vadd.f32 %v2478, %v2823
      %v2866 = vadd.f32 %v2479, %v2828
      %v2867 = vadd.f32 %v2480, %v2833
      %v2868 = vld [vmem:[%s803 + $0x2] sm:$0xff]
      %v2869 = vld [vmem:[%s803 + $0xa] sm:$0xff]
      %v2870 = vld [vmem:[%s803 + $0x1a] sm:$0xff]
      %v2871 = vld [vmem:[%s803 + $0x22] sm:$0xff]
      %v2872 = vld [vmem:[%s803 + $0x32] sm:$0xff]
      %v2873 = vld [vmem:[%s803 + $0x3a] sm:$0xff]
      %v2874 = vld [vmem:[%s803 + $0x4a] sm:$0xff]
      %v2875 = vld [vmem:[%s803 + $0x52] sm:$0xff]
      %v2876 = vld [vmem:[%s803 + $0x62] sm:$0xff]
      %v2877 = vld [vmem:[%s803 + $0x6a] sm:$0xff]
      %v2878 = vld [vmem:[%s803 + $0x7a] sm:$0xff]
      %v2879 = vld [vmem:[%s803 + $0x82] sm:$0xff]
      %v2880 = vld [vmem:[%s803 + $0x92] sm:$0xff]
      %v2881 = vld [vmem:[%s803 + $0x9a] sm:$0xff]
      %v2882 = vld [vmem:[%s803 + $0xaa] sm:$0xff]
      %v2883 = vld [vmem:[%s803 + $0xb2] sm:$0xff]
      %v2884 = vld [vmem:[%s803 + $0xc2] sm:$0xff]
      %v2885 = vld [vmem:[%s803 + $0xca] sm:$0xff]
      %v2886 = vld [vmem:[%s803 + $0xda] sm:$0xff]
      %v2887 = vld [vmem:[%s803 + $0xe2] sm:$0xff]
      %v2888 = vld [vmem:[%s803 + $0xf2] sm:$0xff]
      %v2889 = vld [vmem:[%s803 + $0xfa] sm:$0xff]
      %v2890 = vld [vmem:[%s803 + $0x10a] sm:$0xff]
      %v2891 = vld [vmem:[%s803 + $0x112] sm:$0xff]
      %v2892 = vld [vmem:[%s803 + $0x122] sm:$0xff]
      %v2893 = vld [vmem:[%s803 + $0x12a] sm:$0xff]
      %v2894 = vld [vmem:[%s803 + $0x13a] sm:$0xff]
      %v2895 = vld [vmem:[%s803 + $0x142] sm:$0xff]
      %v2896 = vld [vmem:[%s803 + $0x152] sm:$0xff]
      %v2897 = vld [vmem:[%s803 + $0x15a] sm:$0xff]
      %v2898 = vld [vmem:[%s803 + $0x16a] sm:$0xff]
      %v2899 = vld [vmem:[%s803 + $0x172] sm:$0xff]
      %s2900 = scalar_lea.vmem %s3, 40
      %v2901 = vld [vmem:[%s2900] sm:$0xff]
      %v2903 = vsel %vm715, %v2868, 0
      %v2906 = vsel %vm715, %v2869, 0
      %v2909 = vsel %vm715, %v2870, 0
      %v2912 = vsel %vm715, %v2871, 0
      %v2915 = vsel %vm715, %v2872, 0
      %v2918 = vsel %vm715, %v2873, 0
      %v2921 = vsel %vm715, %v2874, 0
      %v2924 = vsel %vm715, %v2875, 0
      %v2927 = vsel %vm715, %v2876, 0
      %v2930 = vsel %vm715, %v2877, 0
      %v2933 = vsel %vm715, %v2878, 0
      %v2936 = vsel %vm715, %v2879, 0
      %v2939 = vsel %vm715, %v2880, 0
      %v2942 = vsel %vm715, %v2881, 0
      %v2945 = vsel %vm715, %v2882, 0
      %v2948 = vsel %vm715, %v2883, 0
      %v2951 = vsel %vm715, %v2884, 0
      %v2954 = vsel %vm715, %v2885, 0
      %v2957 = vsel %vm715, %v2886, 0
      %v2960 = vsel %vm715, %v2887, 0
      %v2963 = vsel %vm715, %v2888, 0
      %v2966 = vsel %vm715, %v2889, 0
      %v2969 = vsel %vm715, %v2890, 0
      %v2972 = vsel %vm715, %v2891, 0
      %v2975 = vsel %vm715, %v2892, 0
      %v2978 = vsel %vm715, %v2893, 0
      %v2981 = vsel %vm715, %v2894, 0
      %v2984 = vsel %vm715, %v2895, 0
      %v2987 = vsel %vm715, %v2896, 0
      %v2990 = vsel %vm715, %v2897, 0
      %v2993 = vsel %vm715, %v2898, 0
      %v2996 = vsel %vm715, %v2899, 0
      %2998 = vmatprep.subr.mxu0 0.0
      %2999 = vmatpush1.msra.mxu0 0.0
      %3000 = vmatprep.subr.mxu0 0.0
      %3001 = vmatpush1.msra.mxu0 0.0
      %3002 = vmatprep.subr.mxu0 0.0
      %3003 = vmatpush1.msra.mxu0 0.0
      %3004 = vmatprep.subr.mxu0 0.0
      %3005 = vmatpush1.msra.mxu0 0.0
      %3006 = vmatprep.subr.mxu0 0.0
      %3007 = vmatpush1.msra.mxu0 0.0
      %3008 = vmatprep.subr.mxu0 0.0
      %3009 = vmatpush1.msra.mxu0 0.0
      %3010 = vmatprep.subr.mxu0 0.0
      %3011 = vmatpush1.msra.mxu0 0.0
      %3012 = vmatprep.subr.mxu0 0.0
      %3013 = vmatpush1.msra.mxu0 0.0
      %3014 = vmatprep.subr.mxu0 0.0
      %3015 = vmatpush1.msra.mxu0 0.0
      %3016 = vmatprep.subr.mxu0 0.0
      %3017 = vmatpush1.msra.mxu0 0.0
      %3018 = vmatprep.subr.mxu0 0.0
      %3019 = vmatpush1.msra.mxu0 0.0
      %3020 = vmatprep.subr.mxu0 0.0
      %3021 = vmatpush1.msra.mxu0 0.0
      %3022 = vmatprep.subr.mxu0 0.0
      %3023 = vmatpush1.msra.mxu0 0.0
      %3024 = vmatprep.subr.mxu0 0.0
      %3025 = vmatpush1.msra.mxu0 0.0
      %3026 = vmatprep.subr.mxu0 0.0
      %3027 = vmatpush1.msra.mxu0 0.0
      %3028 = vmatprep.subr.mxu0 0.0
      %3029 = vmatpush1.msra.mxu0 %v2901
      %3030 = vmatprep.subr.mxu0 0.0
      %3031 = vmatpush2.msra.mxu0 0.0
      %3032 = vmatprep.subr.mxu0 0.0
      %3033 = vmatpush2.msra.mxu0 0.0
      %3034 = vmatprep.subr.mxu0 0.0
      %3035 = vmatpush2.msra.mxu0 0.0
      %3036 = vmatprep.subr.mxu0 0.0
      %3037 = vmatpush2.msra.mxu0 0.0
      %3038 = vmatprep.subr.mxu0 0.0
      %3039 = vmatpush2.msra.mxu0 0.0
      %3040 = vmatprep.subr.mxu0 0.0
      %3041 = vmatpush2.msra.mxu0 0.0
      %3042 = vmatprep.subr.mxu0 0.0
      %3043 = vmatpush2.msra.mxu0 0.0
      %3044 = vmatprep.subr.mxu0 0.0
      %3045 = vmatpush2.msra.mxu0 0.0
      %3046 = vmatprep.subr.mxu0 0.0
      %3047 = vmatpush2.msra.mxu0 0.0
      %3048 = vmatprep.subr.mxu0 0.0
      %3049 = vmatpush2.msra.mxu0 0.0
      %3050 = vmatprep.subr.mxu0 0.0
      %3051 = vmatpush2.msra.mxu0 0.0
      %3052 = vmatprep.subr.mxu0 0.0
      %3053 = vmatpush2.msra.mxu0 0.0
      %3054 = vmatprep.subr.mxu0 0.0
      %3055 = vmatpush2.msra.mxu0 0.0
      %3056 = vmatprep.subr.mxu0 0.0
      %3057 = vmatpush2.msra.mxu0 0.0
      %3058 = vmatprep.subr.mxu0 0.0
      %3059 = vmatpush2.msra.mxu0 0.0
      %3060 = vmatprep.subr.mxu0 0.0
      %3061 = vmatpush2.msra.mxu0 0.0
      %3062 = vmatprep.mubr.f32.mxu0 0.0
      %3063 = vmatmul.mubr.f32.gmra.mxu0 %v2903
      %v3064 = vpop.f32.mrf.mxu0
      %v3065 = vadd.f32 0.0, %v3064
      %v3066 = vpop.f32.mrf.mxu0
      %3067 = vmatprep.mubr.f32.mxu0 0.0
      %3068 = vmatmul.mubr.f32.gmra.mxu0 %v2906
      %v3069 = vpop.f32.mrf.mxu0
      %v3070 = vadd.f32 0.0, %v3069
      %v3071 = vpop.f32.mrf.mxu0
      %3072 = vmatprep.mubr.f32.mxu0 0.0
      %3073 = vmatmul.mubr.f32.gmra.mxu0 %v2909
      %v3074 = vpop.f32.mrf.mxu0
      %v3075 = vadd.f32 0.0, %v3074
      %v3076 = vpop.f32.mrf.mxu0
      %3077 = vmatprep.mubr.f32.mxu0 0.0
      %3078 = vmatmul.mubr.f32.gmra.mxu0 %v2912
      %v3079 = vpop.f32.mrf.mxu0
      %v3080 = vadd.f32 0.0, %v3079
      %v3081 = vpop.f32.mrf.mxu0
      %3082 = vmatprep.mubr.f32.mxu0 0.0
      %3083 = vmatmul.mubr.f32.gmra.mxu0 %v2915
      %v3084 = vpop.f32.mrf.mxu0
      %v3085 = vadd.f32 0.0, %v3084
      %v3086 = vpop.f32.mrf.mxu0
      %3087 = vmatprep.mubr.f32.mxu0 0.0
      %3088 = vmatmul.mubr.f32.gmra.mxu0 %v2918
      %v3089 = vpop.f32.mrf.mxu0
      %v3090 = vadd.f32 0.0, %v3089
      %v3091 = vpop.f32.mrf.mxu0
      %3092 = vmatprep.mubr.f32.mxu0 0.0
      %3093 = vmatmul.mubr.f32.gmra.mxu0 %v2921
      %v3094 = vpop.f32.mrf.mxu0
      %v3095 = vadd.f32 0.0, %v3094
      %v3096 = vpop.f32.mrf.mxu0
      %3097 = vmatprep.mubr.f32.mxu0 0.0
      %3098 = vmatmul.mubr.f32.gmra.mxu0 %v2924
      %v3099 = vpop.f32.mrf.mxu0
      %v3100 = vadd.f32 0.0, %v3099
      %v3101 = vpop.f32.mrf.mxu0
      %3102 = vmatprep.mubr.f32.mxu0 0.0
      %3103 = vmatmul.mubr.f32.gmra.mxu0 %v2927
      %v3104 = vpop.f32.mrf.mxu0
      %v3105 = vadd.f32 0.0, %v3104
      %v3106 = vpop.f32.mrf.mxu0
      %3107 = vmatprep.mubr.f32.mxu0 0.0
      %3108 = vmatmul.mubr.f32.gmra.mxu0 %v2930
      %v3109 = vpop.f32.mrf.mxu0
      %v3110 = vadd.f32 0.0, %v3109
      %v3111 = vpop.f32.mrf.mxu0
      %3112 = vmatprep.mubr.f32.mxu0 0.0
      %3113 = vmatmul.mubr.f32.gmra.mxu0 %v2933
      %v3114 = vpop.f32.mrf.mxu0
      %v3115 = vadd.f32 0.0, %v3114
      %v3116 = vpop.f32.mrf.mxu0
      %3117 = vmatprep.mubr.f32.mxu0 0.0
      %3118 = vmatmul.mubr.f32.gmra.mxu0 %v2936
      %v3119 = vpop.f32.mrf.mxu0
      %v3120 = vadd.f32 0.0, %v3119
      %v3121 = vpop.f32.mrf.mxu0
      %3122 = vmatprep.mubr.f32.mxu0 0.0
      %3123 = vmatmul.mubr.f32.gmra.mxu0 %v2939
      %v3124 = vpop.f32.mrf.mxu0
      %v3125 = vadd.f32 0.0, %v3124
      %v3126 = vpop.f32.mrf.mxu0
      %3127 = vmatprep.mubr.f32.mxu0 0.0
      %3128 = vmatmul.mubr.f32.gmra.mxu0 %v2942
      %v3129 = vpop.f32.mrf.mxu0
      %v3130 = vadd.f32 0.0, %v3129
      %v3131 = vpop.f32.mrf.mxu0
      %3132 = vmatprep.mubr.f32.mxu0 0.0
      %3133 = vmatmul.mubr.f32.gmra.mxu0 %v2945
      %v3134 = vpop.f32.mrf.mxu0
      %v3135 = vadd.f32 0.0, %v3134
      %v3136 = vpop.f32.mrf.mxu0
      %3137 = vmatprep.mubr.f32.mxu0 0.0
      %3138 = vmatmul.mubr.f32.gmra.mxu0 %v2948
      %v3139 = vpop.f32.mrf.mxu0
      %v3140 = vadd.f32 0.0, %v3139
      %v3141 = vpop.f32.mrf.mxu0
      %3142 = vmatprep.mubr.f32.mxu0 0.0
      %3143 = vmatmul.mubr.f32.gmra.mxu0 %v2951
      %v3144 = vpop.f32.mrf.mxu0
      %v3145 = vadd.f32 0.0, %v3144
      %v3146 = vpop.f32.mrf.mxu0
      %3147 = vmatprep.mubr.f32.mxu0 0.0
      %3148 = vmatmul.mubr.f32.gmra.mxu0 %v2954
      %v3149 = vpop.f32.mrf.mxu0
      %v3150 = vadd.f32 0.0, %v3149
      %v3151 = vpop.f32.mrf.mxu0
      %3152 = vmatprep.mubr.f32.mxu0 0.0
      %3153 = vmatmul.mubr.f32.gmra.mxu0 %v2957
      %v3154 = vpop.f32.mrf.mxu0
      %v3155 = vadd.f32 0.0, %v3154
      %v3156 = vpop.f32.mrf.mxu0
      %3157 = vmatprep.mubr.f32.mxu0 0.0
      %3158 = vmatmul.mubr.f32.gmra.mxu0 %v2960
      %v3159 = vpop.f32.mrf.mxu0
      %v3160 = vadd.f32 0.0, %v3159
      %v3161 = vpop.f32.mrf.mxu0
      %3162 = vmatprep.mubr.f32.mxu0 0.0
      %3163 = vmatmul.mubr.f32.gmra.mxu0 %v2963
      %v3164 = vpop.f32.mrf.mxu0
      %v3165 = vadd.f32 0.0, %v3164
      %v3166 = vpop.f32.mrf.mxu0
      %3167 = vmatprep.mubr.f32.mxu0 0.0
      %3168 = vmatmul.mubr.f32.gmra.mxu0 %v2966
      %v3169 = vpop.f32.mrf.mxu0
      %v3170 = vadd.f32 0.0, %v3169
      %v3171 = vpop.f32.mrf.mxu0
      %3172 = vmatprep.mubr.f32.mxu0 0.0
      %3173 = vmatmul.mubr.f32.gmra.mxu0 %v2969
      %v3174 = vpop.f32.mrf.mxu0
      %v3175 = vadd.f32 0.0, %v3174
      %v3176 = vpop.f32.mrf.mxu0
      %3177 = vmatprep.mubr.f32.mxu0 0.0
      %3178 = vmatmul.mubr.f32.gmra.mxu0 %v2972
      %v3179 = vpop.f32.mrf.mxu0
      %v3180 = vadd.f32 0.0, %v3179
      %v3181 = vpop.f32.mrf.mxu0
      %3182 = vmatprep.mubr.f32.mxu0 0.0
      %3183 = vmatmul.mubr.f32.gmra.mxu0 %v2975
      %v3184 = vpop.f32.mrf.mxu0
      %v3185 = vadd.f32 0.0, %v3184
      %v3186 = vpop.f32.mrf.mxu0
      %3187 = vmatprep.mubr.f32.mxu0 0.0
      %3188 = vmatmul.mubr.f32.gmra.mxu0 %v2978
      %v3189 = vpop.f32.mrf.mxu0
      %v3190 = vadd.f32 0.0, %v3189
      %v3191 = vpop.f32.mrf.mxu0
      %3192 = vmatprep.mubr.f32.mxu0 0.0
      %3193 = vmatmul.mubr.f32.gmra.mxu0 %v2981
      %v3194 = vpop.f32.mrf.mxu0
      %v3195 = vadd.f32 0.0, %v3194
      %v3196 = vpop.f32.mrf.mxu0
      %3197 = vmatprep.mubr.f32.mxu0 0.0
      %3198 = vmatmul.mubr.f32.gmra.mxu0 %v2984
      %v3199 = vpop.f32.mrf.mxu0
      %v3200 = vadd.f32 0.0, %v3199
      %v3201 = vpop.f32.mrf.mxu0
      %3202 = vmatprep.mubr.f32.mxu0 0.0
      %3203 = vmatmul.mubr.f32.gmra.mxu0 %v2987
      %v3204 = vpop.f32.mrf.mxu0
      %v3205 = vadd.f32 0.0, %v3204
      %v3206 = vpop.f32.mrf.mxu0
      %3207 = vmatprep.mubr.f32.mxu0 0.0
      %3208 = vmatmul.mubr.f32.gmra.mxu0 %v2990
      %v3209 = vpop.f32.mrf.mxu0
      %v3210 = vadd.f32 0.0, %v3209
      %v3211 = vpop.f32.mrf.mxu0
      %3212 = vmatprep.mubr.f32.mxu0 0.0
      %3213 = vmatmul.mubr.f32.gmra.mxu0 %v2993
      %v3214 = vpop.f32.mrf.mxu0
      %v3215 = vadd.f32 0.0, %v3214
      %v3216 = vpop.f32.mrf.mxu0
      %3217 = vmatprep.mubr.f32.mxu0 0.0
      %3218 = vmatmul.mubr.f32.gmra.mxu0 %v2996
      %v3219 = vpop.f32.mrf.mxu0
      %v3220 = vadd.f32 0.0, %v3219
      %v3221 = vpop.f32.mrf.mxu0
      %3222 = vdwg.mxu0
      %v3223 = vadd.f32 %v2836, %v3065
      %v3224 = vadd.f32 %v2837, %v3070
      %v3225 = vadd.f32 %v2838, %v3075
      %v3226 = vadd.f32 %v2839, %v3080
      %v3227 = vadd.f32 %v2840, %v3085
      %v3228 = vadd.f32 %v2841, %v3090
      %v3229 = vadd.f32 %v2842, %v3095
      %v3230 = vadd.f32 %v2843, %v3100
      %v3231 = vadd.f32 %v2844, %v3105
      %v3232 = vadd.f32 %v2845, %v3110
      %v3233 = vadd.f32 %v2846, %v3115
      %v3234 = vadd.f32 %v2847, %v3120
      %v3235 = vadd.f32 %v2848, %v3125
      %v3236 = vadd.f32 %v2849, %v3130
      %v3237 = vadd.f32 %v2850, %v3135
      %v3238 = vadd.f32 %v2851, %v3140
      %v3239 = vadd.f32 %v2852, %v3145
      %v3240 = vadd.f32 %v2853, %v3150
      %v3241 = vadd.f32 %v2854, %v3155
      %v3242 = vadd.f32 %v2855, %v3160
      %v3243 = vadd.f32 %v2856, %v3165
      %v3244 = vadd.f32 %v2857, %v3170
      %v3245 = vadd.f32 %v2858, %v3175
      %v3246 = vadd.f32 %v2859, %v3180
      %v3247 = vadd.f32 %v2860, %v3185
      %v3248 = vadd.f32 %v2861, %v3190
      %v3249 = vadd.f32 %v2862, %v3195
      %v3250 = vadd.f32 %v2863, %v3200
      %v3251 = vadd.f32 %v2864, %v3205
      %v3252 = vadd.f32 %v2865, %v3210
      %v3253 = vadd.f32 %v2866, %v3215
      %v3254 = vadd.f32 %v2867, %v3220
      %s3255 = scalar_lea.vmem [#allocation2], 48
      %v3256 = vld [vmem:[%s3255] sm:$0xff]
      %v3257 = vld [vmem:[%s3255 + $0x8] sm:$0xff]
      %v3258 = vld [vmem:[%s3255 + $0x18] sm:$0xff]
      %v3259 = vld [vmem:[%s3255 + $0x20] sm:$0xff]
      %v3260 = vld [vmem:[%s3255 + $0x30] sm:$0xff]
      %v3261 = vld [vmem:[%s3255 + $0x38] sm:$0xff]
      %v3262 = vld [vmem:[%s3255 + $0x48] sm:$0xff]
      %v3263 = vld [vmem:[%s3255 + $0x50] sm:$0xff]
      %v3264 = vld [vmem:[%s3255 + $0x60] sm:$0xff]
      %v3265 = vld [vmem:[%s3255 + $0x68] sm:$0xff]
      %v3266 = vld [vmem:[%s3255 + $0x78] sm:$0xff]
      %v3267 = vld [vmem:[%s3255 + $0x80] sm:$0xff]
      %v3268 = vld [vmem:[%s3255 + $0x90] sm:$0xff]
      %v3269 = vld [vmem:[%s3255 + $0x98] sm:$0xff]
      %v3270 = vld [vmem:[%s3255 + $0xa8] sm:$0xff]
      %v3271 = vld [vmem:[%s3255 + $0xb0] sm:$0xff]
      %v3272 = vld [vmem:[%s3255 + $0xc0] sm:$0xff]
      %v3273 = vld [vmem:[%s3255 + $0xc8] sm:$0xff]
      %v3274 = vld [vmem:[%s3255 + $0xd8] sm:$0xff]
      %v3275 = vld [vmem:[%s3255 + $0xe0] sm:$0xff]
      %v3276 = vld [vmem:[%s3255 + $0xf0] sm:$0xff]
      %v3277 = vld [vmem:[%s3255 + $0xf8] sm:$0xff]
      %v3278 = vld [vmem:[%s3255 + $0x108] sm:$0xff]
      %v3279 = vld [vmem:[%s3255 + $0x110] sm:$0xff]
      %v3280 = vld [vmem:[%s3255 + $0x120] sm:$0xff]
      %v3281 = vld [vmem:[%s3255 + $0x128] sm:$0xff]
      %v3282 = vld [vmem:[%s3255 + $0x138] sm:$0xff]
      %v3283 = vld [vmem:[%s3255 + $0x140] sm:$0xff]
      %v3284 = vld [vmem:[%s3255 + $0x150] sm:$0xff]
      %v3285 = vld [vmem:[%s3255 + $0x158] sm:$0xff]
      %v3286 = vld [vmem:[%s3255 + $0x168] sm:$0xff]
      %v3287 = vld [vmem:[%s3255 + $0x170] sm:$0xff]
      %s3288 = scalar_lea.vmem %s3, 48
      %v3289 = vld [vmem:[%s3288] sm:$0xff]
      %v3291 = vsel %vm715, %v3256, 0
      %v3294 = vsel %vm715, %v3257, 0
      %v3297 = vsel %vm715, %v3258, 0
      %v3300 = vsel %vm715, %v3259, 0
      %v3303 = vsel %vm715, %v3260, 0
      %v3306 = vsel %vm715, %v3261, 0
      %v3309 = vsel %vm715, %v3262, 0
      %v3312 = vsel %vm715, %v3263, 0
      %v3315 = vsel %vm715, %v3264, 0
      %v3318 = vsel %vm715, %v3265, 0
      %v3321 = vsel %vm715, %v3266, 0
      %v3324 = vsel %vm715, %v3267, 0
      %v3327 = vsel %vm715, %v3268, 0
      %v3330 = vsel %vm715, %v3269, 0
      %v3333 = vsel %vm715, %v3270, 0
      %v3336 = vsel %vm715, %v3271, 0
      %v3339 = vsel %vm715, %v3272, 0
      %v3342 = vsel %vm715, %v3273, 0
      %v3345 = vsel %vm715, %v3274, 0
      %v3348 = vsel %vm715, %v3275, 0
      %v3351 = vsel %vm715, %v3276, 0
      %v3354 = vsel %vm715, %v3277, 0
      %v3357 = vsel %vm715, %v3278, 0
      %v3360 = vsel %vm715, %v3279, 0
      %v3363 = vsel %vm715, %v3280, 0
      %v3366 = vsel %vm715, %v3281, 0
      %v3369 = vsel %vm715, %v3282, 0
      %v3372 = vsel %vm715, %v3283, 0
      %v3375 = vsel %vm715, %v3284, 0
      %v3378 = vsel %vm715, %v3285, 0
      %v3381 = vsel %vm715, %v3286, 0
      %v3384 = vsel %vm715, %v3287, 0
      %3386 = vmatprep.subr.mxu0 0.0
      %3387 = vmatpush1.msra.mxu0 0.0
      %3388 = vmatprep.subr.mxu0 0.0
      %3389 = vmatpush1.msra.mxu0 0.0
      %3390 = vmatprep.subr.mxu0 0.0
      %3391 = vmatpush1.msra.mxu0 0.0
      %3392 = vmatprep.subr.mxu0 0.0
      %3393 = vmatpush1.msra.mxu0 0.0
      %3394 = vmatprep.subr.mxu0 0.0
      %3395 = vmatpush1.msra.mxu0 0.0
      %3396 = vmatprep.subr.mxu0 0.0
      %3397 = vmatpush1.msra.mxu0 0.0
      %3398 = vmatprep.subr.mxu0 0.0
      %3399 = vmatpush1.msra.mxu0 0.0
      %3400 = vmatprep.subr.mxu0 0.0
      %3401 = vmatpush1.msra.mxu0 0.0
      %3402 = vmatprep.subr.mxu0 0.0
      %3403 = vmatpush1.msra.mxu0 0.0
      %3404 = vmatprep.subr.mxu0 0.0
      %3405 = vmatpush1.msra.mxu0 0.0
      %3406 = vmatprep.subr.mxu0 0.0
      %3407 = vmatpush1.msra.mxu0 0.0
      %3408 = vmatprep.subr.mxu0 0.0
      %3409 = vmatpush1.msra.mxu0 0.0
      %3410 = vmatprep.subr.mxu0 0.0
      %3411 = vmatpush1.msra.mxu0 0.0
      %3412 = vmatprep.subr.mxu0 0.0
      %3413 = vmatpush1.msra.mxu0 0.0
      %3414 = vmatprep.subr.mxu0 0.0
      %3415 = vmatpush1.msra.mxu0 0.0
      %3416 = vmatprep.subr.mxu0 0.0
      %3417 = vmatpush1.msra.mxu0 %v3289
      %3418 = vmatprep.subr.mxu0 0.0
      %3419 = vmatpush2.msra.mxu0 0.0
      %3420 = vmatprep.subr.mxu0 0.0
      %3421 = vmatpush2.msra.mxu0 0.0
      %3422 = vmatprep.subr.mxu0 0.0
      %3423 = vmatpush2.msra.mxu0 0.0
      %3424 = vmatprep.subr.mxu0 0.0
      %3425 = vmatpush2.msra.mxu0 0.0
      %3426 = vmatprep.subr.mxu0 0.0
      %3427 = vmatpush2.msra.mxu0 0.0
      %3428 = vmatprep.subr.mxu0 0.0
      %3429 = vmatpush2.msra.mxu0 0.0
      %3430 = vmatprep.subr.mxu0 0.0
      %3431 = vmatpush2.msra.mxu0 0.0
      %3432 = vmatprep.subr.mxu0 0.0
      %3433 = vmatpush2.msra.mxu0 0.0
      %3434 = vmatprep.subr.mxu0 0.0
      %3435 = vmatpush2.msra.mxu0 0.0
      %3436 = vmatprep.subr.mxu0 0.0
      %3437 = vmatpush2.msra.mxu0 0.0
      %3438 = vmatprep.subr.mxu0 0.0
      %3439 = vmatpush2.msra.mxu0 0.0
      %3440 = vmatprep.subr.mxu0 0.0
      %3441 = vmatpush2.msra.mxu0 0.0
      %3442 = vmatprep.subr.mxu0 0.0
      %3443 = vmatpush2.msra.mxu0 0.0
      %3444 = vmatprep.subr.mxu0 0.0
      %3445 = vmatpush2.msra.mxu0 0.0
      %3446 = vmatprep.subr.mxu0 0.0
      %3447 = vmatpush2.msra.mxu0 0.0
      %3448 = vmatprep.subr.mxu0 0.0
      %3449 = vmatpush2.msra.mxu0 0.0
      %3450 = vmatprep.mubr.f32.mxu0 0.0
      %3451 = vmatmul.mubr.f32.gmra.mxu0 %v3291
      %v3452 = vpop.f32.mrf.mxu0
      %v3453 = vadd.f32 0.0, %v3452
      %v3454 = vpop.f32.mrf.mxu0
      %3455 = vmatprep.mubr.f32.mxu0 0.0
      %3456 = vmatmul.mubr.f32.gmra.mxu0 %v3294
      %v3457 = vpop.f32.mrf.mxu0
      %v3458 = vadd.f32 0.0, %v3457
      %v3459 = vpop.f32.mrf.mxu0
      %3460 = vmatprep.mubr.f32.mxu0 0.0
      %3461 = vmatmul.mubr.f32.gmra.mxu0 %v3297
      %v3462 = vpop.f32.mrf.mxu0
      %v3463 = vadd.f32 0.0, %v3462
      %v3464 = vpop.f32.mrf.mxu0
      %3465 = vmatprep.mubr.f32.mxu0 0.0
      %3466 = vmatmul.mubr.f32.gmra.mxu0 %v3300
      %v3467 = vpop.f32.mrf.mxu0
      %v3468 = vadd.f32 0.0, %v3467
      %v3469 = vpop.f32.mrf.mxu0
      %3470 = vmatprep.mubr.f32.mxu0 0.0
      %3471 = vmatmul.mubr.f32.gmra.mxu0 %v3303
      %v3472 = vpop.f32.mrf.mxu0
      %v3473 = vadd.f32 0.0, %v3472
      %v3474 = vpop.f32.mrf.mxu0
      %3475 = vmatprep.mubr.f32.mxu0 0.0
      %3476 = vmatmul.mubr.f32.gmra.mxu0 %v3306
      %v3477 = vpop.f32.mrf.mxu0
      %v3478 = vadd.f32 0.0, %v3477
      %v3479 = vpop.f32.mrf.mxu0
      %3480 = vmatprep.mubr.f32.mxu0 0.0
      %3481 = vmatmul.mubr.f32.gmra.mxu0 %v3309
      %v3482 = vpop.f32.mrf.mxu0
      %v3483 = vadd.f32 0.0, %v3482
      %v3484 = vpop.f32.mrf.mxu0
      %3485 = vmatprep.mubr.f32.mxu0 0.0
      %3486 = vmatmul.mubr.f32.gmra.mxu0 %v3312
      %v3487 = vpop.f32.mrf.mxu0
      %v3488 = vadd.f32 0.0, %v3487
      %v3489 = vpop.f32.mrf.mxu0
      %3490 = vmatprep.mubr.f32.mxu0 0.0
      %3491 = vmatmul.mubr.f32.gmra.mxu0 %v3315
      %v3492 = vpop.f32.mrf.mxu0
      %v3493 = vadd.f32 0.0, %v3492
      %v3494 = vpop.f32.mrf.mxu0
      %3495 = vmatprep.mubr.f32.mxu0 0.0
      %3496 = vmatmul.mubr.f32.gmra.mxu0 %v3318
      %v3497 = vpop.f32.mrf.mxu0
      %v3498 = vadd.f32 0.0, %v3497
      %v3499 = vpop.f32.mrf.mxu0
      %3500 = vmatprep.mubr.f32.mxu0 0.0
      %3501 = vmatmul.mubr.f32.gmra.mxu0 %v3321
      %v3502 = vpop.f32.mrf.mxu0
      %v3503 = vadd.f32 0.0, %v3502
      %v3504 = vpop.f32.mrf.mxu0
      %3505 = vmatprep.mubr.f32.mxu0 0.0
      %3506 = vmatmul.mubr.f32.gmra.mxu0 %v3324
      %v3507 = vpop.f32.mrf.mxu0
      %v3508 = vadd.f32 0.0, %v3507
      %v3509 = vpop.f32.mrf.mxu0
      %3510 = vmatprep.mubr.f32.mxu0 0.0
      %3511 = vmatmul.mubr.f32.gmra.mxu0 %v3327
      %v3512 = vpop.f32.mrf.mxu0
      %v3513 = vadd.f32 0.0, %v3512
      %v3514 = vpop.f32.mrf.mxu0
      %3515 = vmatprep.mubr.f32.mxu0 0.0
      %3516 = vmatmul.mubr.f32.gmra.mxu0 %v3330
      %v3517 = vpop.f32.mrf.mxu0
      %v3518 = vadd.f32 0.0, %v3517
      %v3519 = vpop.f32.mrf.mxu0
      %3520 = vmatprep.mubr.f32.mxu0 0.0
      %3521 = vmatmul.mubr.f32.gmra.mxu0 %v3333
      %v3522 = vpop.f32.mrf.mxu0
      %v3523 = vadd.f32 0.0, %v3522
      %v3524 = vpop.f32.mrf.mxu0
      %3525 = vmatprep.mubr.f32.mxu0 0.0
      %3526 = vmatmul.mubr.f32.gmra.mxu0 %v3336
      %v3527 = vpop.f32.mrf.mxu0
      %v3528 = vadd.f32 0.0, %v3527
      %v3529 = vpop.f32.mrf.mxu0
      %3530 = vmatprep.mubr.f32.mxu0 0.0
      %3531 = vmatmul.mubr.f32.gmra.mxu0 %v3339
      %v3532 = vpop.f32.mrf.mxu0
      %v3533 = vadd.f32 0.0, %v3532
      %v3534 = vpop.f32.mrf.mxu0
      %3535 = vmatprep.mubr.f32.mxu0 0.0
      %3536 = vmatmul.mubr.f32.gmra.mxu0 %v3342
      %v3537 = vpop.f32.mrf.mxu0
      %v3538 = vadd.f32 0.0, %v3537
      %v3539 = vpop.f32.mrf.mxu0
      %3540 = vmatprep.mubr.f32.mxu0 0.0
      %3541 = vmatmul.mubr.f32.gmra.mxu0 %v3345
      %v3542 = vpop.f32.mrf.mxu0
      %v3543 = vadd.f32 0.0, %v3542
      %v3544 = vpop.f32.mrf.mxu0
      %3545 = vmatprep.mubr.f32.mxu0 0.0
      %3546 = vmatmul.mubr.f32.gmra.mxu0 %v3348
      %v3547 = vpop.f32.mrf.mxu0
      %v3548 = vadd.f32 0.0, %v3547
      %v3549 = vpop.f32.mrf.mxu0
      %3550 = vmatprep.mubr.f32.mxu0 0.0
      %3551 = vmatmul.mubr.f32.gmra.mxu0 %v3351
      %v3552 = vpop.f32.mrf.mxu0
      %v3553 = vadd.f32 0.0, %v3552
      %v3554 = vpop.f32.mrf.mxu0
      %3555 = vmatprep.mubr.f32.mxu0 0.0
      %3556 = vmatmul.mubr.f32.gmra.mxu0 %v3354
      %v3557 = vpop.f32.mrf.mxu0
      %v3558 = vadd.f32 0.0, %v3557
      %v3559 = vpop.f32.mrf.mxu0
      %3560 = vmatprep.mubr.f32.mxu0 0.0
      %3561 = vmatmul.mubr.f32.gmra.mxu0 %v3357
      %v3562 = vpop.f32.mrf.mxu0
      %v3563 = vadd.f32 0.0, %v3562
      %v3564 = vpop.f32.mrf.mxu0
      %3565 = vmatprep.mubr.f32.mxu0 0.0
      %3566 = vmatmul.mubr.f32.gmra.mxu0 %v3360
      %v3567 = vpop.f32.mrf.mxu0
      %v3568 = vadd.f32 0.0, %v3567
      %v3569 = vpop.f32.mrf.mxu0
      %3570 = vmatprep.mubr.f32.mxu0 0.0
      %3571 = vmatmul.mubr.f32.gmra.mxu0 %v3363
      %v3572 = vpop.f32.mrf.mxu0
      %v3573 = vadd.f32 0.0, %v3572
      %v3574 = vpop.f32.mrf.mxu0
      %3575 = vmatprep.mubr.f32.mxu0 0.0
      %3576 = vmatmul.mubr.f32.gmra.mxu0 %v3366
      %v3577 = vpop.f32.mrf.mxu0
      %v3578 = vadd.f32 0.0, %v3577
      %v3579 = vpop.f32.mrf.mxu0
      %3580 = vmatprep.mubr.f32.mxu0 0.0
      %3581 = vmatmul.mubr.f32.gmra.mxu0 %v3369
      %v3582 = vpop.f32.mrf.mxu0
      %v3583 = vadd.f32 0.0, %v3582
      %v3584 = vpop.f32.mrf.mxu0
      %3585 = vmatprep.mubr.f32.mxu0 0.0
      %3586 = vmatmul.mubr.f32.gmra.mxu0 %v3372
      %v3587 = vpop.f32.mrf.mxu0
      %v3588 = vadd.f32 0.0, %v3587
      %v3589 = vpop.f32.mrf.mxu0
      %3590 = vmatprep.mubr.f32.mxu0 0.0
      %3591 = vmatmul.mubr.f32.gmra.mxu0 %v3375
      %v3592 = vpop.f32.mrf.mxu0
      %v3593 = vadd.f32 0.0, %v3592
      %v3594 = vpop.f32.mrf.mxu0
      %3595 = vmatprep.mubr.f32.mxu0 0.0
      %3596 = vmatmul.mubr.f32.gmra.mxu0 %v3378
      %v3597 = vpop.f32.mrf.mxu0
      %v3598 = vadd.f32 0.0, %v3597
      %v3599 = vpop.f32.mrf.mxu0
      %3600 = vmatprep.mubr.f32.mxu0 0.0
      %3601 = vmatmul.mubr.f32.gmra.mxu0 %v3381
      %v3602 = vpop.f32.mrf.mxu0
      %v3603 = vadd.f32 0.0, %v3602
      %v3604 = vpop.f32.mrf.mxu0
      %3605 = vmatprep.mubr.f32.mxu0 0.0
      %3606 = vmatmul.mubr.f32.gmra.mxu0 %v3384
      %v3607 = vpop.f32.mrf.mxu0
      %v3608 = vadd.f32 0.0, %v3607
      %v3609 = vpop.f32.mrf.mxu0
      %3610 = vdwg.mxu0
      %v3611 = vadd.f32 %v3223, %v3453
      %v3612 = vadd.f32 %v3224, %v3458
      %v3613 = vadd.f32 %v3225, %v3463
      %v3614 = vadd.f32 %v3226, %v3468
      %v3615 = vadd.f32 %v3227, %v3473
      %v3616 = vadd.f32 %v3228, %v3478
      %v3617 = vadd.f32 %v3229, %v3483
      %v3618 = vadd.f32 %v3230, %v3488
      %v3619 = vadd.f32 %v3231, %v3493
      %v3620 = vadd.f32 %v3232, %v3498
      %v3621 = vadd.f32 %v3233, %v3503
      %v3622 = vadd.f32 %v3234, %v3508
      %v3623 = vadd.f32 %v3235, %v3513
      %v3624 = vadd.f32 %v3236, %v3518
      %v3625 = vadd.f32 %v3237, %v3523
      %v3626 = vadd.f32 %v3238, %v3528
      %v3627 = vadd.f32 %v3239, %v3533
      %v3628 = vadd.f32 %v3240, %v3538
      %v3629 = vadd.f32 %v3241, %v3543
      %v3630 = vadd.f32 %v3242, %v3548
      %v3631 = vadd.f32 %v3243, %v3553
      %v3632 = vadd.f32 %v3244, %v3558
      %v3633 = vadd.f32 %v3245, %v3563
      %v3634 = vadd.f32 %v3246, %v3568
      %v3635 = vadd.f32 %v3247, %v3573
      %v3636 = vadd.f32 %v3248, %v3578
      %v3637 = vadd.f32 %v3249, %v3583
      %v3638 = vadd.f32 %v3250, %v3588
      %v3639 = vadd.f32 %v3251, %v3593
      %v3640 = vadd.f32 %v3252, %v3598
      %v3641 = vadd.f32 %v3253, %v3603
      %v3642 = vadd.f32 %v3254, %v3608
      %v3643 = vld [vmem:[%s3255 + $0x1] sm:$0xff]
      %v3644 = vld [vmem:[%s3255 + $0x9] sm:$0xff]
      %v3645 = vld [vmem:[%s3255 + $0x19] sm:$0xff]
      %v3646 = vld [vmem:[%s3255 + $0x21] sm:$0xff]
      %v3647 = vld [vmem:[%s3255 + $0x31] sm:$0xff]
      %v3648 = vld [vmem:[%s3255 + $0x39] sm:$0xff]
      %v3649 = vld [vmem:[%s3255 + $0x49] sm:$0xff]
      %v3650 = vld [vmem:[%s3255 + $0x51] sm:$0xff]
      %v3651 = vld [vmem:[%s3255 + $0x61] sm:$0xff]
      %v3652 = vld [vmem:[%s3255 + $0x69] sm:$0xff]
      %v3653 = vld [vmem:[%s3255 + $0x79] sm:$0xff]
      %v3654 = vld [vmem:[%s3255 + $0x81] sm:$0xff]
      %v3655 = vld [vmem:[%s3255 + $0x91] sm:$0xff]
      %v3656 = vld [vmem:[%s3255 + $0x99] sm:$0xff]
      %v3657 = vld [vmem:[%s3255 + $0xa9] sm:$0xff]
      %v3658 = vld [vmem:[%s3255 + $0xb1] sm:$0xff]
      %v3659 = vld [vmem:[%s3255 + $0xc1] sm:$0xff]
      %v3660 = vld [vmem:[%s3255 + $0xc9] sm:$0xff]
      %v3661 = vld [vmem:[%s3255 + $0xd9] sm:$0xff]
      %v3662 = vld [vmem:[%s3255 + $0xe1] sm:$0xff]
      %v3663 = vld [vmem:[%s3255 + $0xf1] sm:$0xff]
      %v3664 = vld [vmem:[%s3255 + $0xf9] sm:$0xff]
      %v3665 = vld [vmem:[%s3255 + $0x109] sm:$0xff]
      %v3666 = vld [vmem:[%s3255 + $0x111] sm:$0xff]
      %v3667 = vld [vmem:[%s3255 + $0x121] sm:$0xff]
      %v3668 = vld [vmem:[%s3255 + $0x129] sm:$0xff]
      %v3669 = vld [vmem:[%s3255 + $0x139] sm:$0xff]
      %v3670 = vld [vmem:[%s3255 + $0x141] sm:$0xff]
      %v3671 = vld [vmem:[%s3255 + $0x151] sm:$0xff]
      %v3672 = vld [vmem:[%s3255 + $0x159] sm:$0xff]
      %v3673 = vld [vmem:[%s3255 + $0x169] sm:$0xff]
      %v3674 = vld [vmem:[%s3255 + $0x171] sm:$0xff]
      %s3675 = scalar_lea.vmem %s3, 56
      %v3676 = vld [vmem:[%s3675] sm:$0xff]
      %v3678 = vsel %vm715, %v3643, 0
      %v3681 = vsel %vm715, %v3644, 0
      %v3684 = vsel %vm715, %v3645, 0
      %v3687 = vsel %vm715, %v3646, 0
      %v3690 = vsel %vm715, %v3647, 0
      %v3693 = vsel %vm715, %v3648, 0
      %v3696 = vsel %vm715, %v3649, 0
      %v3699 = vsel %vm715, %v3650, 0
      %v3702 = vsel %vm715, %v3651, 0
      %v3705 = vsel %vm715, %v3652, 0
      %v3708 = vsel %vm715, %v3653, 0
      %v3711 = vsel %vm715, %v3654, 0
      %v3714 = vsel %vm715, %v3655, 0
      %v3717 = vsel %vm715, %v3656, 0
      %v3720 = vsel %vm715, %v3657, 0
      %v3723 = vsel %vm715, %v3658, 0
      %v3726 = vsel %vm715, %v3659, 0
      %v3729 = vsel %vm715, %v3660, 0
      %v3732 = vsel %vm715, %v3661, 0
      %v3735 = vsel %vm715, %v3662, 0
      %v3738 = vsel %vm715, %v3663, 0
      %v3741 = vsel %vm715, %v3664, 0
      %v3744 = vsel %vm715, %v3665, 0
      %v3747 = vsel %vm715, %v3666, 0
      %v3750 = vsel %vm715, %v3667, 0
      %v3753 = vsel %vm715, %v3668, 0
      %v3756 = vsel %vm715, %v3669, 0
      %v3759 = vsel %vm715, %v3670, 0
      %v3762 = vsel %vm715, %v3671, 0
      %v3765 = vsel %vm715, %v3672, 0
      %v3768 = vsel %vm715, %v3673, 0
      %v3771 = vsel %vm715, %v3674, 0
      %3773 = vmatprep.subr.mxu0 0.0
      %3774 = vmatpush1.msra.mxu0 0.0
      %3775 = vmatprep.subr.mxu0 0.0
      %3776 = vmatpush1.msra.mxu0 0.0
      %3777 = vmatprep.subr.mxu0 0.0
      %3778 = vmatpush1.msra.mxu0 0.0
      %3779 = vmatprep.subr.mxu0 0.0
      %3780 = vmatpush1.msra.mxu0 0.0
      %3781 = vmatprep.subr.mxu0 0.0
      %3782 = vmatpush1.msra.mxu0 0.0
      %3783 = vmatprep.subr.mxu0 0.0
      %3784 = vmatpush1.msra.mxu0 0.0
      %3785 = vmatprep.subr.mxu0 0.0
      %3786 = vmatpush1.msra.mxu0 0.0
      %3787 = vmatprep.subr.mxu0 0.0
      %3788 = vmatpush1.msra.mxu0 0.0
      %3789 = vmatprep.subr.mxu0 0.0
      %3790 = vmatpush1.msra.mxu0 0.0
      %3791 = vmatprep.subr.mxu0 0.0
      %3792 = vmatpush1.msra.mxu0 0.0
      %3793 = vmatprep.subr.mxu0 0.0
      %3794 = vmatpush1.msra.mxu0 0.0
      %3795 = vmatprep.subr.mxu0 0.0
      %3796 = vmatpush1.msra.mxu0 0.0
      %3797 = vmatprep.subr.mxu0 0.0
      %3798 = vmatpush1.msra.mxu0 0.0
      %3799 = vmatprep.subr.mxu0 0.0
      %3800 = vmatpush1.msra.mxu0 0.0
      %3801 = vmatprep.subr.mxu0 0.0
      %3802 = vmatpush1.msra.mxu0 0.0
      %3803 = vmatprep.subr.mxu0 0.0
      %3804 = vmatpush1.msra.mxu0 %v3676
      %3805 = vmatprep.subr.mxu0 0.0
      %3806 = vmatpush2.msra.mxu0 0.0
      %3807 = vmatprep.subr.mxu0 0.0
      %3808 = vmatpush2.msra.mxu0 0.0
      %3809 = vmatprep.subr.mxu0 0.0
      %3810 = vmatpush2.msra.mxu0 0.0
      %3811 = vmatprep.subr.mxu0 0.0
      %3812 = vmatpush2.msra.mxu0 0.0
      %3813 = vmatprep.subr.mxu0 0.0
      %3814 = vmatpush2.msra.mxu0 0.0
      %3815 = vmatprep.subr.mxu0 0.0
      %3816 = vmatpush2.msra.mxu0 0.0
      %3817 = vmatprep.subr.mxu0 0.0
      %3818 = vmatpush2.msra.mxu0 0.0
      %3819 = vmatprep.subr.mxu0 0.0
      %3820 = vmatpush2.msra.mxu0 0.0
      %3821 = vmatprep.subr.mxu0 0.0
      %3822 = vmatpush2.msra.mxu0 0.0
      %3823 = vmatprep.subr.mxu0 0.0
      %3824 = vmatpush2.msra.mxu0 0.0
      %3825 = vmatprep.subr.mxu0 0.0
      %3826 = vmatpush2.msra.mxu0 0.0
      %3827 = vmatprep.subr.mxu0 0.0
      %3828 = vmatpush2.msra.mxu0 0.0
      %3829 = vmatprep.subr.mxu0 0.0
      %3830 = vmatpush2.msra.mxu0 0.0
      %3831 = vmatprep.subr.mxu0 0.0
      %3832 = vmatpush2.msra.mxu0 0.0
      %3833 = vmatprep.subr.mxu0 0.0
      %3834 = vmatpush2.msra.mxu0 0.0
      %3835 = vmatprep.subr.mxu0 0.0
      %3836 = vmatpush2.msra.mxu0 0.0
      %3837 = vmatprep.mubr.f32.mxu0 0.0
      %3838 = vmatmul.mubr.f32.gmra.mxu0 %v3678
      %v3839 = vpop.f32.mrf.mxu0
      %v3840 = vadd.f32 0.0, %v3839
      %v3841 = vpop.f32.mrf.mxu0
      %3842 = vmatprep.mubr.f32.mxu0 0.0
      %3843 = vmatmul.mubr.f32.gmra.mxu0 %v3681
      %v3844 = vpop.f32.mrf.mxu0
      %v3845 = vadd.f32 0.0, %v3844
      %v3846 = vpop.f32.mrf.mxu0
      %3847 = vmatprep.mubr.f32.mxu0 0.0
      %3848 = vmatmul.mubr.f32.gmra.mxu0 %v3684
      %v3849 = vpop.f32.mrf.mxu0
      %v3850 = vadd.f32 0.0, %v3849
      %v3851 = vpop.f32.mrf.mxu0
      %3852 = vmatprep.mubr.f32.mxu0 0.0
      %3853 = vmatmul.mubr.f32.gmra.mxu0 %v3687
      %v3854 = vpop.f32.mrf.mxu0
      %v3855 = vadd.f32 0.0, %v3854
      %v3856 = vpop.f32.mrf.mxu0
      %3857 = vmatprep.mubr.f32.mxu0 0.0
      %3858 = vmatmul.mubr.f32.gmra.mxu0 %v3690
      %v3859 = vpop.f32.mrf.mxu0
      %v3860 = vadd.f32 0.0, %v3859
      %v3861 = vpop.f32.mrf.mxu0
      %3862 = vmatprep.mubr.f32.mxu0 0.0
      %3863 = vmatmul.mubr.f32.gmra.mxu0 %v3693
      %v3864 = vpop.f32.mrf.mxu0
      %v3865 = vadd.f32 0.0, %v3864
      %v3866 = vpop.f32.mrf.mxu0
      %3867 = vmatprep.mubr.f32.mxu0 0.0
      %3868 = vmatmul.mubr.f32.gmra.mxu0 %v3696
      %v3869 = vpop.f32.mrf.mxu0
      %v3870 = vadd.f32 0.0, %v3869
      %v3871 = vpop.f32.mrf.mxu0
      %3872 = vmatprep.mubr.f32.mxu0 0.0
      %3873 = vmatmul.mubr.f32.gmra.mxu0 %v3699
      %v3874 = vpop.f32.mrf.mxu0
      %v3875 = vadd.f32 0.0, %v3874
      %v3876 = vpop.f32.mrf.mxu0
      %3877 = vmatprep.mubr.f32.mxu0 0.0
      %3878 = vmatmul.mubr.f32.gmra.mxu0 %v3702
      %v3879 = vpop.f32.mrf.mxu0
      %v3880 = vadd.f32 0.0, %v3879
      %v3881 = vpop.f32.mrf.mxu0
      %3882 = vmatprep.mubr.f32.mxu0 0.0
      %3883 = vmatmul.mubr.f32.gmra.mxu0 %v3705
      %v3884 = vpop.f32.mrf.mxu0
      %v3885 = vadd.f32 0.0, %v3884
      %v3886 = vpop.f32.mrf.mxu0
      %3887 = vmatprep.mubr.f32.mxu0 0.0
      %3888 = vmatmul.mubr.f32.gmra.mxu0 %v3708
      %v3889 = vpop.f32.mrf.mxu0
      %v3890 = vadd.f32 0.0, %v3889
      %v3891 = vpop.f32.mrf.mxu0
      %3892 = vmatprep.mubr.f32.mxu0 0.0
      %3893 = vmatmul.mubr.f32.gmra.mxu0 %v3711
      %v3894 = vpop.f32.mrf.mxu0
      %v3895 = vadd.f32 0.0, %v3894
      %v3896 = vpop.f32.mrf.mxu0
      %3897 = vmatprep.mubr.f32.mxu0 0.0
      %3898 = vmatmul.mubr.f32.gmra.mxu0 %v3714
      %v3899 = vpop.f32.mrf.mxu0
      %v3900 = vadd.f32 0.0, %v3899
      %v3901 = vpop.f32.mrf.mxu0
      %3902 = vmatprep.mubr.f32.mxu0 0.0
      %3903 = vmatmul.mubr.f32.gmra.mxu0 %v3717
      %v3904 = vpop.f32.mrf.mxu0
      %v3905 = vadd.f32 0.0, %v3904
      %v3906 = vpop.f32.mrf.mxu0
      %3907 = vmatprep.mubr.f32.mxu0 0.0
      %3908 = vmatmul.mubr.f32.gmra.mxu0 %v3720
      %v3909 = vpop.f32.mrf.mxu0
      %v3910 = vadd.f32 0.0, %v3909
      %v3911 = vpop.f32.mrf.mxu0
      %3912 = vmatprep.mubr.f32.mxu0 0.0
      %3913 = vmatmul.mubr.f32.gmra.mxu0 %v3723
      %v3914 = vpop.f32.mrf.mxu0
      %v3915 = vadd.f32 0.0, %v3914
      %v3916 = vpop.f32.mrf.mxu0
      %3917 = vmatprep.mubr.f32.mxu0 0.0
      %3918 = vmatmul.mubr.f32.gmra.mxu0 %v3726
      %v3919 = vpop.f32.mrf.mxu0
      %v3920 = vadd.f32 0.0, %v3919
      %v3921 = vpop.f32.mrf.mxu0
      %3922 = vmatprep.mubr.f32.mxu0 0.0
      %3923 = vmatmul.mubr.f32.gmra.mxu0 %v3729
      %v3924 = vpop.f32.mrf.mxu0
      %v3925 = vadd.f32 0.0, %v3924
      %v3926 = vpop.f32.mrf.mxu0
      %3927 = vmatprep.mubr.f32.mxu0 0.0
      %3928 = vmatmul.mubr.f32.gmra.mxu0 %v3732
      %v3929 = vpop.f32.mrf.mxu0
      %v3930 = vadd.f32 0.0, %v3929
      %v3931 = vpop.f32.mrf.mxu0
      %3932 = vmatprep.mubr.f32.mxu0 0.0
      %3933 = vmatmul.mubr.f32.gmra.mxu0 %v3735
      %v3934 = vpop.f32.mrf.mxu0
      %v3935 = vadd.f32 0.0, %v3934
      %v3936 = vpop.f32.mrf.mxu0
      %3937 = vmatprep.mubr.f32.mxu0 0.0
      %3938 = vmatmul.mubr.f32.gmra.mxu0 %v3738
      %v3939 = vpop.f32.mrf.mxu0
      %v3940 = vadd.f32 0.0, %v3939
      %v3941 = vpop.f32.mrf.mxu0
      %3942 = vmatprep.mubr.f32.mxu0 0.0
      %3943 = vmatmul.mubr.f32.gmra.mxu0 %v3741
      %v3944 = vpop.f32.mrf.mxu0
      %v3945 = vadd.f32 0.0, %v3944
      %v3946 = vpop.f32.mrf.mxu0
      %3947 = vmatprep.mubr.f32.mxu0 0.0
      %3948 = vmatmul.mubr.f32.gmra.mxu0 %v3744
      %v3949 = vpop.f32.mrf.mxu0
      %v3950 = vadd.f32 0.0, %v3949
      %v3951 = vpop.f32.mrf.mxu0
      %3952 = vmatprep.mubr.f32.mxu0 0.0
      %3953 = vmatmul.mubr.f32.gmra.mxu0 %v3747
      %v3954 = vpop.f32.mrf.mxu0
      %v3955 = vadd.f32 0.0, %v3954
      %v3956 = vpop.f32.mrf.mxu0
      %3957 = vmatprep.mubr.f32.mxu0 0.0
      %3958 = vmatmul.mubr.f32.gmra.mxu0 %v3750
      %v3959 = vpop.f32.mrf.mxu0
      %v3960 = vadd.f32 0.0, %v3959
      %v3961 = vpop.f32.mrf.mxu0
      %3962 = vmatprep.mubr.f32.mxu0 0.0
      %3963 = vmatmul.mubr.f32.gmra.mxu0 %v3753
      %v3964 = vpop.f32.mrf.mxu0
      %v3965 = vadd.f32 0.0, %v3964
      %v3966 = vpop.f32.mrf.mxu0
      %3967 = vmatprep.mubr.f32.mxu0 0.0
      %3968 = vmatmul.mubr.f32.gmra.mxu0 %v3756
      %v3969 = vpop.f32.mrf.mxu0
      %v3970 = vadd.f32 0.0, %v3969
      %v3971 = vpop.f32.mrf.mxu0
      %3972 = vmatprep.mubr.f32.mxu0 0.0
      %3973 = vmatmul.mubr.f32.gmra.mxu0 %v3759
      %v3974 = vpop.f32.mrf.mxu0
      %v3975 = vadd.f32 0.0, %v3974
      %v3976 = vpop.f32.mrf.mxu0
      %3977 = vmatprep.mubr.f32.mxu0 0.0
      %3978 = vmatmul.mubr.f32.gmra.mxu0 %v3762
      %v3979 = vpop.f32.mrf.mxu0
      %v3980 = vadd.f32 0.0, %v3979
      %v3981 = vpop.f32.mrf.mxu0
      %3982 = vmatprep.mubr.f32.mxu0 0.0
      %3983 = vmatmul.mubr.f32.gmra.mxu0 %v3765
      %v3984 = vpop.f32.mrf.mxu0
      %v3985 = vadd.f32 0.0, %v3984
      %v3986 = vpop.f32.mrf.mxu0
      %3987 = vmatprep.mubr.f32.mxu0 0.0
      %3988 = vmatmul.mubr.f32.gmra.mxu0 %v3768
      %v3989 = vpop.f32.mrf.mxu0
      %v3990 = vadd.f32 0.0, %v3989
      %v3991 = vpop.f32.mrf.mxu0
      %3992 = vmatprep.mubr.f32.mxu0 0.0
      %3993 = vmatmul.mubr.f32.gmra.mxu0 %v3771
      %v3994 = vpop.f32.mrf.mxu0
      %v3995 = vadd.f32 0.0, %v3994
      %v3996 = vpop.f32.mrf.mxu0
      %3997 = vdwg.mxu0
      %v3998 = vadd.f32 %v3611, %v3840
      %v3999 = vadd.f32 %v3612, %v3845
      %v4000 = vadd.f32 %v3613, %v3850
      %v4001 = vadd.f32 %v3614, %v3855
      %v4002 = vadd.f32 %v3615, %v3860
      %v4003 = vadd.f32 %v3616, %v3865
      %v4004 = vadd.f32 %v3617, %v3870
      %v4005 = vadd.f32 %v3618, %v3875
      %v4006 = vadd.f32 %v3619, %v3880
      %v4007 = vadd.f32 %v3620, %v3885
      %v4008 = vadd.f32 %v3621, %v3890
      %v4009 = vadd.f32 %v3622, %v3895
      %v4010 = vadd.f32 %v3623, %v3900
      %v4011 = vadd.f32 %v3624, %v3905
      %v4012 = vadd.f32 %v3625, %v3910
      %v4013 = vadd.f32 %v3626, %v3915
      %v4014 = vadd.f32 %v3627, %v3920
      %v4015 = vadd.f32 %v3628, %v3925
      %v4016 = vadd.f32 %v3629, %v3930
      %v4017 = vadd.f32 %v3630, %v3935
      %v4018 = vadd.f32 %v3631, %v3940
      %v4019 = vadd.f32 %v3632, %v3945
      %v4020 = vadd.f32 %v3633, %v3950
      %v4021 = vadd.f32 %v3634, %v3955
      %v4022 = vadd.f32 %v3635, %v3960
      %v4023 = vadd.f32 %v3636, %v3965
      %v4024 = vadd.f32 %v3637, %v3970
      %v4025 = vadd.f32 %v3638, %v3975
      %v4026 = vadd.f32 %v3639, %v3980
      %v4027 = vadd.f32 %v3640, %v3985
      %v4028 = vadd.f32 %v3641, %v3990
      %v4029 = vadd.f32 %v3642, %v3995
      %v4030 = vld [vmem:[%s3255 + $0x2] sm:$0xff]
      %v4031 = vld [vmem:[%s3255 + $0xa] sm:$0xff]
      %v4032 = vld [vmem:[%s3255 + $0x1a] sm:$0xff]
      %v4033 = vld [vmem:[%s3255 + $0x22] sm:$0xff]
      %v4034 = vld [vmem:[%s3255 + $0x32] sm:$0xff]
      %v4035 = vld [vmem:[%s3255 + $0x3a] sm:$0xff]
      %v4036 = vld [vmem:[%s3255 + $0x4a] sm:$0xff]
      %v4037 = vld [vmem:[%s3255 + $0x52] sm:$0xff]
      %v4038 = vld [vmem:[%s3255 + $0x62] sm:$0xff]
      %v4039 = vld [vmem:[%s3255 + $0x6a] sm:$0xff]
      %v4040 = vld [vmem:[%s3255 + $0x7a] sm:$0xff]
      %v4041 = vld [vmem:[%s3255 + $0x82] sm:$0xff]
      %v4042 = vld [vmem:[%s3255 + $0x92] sm:$0xff]
      %v4043 = vld [vmem:[%s3255 + $0x9a] sm:$0xff]
      %v4044 = vld [vmem:[%s3255 + $0xaa] sm:$0xff]
      %v4045 = vld [vmem:[%s3255 + $0xb2] sm:$0xff]
      %v4046 = vld [vmem:[%s3255 + $0xc2] sm:$0xff]
      %v4047 = vld [vmem:[%s3255 + $0xca] sm:$0xff]
      %v4048 = vld [vmem:[%s3255 + $0xda] sm:$0xff]
      %v4049 = vld [vmem:[%s3255 + $0xe2] sm:$0xff]
      %v4050 = vld [vmem:[%s3255 + $0xf2] sm:$0xff]
      %v4051 = vld [vmem:[%s3255 + $0xfa] sm:$0xff]
      %v4052 = vld [vmem:[%s3255 + $0x10a] sm:$0xff]
      %v4053 = vld [vmem:[%s3255 + $0x112] sm:$0xff]
      %v4054 = vld [vmem:[%s3255 + $0x122] sm:$0xff]
      %v4055 = vld [vmem:[%s3255 + $0x12a] sm:$0xff]
      %v4056 = vld [vmem:[%s3255 + $0x13a] sm:$0xff]
      %v4057 = vld [vmem:[%s3255 + $0x142] sm:$0xff]
      %v4058 = vld [vmem:[%s3255 + $0x152] sm:$0xff]
      %v4059 = vld [vmem:[%s3255 + $0x15a] sm:$0xff]
      %v4060 = vld [vmem:[%s3255 + $0x16a] sm:$0xff]
      %v4061 = vld [vmem:[%s3255 + $0x172] sm:$0xff]
      %s4062 = scalar_lea.vmem %s3, 64
      %v4063 = vld [vmem:[%s4062] sm:$0xff]
      %v4065 = vsel %vm715, %v4030, 0
      %v4068 = vsel %vm715, %v4031, 0
      %v4071 = vsel %vm715, %v4032, 0
      %v4074 = vsel %vm715, %v4033, 0
      %v4077 = vsel %vm715, %v4034, 0
      %v4080 = vsel %vm715, %v4035, 0
      %v4083 = vsel %vm715, %v4036, 0
      %v4086 = vsel %vm715, %v4037, 0
      %v4089 = vsel %vm715, %v4038, 0
      %v4092 = vsel %vm715, %v4039, 0
      %v4095 = vsel %vm715, %v4040, 0
      %v4098 = vsel %vm715, %v4041, 0
      %v4101 = vsel %vm715, %v4042, 0
      %v4104 = vsel %vm715, %v4043, 0
      %v4107 = vsel %vm715, %v4044, 0
      %v4110 = vsel %vm715, %v4045, 0
      %v4113 = vsel %vm715, %v4046, 0
      %v4116 = vsel %vm715, %v4047, 0
      %v4119 = vsel %vm715, %v4048, 0
      %v4122 = vsel %vm715, %v4049, 0
      %v4125 = vsel %vm715, %v4050, 0
      %v4128 = vsel %vm715, %v4051, 0
      %v4131 = vsel %vm715, %v4052, 0
      %v4134 = vsel %vm715, %v4053, 0
      %v4137 = vsel %vm715, %v4054, 0
      %v4140 = vsel %vm715, %v4055, 0
      %v4143 = vsel %vm715, %v4056, 0
      %v4146 = vsel %vm715, %v4057, 0
      %v4149 = vsel %vm715, %v4058, 0
      %v4152 = vsel %vm715, %v4059, 0
      %v4155 = vsel %vm715, %v4060, 0
      %v4158 = vsel %vm715, %v4061, 0
      %4160 = vmatprep.subr.mxu0 0.0
      %4161 = vmatpush1.msra.mxu0 0.0
      %4162 = vmatprep.subr.mxu0 0.0
      %4163 = vmatpush1.msra.mxu0 0.0
      %4164 = vmatprep.subr.mxu0 0.0
      %4165 = vmatpush1.msra.mxu0 0.0
      %4166 = vmatprep.subr.mxu0 0.0
      %4167 = vmatpush1.msra.mxu0 0.0
      %4168 = vmatprep.subr.mxu0 0.0
      %4169 = vmatpush1.msra.mxu0 0.0
      %4170 = vmatprep.subr.mxu0 0.0
      %4171 = vmatpush1.msra.mxu0 0.0
      %4172 = vmatprep.subr.mxu0 0.0
      %4173 = vmatpush1.msra.mxu0 0.0
      %4174 = vmatprep.subr.mxu0 0.0
      %4175 = vmatpush1.msra.mxu0 0.0
      %4176 = vmatprep.subr.mxu0 0.0
      %4177 = vmatpush1.msra.mxu0 0.0
      %4178 = vmatprep.subr.mxu0 0.0
      %4179 = vmatpush1.msra.mxu0 0.0
      %4180 = vmatprep.subr.mxu0 0.0
      %4181 = vmatpush1.msra.mxu0 0.0
      %4182 = vmatprep.subr.mxu0 0.0
      %4183 = vmatpush1.msra.mxu0 0.0
      %4184 = vmatprep.subr.mxu0 0.0
      %4185 = vmatpush1.msra.mxu0 0.0
      %4186 = vmatprep.subr.mxu0 0.0
      %4187 = vmatpush1.msra.mxu0 0.0
      %4188 = vmatprep.subr.mxu0 0.0
      %4189 = vmatpush1.msra.mxu0 0.0
      %4190 = vmatprep.subr.mxu0 0.0
      %4191 = vmatpush1.msra.mxu0 %v4063
      %4192 = vmatprep.subr.mxu0 0.0
      %4193 = vmatpush2.msra.mxu0 0.0
      %4194 = vmatprep.subr.mxu0 0.0
      %4195 = vmatpush2.msra.mxu0 0.0
      %4196 = vmatprep.subr.mxu0 0.0
      %4197 = vmatpush2.msra.mxu0 0.0
      %4198 = vmatprep.subr.mxu0 0.0
      %4199 = vmatpush2.msra.mxu0 0.0
      %4200 = vmatprep.subr.mxu0 0.0
      %4201 = vmatpush2.msra.mxu0 0.0
      %4202 = vmatprep.subr.mxu0 0.0
      %4203 = vmatpush2.msra.mxu0 0.0
      %4204 = vmatprep.subr.mxu0 0.0
      %4205 = vmatpush2.msra.mxu0 0.0
      %4206 = vmatprep.subr.mxu0 0.0
      %4207 = vmatpush2.msra.mxu0 0.0
      %4208 = vmatprep.subr.mxu0 0.0
      %4209 = vmatpush2.msra.mxu0 0.0
      %4210 = vmatprep.subr.mxu0 0.0
      %4211 = vmatpush2.msra.mxu0 0.0
      %4212 = vmatprep.subr.mxu0 0.0
      %4213 = vmatpush2.msra.mxu0 0.0
      %4214 = vmatprep.subr.mxu0 0.0
      %4215 = vmatpush2.msra.mxu0 0.0
      %4216 = vmatprep.subr.mxu0 0.0
      %4217 = vmatpush2.msra.mxu0 0.0
      %4218 = vmatprep.subr.mxu0 0.0
      %4219 = vmatpush2.msra.mxu0 0.0
      %4220 = vmatprep.subr.mxu0 0.0
      %4221 = vmatpush2.msra.mxu0 0.0
      %4222 = vmatprep.subr.mxu0 0.0
      %4223 = vmatpush2.msra.mxu0 0.0
      %4224 = vmatprep.mubr.f32.mxu0 0.0
      %4225 = vmatmul.mubr.f32.gmra.mxu0 %v4065
      %v4226 = vpop.f32.mrf.mxu0
      %v4227 = vadd.f32 0.0, %v4226
      %v4228 = vpop.f32.mrf.mxu0
      %4229 = vmatprep.mubr.f32.mxu0 0.0
      %4230 = vmatmul.mubr.f32.gmra.mxu0 %v4068
      %v4231 = vpop.f32.mrf.mxu0
      %v4232 = vadd.f32 0.0, %v4231
      %v4233 = vpop.f32.mrf.mxu0
      %4234 = vmatprep.mubr.f32.mxu0 0.0
      %4235 = vmatmul.mubr.f32.gmra.mxu0 %v4071
      %v4236 = vpop.f32.mrf.mxu0
      %v4237 = vadd.f32 0.0, %v4236
      %v4238 = vpop.f32.mrf.mxu0
      %4239 = vmatprep.mubr.f32.mxu0 0.0
      %4240 = vmatmul.mubr.f32.gmra.mxu0 %v4074
      %v4241 = vpop.f32.mrf.mxu0
      %v4242 = vadd.f32 0.0, %v4241
      %v4243 = vpop.f32.mrf.mxu0
      %4244 = vmatprep.mubr.f32.mxu0 0.0
      %4245 = vmatmul.mubr.f32.gmra.mxu0 %v4077
      %v4246 = vpop.f32.mrf.mxu0
      %v4247 = vadd.f32 0.0, %v4246
      %v4248 = vpop.f32.mrf.mxu0
      %4249 = vmatprep.mubr.f32.mxu0 0.0
      %4250 = vmatmul.mubr.f32.gmra.mxu0 %v4080
      %v4251 = vpop.f32.mrf.mxu0
      %v4252 = vadd.f32 0.0, %v4251
      %v4253 = vpop.f32.mrf.mxu0
      %4254 = vmatprep.mubr.f32.mxu0 0.0
      %4255 = vmatmul.mubr.f32.gmra.mxu0 %v4083
      %v4256 = vpop.f32.mrf.mxu0
      %v4257 = vadd.f32 0.0, %v4256
      %v4258 = vpop.f32.mrf.mxu0
      %4259 = vmatprep.mubr.f32.mxu0 0.0
      %4260 = vmatmul.mubr.f32.gmra.mxu0 %v4086
      %v4261 = vpop.f32.mrf.mxu0
      %v4262 = vadd.f32 0.0, %v4261
      %v4263 = vpop.f32.mrf.mxu0
      %4264 = vmatprep.mubr.f32.mxu0 0.0
      %4265 = vmatmul.mubr.f32.gmra.mxu0 %v4089
      %v4266 = vpop.f32.mrf.mxu0
      %v4267 = vadd.f32 0.0, %v4266
      %v4268 = vpop.f32.mrf.mxu0
      %4269 = vmatprep.mubr.f32.mxu0 0.0
      %4270 = vmatmul.mubr.f32.gmra.mxu0 %v4092
      %v4271 = vpop.f32.mrf.mxu0
      %v4272 = vadd.f32 0.0, %v4271
      %v4273 = vpop.f32.mrf.mxu0
      %4274 = vmatprep.mubr.f32.mxu0 0.0
      %4275 = vmatmul.mubr.f32.gmra.mxu0 %v4095
      %v4276 = vpop.f32.mrf.mxu0
      %v4277 = vadd.f32 0.0, %v4276
      %v4278 = vpop.f32.mrf.mxu0
      %4279 = vmatprep.mubr.f32.mxu0 0.0
      %4280 = vmatmul.mubr.f32.gmra.mxu0 %v4098
      %v4281 = vpop.f32.mrf.mxu0
      %v4282 = vadd.f32 0.0, %v4281
      %v4283 = vpop.f32.mrf.mxu0
      %4284 = vmatprep.mubr.f32.mxu0 0.0
      %4285 = vmatmul.mubr.f32.gmra.mxu0 %v4101
      %v4286 = vpop.f32.mrf.mxu0
      %v4287 = vadd.f32 0.0, %v4286
      %v4288 = vpop.f32.mrf.mxu0
      %4289 = vmatprep.mubr.f32.mxu0 0.0
      %4290 = vmatmul.mubr.f32.gmra.mxu0 %v4104
      %v4291 = vpop.f32.mrf.mxu0
      %v4292 = vadd.f32 0.0, %v4291
      %v4293 = vpop.f32.mrf.mxu0
      %4294 = vmatprep.mubr.f32.mxu0 0.0
      %4295 = vmatmul.mubr.f32.gmra.mxu0 %v4107
      %v4296 = vpop.f32.mrf.mxu0
      %v4297 = vadd.f32 0.0, %v4296
      %v4298 = vpop.f32.mrf.mxu0
      %4299 = vmatprep.mubr.f32.mxu0 0.0
      %4300 = vmatmul.mubr.f32.gmra.mxu0 %v4110
      %v4301 = vpop.f32.mrf.mxu0
      %v4302 = vadd.f32 0.0, %v4301
      %v4303 = vpop.f32.mrf.mxu0
      %4304 = vmatprep.mubr.f32.mxu0 0.0
      %4305 = vmatmul.mubr.f32.gmra.mxu0 %v4113
      %v4306 = vpop.f32.mrf.mxu0
      %v4307 = vadd.f32 0.0, %v4306
      %v4308 = vpop.f32.mrf.mxu0
      %4309 = vmatprep.mubr.f32.mxu0 0.0
      %4310 = vmatmul.mubr.f32.gmra.mxu0 %v4116
      %v4311 = vpop.f32.mrf.mxu0
      %v4312 = vadd.f32 0.0, %v4311
      %v4313 = vpop.f32.mrf.mxu0
      %4314 = vmatprep.mubr.f32.mxu0 0.0
      %4315 = vmatmul.mubr.f32.gmra.mxu0 %v4119
      %v4316 = vpop.f32.mrf.mxu0
      %v4317 = vadd.f32 0.0, %v4316
      %v4318 = vpop.f32.mrf.mxu0
      %4319 = vmatprep.mubr.f32.mxu0 0.0
      %4320 = vmatmul.mubr.f32.gmra.mxu0 %v4122
      %v4321 = vpop.f32.mrf.mxu0
      %v4322 = vadd.f32 0.0, %v4321
      %v4323 = vpop.f32.mrf.mxu0
      %4324 = vmatprep.mubr.f32.mxu0 0.0
      %4325 = vmatmul.mubr.f32.gmra.mxu0 %v4125
      %v4326 = vpop.f32.mrf.mxu0
      %v4327 = vadd.f32 0.0, %v4326
      %v4328 = vpop.f32.mrf.mxu0
      %4329 = vmatprep.mubr.f32.mxu0 0.0
      %4330 = vmatmul.mubr.f32.gmra.mxu0 %v4128
      %v4331 = vpop.f32.mrf.mxu0
      %v4332 = vadd.f32 0.0, %v4331
      %v4333 = vpop.f32.mrf.mxu0
      %4334 = vmatprep.mubr.f32.mxu0 0.0
      %4335 = vmatmul.mubr.f32.gmra.mxu0 %v4131
      %v4336 = vpop.f32.mrf.mxu0
      %v4337 = vadd.f32 0.0, %v4336
      %v4338 = vpop.f32.mrf.mxu0
      %4339 = vmatprep.mubr.f32.mxu0 0.0
      %4340 = vmatmul.mubr.f32.gmra.mxu0 %v4134
      %v4341 = vpop.f32.mrf.mxu0
      %v4342 = vadd.f32 0.0, %v4341
      %v4343 = vpop.f32.mrf.mxu0
      %4344 = vmatprep.mubr.f32.mxu0 0.0
      %4345 = vmatmul.mubr.f32.gmra.mxu0 %v4137
      %v4346 = vpop.f32.mrf.mxu0
      %v4347 = vadd.f32 0.0, %v4346
      %v4348 = vpop.f32.mrf.mxu0
      %4349 = vmatprep.mubr.f32.mxu0 0.0
      %4350 = vmatmul.mubr.f32.gmra.mxu0 %v4140
      %v4351 = vpop.f32.mrf.mxu0
      %v4352 = vadd.f32 0.0, %v4351
      %v4353 = vpop.f32.mrf.mxu0
      %4354 = vmatprep.mubr.f32.mxu0 0.0
      %4355 = vmatmul.mubr.f32.gmra.mxu0 %v4143
      %v4356 = vpop.f32.mrf.mxu0
      %v4357 = vadd.f32 0.0, %v4356
      %v4358 = vpop.f32.mrf.mxu0
      %4359 = vmatprep.mubr.f32.mxu0 0.0
      %4360 = vmatmul.mubr.f32.gmra.mxu0 %v4146
      %v4361 = vpop.f32.mrf.mxu0
      %v4362 = vadd.f32 0.0, %v4361
      %v4363 = vpop.f32.mrf.mxu0
      %4364 = vmatprep.mubr.f32.mxu0 0.0
      %4365 = vmatmul.mubr.f32.gmra.mxu0 %v4149
      %v4366 = vpop.f32.mrf.mxu0
      %v4367 = vadd.f32 0.0, %v4366
      %v4368 = vpop.f32.mrf.mxu0
      %4369 = vmatprep.mubr.f32.mxu0 0.0
      %4370 = vmatmul.mubr.f32.gmra.mxu0 %v4152
      %v4371 = vpop.f32.mrf.mxu0
      %v4372 = vadd.f32 0.0, %v4371
      %v4373 = vpop.f32.mrf.mxu0
      %4374 = vmatprep.mubr.f32.mxu0 0.0
      %4375 = vmatmul.mubr.f32.gmra.mxu0 %v4155
      %v4376 = vpop.f32.mrf.mxu0
      %v4377 = vadd.f32 0.0, %v4376
      %v4378 = vpop.f32.mrf.mxu0
      %4379 = vmatprep.mubr.f32.mxu0 0.0
      %4380 = vmatmul.mubr.f32.gmra.mxu0 %v4158
      %v4381 = vpop.f32.mrf.mxu0
      %v4382 = vadd.f32 0.0, %v4381
      %v4383 = vpop.f32.mrf.mxu0
      %4384 = vdwg.mxu0
      %v4385 = vadd.f32 %v3998, %v4227
      %v4386 = vadd.f32 %v3999, %v4232
      %v4387 = vadd.f32 %v4000, %v4237
      %v4388 = vadd.f32 %v4001, %v4242
      %v4389 = vadd.f32 %v4002, %v4247
      %v4390 = vadd.f32 %v4003, %v4252
      %v4391 = vadd.f32 %v4004, %v4257
      %v4392 = vadd.f32 %v4005, %v4262
      %v4393 = vadd.f32 %v4006, %v4267
      %v4394 = vadd.f32 %v4007, %v4272
      %v4395 = vadd.f32 %v4008, %v4277
      %v4396 = vadd.f32 %v4009, %v4282
      %v4397 = vadd.f32 %v4010, %v4287
      %v4398 = vadd.f32 %v4011, %v4292
      %v4399 = vadd.f32 %v4012, %v4297
      %v4400 = vadd.f32 %v4013, %v4302
      %v4401 = vadd.f32 %v4014, %v4307
      %v4402 = vadd.f32 %v4015, %v4312
      %v4403 = vadd.f32 %v4016, %v4317
      %v4404 = vadd.f32 %v4017, %v4322
      %v4405 = vadd.f32 %v4018, %v4327
      %v4406 = vadd.f32 %v4019, %v4332
      %v4407 = vadd.f32 %v4020, %v4337
      %v4408 = vadd.f32 %v4021, %v4342
      %v4409 = vadd.f32 %v4022, %v4347
      %v4410 = vadd.f32 %v4023, %v4352
      %v4411 = vadd.f32 %v4024, %v4357
      %v4412 = vadd.f32 %v4025, %v4362
      %v4413 = vadd.f32 %v4026, %v4367
      %v4414 = vadd.f32 %v4027, %v4372
      %v4415 = vadd.f32 %v4028, %v4377
      %v4416 = vadd.f32 %v4029, %v4382
      %v4417 = vld [vmem:[%s4] sm:$0x1]
      %v4419 = vlaneseq
      %v4420 = vshrl.u32 %v4419, 7
      %v4421 = vsub.s32 0, %v4420
      %v4422 = vrot.slane %v4417, %v4421
      %v4424 = vmul.f32 %v4385, %v4422
      %v4425 = vmul.f32 %v4386, %v4422
      %v4426 = vmul.f32 %v4387, %v4422
      %v4427 = vmul.f32 %v4388, %v4422
      %v4428 = vmul.f32 %v4389, %v4422
      %v4429 = vmul.f32 %v4390, %v4422
      %v4430 = vmul.f32 %v4391, %v4422
      %v4431 = vmul.f32 %v4392, %v4422
      %v4432 = vmul.f32 %v4393, %v4422
      %v4433 = vmul.f32 %v4394, %v4422
      %v4434 = vmul.f32 %v4395, %v4422
      %v4435 = vmul.f32 %v4396, %v4422
      %v4436 = vmul.f32 %v4397, %v4422
      %v4437 = vmul.f32 %v4398, %v4422
      %v4438 = vmul.f32 %v4399, %v4422
      %v4439 = vmul.f32 %v4400, %v4422
      %v4440 = vmul.f32 %v4401, %v4422
      %v4441 = vmul.f32 %v4402, %v4422
      %v4442 = vmul.f32 %v4403, %v4422
      %v4443 = vmul.f32 %v4404, %v4422
      %v4444 = vmul.f32 %v4405, %v4422
      %v4445 = vmul.f32 %v4406, %v4422
      %v4446 = vmul.f32 %v4407, %v4422
      %v4447 = vmul.f32 %v4408, %v4422
      %v4448 = vmul.f32 %v4409, %v4422
      %v4449 = vmul.f32 %v4410, %v4422
      %v4450 = vmul.f32 %v4411, %v4422
      %v4451 = vmul.f32 %v4412, %v4422
      %v4452 = vmul.f32 %v4413, %v4422
      %v4453 = vmul.f32 %v4414, %v4422
      %v4454 = vmul.f32 %v4415, %v4422
      %v4455 = vmul.f32 %v4416, %v4422
      %v4456 = vld [vmem:[%s5] sm:$0x1]
      %v4458 = vlaneseq
      %v4459 = vshrl.u32 %v4458, 7
      %v4460 = vsub.s32 0, %v4459
      %v4461 = vrot.slane %v4456, %v4460
      %v4463 = vadd.f32 %v4424, %v4461
      %v4464 = vadd.f32 %v4425, %v4461
      %v4465 = vadd.f32 %v4426, %v4461
      %v4466 = vadd.f32 %v4427, %v4461
      %v4467 = vadd.f32 %v4428, %v4461
      %v4468 = vadd.f32 %v4429, %v4461
      %v4469 = vadd.f32 %v4430, %v4461
      %v4470 = vadd.f32 %v4431, %v4461
      %v4471 = vadd.f32 %v4432, %v4461
      %v4472 = vadd.f32 %v4433, %v4461
      %v4473 = vadd.f32 %v4434, %v4461
      %v4474 = vadd.f32 %v4435, %v4461
      %v4475 = vadd.f32 %v4436, %v4461
      %v4476 = vadd.f32 %v4437, %v4461
      %v4477 = vadd.f32 %v4438, %v4461
      %v4478 = vadd.f32 %v4439, %v4461
      %v4479 = vadd.f32 %v4440, %v4461
      %v4480 = vadd.f32 %v4441, %v4461
      %v4481 = vadd.f32 %v4442, %v4461
      %v4482 = vadd.f32 %v4443, %v4461
      %v4483 = vadd.f32 %v4444, %v4461
      %v4484 = vadd.f32 %v4445, %v4461
      %v4485 = vadd.f32 %v4446, %v4461
      %v4486 = vadd.f32 %v4447, %v4461
      %v4487 = vadd.f32 %v4448, %v4461
      %v4488 = vadd.f32 %v4449, %v4461
      %v4489 = vadd.f32 %v4450, %v4461
      %v4490 = vadd.f32 %v4451, %v4461
      %v4491 = vadd.f32 %v4452, %v4461
      %v4492 = vadd.f32 %v4453, %v4461
      %v4493 = vadd.f32 %v4454, %v4461
      %v4494 = vadd.f32 %v4455, %v4461
      %v4495 = vmax.f32 %v4463, 0.0
      %v4496 = vmax.f32 %v4464, 0.0
      %v4497 = vmax.f32 %v4465, 0.0
      %v4498 = vmax.f32 %v4466, 0.0
      %v4499 = vmax.f32 %v4467, 0.0
      %v4500 = vmax.f32 %v4468, 0.0
      %v4501 = vmax.f32 %v4469, 0.0
      %v4502 = vmax.f32 %v4470, 0.0
      %v4503 = vmax.f32 %v4471, 0.0
      %v4504 = vmax.f32 %v4472, 0.0
      %v4505 = vmax.f32 %v4473, 0.0
      %v4506 = vmax.f32 %v4474, 0.0
      %v4507 = vmax.f32 %v4475, 0.0
      %v4508 = vmax.f32 %v4476, 0.0
      %v4509 = vmax.f32 %v4477, 0.0
      %v4510 = vmax.f32 %v4478, 0.0
      %v4511 = vmax.f32 %v4479, 0.0
      %v4512 = vmax.f32 %v4480, 0.0
      %v4513 = vmax.f32 %v4481, 0.0
      %v4514 = vmax.f32 %v4482, 0.0
      %v4515 = vmax.f32 %v4483, 0.0
      %v4516 = vmax.f32 %v4484, 0.0
      %v4517 = vmax.f32 %v4485, 0.0
      %v4518 = vmax.f32 %v4486, 0.0
      %v4519 = vmax.f32 %v4487, 0.0
      %v4520 = vmax.f32 %v4488, 0.0
      %v4521 = vmax.f32 %v4489, 0.0
      %v4522 = vmax.f32 %v4490, 0.0
      %v4523 = vmax.f32 %v4491, 0.0
      %v4524 = vmax.f32 %v4492, 0.0
      %v4525 = vmax.f32 %v4493, 0.0
      %v4526 = vmax.f32 %v4494, 0.0
      %4527 = vst.msk [vmem:[#allocation3] sm:$0xff] %vm804, 0.0
      %4528 = vst.msk [vmem:[#allocation3 + $0x8] sm:$0xff] %vm804, 0.0
      %vm4529 = vcmask 25600
      %4530 = vst.msk [vmem:[#allocation3 + $0x10] sm:$0x3] %vm4529, 0.0
      %4531 = vst.msk [vmem:[#allocation3 + $0x18] sm:$0xff] %vm804, 0.0
      %4532 = vst.msk [vmem:[#allocation3 + $0x20] sm:$0xff] %vm804, 0.0
      %4533 = vst.msk [vmem:[#allocation3 + $0x28] sm:$0x3] %vm4529, 0.0
      %4534 = vst.msk [vmem:[#allocation3 + $0x30] sm:$0xff] %vm804, 0.0
      %4535 = vst.msk [vmem:[#allocation3 + $0x38] sm:$0xff] %vm804, 0.0
      %4536 = vst.msk [vmem:[#allocation3 + $0x40] sm:$0x3] %vm4529, 0.0
      %4537 = vst.msk [vmem:[#allocation3 + $0x48] sm:$0xff] %vm804, 0.0
      %4538 = vst.msk [vmem:[#allocation3 + $0x50] sm:$0xff] %vm804, 0.0
      %4539 = vst.msk [vmem:[#allocation3 + $0x58] sm:$0x3] %vm4529, 0.0
      %4540 = vst.msk [vmem:[#allocation3 + $0x60] sm:$0xff] %vm804, 0.0
      %4541 = vst.msk [vmem:[#allocation3 + $0x68] sm:$0xff] %vm804, 0.0
      %4542 = vst.msk [vmem:[#allocation3 + $0x70] sm:$0x3] %vm4529, 0.0
      %4543 = vst.msk [vmem:[#allocation3 + $0x78] sm:$0xff] %vm804, 0.0
      %4544 = vst.msk [vmem:[#allocation3 + $0x80] sm:$0xff] %vm804, 0.0
      %4545 = vst.msk [vmem:[#allocation3 + $0x88] sm:$0x3] %vm4529, 0.0
      %4546 = vst.msk [vmem:[#allocation3 + $0x90] sm:$0xff] %vm804, 0.0
      %4547 = vst.msk [vmem:[#allocation3 + $0x98] sm:$0xff] %vm804, 0.0
      %4548 = vst.msk [vmem:[#allocation3 + $0xa0] sm:$0x3] %vm4529, 0.0
      %4549 = vst.msk [vmem:[#allocation3 + $0xa8] sm:$0xff] %vm804, 0.0
      %4550 = vst.msk [vmem:[#allocation3 + $0xb0] sm:$0xff] %vm804, 0.0
      %4551 = vst.msk [vmem:[#allocation3 + $0xb8] sm:$0x3] %vm4529, 0.0
      %4552 = vst.msk [vmem:[#allocation3 + $0xc0] sm:$0xff] %vm804, 0.0
      %4553 = vst.msk [vmem:[#allocation3 + $0xc8] sm:$0xff] %vm804, 0.0
      %4554 = vst.msk [vmem:[#allocation3 + $0xd0] sm:$0x3] %vm4529, 0.0
      %4555 = vst.msk [vmem:[#allocation3 + $0xd8] sm:$0xff] %vm804, 0.0
      %4556 = vst.msk [vmem:[#allocation3 + $0xe0] sm:$0xff] %vm804, 0.0
      %4557 = vst.msk [vmem:[#allocation3 + $0xe8] sm:$0x3] %vm4529, 0.0
      %4558 = vst.msk [vmem:[#allocation3 + $0xf0] sm:$0xff] %vm804, 0.0
      %4559 = vst.msk [vmem:[#allocation3 + $0xf8] sm:$0xff] %vm804, 0.0
      %4560 = vst.msk [vmem:[#allocation3 + $0x100] sm:$0x3] %vm4529, 0.0
      %4561 = vst.msk [vmem:[#allocation3 + $0x108] sm:$0xff] %vm804, 0.0
      %4562 = vst.msk [vmem:[#allocation3 + $0x110] sm:$0xff] %vm804, 0.0
      %4563 = vst.msk [vmem:[#allocation3 + $0x118] sm:$0x3] %vm4529, 0.0
      %4564 = vst.msk [vmem:[#allocation3 + $0x120] sm:$0xff] %vm804, 0.0
      %4565 = vst.msk [vmem:[#allocation3 + $0x128] sm:$0xff] %vm804, 0.0
      %4566 = vst.msk [vmem:[#allocation3 + $0x130] sm:$0x3] %vm4529, 0.0
      %4567 = vst.msk [vmem:[#allocation3 + $0x138] sm:$0xff] %vm804, 0.0
      %4568 = vst.msk [vmem:[#allocation3 + $0x140] sm:$0xff] %vm804, 0.0
      %4569 = vst.msk [vmem:[#allocation3 + $0x148] sm:$0x3] %vm4529, 0.0
      %4570 = vst.msk [vmem:[#allocation3 + $0x150] sm:$0xff] %vm804, 0.0
      %4571 = vst.msk [vmem:[#allocation3 + $0x158] sm:$0xff] %vm804, 0.0
      %4572 = vst.msk [vmem:[#allocation3 + $0x160] sm:$0x3] %vm4529, 0.0
      %4573 = vst.msk [vmem:[#allocation3 + $0x168] sm:$0xff] %vm804, 0.0
      %4574 = vst.msk [vmem:[#allocation3 + $0x170] sm:$0xff] %vm804, 0.0
      %4575 = vst.msk [vmem:[#allocation3 + $0x178] sm:$0x3] %vm4529, 0.0
      %4576 = vst.msk [vmem:[#allocation3 + $0x180] sm:$0xff] %vm804, 0.0
      %4577 = vst.msk [vmem:[#allocation3 + $0x188] sm:$0xff] %vm804, 0.0
      %4578 = vst.msk [vmem:[#allocation3 + $0x190] sm:$0x3] %vm4529, 0.0
      %4579 = vst.msk [vmem:[#allocation3 + $0x198] sm:$0xff] %vm804, 0.0
      %4580 = vst.msk [vmem:[#allocation3 + $0x1a0] sm:$0xff] %vm804, 0.0
      %4581 = vst.msk [vmem:[#allocation3 + $0x1a8] sm:$0x3] %vm4529, 0.0
      %s4582 = scalar_lea.vmem [#allocation3], 24
      %4583 = vst.msk [vmem:[%s4582 + $0x1] sm:$0xff] %vm804, %v4495
      %4584 = vst.msk [vmem:[%s4582 + $0x9] sm:$0xff] %vm804, %v4496
      %4585 = vst.msk [vmem:[%s4582 + $0x19] sm:$0xff] %vm804, %v4497
      %4586 = vst.msk [vmem:[%s4582 + $0x21] sm:$0xff] %vm804, %v4498
      %4587 = vst.msk [vmem:[%s4582 + $0x31] sm:$0xff] %vm804, %v4499
      %4588 = vst.msk [vmem:[%s4582 + $0x39] sm:$0xff] %vm804, %v4500
      %4589 = vst.msk [vmem:[%s4582 + $0x49] sm:$0xff] %vm804, %v4501
      %4590 = vst.msk [vmem:[%s4582 + $0x51] sm:$0xff] %vm804, %v4502
      %4591 = vst.msk [vmem:[%s4582 + $0x61] sm:$0xff] %vm804, %v4503
      %4592 = vst.msk [vmem:[%s4582 + $0x69] sm:$0xff] %vm804, %v4504
      %4593 = vst.msk [vmem:[%s4582 + $0x79] sm:$0xff] %vm804, %v4505
      %4594 = vst.msk [vmem:[%s4582 + $0x81] sm:$0xff] %vm804, %v4506
      %4595 = vst.msk [vmem:[%s4582 + $0x91] sm:$0xff] %vm804, %v4507
      %4596 = vst.msk [vmem:[%s4582 + $0x99] sm:$0xff] %vm804, %v4508
      %4597 = vst.msk [vmem:[%s4582 + $0xa9] sm:$0xff] %vm804, %v4509
      %4598 = vst.msk [vmem:[%s4582 + $0xb1] sm:$0xff] %vm804, %v4510
      %4599 = vst.msk [vmem:[%s4582 + $0xc1] sm:$0xff] %vm804, %v4511
      %4600 = vst.msk [vmem:[%s4582 + $0xc9] sm:$0xff] %vm804, %v4512
      %4601 = vst.msk [vmem:[%s4582 + $0xd9] sm:$0xff] %vm804, %v4513
      %4602 = vst.msk [vmem:[%s4582 + $0xe1] sm:$0xff] %vm804, %v4514
      %4603 = vst.msk [vmem:[%s4582 + $0xf1] sm:$0xff] %vm804, %v4515
      %4604 = vst.msk [vmem:[%s4582 + $0xf9] sm:$0xff] %vm804, %v4516
      %4605 = vst.msk [vmem:[%s4582 + $0x109] sm:$0xff] %vm804, %v4517
      %4606 = vst.msk [vmem:[%s4582 + $0x111] sm:$0xff] %vm804, %v4518
      %4607 = vst.msk [vmem:[%s4582 + $0x121] sm:$0xff] %vm804, %v4519
      %4608 = vst.msk [vmem:[%s4582 + $0x129] sm:$0xff] %vm804, %v4520
      %4609 = vst.msk [vmem:[%s4582 + $0x139] sm:$0xff] %vm804, %v4521
      %4610 = vst.msk [vmem:[%s4582 + $0x141] sm:$0xff] %vm804, %v4522
      %4611 = vst.msk [vmem:[%s4582 + $0x151] sm:$0xff] %vm804, %v4523
      %4612 = vst.msk [vmem:[%s4582 + $0x159] sm:$0xff] %vm804, %v4524
      %4613 = vst.msk [vmem:[%s4582 + $0x169] sm:$0xff] %vm804, %v4525
      %4614 = vst.msk [vmem:[%s4582 + $0x171] sm:$0xff] %vm804, %v4526
      %v4615 = vld [vmem:[#allocation3] sm:$0xff]
      %v4616 = vld [vmem:[#allocation3 + $0x8] sm:$0xff]
      %v4617 = vld [vmem:[#allocation3 + $0x18] sm:$0xff]
      %v4618 = vld [vmem:[#allocation3 + $0x20] sm:$0xff]
      %v4619 = vld [vmem:[#allocation3 + $0x30] sm:$0xff]
      %v4620 = vld [vmem:[#allocation3 + $0x38] sm:$0xff]
      %v4621 = vld [vmem:[#allocation3 + $0x48] sm:$0xff]
      %v4622 = vld [vmem:[#allocation3 + $0x50] sm:$0xff]
      %v4623 = vld [vmem:[#allocation3 + $0x60] sm:$0xff]
      %v4624 = vld [vmem:[#allocation3 + $0x68] sm:$0xff]
      %v4625 = vld [vmem:[#allocation3 + $0x78] sm:$0xff]
      %v4626 = vld [vmem:[#allocation3 + $0x80] sm:$0xff]
      %v4627 = vld [vmem:[#allocation3 + $0x90] sm:$0xff]
      %v4628 = vld [vmem:[#allocation3 + $0x98] sm:$0xff]
      %v4629 = vld [vmem:[#allocation3 + $0xa8] sm:$0xff]
      %v4630 = vld [vmem:[#allocation3 + $0xb0] sm:$0xff]
      %v4631 = vld [vmem:[#allocation3 + $0xc0] sm:$0xff]
      %v4632 = vld [vmem:[#allocation3 + $0xc8] sm:$0xff]
      %v4633 = vld [vmem:[#allocation3 + $0xd8] sm:$0xff]
      %v4634 = vld [vmem:[#allocation3 + $0xe0] sm:$0xff]
      %v4635 = vld [vmem:[#allocation3 + $0xf0] sm:$0xff]
      %v4636 = vld [vmem:[#allocation3 + $0xf8] sm:$0xff]
      %v4637 = vld [vmem:[#allocation3 + $0x108] sm:$0xff]
      %v4638 = vld [vmem:[#allocation3 + $0x110] sm:$0xff]
      %v4639 = vld [vmem:[#allocation3 + $0x120] sm:$0xff]
      %v4640 = vld [vmem:[#allocation3 + $0x128] sm:$0xff]
      %v4641 = vld [vmem:[#allocation3 + $0x138] sm:$0xff]
      %v4642 = vld [vmem:[#allocation3 + $0x140] sm:$0xff]
      %v4643 = vld [vmem:[#allocation3 + $0x150] sm:$0xff]
      %v4644 = vld [vmem:[#allocation3 + $0x158] sm:$0xff]
      %v4645 = vld [vmem:[#allocation3 + $0x168] sm:$0xff]
      %v4646 = vld [vmem:[#allocation3 + $0x170] sm:$0xff]
      %v4647 = vld [vmem:[%s6] sm:$0xf]
      %v4648 = vld [vmem:[#allocation3 + $0x1] sm:$0xff]
      %v4649 = vld [vmem:[#allocation3 + $0x9] sm:$0xff]
      %v4650 = vld [vmem:[#allocation3 + $0x19] sm:$0xff]
      %v4651 = vld [vmem:[#allocation3 + $0x21] sm:$0xff]
      %v4652 = vld [vmem:[#allocation3 + $0x31] sm:$0xff]
      %v4653 = vld [vmem:[#allocation3 + $0x39] sm:$0xff]
      %v4654 = vld [vmem:[#allocation3 + $0x49] sm:$0xff]
      %v4655 = vld [vmem:[#allocation3 + $0x51] sm:$0xff]
      %v4656 = vld [vmem:[#allocation3 + $0x61] sm:$0xff]
      %v4657 = vld [vmem:[#allocation3 + $0x69] sm:$0xff]
      %v4658 = vld [vmem:[#allocation3 + $0x79] sm:$0xff]
      %v4659 = vld [vmem:[#allocation3 + $0x81] sm:$0xff]
      %v4660 = vld [vmem:[#allocation3 + $0x91] sm:$0xff]
      %v4661 = vld [vmem:[#allocation3 + $0x99] sm:$0xff]
      %v4662 = vld [vmem:[#allocation3 + $0xa9] sm:$0xff]
      %v4663 = vld [vmem:[#allocation3 + $0xb1] sm:$0xff]
      %v4664 = vld [vmem:[#allocation3 + $0xc1] sm:$0xff]
      %v4665 = vld [vmem:[#allocation3 + $0xc9] sm:$0xff]
      %v4666 = vld [vmem:[#allocation3 + $0xd9] sm:$0xff]
      %v4667 = vld [vmem:[#allocation3 + $0xe1] sm:$0xff]
      %v4668 = vld [vmem:[#allocation3 + $0xf1] sm:$0xff]
      %v4669 = vld [vmem:[#allocation3 + $0xf9] sm:$0xff]
      %v4670 = vld [vmem:[#allocation3 + $0x109] sm:$0xff]
      %v4671 = vld [vmem:[#allocation3 + $0x111] sm:$0xff]
      %v4672 = vld [vmem:[#allocation3 + $0x121] sm:$0xff]
      %v4673 = vld [vmem:[#allocation3 + $0x129] sm:$0xff]
      %v4674 = vld [vmem:[#allocation3 + $0x139] sm:$0xff]
      %v4675 = vld [vmem:[#allocation3 + $0x141] sm:$0xff]
      %v4676 = vld [vmem:[#allocation3 + $0x151] sm:$0xff]
      %v4677 = vld [vmem:[#allocation3 + $0x159] sm:$0xff]
      %v4678 = vld [vmem:[#allocation3 + $0x169] sm:$0xff]
      %v4679 = vld [vmem:[#allocation3 + $0x171] sm:$0xff]
      %s4680 = scalar_lea.vmem %s6, 4
      %v4681 = vld [vmem:[%s4680] sm:$0xf]
      %v4683 = vsel %vm804, %v4648, 0
      %v4686 = vsel %vm804, %v4649, 0
      %v4689 = vsel %vm804, %v4650, 0
      %v4692 = vsel %vm804, %v4651, 0
      %v4695 = vsel %vm804, %v4652, 0
      %v4698 = vsel %vm804, %v4653, 0
      %v4701 = vsel %vm804, %v4654, 0
      %v4704 = vsel %vm804, %v4655, 0
      %v4707 = vsel %vm804, %v4656, 0
      %v4710 = vsel %vm804, %v4657, 0
      %v4713 = vsel %vm804, %v4658, 0
      %v4716 = vsel %vm804, %v4659, 0
      %v4719 = vsel %vm804, %v4660, 0
      %v4722 = vsel %vm804, %v4661, 0
      %v4725 = vsel %vm804, %v4662, 0
      %v4728 = vsel %vm804, %v4663, 0
      %v4731 = vsel %vm804, %v4664, 0
      %v4734 = vsel %vm804, %v4665, 0
      %v4737 = vsel %vm804, %v4666, 0
      %v4740 = vsel %vm804, %v4667, 0
      %v4743 = vsel %vm804, %v4668, 0
      %v4746 = vsel %vm804, %v4669, 0
      %v4749 = vsel %vm804, %v4670, 0
      %v4752 = vsel %vm804, %v4671, 0
      %v4755 = vsel %vm804, %v4672, 0
      %v4758 = vsel %vm804, %v4673, 0
      %v4761 = vsel %vm804, %v4674, 0
      %v4764 = vsel %vm804, %v4675, 0
      %v4767 = vsel %vm804, %v4676, 0
      %v4770 = vsel %vm804, %v4677, 0
      %v4773 = vsel %vm804, %v4678, 0
      %v4776 = vsel %vm804, %v4679, 0
      %vm4778 = vcmask 1043456
      %v4780 = vsel %vm4778, %v4681, 0
      %4782 = vmatprep.subr.mxu0 0.0
      %4783 = vmatpush1.msra.mxu0 0.0
      %4784 = vmatprep.subr.mxu0 0.0
      %4785 = vmatpush1.msra.mxu0 0.0
      %4786 = vmatprep.subr.mxu0 0.0
      %4787 = vmatpush1.msra.mxu0 0.0
      %4788 = vmatprep.subr.mxu0 0.0
      %4789 = vmatpush1.msra.mxu0 0.0
      %4790 = vmatprep.subr.mxu0 0.0
      %4791 = vmatpush1.msra.mxu0 0.0
      %4792 = vmatprep.subr.mxu0 0.0
      %4793 = vmatpush1.msra.mxu0 0.0
      %4794 = vmatprep.subr.mxu0 0.0
      %4795 = vmatpush1.msra.mxu0 0.0
      %4796 = vmatprep.subr.mxu0 0.0
      %4797 = vmatpush1.msra.mxu0 0.0
      %4798 = vmatprep.subr.mxu0 0.0
      %4799 = vmatpush1.msra.mxu0 0.0
      %4800 = vmatprep.subr.mxu0 0.0
      %4801 = vmatpush1.msra.mxu0 0.0
      %4802 = vmatprep.subr.mxu0 0.0
      %4803 = vmatpush1.msra.mxu0 0.0
      %4804 = vmatprep.subr.mxu0 0.0
      %4805 = vmatpush1.msra.mxu0 0.0
      %4806 = vmatprep.subr.mxu0 0.0
      %4807 = vmatpush1.msra.mxu0 0.0
      %4808 = vmatprep.subr.mxu0 0.0
      %4809 = vmatpush1.msra.mxu0 0.0
      %4810 = vmatprep.subr.mxu0 0.0
      %4811 = vmatpush1.msra.mxu0 0.0
      %4812 = vmatprep.subr.mxu0 0.0
      %4813 = vmatpush1.msra.mxu0 %v4780
      %4814 = vmatprep.subr.mxu0 0.0
      %4815 = vmatpush2.msra.mxu0 0.0
      %4816 = vmatprep.subr.mxu0 0.0
      %4817 = vmatpush2.msra.mxu0 0.0
      %4818 = vmatprep.subr.mxu0 0.0
      %4819 = vmatpush2.msra.mxu0 0.0
      %4820 = vmatprep.subr.mxu0 0.0
      %4821 = vmatpush2.msra.mxu0 0.0
      %4822 = vmatprep.subr.mxu0 0.0
      %4823 = vmatpush2.msra.mxu0 0.0
      %4824 = vmatprep.subr.mxu0 0.0
      %4825 = vmatpush2.msra.mxu0 0.0
      %4826 = vmatprep.subr.mxu0 0.0
      %4827 = vmatpush2.msra.mxu0 0.0
      %4828 = vmatprep.subr.mxu0 0.0
      %4829 = vmatpush2.msra.mxu0 0.0
      %4830 = vmatprep.subr.mxu0 0.0
      %4831 = vmatpush2.msra.mxu0 0.0
      %4832 = vmatprep.subr.mxu0 0.0
      %4833 = vmatpush2.msra.mxu0 0.0
      %4834 = vmatprep.subr.mxu0 0.0
      %4835 = vmatpush2.msra.mxu0 0.0
      %4836 = vmatprep.subr.mxu0 0.0
      %4837 = vmatpush2.msra.mxu0 0.0
      %4838 = vmatprep.subr.mxu0 0.0
      %4839 = vmatpush2.msra.mxu0 0.0
      %4840 = vmatprep.subr.mxu0 0.0
      %4841 = vmatpush2.msra.mxu0 0.0
      %4842 = vmatprep.subr.mxu0 0.0
      %4843 = vmatpush2.msra.mxu0 0.0
      %4844 = vmatprep.subr.mxu0 0.0
      %4845 = vmatpush2.msra.mxu0 0.0
      %4846 = vmatprep.mubr.f32.mxu0 0.0
      %4847 = vmatmul.mubr.f32.gmra.mxu0 %v4683
      %v4848 = vpop.f32.mrf.mxu0
      %v4849 = vadd.f32 0.0, %v4848
      %v4850 = vpop.f32.mrf.mxu0
      %4851 = vmatprep.mubr.f32.mxu0 0.0
      %4852 = vmatmul.mubr.f32.gmra.mxu0 %v4686
      %v4853 = vpop.f32.mrf.mxu0
      %v4854 = vadd.f32 0.0, %v4853
      %v4855 = vpop.f32.mrf.mxu0
      %4856 = vmatprep.mubr.f32.mxu0 0.0
      %4857 = vmatmul.mubr.f32.gmra.mxu0 %v4689
      %v4858 = vpop.f32.mrf.mxu0
      %v4859 = vadd.f32 0.0, %v4858
      %v4860 = vpop.f32.mrf.mxu0
      %4861 = vmatprep.mubr.f32.mxu0 0.0
      %4862 = vmatmul.mubr.f32.gmra.mxu0 %v4692
      %v4863 = vpop.f32.mrf.mxu0
      %v4864 = vadd.f32 0.0, %v4863
      %v4865 = vpop.f32.mrf.mxu0
      %4866 = vmatprep.mubr.f32.mxu0 0.0
      %4867 = vmatmul.mubr.f32.gmra.mxu0 %v4695
      %v4868 = vpop.f32.mrf.mxu0
      %v4869 = vadd.f32 0.0, %v4868
      %v4870 = vpop.f32.mrf.mxu0
      %4871 = vmatprep.mubr.f32.mxu0 0.0
      %4872 = vmatmul.mubr.f32.gmra.mxu0 %v4698
      %v4873 = vpop.f32.mrf.mxu0
      %v4874 = vadd.f32 0.0, %v4873
      %v4875 = vpop.f32.mrf.mxu0
      %4876 = vmatprep.mubr.f32.mxu0 0.0
      %4877 = vmatmul.mubr.f32.gmra.mxu0 %v4701
      %v4878 = vpop.f32.mrf.mxu0
      %v4879 = vadd.f32 0.0, %v4878
      %v4880 = vpop.f32.mrf.mxu0
      %4881 = vmatprep.mubr.f32.mxu0 0.0
      %4882 = vmatmul.mubr.f32.gmra.mxu0 %v4704
      %v4883 = vpop.f32.mrf.mxu0
      %v4884 = vadd.f32 0.0, %v4883
      %v4885 = vpop.f32.mrf.mxu0
      %4886 = vmatprep.mubr.f32.mxu0 0.0
      %4887 = vmatmul.mubr.f32.gmra.mxu0 %v4707
      %v4888 = vpop.f32.mrf.mxu0
      %v4889 = vadd.f32 0.0, %v4888
      %v4890 = vpop.f32.mrf.mxu0
      %4891 = vmatprep.mubr.f32.mxu0 0.0
      %4892 = vmatmul.mubr.f32.gmra.mxu0 %v4710
      %v4893 = vpop.f32.mrf.mxu0
      %v4894 = vadd.f32 0.0, %v4893
      %v4895 = vpop.f32.mrf.mxu0
      %4896 = vmatprep.mubr.f32.mxu0 0.0
      %4897 = vmatmul.mubr.f32.gmra.mxu0 %v4713
      %v4898 = vpop.f32.mrf.mxu0
      %v4899 = vadd.f32 0.0, %v4898
      %v4900 = vpop.f32.mrf.mxu0
      %4901 = vmatprep.mubr.f32.mxu0 0.0
      %4902 = vmatmul.mubr.f32.gmra.mxu0 %v4716
      %v4903 = vpop.f32.mrf.mxu0
      %v4904 = vadd.f32 0.0, %v4903
      %v4905 = vpop.f32.mrf.mxu0
      %4906 = vmatprep.mubr.f32.mxu0 0.0
      %4907 = vmatmul.mubr.f32.gmra.mxu0 %v4719
      %v4908 = vpop.f32.mrf.mxu0
      %v4909 = vadd.f32 0.0, %v4908
      %v4910 = vpop.f32.mrf.mxu0
      %4911 = vmatprep.mubr.f32.mxu0 0.0
      %4912 = vmatmul.mubr.f32.gmra.mxu0 %v4722
      %v4913 = vpop.f32.mrf.mxu0
      %v4914 = vadd.f32 0.0, %v4913
      %v4915 = vpop.f32.mrf.mxu0
      %4916 = vmatprep.mubr.f32.mxu0 0.0
      %4917 = vmatmul.mubr.f32.gmra.mxu0 %v4725
      %v4918 = vpop.f32.mrf.mxu0
      %v4919 = vadd.f32 0.0, %v4918
      %v4920 = vpop.f32.mrf.mxu0
      %4921 = vmatprep.mubr.f32.mxu0 0.0
      %4922 = vmatmul.mubr.f32.gmra.mxu0 %v4728
      %v4923 = vpop.f32.mrf.mxu0
      %v4924 = vadd.f32 0.0, %v4923
      %v4925 = vpop.f32.mrf.mxu0
      %4926 = vmatprep.mubr.f32.mxu0 0.0
      %4927 = vmatmul.mubr.f32.gmra.mxu0 %v4731
      %v4928 = vpop.f32.mrf.mxu0
      %v4929 = vadd.f32 0.0, %v4928
      %v4930 = vpop.f32.mrf.mxu0
      %4931 = vmatprep.mubr.f32.mxu0 0.0
      %4932 = vmatmul.mubr.f32.gmra.mxu0 %v4734
      %v4933 = vpop.f32.mrf.mxu0
      %v4934 = vadd.f32 0.0, %v4933
      %v4935 = vpop.f32.mrf.mxu0
      %4936 = vmatprep.mubr.f32.mxu0 0.0
      %4937 = vmatmul.mubr.f32.gmra.mxu0 %v4737
      %v4938 = vpop.f32.mrf.mxu0
      %v4939 = vadd.f32 0.0, %v4938
      %v4940 = vpop.f32.mrf.mxu0
      %4941 = vmatprep.mubr.f32.mxu0 0.0
      %4942 = vmatmul.mubr.f32.gmra.mxu0 %v4740
      %v4943 = vpop.f32.mrf.mxu0
      %v4944 = vadd.f32 0.0, %v4943
      %v4945 = vpop.f32.mrf.mxu0
      %4946 = vmatprep.mubr.f32.mxu0 0.0
      %4947 = vmatmul.mubr.f32.gmra.mxu0 %v4743
      %v4948 = vpop.f32.mrf.mxu0
      %v4949 = vadd.f32 0.0, %v4948
      %v4950 = vpop.f32.mrf.mxu0
      %4951 = vmatprep.mubr.f32.mxu0 0.0
      %4952 = vmatmul.mubr.f32.gmra.mxu0 %v4746
      %v4953 = vpop.f32.mrf.mxu0
      %v4954 = vadd.f32 0.0, %v4953
      %v4955 = vpop.f32.mrf.mxu0
      %4956 = vmatprep.mubr.f32.mxu0 0.0
      %4957 = vmatmul.mubr.f32.gmra.mxu0 %v4749
      %v4958 = vpop.f32.mrf.mxu0
      %v4959 = vadd.f32 0.0, %v4958
      %v4960 = vpop.f32.mrf.mxu0
      %4961 = vmatprep.mubr.f32.mxu0 0.0
      %4962 = vmatmul.mubr.f32.gmra.mxu0 %v4752
      %v4963 = vpop.f32.mrf.mxu0
      %v4964 = vadd.f32 0.0, %v4963
      %v4965 = vpop.f32.mrf.mxu0
      %4966 = vmatprep.mubr.f32.mxu0 0.0
      %4967 = vmatmul.mubr.f32.gmra.mxu0 %v4755
      %v4968 = vpop.f32.mrf.mxu0
      %v4969 = vadd.f32 0.0, %v4968
      %v4970 = vpop.f32.mrf.mxu0
      %4971 = vmatprep.mubr.f32.mxu0 0.0
      %4972 = vmatmul.mubr.f32.gmra.mxu0 %v4758
      %v4973 = vpop.f32.mrf.mxu0
      %v4974 = vadd.f32 0.0, %v4973
      %v4975 = vpop.f32.mrf.mxu0
      %4976 = vmatprep.mubr.f32.mxu0 0.0
      %4977 = vmatmul.mubr.f32.gmra.mxu0 %v4761
      %v4978 = vpop.f32.mrf.mxu0
      %v4979 = vadd.f32 0.0, %v4978
      %v4980 = vpop.f32.mrf.mxu0
      %4981 = vmatprep.mubr.f32.mxu0 0.0
      %4982 = vmatmul.mubr.f32.gmra.mxu0 %v4764
      %v4983 = vpop.f32.mrf.mxu0
      %v4984 = vadd.f32 0.0, %v4983
      %v4985 = vpop.f32.mrf.mxu0
      %4986 = vmatprep.mubr.f32.mxu0 0.0
      %4987 = vmatmul.mubr.f32.gmra.mxu0 %v4767
      %v4988 = vpop.f32.mrf.mxu0
      %v4989 = vadd.f32 0.0, %v4988
      %v4990 = vpop.f32.mrf.mxu0
      %4991 = vmatprep.mubr.f32.mxu0 0.0
      %4992 = vmatmul.mubr.f32.gmra.mxu0 %v4770
      %v4993 = vpop.f32.mrf.mxu0
      %v4994 = vadd.f32 0.0, %v4993
      %v4995 = vpop.f32.mrf.mxu0
      %4996 = vmatprep.mubr.f32.mxu0 0.0
      %4997 = vmatmul.mubr.f32.gmra.mxu0 %v4773
      %v4998 = vpop.f32.mrf.mxu0
      %v4999 = vadd.f32 0.0, %v4998
      %v5000 = vpop.f32.mrf.mxu0
      %5001 = vmatprep.mubr.f32.mxu0 0.0
      %5002 = vmatmul.mubr.f32.gmra.mxu0 %v4776
      %v5003 = vpop.f32.mrf.mxu0
      %v5004 = vadd.f32 0.0, %v5003
      %v5005 = vpop.f32.mrf.mxu0
      %5006 = vdwg.mxu0
      %v5008 = vsel %vm804, %v4615, 0
      %v5011 = vsel %vm804, %v4616, 0
      %v5014 = vsel %vm804, %v4617, 0
      %v5017 = vsel %vm804, %v4618, 0
      %v5020 = vsel %vm804, %v4619, 0
      %v5023 = vsel %vm804, %v4620, 0
      %v5026 = vsel %vm804, %v4621, 0
      %v5029 = vsel %vm804, %v4622, 0
      %v5032 = vsel %vm804, %v4623, 0
      %v5035 = vsel %vm804, %v4624, 0
      %v5038 = vsel %vm804, %v4625, 0
      %v5041 = vsel %vm804, %v4626, 0
      %v5044 = vsel %vm804, %v4627, 0
      %v5047 = vsel %vm804, %v4628, 0
      %v5050 = vsel %vm804, %v4629, 0
      %v5053 = vsel %vm804, %v4630, 0
      %v5056 = vsel %vm804, %v4631, 0
      %v5059 = vsel %vm804, %v4632, 0
      %v5062 = vsel %vm804, %v4633, 0
      %v5065 = vsel %vm804, %v4634, 0
      %v5068 = vsel %vm804, %v4635, 0
      %v5071 = vsel %vm804, %v4636, 0
      %v5074 = vsel %vm804, %v4637, 0
      %v5077 = vsel %vm804, %v4638, 0
      %v5080 = vsel %vm804, %v4639, 0
      %v5083 = vsel %vm804, %v4640, 0
      %v5086 = vsel %vm804, %v4641, 0
      %v5089 = vsel %vm804, %v4642, 0
      %v5092 = vsel %vm804, %v4643, 0
      %v5095 = vsel %vm804, %v4644, 0
      %v5098 = vsel %vm804, %v4645, 0
      %v5101 = vsel %vm804, %v4646, 0
      %v5104 = vsel %vm4778, %v4647, 0
      %5106 = vmatprep.subr.mxu0 0.0
      %5107 = vmatpush1.msra.mxu0 0.0
      %5108 = vmatprep.subr.mxu0 0.0
      %5109 = vmatpush1.msra.mxu0 0.0
      %5110 = vmatprep.subr.mxu0 0.0
      %5111 = vmatpush1.msra.mxu0 0.0
      %5112 = vmatprep.subr.mxu0 0.0
      %5113 = vmatpush1.msra.mxu0 0.0
      %5114 = vmatprep.subr.mxu0 0.0
      %5115 = vmatpush1.msra.mxu0 0.0
      %5116 = vmatprep.subr.mxu0 0.0
      %5117 = vmatpush1.msra.mxu0 0.0
      %5118 = vmatprep.subr.mxu0 0.0
      %5119 = vmatpush1.msra.mxu0 0.0
      %5120 = vmatprep.subr.mxu0 0.0
      %5121 = vmatpush1.msra.mxu0 0.0
      %5122 = vmatprep.subr.mxu0 0.0
      %5123 = vmatpush1.msra.mxu0 0.0
      %5124 = vmatprep.subr.mxu0 0.0
      %5125 = vmatpush1.msra.mxu0 0.0
      %5126 = vmatprep.subr.mxu0 0.0
      %5127 = vmatpush1.msra.mxu0 0.0
      %5128 = vmatprep.subr.mxu0 0.0
      %5129 = vmatpush1.msra.mxu0 0.0
      %5130 = vmatprep.subr.mxu0 0.0
      %5131 = vmatpush1.msra.mxu0 0.0
      %5132 = vmatprep.subr.mxu0 0.0
      %5133 = vmatpush1.msra.mxu0 0.0
      %5134 = vmatprep.subr.mxu0 0.0
      %5135 = vmatpush1.msra.mxu0 0.0
      %5136 = vmatprep.subr.mxu0 0.0
      %5137 = vmatpush1.msra.mxu0 %v5104
      %5138 = vmatprep.subr.mxu0 0.0
      %5139 = vmatpush2.msra.mxu0 0.0
      %5140 = vmatprep.subr.mxu0 0.0
      %5141 = vmatpush2.msra.mxu0 0.0
      %5142 = vmatprep.subr.mxu0 0.0
      %5143 = vmatpush2.msra.mxu0 0.0
      %5144 = vmatprep.subr.mxu0 0.0
      %5145 = vmatpush2.msra.mxu0 0.0
      %5146 = vmatprep.subr.mxu0 0.0
      %5147 = vmatpush2.msra.mxu0 0.0
      %5148 = vmatprep.subr.mxu0 0.0
      %5149 = vmatpush2.msra.mxu0 0.0
      %5150 = vmatprep.subr.mxu0 0.0
      %5151 = vmatpush2.msra.mxu0 0.0
      %5152 = vmatprep.subr.mxu0 0.0
      %5153 = vmatpush2.msra.mxu0 0.0
      %5154 = vmatprep.subr.mxu0 0.0
      %5155 = vmatpush2.msra.mxu0 0.0
      %5156 = vmatprep.subr.mxu0 0.0
      %5157 = vmatpush2.msra.mxu0 0.0
      %5158 = vmatprep.subr.mxu0 0.0
      %5159 = vmatpush2.msra.mxu0 0.0
      %5160 = vmatprep.subr.mxu0 0.0
      %5161 = vmatpush2.msra.mxu0 0.0
      %5162 = vmatprep.subr.mxu0 0.0
      %5163 = vmatpush2.msra.mxu0 0.0
      %5164 = vmatprep.subr.mxu0 0.0
      %5165 = vmatpush2.msra.mxu0 0.0
      %5166 = vmatprep.subr.mxu0 0.0
      %5167 = vmatpush2.msra.mxu0 0.0
      %5168 = vmatprep.subr.mxu0 0.0
      %5169 = vmatpush2.msra.mxu0 0.0
      %5170 = vmatprep.mubr.f32.mxu0 0.0
      %5171 = vmatmul.mubr.f32.gmra.mxu0 %v5008
      %v5172 = vpop.f32.mrf.mxu0
      %v5173 = vadd.f32 %v4849, %v5172
      %v5174 = vpop.f32.mrf.mxu0
      %5175 = vmatprep.mubr.f32.mxu0 0.0
      %5176 = vmatmul.mubr.f32.gmra.mxu0 %v5011
      %v5177 = vpop.f32.mrf.mxu0
      %v5178 = vadd.f32 %v4854, %v5177
      %v5179 = vpop.f32.mrf.mxu0
      %5180 = vmatprep.mubr.f32.mxu0 0.0
      %5181 = vmatmul.mubr.f32.gmra.mxu0 %v5014
      %v5182 = vpop.f32.mrf.mxu0
      %v5183 = vadd.f32 %v4859, %v5182
      %v5184 = vpop.f32.mrf.mxu0
      %5185 = vmatprep.mubr.f32.mxu0 0.0
      %5186 = vmatmul.mubr.f32.gmra.mxu0 %v5017
      %v5187 = vpop.f32.mrf.mxu0
      %v5188 = vadd.f32 %v4864, %v5187
      %v5189 = vpop.f32.mrf.mxu0
      %5190 = vmatprep.mubr.f32.mxu0 0.0
      %5191 = vmatmul.mubr.f32.gmra.mxu0 %v5020
      %v5192 = vpop.f32.mrf.mxu0
      %v5193 = vadd.f32 %v4869, %v5192
      %v5194 = vpop.f32.mrf.mxu0
      %5195 = vmatprep.mubr.f32.mxu0 0.0
      %5196 = vmatmul.mubr.f32.gmra.mxu0 %v5023
      %v5197 = vpop.f32.mrf.mxu0
      %v5198 = vadd.f32 %v4874, %v5197
      %v5199 = vpop.f32.mrf.mxu0
      %5200 = vmatprep.mubr.f32.mxu0 0.0
      %5201 = vmatmul.mubr.f32.gmra.mxu0 %v5026
      %v5202 = vpop.f32.mrf.mxu0
      %v5203 = vadd.f32 %v4879, %v5202
      %v5204 = vpop.f32.mrf.mxu0
      %5205 = vmatprep.mubr.f32.mxu0 0.0
      %5206 = vmatmul.mubr.f32.gmra.mxu0 %v5029
      %v5207 = vpop.f32.mrf.mxu0
      %v5208 = vadd.f32 %v4884, %v5207
      %v5209 = vpop.f32.mrf.mxu0
      %5210 = vmatprep.mubr.f32.mxu0 0.0
      %5211 = vmatmul.mubr.f32.gmra.mxu0 %v5032
      %v5212 = vpop.f32.mrf.mxu0
      %v5213 = vadd.f32 %v4889, %v5212
      %v5214 = vpop.f32.mrf.mxu0
      %5215 = vmatprep.mubr.f32.mxu0 0.0
      %5216 = vmatmul.mubr.f32.gmra.mxu0 %v5035
      %v5217 = vpop.f32.mrf.mxu0
      %v5218 = vadd.f32 %v4894, %v5217
      %v5219 = vpop.f32.mrf.mxu0
      %5220 = vmatprep.mubr.f32.mxu0 0.0
      %5221 = vmatmul.mubr.f32.gmra.mxu0 %v5038
      %v5222 = vpop.f32.mrf.mxu0
      %v5223 = vadd.f32 %v4899, %v5222
      %v5224 = vpop.f32.mrf.mxu0
      %5225 = vmatprep.mubr.f32.mxu0 0.0
      %5226 = vmatmul.mubr.f32.gmra.mxu0 %v5041
      %v5227 = vpop.f32.mrf.mxu0
      %v5228 = vadd.f32 %v4904, %v5227
      %v5229 = vpop.f32.mrf.mxu0
      %5230 = vmatprep.mubr.f32.mxu0 0.0
      %5231 = vmatmul.mubr.f32.gmra.mxu0 %v5044
      %v5232 = vpop.f32.mrf.mxu0
      %v5233 = vadd.f32 %v4909, %v5232
      %v5234 = vpop.f32.mrf.mxu0
      %5235 = vmatprep.mubr.f32.mxu0 0.0
      %5236 = vmatmul.mubr.f32.gmra.mxu0 %v5047
      %v5237 = vpop.f32.mrf.mxu0
      %v5238 = vadd.f32 %v4914, %v5237
      %v5239 = vpop.f32.mrf.mxu0
      %5240 = vmatprep.mubr.f32.mxu0 0.0
      %5241 = vmatmul.mubr.f32.gmra.mxu0 %v5050
      %v5242 = vpop.f32.mrf.mxu0
      %v5243 = vadd.f32 %v4919, %v5242
      %v5244 = vpop.f32.mrf.mxu0
      %5245 = vmatprep.mubr.f32.mxu0 0.0
      %5246 = vmatmul.mubr.f32.gmra.mxu0 %v5053
      %v5247 = vpop.f32.mrf.mxu0
      %v5248 = vadd.f32 %v4924, %v5247
      %v5249 = vpop.f32.mrf.mxu0
      %5250 = vmatprep.mubr.f32.mxu0 0.0
      %5251 = vmatmul.mubr.f32.gmra.mxu0 %v5056
      %v5252 = vpop.f32.mrf.mxu0
      %v5253 = vadd.f32 %v4929, %v5252
      %v5254 = vpop.f32.mrf.mxu0
      %5255 = vmatprep.mubr.f32.mxu0 0.0
      %5256 = vmatmul.mubr.f32.gmra.mxu0 %v5059
      %v5257 = vpop.f32.mrf.mxu0
      %v5258 = vadd.f32 %v4934, %v5257
      %v5259 = vpop.f32.mrf.mxu0
      %5260 = vmatprep.mubr.f32.mxu0 0.0
      %5261 = vmatmul.mubr.f32.gmra.mxu0 %v5062
      %v5262 = vpop.f32.mrf.mxu0
      %v5263 = vadd.f32 %v4939, %v5262
      %v5264 = vpop.f32.mrf.mxu0
      %5265 = vmatprep.mubr.f32.mxu0 0.0
      %5266 = vmatmul.mubr.f32.gmra.mxu0 %v5065
      %v5267 = vpop.f32.mrf.mxu0
      %v5268 = vadd.f32 %v4944, %v5267
      %v5269 = vpop.f32.mrf.mxu0
      %5270 = vmatprep.mubr.f32.mxu0 0.0
      %5271 = vmatmul.mubr.f32.gmra.mxu0 %v5068
      %v5272 = vpop.f32.mrf.mxu0
      %v5273 = vadd.f32 %v4949, %v5272
      %v5274 = vpop.f32.mrf.mxu0
      %5275 = vmatprep.mubr.f32.mxu0 0.0
      %5276 = vmatmul.mubr.f32.gmra.mxu0 %v5071
      %v5277 = vpop.f32.mrf.mxu0
      %v5278 = vadd.f32 %v4954, %v5277
      %v5279 = vpop.f32.mrf.mxu0
      %5280 = vmatprep.mubr.f32.mxu0 0.0
      %5281 = vmatmul.mubr.f32.gmra.mxu0 %v5074
      %v5282 = vpop.f32.mrf.mxu0
      %v5283 = vadd.f32 %v4959, %v5282
      %v5284 = vpop.f32.mrf.mxu0
      %5285 = vmatprep.mubr.f32.mxu0 0.0
      %5286 = vmatmul.mubr.f32.gmra.mxu0 %v5077
      %v5287 = vpop.f32.mrf.mxu0
      %v5288 = vadd.f32 %v4964, %v5287
      %v5289 = vpop.f32.mrf.mxu0
      %5290 = vmatprep.mubr.f32.mxu0 0.0
      %5291 = vmatmul.mubr.f32.gmra.mxu0 %v5080
      %v5292 = vpop.f32.mrf.mxu0
      %v5293 = vadd.f32 %v4969, %v5292
      %v5294 = vpop.f32.mrf.mxu0
      %5295 = vmatprep.mubr.f32.mxu0 0.0
      %5296 = vmatmul.mubr.f32.gmra.mxu0 %v5083
      %v5297 = vpop.f32.mrf.mxu0
      %v5298 = vadd.f32 %v4974, %v5297
      %v5299 = vpop.f32.mrf.mxu0
      %5300 = vmatprep.mubr.f32.mxu0 0.0
      %5301 = vmatmul.mubr.f32.gmra.mxu0 %v5086
      %v5302 = vpop.f32.mrf.mxu0
      %v5303 = vadd.f32 %v4979, %v5302
      %v5304 = vpop.f32.mrf.mxu0
      %5305 = vmatprep.mubr.f32.mxu0 0.0
      %5306 = vmatmul.mubr.f32.gmra.mxu0 %v5089
      %v5307 = vpop.f32.mrf.mxu0
      %v5308 = vadd.f32 %v4984, %v5307
      %v5309 = vpop.f32.mrf.mxu0
      %5310 = vmatprep.mubr.f32.mxu0 0.0
      %5311 = vmatmul.mubr.f32.gmra.mxu0 %v5092
      %v5312 = vpop.f32.mrf.mxu0
      %v5313 = vadd.f32 %v4989, %v5312
      %v5314 = vpop.f32.mrf.mxu0
      %5315 = vmatprep.mubr.f32.mxu0 0.0
      %5316 = vmatmul.mubr.f32.gmra.mxu0 %v5095
      %v5317 = vpop.f32.mrf.mxu0
      %v5318 = vadd.f32 %v4994, %v5317
      %v5319 = vpop.f32.mrf.mxu0
      %5320 = vmatprep.mubr.f32.mxu0 0.0
      %5321 = vmatmul.mubr.f32.gmra.mxu0 %v5098
      %v5322 = vpop.f32.mrf.mxu0
      %v5323 = vadd.f32 %v4999, %v5322
      %v5324 = vpop.f32.mrf.mxu0
      %5325 = vmatprep.mubr.f32.mxu0 0.0
      %5326 = vmatmul.mubr.f32.gmra.mxu0 %v5101
      %v5327 = vpop.f32.mrf.mxu0
      %v5328 = vadd.f32 %v5004, %v5327
      %v5329 = vpop.f32.mrf.mxu0
      %5330 = vdwg.mxu0
      %v5331 = vld [vmem:[#allocation3 + $0x2] sm:$0xff]
      %v5332 = vld [vmem:[#allocation3 + $0xa] sm:$0xff]
      %v5333 = vld [vmem:[#allocation3 + $0x1a] sm:$0xff]
      %v5334 = vld [vmem:[#allocation3 + $0x22] sm:$0xff]
      %v5335 = vld [vmem:[#allocation3 + $0x32] sm:$0xff]
      %v5336 = vld [vmem:[#allocation3 + $0x3a] sm:$0xff]
      %v5337 = vld [vmem:[#allocation3 + $0x4a] sm:$0xff]
      %v5338 = vld [vmem:[#allocation3 + $0x52] sm:$0xff]
      %v5339 = vld [vmem:[#allocation3 + $0x62] sm:$0xff]
      %v5340 = vld [vmem:[#allocation3 + $0x6a] sm:$0xff]
      %v5341 = vld [vmem:[#allocation3 + $0x7a] sm:$0xff]
      %v5342 = vld [vmem:[#allocation3 + $0x82] sm:$0xff]
      %v5343 = vld [vmem:[#allocation3 + $0x92] sm:$0xff]
      %v5344 = vld [vmem:[#allocation3 + $0x9a] sm:$0xff]
      %v5345 = vld [vmem:[#allocation3 + $0xaa] sm:$0xff]
      %v5346 = vld [vmem:[#allocation3 + $0xb2] sm:$0xff]
      %v5347 = vld [vmem:[#allocation3 + $0xc2] sm:$0xff]
      %v5348 = vld [vmem:[#allocation3 + $0xca] sm:$0xff]
      %v5349 = vld [vmem:[#allocation3 + $0xda] sm:$0xff]
      %v5350 = vld [vmem:[#allocation3 + $0xe2] sm:$0xff]
      %v5351 = vld [vmem:[#allocation3 + $0xf2] sm:$0xff]
      %v5352 = vld [vmem:[#allocation3 + $0xfa] sm:$0xff]
      %v5353 = vld [vmem:[#allocation3 + $0x10a] sm:$0xff]
      %v5354 = vld [vmem:[#allocation3 + $0x112] sm:$0xff]
      %v5355 = vld [vmem:[#allocation3 + $0x122] sm:$0xff]
      %v5356 = vld [vmem:[#allocation3 + $0x12a] sm:$0xff]
      %v5357 = vld [vmem:[#allocation3 + $0x13a] sm:$0xff]
      %v5358 = vld [vmem:[#allocation3 + $0x142] sm:$0xff]
      %v5359 = vld [vmem:[#allocation3 + $0x152] sm:$0xff]
      %v5360 = vld [vmem:[#allocation3 + $0x15a] sm:$0xff]
      %v5361 = vld [vmem:[#allocation3 + $0x16a] sm:$0xff]
      %v5362 = vld [vmem:[#allocation3 + $0x172] sm:$0xff]
      %s5363 = scalar_lea.vmem %s6, 8
      %v5364 = vld [vmem:[%s5363] sm:$0xf]
      %v5366 = vsel %vm804, %v5331, 0
      %v5369 = vsel %vm804, %v5332, 0
      %v5372 = vsel %vm804, %v5333, 0
      %v5375 = vsel %vm804, %v5334, 0
      %v5378 = vsel %vm804, %v5335, 0
      %v5381 = vsel %vm804, %v5336, 0
      %v5384 = vsel %vm804, %v5337, 0
      %v5387 = vsel %vm804, %v5338, 0
      %v5390 = vsel %vm804, %v5339, 0
      %v5393 = vsel %vm804, %v5340, 0
      %v5396 = vsel %vm804, %v5341, 0
      %v5399 = vsel %vm804, %v5342, 0
      %v5402 = vsel %vm804, %v5343, 0
      %v5405 = vsel %vm804, %v5344, 0
      %v5408 = vsel %vm804, %v5345, 0
      %v5411 = vsel %vm804, %v5346, 0
      %v5414 = vsel %vm804, %v5347, 0
      %v5417 = vsel %vm804, %v5348, 0
      %v5420 = vsel %vm804, %v5349, 0
      %v5423 = vsel %vm804, %v5350, 0
      %v5426 = vsel %vm804, %v5351, 0
      %v5429 = vsel %vm804, %v5352, 0
      %v5432 = vsel %vm804, %v5353, 0
      %v5435 = vsel %vm804, %v5354, 0
      %v5438 = vsel %vm804, %v5355, 0
      %v5441 = vsel %vm804, %v5356, 0
      %v5444 = vsel %vm804, %v5357, 0
      %v5447 = vsel %vm804, %v5358, 0
      %v5450 = vsel %vm804, %v5359, 0
      %v5453 = vsel %vm804, %v5360, 0
      %v5456 = vsel %vm804, %v5361, 0
      %v5459 = vsel %vm804, %v5362, 0
      %v5462 = vsel %vm4778, %v5364, 0
      %5464 = vmatprep.subr.mxu0 0.0
      %5465 = vmatpush1.msra.mxu0 0.0
      %5466 = vmatprep.subr.mxu0 0.0
      %5467 = vmatpush1.msra.mxu0 0.0
      %5468 = vmatprep.subr.mxu0 0.0
      %5469 = vmatpush1.msra.mxu0 0.0
      %5470 = vmatprep.subr.mxu0 0.0
      %5471 = vmatpush1.msra.mxu0 0.0
      %5472 = vmatprep.subr.mxu0 0.0
      %5473 = vmatpush1.msra.mxu0 0.0
      %5474 = vmatprep.subr.mxu0 0.0
      %5475 = vmatpush1.msra.mxu0 0.0
      %5476 = vmatprep.subr.mxu0 0.0
      %5477 = vmatpush1.msra.mxu0 0.0
      %5478 = vmatprep.subr.mxu0 0.0
      %5479 = vmatpush1.msra.mxu0 0.0
      %5480 = vmatprep.subr.mxu0 0.0
      %5481 = vmatpush1.msra.mxu0 0.0
      %5482 = vmatprep.subr.mxu0 0.0
      %5483 = vmatpush1.msra.mxu0 0.0
      %5484 = vmatprep.subr.mxu0 0.0
      %5485 = vmatpush1.msra.mxu0 0.0
      %5486 = vmatprep.subr.mxu0 0.0
      %5487 = vmatpush1.msra.mxu0 0.0
      %5488 = vmatprep.subr.mxu0 0.0
      %5489 = vmatpush1.msra.mxu0 0.0
      %5490 = vmatprep.subr.mxu0 0.0
      %5491 = vmatpush1.msra.mxu0 0.0
      %5492 = vmatprep.subr.mxu0 0.0
      %5493 = vmatpush1.msra.mxu0 0.0
      %5494 = vmatprep.subr.mxu0 0.0
      %5495 = vmatpush1.msra.mxu0 %v5462
      %5496 = vmatprep.subr.mxu0 0.0
      %5497 = vmatpush2.msra.mxu0 0.0
      %5498 = vmatprep.subr.mxu0 0.0
      %5499 = vmatpush2.msra.mxu0 0.0
      %5500 = vmatprep.subr.mxu0 0.0
      %5501 = vmatpush2.msra.mxu0 0.0
      %5502 = vmatprep.subr.mxu0 0.0
      %5503 = vmatpush2.msra.mxu0 0.0
      %5504 = vmatprep.subr.mxu0 0.0
      %5505 = vmatpush2.msra.mxu0 0.0
      %5506 = vmatprep.subr.mxu0 0.0
      %5507 = vmatpush2.msra.mxu0 0.0
      %5508 = vmatprep.subr.mxu0 0.0
      %5509 = vmatpush2.msra.mxu0 0.0
      %5510 = vmatprep.subr.mxu0 0.0
      %5511 = vmatpush2.msra.mxu0 0.0
      %5512 = vmatprep.subr.mxu0 0.0
      %5513 = vmatpush2.msra.mxu0 0.0
      %5514 = vmatprep.subr.mxu0 0.0
      %5515 = vmatpush2.msra.mxu0 0.0
      %5516 = vmatprep.subr.mxu0 0.0
      %5517 = vmatpush2.msra.mxu0 0.0
      %5518 = vmatprep.subr.mxu0 0.0
      %5519 = vmatpush2.msra.mxu0 0.0
      %5520 = vmatprep.subr.mxu0 0.0
      %5521 = vmatpush2.msra.mxu0 0.0
      %5522 = vmatprep.subr.mxu0 0.0
      %5523 = vmatpush2.msra.mxu0 0.0
      %5524 = vmatprep.subr.mxu0 0.0
      %5525 = vmatpush2.msra.mxu0 0.0
      %5526 = vmatprep.subr.mxu0 0.0
      %5527 = vmatpush2.msra.mxu0 0.0
      %5528 = vmatprep.mubr.f32.mxu0 0.0
      %5529 = vmatmul.mubr.f32.gmra.mxu0 %v5366
      %v5530 = vpop.f32.mrf.mxu0
      %v5531 = vadd.f32 0.0, %v5530
      %v5532 = vpop.f32.mrf.mxu0
      %5533 = vmatprep.mubr.f32.mxu0 0.0
      %5534 = vmatmul.mubr.f32.gmra.mxu0 %v5369
      %v5535 = vpop.f32.mrf.mxu0
      %v5536 = vadd.f32 0.0, %v5535
      %v5537 = vpop.f32.mrf.mxu0
      %5538 = vmatprep.mubr.f32.mxu0 0.0
      %5539 = vmatmul.mubr.f32.gmra.mxu0 %v5372
      %v5540 = vpop.f32.mrf.mxu0
      %v5541 = vadd.f32 0.0, %v5540
      %v5542 = vpop.f32.mrf.mxu0
      %5543 = vmatprep.mubr.f32.mxu0 0.0
      %5544 = vmatmul.mubr.f32.gmra.mxu0 %v5375
      %v5545 = vpop.f32.mrf.mxu0
      %v5546 = vadd.f32 0.0, %v5545
      %v5547 = vpop.f32.mrf.mxu0
      %5548 = vmatprep.mubr.f32.mxu0 0.0
      %5549 = vmatmul.mubr.f32.gmra.mxu0 %v5378
      %v5550 = vpop.f32.mrf.mxu0
      %v5551 = vadd.f32 0.0, %v5550
      %v5552 = vpop.f32.mrf.mxu0
      %5553 = vmatprep.mubr.f32.mxu0 0.0
      %5554 = vmatmul.mubr.f32.gmra.mxu0 %v5381
      %v5555 = vpop.f32.mrf.mxu0
      %v5556 = vadd.f32 0.0, %v5555
      %v5557 = vpop.f32.mrf.mxu0
      %5558 = vmatprep.mubr.f32.mxu0 0.0
      %5559 = vmatmul.mubr.f32.gmra.mxu0 %v5384
      %v5560 = vpop.f32.mrf.mxu0
      %v5561 = vadd.f32 0.0, %v5560
      %v5562 = vpop.f32.mrf.mxu0
      %5563 = vmatprep.mubr.f32.mxu0 0.0
      %5564 = vmatmul.mubr.f32.gmra.mxu0 %v5387
      %v5565 = vpop.f32.mrf.mxu0
      %v5566 = vadd.f32 0.0, %v5565
      %v5567 = vpop.f32.mrf.mxu0
      %5568 = vmatprep.mubr.f32.mxu0 0.0
      %5569 = vmatmul.mubr.f32.gmra.mxu0 %v5390
      %v5570 = vpop.f32.mrf.mxu0
      %v5571 = vadd.f32 0.0, %v5570
      %v5572 = vpop.f32.mrf.mxu0
      %5573 = vmatprep.mubr.f32.mxu0 0.0
      %5574 = vmatmul.mubr.f32.gmra.mxu0 %v5393
      %v5575 = vpop.f32.mrf.mxu0
      %v5576 = vadd.f32 0.0, %v5575
      %v5577 = vpop.f32.mrf.mxu0
      %5578 = vmatprep.mubr.f32.mxu0 0.0
      %5579 = vmatmul.mubr.f32.gmra.mxu0 %v5396
      %v5580 = vpop.f32.mrf.mxu0
      %v5581 = vadd.f32 0.0, %v5580
      %v5582 = vpop.f32.mrf.mxu0
      %5583 = vmatprep.mubr.f32.mxu0 0.0
      %5584 = vmatmul.mubr.f32.gmra.mxu0 %v5399
      %v5585 = vpop.f32.mrf.mxu0
      %v5586 = vadd.f32 0.0, %v5585
      %v5587 = vpop.f32.mrf.mxu0
      %5588 = vmatprep.mubr.f32.mxu0 0.0
      %5589 = vmatmul.mubr.f32.gmra.mxu0 %v5402
      %v5590 = vpop.f32.mrf.mxu0
      %v5591 = vadd.f32 0.0, %v5590
      %v5592 = vpop.f32.mrf.mxu0
      %5593 = vmatprep.mubr.f32.mxu0 0.0
      %5594 = vmatmul.mubr.f32.gmra.mxu0 %v5405
      %v5595 = vpop.f32.mrf.mxu0
      %v5596 = vadd.f32 0.0, %v5595
      %v5597 = vpop.f32.mrf.mxu0
      %5598 = vmatprep.mubr.f32.mxu0 0.0
      %5599 = vmatmul.mubr.f32.gmra.mxu0 %v5408
      %v5600 = vpop.f32.mrf.mxu0
      %v5601 = vadd.f32 0.0, %v5600
      %v5602 = vpop.f32.mrf.mxu0
      %5603 = vmatprep.mubr.f32.mxu0 0.0
      %5604 = vmatmul.mubr.f32.gmra.mxu0 %v5411
      %v5605 = vpop.f32.mrf.mxu0
      %v5606 = vadd.f32 0.0, %v5605
      %v5607 = vpop.f32.mrf.mxu0
      %5608 = vmatprep.mubr.f32.mxu0 0.0
      %5609 = vmatmul.mubr.f32.gmra.mxu0 %v5414
      %v5610 = vpop.f32.mrf.mxu0
      %v5611 = vadd.f32 0.0, %v5610
      %v5612 = vpop.f32.mrf.mxu0
      %5613 = vmatprep.mubr.f32.mxu0 0.0
      %5614 = vmatmul.mubr.f32.gmra.mxu0 %v5417
      %v5615 = vpop.f32.mrf.mxu0
      %v5616 = vadd.f32 0.0, %v5615
      %v5617 = vpop.f32.mrf.mxu0
      %5618 = vmatprep.mubr.f32.mxu0 0.0
      %5619 = vmatmul.mubr.f32.gmra.mxu0 %v5420
      %v5620 = vpop.f32.mrf.mxu0
      %v5621 = vadd.f32 0.0, %v5620
      %v5622 = vpop.f32.mrf.mxu0
      %5623 = vmatprep.mubr.f32.mxu0 0.0
      %5624 = vmatmul.mubr.f32.gmra.mxu0 %v5423
      %v5625 = vpop.f32.mrf.mxu0
      %v5626 = vadd.f32 0.0, %v5625
      %v5627 = vpop.f32.mrf.mxu0
      %5628 = vmatprep.mubr.f32.mxu0 0.0
      %5629 = vmatmul.mubr.f32.gmra.mxu0 %v5426
      %v5630 = vpop.f32.mrf.mxu0
      %v5631 = vadd.f32 0.0, %v5630
      %v5632 = vpop.f32.mrf.mxu0
      %5633 = vmatprep.mubr.f32.mxu0 0.0
      %5634 = vmatmul.mubr.f32.gmra.mxu0 %v5429
      %v5635 = vpop.f32.mrf.mxu0
      %v5636 = vadd.f32 0.0, %v5635
      %v5637 = vpop.f32.mrf.mxu0
      %5638 = vmatprep.mubr.f32.mxu0 0.0
      %5639 = vmatmul.mubr.f32.gmra.mxu0 %v5432
      %v5640 = vpop.f32.mrf.mxu0
      %v5641 = vadd.f32 0.0, %v5640
      %v5642 = vpop.f32.mrf.mxu0
      %5643 = vmatprep.mubr.f32.mxu0 0.0
      %5644 = vmatmul.mubr.f32.gmra.mxu0 %v5435
      %v5645 = vpop.f32.mrf.mxu0
      %v5646 = vadd.f32 0.0, %v5645
      %v5647 = vpop.f32.mrf.mxu0
      %5648 = vmatprep.mubr.f32.mxu0 0.0
      %5649 = vmatmul.mubr.f32.gmra.mxu0 %v5438
      %v5650 = vpop.f32.mrf.mxu0
      %v5651 = vadd.f32 0.0, %v5650
      %v5652 = vpop.f32.mrf.mxu0
      %5653 = vmatprep.mubr.f32.mxu0 0.0
      %5654 = vmatmul.mubr.f32.gmra.mxu0 %v5441
      %v5655 = vpop.f32.mrf.mxu0
      %v5656 = vadd.f32 0.0, %v5655
      %v5657 = vpop.f32.mrf.mxu0
      %5658 = vmatprep.mubr.f32.mxu0 0.0
      %5659 = vmatmul.mubr.f32.gmra.mxu0 %v5444
      %v5660 = vpop.f32.mrf.mxu0
      %v5661 = vadd.f32 0.0, %v5660
      %v5662 = vpop.f32.mrf.mxu0
      %5663 = vmatprep.mubr.f32.mxu0 0.0
      %5664 = vmatmul.mubr.f32.gmra.mxu0 %v5447
      %v5665 = vpop.f32.mrf.mxu0
      %v5666 = vadd.f32 0.0, %v5665
      %v5667 = vpop.f32.mrf.mxu0
      %5668 = vmatprep.mubr.f32.mxu0 0.0
      %5669 = vmatmul.mubr.f32.gmra.mxu0 %v5450
      %v5670 = vpop.f32.mrf.mxu0
      %v5671 = vadd.f32 0.0, %v5670
      %v5672 = vpop.f32.mrf.mxu0
      %5673 = vmatprep.mubr.f32.mxu0 0.0
      %5674 = vmatmul.mubr.f32.gmra.mxu0 %v5453
      %v5675 = vpop.f32.mrf.mxu0
      %v5676 = vadd.f32 0.0, %v5675
      %v5677 = vpop.f32.mrf.mxu0
      %5678 = vmatprep.mubr.f32.mxu0 0.0
      %5679 = vmatmul.mubr.f32.gmra.mxu0 %v5456
      %v5680 = vpop.f32.mrf.mxu0
      %v5681 = vadd.f32 0.0, %v5680
      %v5682 = vpop.f32.mrf.mxu0
      %5683 = vmatprep.mubr.f32.mxu0 0.0
      %5684 = vmatmul.mubr.f32.gmra.mxu0 %v5459
      %v5685 = vpop.f32.mrf.mxu0
      %v5686 = vadd.f32 0.0, %v5685
      %v5687 = vpop.f32.mrf.mxu0
      %5688 = vdwg.mxu0
      %v5689 = vadd.f32 %v5173, %v5531
      %v5690 = vadd.f32 %v5178, %v5536
      %v5691 = vadd.f32 %v5183, %v5541
      %v5692 = vadd.f32 %v5188, %v5546
      %v5693 = vadd.f32 %v5193, %v5551
      %v5694 = vadd.f32 %v5198, %v5556
      %v5695 = vadd.f32 %v5203, %v5561
      %v5696 = vadd.f32 %v5208, %v5566
      %v5697 = vadd.f32 %v5213, %v5571
      %v5698 = vadd.f32 %v5218, %v5576
      %v5699 = vadd.f32 %v5223, %v5581
      %v5700 = vadd.f32 %v5228, %v5586
      %v5701 = vadd.f32 %v5233, %v5591
      %v5702 = vadd.f32 %v5238, %v5596
      %v5703 = vadd.f32 %v5243, %v5601
      %v5704 = vadd.f32 %v5248, %v5606
      %v5705 = vadd.f32 %v5253, %v5611
      %v5706 = vadd.f32 %v5258, %v5616
      %v5707 = vadd.f32 %v5263, %v5621
      %v5708 = vadd.f32 %v5268, %v5626
      %v5709 = vadd.f32 %v5273, %v5631
      %v5710 = vadd.f32 %v5278, %v5636
      %v5711 = vadd.f32 %v5283, %v5641
      %v5712 = vadd.f32 %v5288, %v5646
      %v5713 = vadd.f32 %v5293, %v5651
      %v5714 = vadd.f32 %v5298, %v5656
      %v5715 = vadd.f32 %v5303, %v5661
      %v5716 = vadd.f32 %v5308, %v5666
      %v5717 = vadd.f32 %v5313, %v5671
      %v5718 = vadd.f32 %v5318, %v5676
      %v5719 = vadd.f32 %v5323, %v5681
      %v5720 = vadd.f32 %v5328, %v5686
      %v5721 = vld [vmem:[%s4582] sm:$0xff]
      %v5722 = vld [vmem:[%s4582 + $0x8] sm:$0xff]
      %v5723 = vld [vmem:[%s4582 + $0x18] sm:$0xff]
      %v5724 = vld [vmem:[%s4582 + $0x20] sm:$0xff]
      %v5725 = vld [vmem:[%s4582 + $0x30] sm:$0xff]
      %v5726 = vld [vmem:[%s4582 + $0x38] sm:$0xff]
      %v5727 = vld [vmem:[%s4582 + $0x48] sm:$0xff]
      %v5728 = vld [vmem:[%s4582 + $0x50] sm:$0xff]
      %v5729 = vld [vmem:[%s4582 + $0x60] sm:$0xff]
      %v5730 = vld [vmem:[%s4582 + $0x68] sm:$0xff]
      %v5731 = vld [vmem:[%s4582 + $0x78] sm:$0xff]
      %v5732 = vld [vmem:[%s4582 + $0x80] sm:$0xff]
      %v5733 = vld [vmem:[%s4582 + $0x90] sm:$0xff]
      %v5734 = vld [vmem:[%s4582 + $0x98] sm:$0xff]
      %v5735 = vld [vmem:[%s4582 + $0xa8] sm:$0xff]
      %v5736 = vld [vmem:[%s4582 + $0xb0] sm:$0xff]
      %v5737 = vld [vmem:[%s4582 + $0xc0] sm:$0xff]
      %v5738 = vld [vmem:[%s4582 + $0xc8] sm:$0xff]
      %v5739 = vld [vmem:[%s4582 + $0xd8] sm:$0xff]
      %v5740 = vld [vmem:[%s4582 + $0xe0] sm:$0xff]
      %v5741 = vld [vmem:[%s4582 + $0xf0] sm:$0xff]
      %v5742 = vld [vmem:[%s4582 + $0xf8] sm:$0xff]
      %v5743 = vld [vmem:[%s4582 + $0x108] sm:$0xff]
      %v5744 = vld [vmem:[%s4582 + $0x110] sm:$0xff]
      %v5745 = vld [vmem:[%s4582 + $0x120] sm:$0xff]
      %v5746 = vld [vmem:[%s4582 + $0x128] sm:$0xff]
      %v5747 = vld [vmem:[%s4582 + $0x138] sm:$0xff]
      %v5748 = vld [vmem:[%s4582 + $0x140] sm:$0xff]
      %v5749 = vld [vmem:[%s4582 + $0x150] sm:$0xff]
      %v5750 = vld [vmem:[%s4582 + $0x158] sm:$0xff]
      %v5751 = vld [vmem:[%s4582 + $0x168] sm:$0xff]
      %v5752 = vld [vmem:[%s4582 + $0x170] sm:$0xff]
      %s5753 = scalar_lea.vmem %s6, 12
      %v5754 = vld [vmem:[%s5753] sm:$0xf]
      %v5756 = vsel %vm804, %v5721, 0
      %v5759 = vsel %vm804, %v5722, 0
      %v5762 = vsel %vm804, %v5723, 0
      %v5765 = vsel %vm804, %v5724, 0
      %v5768 = vsel %vm804, %v5725, 0
      %v5771 = vsel %vm804, %v5726, 0
      %v5774 = vsel %vm804, %v5727, 0
      %v5777 = vsel %vm804, %v5728, 0
      %v5780 = vsel %vm804, %v5729, 0
      %v5783 = vsel %vm804, %v5730, 0
      %v5786 = vsel %vm804, %v5731, 0
      %v5789 = vsel %vm804, %v5732, 0
      %v5792 = vsel %vm804, %v5733, 0
      %v5795 = vsel %vm804, %v5734, 0
      %v5798 = vsel %vm804, %v5735, 0
      %v5801 = vsel %vm804, %v5736, 0
      %v5804 = vsel %vm804, %v5737, 0
      %v5807 = vsel %vm804, %v5738, 0
      %v5810 = vsel %vm804, %v5739, 0
      %v5813 = vsel %vm804, %v5740, 0
      %v5816 = vsel %vm804, %v5741, 0
      %v5819 = vsel %vm804, %v5742, 0
      %v5822 = vsel %vm804, %v5743, 0
      %v5825 = vsel %vm804, %v5744, 0
      %v5828 = vsel %vm804, %v5745, 0
      %v5831 = vsel %vm804, %v5746, 0
      %v5834 = vsel %vm804, %v5747, 0
      %v5837 = vsel %vm804, %v5748, 0
      %v5840 = vsel %vm804, %v5749, 0
      %v5843 = vsel %vm804, %v5750, 0
      %v5846 = vsel %vm804, %v5751, 0
      %v5849 = vsel %vm804, %v5752, 0
      %v5852 = vsel %vm4778, %v5754, 0
      %5854 = vmatprep.subr.mxu0 0.0
      %5855 = vmatpush1.msra.mxu0 0.0
      %5856 = vmatprep.subr.mxu0 0.0
      %5857 = vmatpush1.msra.mxu0 0.0
      %5858 = vmatprep.subr.mxu0 0.0
      %5859 = vmatpush1.msra.mxu0 0.0
      %5860 = vmatprep.subr.mxu0 0.0
      %5861 = vmatpush1.msra.mxu0 0.0
      %5862 = vmatprep.subr.mxu0 0.0
      %5863 = vmatpush1.msra.mxu0 0.0
      %5864 = vmatprep.subr.mxu0 0.0
      %5865 = vmatpush1.msra.mxu0 0.0
      %5866 = vmatprep.subr.mxu0 0.0
      %5867 = vmatpush1.msra.mxu0 0.0
      %5868 = vmatprep.subr.mxu0 0.0
      %5869 = vmatpush1.msra.mxu0 0.0
      %5870 = vmatprep.subr.mxu0 0.0
      %5871 = vmatpush1.msra.mxu0 0.0
      %5872 = vmatprep.subr.mxu0 0.0
      %5873 = vmatpush1.msra.mxu0 0.0
      %5874 = vmatprep.subr.mxu0 0.0
      %5875 = vmatpush1.msra.mxu0 0.0
      %5876 = vmatprep.subr.mxu0 0.0
      %5877 = vmatpush1.msra.mxu0 0.0
      %5878 = vmatprep.subr.mxu0 0.0
      %5879 = vmatpush1.msra.mxu0 0.0
      %5880 = vmatprep.subr.mxu0 0.0
      %5881 = vmatpush1.msra.mxu0 0.0
      %5882 = vmatprep.subr.mxu0 0.0
      %5883 = vmatpush1.msra.mxu0 0.0
      %5884 = vmatprep.subr.mxu0 0.0
      %5885 = vmatpush1.msra.mxu0 %v5852
      %5886 = vmatprep.subr.mxu0 0.0
      %5887 = vmatpush2.msra.mxu0 0.0
      %5888 = vmatprep.subr.mxu0 0.0
      %5889 = vmatpush2.msra.mxu0 0.0
      %5890 = vmatprep.subr.mxu0 0.0
      %5891 = vmatpush2.msra.mxu0 0.0
      %5892 = vmatprep.subr.mxu0 0.0
      %5893 = vmatpush2.msra.mxu0 0.0
      %5894 = vmatprep.subr.mxu0 0.0
      %5895 = vmatpush2.msra.mxu0 0.0
      %5896 = vmatprep.subr.mxu0 0.0
      %5897 = vmatpush2.msra.mxu0 0.0
      %5898 = vmatprep.subr.mxu0 0.0
      %5899 = vmatpush2.msra.mxu0 0.0
      %5900 = vmatprep.subr.mxu0 0.0
      %5901 = vmatpush2.msra.mxu0 0.0
      %5902 = vmatprep.subr.mxu0 0.0
      %5903 = vmatpush2.msra.mxu0 0.0
      %5904 = vmatprep.subr.mxu0 0.0
      %5905 = vmatpush2.msra.mxu0 0.0
      %5906 = vmatprep.subr.mxu0 0.0
      %5907 = vmatpush2.msra.mxu0 0.0
      %5908 = vmatprep.subr.mxu0 0.0
      %5909 = vmatpush2.msra.mxu0 0.0
      %5910 = vmatprep.subr.mxu0 0.0
      %5911 = vmatpush2.msra.mxu0 0.0
      %5912 = vmatprep.subr.mxu0 0.0
      %5913 = vmatpush2.msra.mxu0 0.0
      %5914 = vmatprep.subr.mxu0 0.0
      %5915 = vmatpush2.msra.mxu0 0.0
      %5916 = vmatprep.subr.mxu0 0.0
      %5917 = vmatpush2.msra.mxu0 0.0
      %5918 = vmatprep.mubr.f32.mxu0 0.0
      %5919 = vmatmul.mubr.f32.gmra.mxu0 %v5756
      %v5920 = vpop.f32.mrf.mxu0
      %v5921 = vadd.f32 0.0, %v5920
      %v5922 = vpop.f32.mrf.mxu0
      %5923 = vmatprep.mubr.f32.mxu0 0.0
      %5924 = vmatmul.mubr.f32.gmra.mxu0 %v5759
      %v5925 = vpop.f32.mrf.mxu0
      %v5926 = vadd.f32 0.0, %v5925
      %v5927 = vpop.f32.mrf.mxu0
      %5928 = vmatprep.mubr.f32.mxu0 0.0
      %5929 = vmatmul.mubr.f32.gmra.mxu0 %v5762
      %v5930 = vpop.f32.mrf.mxu0
      %v5931 = vadd.f32 0.0, %v5930
      %v5932 = vpop.f32.mrf.mxu0
      %5933 = vmatprep.mubr.f32.mxu0 0.0
      %5934 = vmatmul.mubr.f32.gmra.mxu0 %v5765
      %v5935 = vpop.f32.mrf.mxu0
      %v5936 = vadd.f32 0.0, %v5935
      %v5937 = vpop.f32.mrf.mxu0
      %5938 = vmatprep.mubr.f32.mxu0 0.0
      %5939 = vmatmul.mubr.f32.gmra.mxu0 %v5768
      %v5940 = vpop.f32.mrf.mxu0
      %v5941 = vadd.f32 0.0, %v5940
      %v5942 = vpop.f32.mrf.mxu0
      %5943 = vmatprep.mubr.f32.mxu0 0.0
      %5944 = vmatmul.mubr.f32.gmra.mxu0 %v5771
      %v5945 = vpop.f32.mrf.mxu0
      %v5946 = vadd.f32 0.0, %v5945
      %v5947 = vpop.f32.mrf.mxu0
      %5948 = vmatprep.mubr.f32.mxu0 0.0
      %5949 = vmatmul.mubr.f32.gmra.mxu0 %v5774
      %v5950 = vpop.f32.mrf.mxu0
      %v5951 = vadd.f32 0.0, %v5950
      %v5952 = vpop.f32.mrf.mxu0
      %5953 = vmatprep.mubr.f32.mxu0 0.0
      %5954 = vmatmul.mubr.f32.gmra.mxu0 %v5777
      %v5955 = vpop.f32.mrf.mxu0
      %v5956 = vadd.f32 0.0, %v5955
      %v5957 = vpop.f32.mrf.mxu0
      %5958 = vmatprep.mubr.f32.mxu0 0.0
      %5959 = vmatmul.mubr.f32.gmra.mxu0 %v5780
      %v5960 = vpop.f32.mrf.mxu0
      %v5961 = vadd.f32 0.0, %v5960
      %v5962 = vpop.f32.mrf.mxu0
      %5963 = vmatprep.mubr.f32.mxu0 0.0
      %5964 = vmatmul.mubr.f32.gmra.mxu0 %v5783
      %v5965 = vpop.f32.mrf.mxu0
      %v5966 = vadd.f32 0.0, %v5965
      %v5967 = vpop.f32.mrf.mxu0
      %5968 = vmatprep.mubr.f32.mxu0 0.0
      %5969 = vmatmul.mubr.f32.gmra.mxu0 %v5786
      %v5970 = vpop.f32.mrf.mxu0
      %v5971 = vadd.f32 0.0, %v5970
      %v5972 = vpop.f32.mrf.mxu0
      %5973 = vmatprep.mubr.f32.mxu0 0.0
      %5974 = vmatmul.mubr.f32.gmra.mxu0 %v5789
      %v5975 = vpop.f32.mrf.mxu0
      %v5976 = vadd.f32 0.0, %v5975
      %v5977 = vpop.f32.mrf.mxu0
      %5978 = vmatprep.mubr.f32.mxu0 0.0
      %5979 = vmatmul.mubr.f32.gmra.mxu0 %v5792
      %v5980 = vpop.f32.mrf.mxu0
      %v5981 = vadd.f32 0.0, %v5980
      %v5982 = vpop.f32.mrf.mxu0
      %5983 = vmatprep.mubr.f32.mxu0 0.0
      %5984 = vmatmul.mubr.f32.gmra.mxu0 %v5795
      %v5985 = vpop.f32.mrf.mxu0
      %v5986 = vadd.f32 0.0, %v5985
      %v5987 = vpop.f32.mrf.mxu0
      %5988 = vmatprep.mubr.f32.mxu0 0.0
      %5989 = vmatmul.mubr.f32.gmra.mxu0 %v5798
      %v5990 = vpop.f32.mrf.mxu0
      %v5991 = vadd.f32 0.0, %v5990
      %v5992 = vpop.f32.mrf.mxu0
      %5993 = vmatprep.mubr.f32.mxu0 0.0
      %5994 = vmatmul.mubr.f32.gmra.mxu0 %v5801
      %v5995 = vpop.f32.mrf.mxu0
      %v5996 = vadd.f32 0.0, %v5995
      %v5997 = vpop.f32.mrf.mxu0
      %5998 = vmatprep.mubr.f32.mxu0 0.0
      %5999 = vmatmul.mubr.f32.gmra.mxu0 %v5804
      %v6000 = vpop.f32.mrf.mxu0
      %v6001 = vadd.f32 0.0, %v6000
      %v6002 = vpop.f32.mrf.mxu0
      %6003 = vmatprep.mubr.f32.mxu0 0.0
      %6004 = vmatmul.mubr.f32.gmra.mxu0 %v5807
      %v6005 = vpop.f32.mrf.mxu0
      %v6006 = vadd.f32 0.0, %v6005
      %v6007 = vpop.f32.mrf.mxu0
      %6008 = vmatprep.mubr.f32.mxu0 0.0
      %6009 = vmatmul.mubr.f32.gmra.mxu0 %v5810
      %v6010 = vpop.f32.mrf.mxu0
      %v6011 = vadd.f32 0.0, %v6010
      %v6012 = vpop.f32.mrf.mxu0
      %6013 = vmatprep.mubr.f32.mxu0 0.0
      %6014 = vmatmul.mubr.f32.gmra.mxu0 %v5813
      %v6015 = vpop.f32.mrf.mxu0
      %v6016 = vadd.f32 0.0, %v6015
      %v6017 = vpop.f32.mrf.mxu0
      %6018 = vmatprep.mubr.f32.mxu0 0.0
      %6019 = vmatmul.mubr.f32.gmra.mxu0 %v5816
      %v6020 = vpop.f32.mrf.mxu0
      %v6021 = vadd.f32 0.0, %v6020
      %v6022 = vpop.f32.mrf.mxu0
      %6023 = vmatprep.mubr.f32.mxu0 0.0
      %6024 = vmatmul.mubr.f32.gmra.mxu0 %v5819
      %v6025 = vpop.f32.mrf.mxu0
      %v6026 = vadd.f32 0.0, %v6025
      %v6027 = vpop.f32.mrf.mxu0
      %6028 = vmatprep.mubr.f32.mxu0 0.0
      %6029 = vmatmul.mubr.f32.gmra.mxu0 %v5822
      %v6030 = vpop.f32.mrf.mxu0
      %v6031 = vadd.f32 0.0, %v6030
      %v6032 = vpop.f32.mrf.mxu0
      %6033 = vmatprep.mubr.f32.mxu0 0.0
      %6034 = vmatmul.mubr.f32.gmra.mxu0 %v5825
      %v6035 = vpop.f32.mrf.mxu0
      %v6036 = vadd.f32 0.0, %v6035
      %v6037 = vpop.f32.mrf.mxu0
      %6038 = vmatprep.mubr.f32.mxu0 0.0
      %6039 = vmatmul.mubr.f32.gmra.mxu0 %v5828
      %v6040 = vpop.f32.mrf.mxu0
      %v6041 = vadd.f32 0.0, %v6040
      %v6042 = vpop.f32.mrf.mxu0
      %6043 = vmatprep.mubr.f32.mxu0 0.0
      %6044 = vmatmul.mubr.f32.gmra.mxu0 %v5831
      %v6045 = vpop.f32.mrf.mxu0
      %v6046 = vadd.f32 0.0, %v6045
      %v6047 = vpop.f32.mrf.mxu0
      %6048 = vmatprep.mubr.f32.mxu0 0.0
      %6049 = vmatmul.mubr.f32.gmra.mxu0 %v5834
      %v6050 = vpop.f32.mrf.mxu0
      %v6051 = vadd.f32 0.0, %v6050
      %v6052 = vpop.f32.mrf.mxu0
      %6053 = vmatprep.mubr.f32.mxu0 0.0
      %6054 = vmatmul.mubr.f32.gmra.mxu0 %v5837
      %v6055 = vpop.f32.mrf.mxu0
      %v6056 = vadd.f32 0.0, %v6055
      %v6057 = vpop.f32.mrf.mxu0
      %6058 = vmatprep.mubr.f32.mxu0 0.0
      %6059 = vmatmul.mubr.f32.gmra.mxu0 %v5840
      %v6060 = vpop.f32.mrf.mxu0
      %v6061 = vadd.f32 0.0, %v6060
      %v6062 = vpop.f32.mrf.mxu0
      %6063 = vmatprep.mubr.f32.mxu0 0.0
      %6064 = vmatmul.mubr.f32.gmra.mxu0 %v5843
      %v6065 = vpop.f32.mrf.mxu0
      %v6066 = vadd.f32 0.0, %v6065
      %v6067 = vpop.f32.mrf.mxu0
      %6068 = vmatprep.mubr.f32.mxu0 0.0
      %6069 = vmatmul.mubr.f32.gmra.mxu0 %v5846
      %v6070 = vpop.f32.mrf.mxu0
      %v6071 = vadd.f32 0.0, %v6070
      %v6072 = vpop.f32.mrf.mxu0
      %6073 = vmatprep.mubr.f32.mxu0 0.0
      %6074 = vmatmul.mubr.f32.gmra.mxu0 %v5849
      %v6075 = vpop.f32.mrf.mxu0
      %v6076 = vadd.f32 0.0, %v6075
      %v6077 = vpop.f32.mrf.mxu0
      %6078 = vdwg.mxu0
      %v6079 = vadd.f32 %v5689, %v5921
      %v6080 = vadd.f32 %v5690, %v5926
      %v6081 = vadd.f32 %v5691, %v5931
      %v6082 = vadd.f32 %v5692, %v5936
      %v6083 = vadd.f32 %v5693, %v5941
      %v6084 = vadd.f32 %v5694, %v5946
      %v6085 = vadd.f32 %v5695, %v5951
      %v6086 = vadd.f32 %v5696, %v5956
      %v6087 = vadd.f32 %v5697, %v5961
      %v6088 = vadd.f32 %v5698, %v5966
      %v6089 = vadd.f32 %v5699, %v5971
      %v6090 = vadd.f32 %v5700, %v5976
      %v6091 = vadd.f32 %v5701, %v5981
      %v6092 = vadd.f32 %v5702, %v5986
      %v6093 = vadd.f32 %v5703, %v5991
      %v6094 = vadd.f32 %v5704, %v5996
      %v6095 = vadd.f32 %v5705, %v6001
      %v6096 = vadd.f32 %v5706, %v6006
      %v6097 = vadd.f32 %v5707, %v6011
      %v6098 = vadd.f32 %v5708, %v6016
      %v6099 = vadd.f32 %v5709, %v6021
      %v6100 = vadd.f32 %v5710, %v6026
      %v6101 = vadd.f32 %v5711, %v6031
      %v6102 = vadd.f32 %v5712, %v6036
      %v6103 = vadd.f32 %v5713, %v6041
      %v6104 = vadd.f32 %v5714, %v6046
      %v6105 = vadd.f32 %v5715, %v6051
      %v6106 = vadd.f32 %v5716, %v6056
      %v6107 = vadd.f32 %v5717, %v6061
      %v6108 = vadd.f32 %v5718, %v6066
      %v6109 = vadd.f32 %v5719, %v6071
      %v6110 = vadd.f32 %v5720, %v6076
      %v6111 = vld [vmem:[%s4582 + $0x1] sm:$0xff]
      %v6112 = vld [vmem:[%s4582 + $0x9] sm:$0xff]
      %v6113 = vld [vmem:[%s4582 + $0x19] sm:$0xff]
      %v6114 = vld [vmem:[%s4582 + $0x21] sm:$0xff]
      %v6115 = vld [vmem:[%s4582 + $0x31] sm:$0xff]
      %v6116 = vld [vmem:[%s4582 + $0x39] sm:$0xff]
      %v6117 = vld [vmem:[%s4582 + $0x49] sm:$0xff]
      %v6118 = vld [vmem:[%s4582 + $0x51] sm:$0xff]
      %v6119 = vld [vmem:[%s4582 + $0x61] sm:$0xff]
      %v6120 = vld [vmem:[%s4582 + $0x69] sm:$0xff]
      %v6121 = vld [vmem:[%s4582 + $0x79] sm:$0xff]
      %v6122 = vld [vmem:[%s4582 + $0x81] sm:$0xff]
      %v6123 = vld [vmem:[%s4582 + $0x91] sm:$0xff]
      %v6124 = vld [vmem:[%s4582 + $0x99] sm:$0xff]
      %v6125 = vld [vmem:[%s4582 + $0xa9] sm:$0xff]
      %v6126 = vld [vmem:[%s4582 + $0xb1] sm:$0xff]
      %v6127 = vld [vmem:[%s4582 + $0xc1] sm:$0xff]
      %v6128 = vld [vmem:[%s4582 + $0xc9] sm:$0xff]
      %v6129 = vld [vmem:[%s4582 + $0xd9] sm:$0xff]
      %v6130 = vld [vmem:[%s4582 + $0xe1] sm:$0xff]
      %v6131 = vld [vmem:[%s4582 + $0xf1] sm:$0xff]
      %v6132 = vld [vmem:[%s4582 + $0xf9] sm:$0xff]
      %v6133 = vld [vmem:[%s4582 + $0x109] sm:$0xff]
      %v6134 = vld [vmem:[%s4582 + $0x111] sm:$0xff]
      %v6135 = vld [vmem:[%s4582 + $0x121] sm:$0xff]
      %v6136 = vld [vmem:[%s4582 + $0x129] sm:$0xff]
      %v6137 = vld [vmem:[%s4582 + $0x139] sm:$0xff]
      %v6138 = vld [vmem:[%s4582 + $0x141] sm:$0xff]
      %v6139 = vld [vmem:[%s4582 + $0x151] sm:$0xff]
      %v6140 = vld [vmem:[%s4582 + $0x159] sm:$0xff]
      %v6141 = vld [vmem:[%s4582 + $0x169] sm:$0xff]
      %v6142 = vld [vmem:[%s4582 + $0x171] sm:$0xff]
      %s6143 = scalar_lea.vmem %s6, 16
      %v6144 = vld [vmem:[%s6143] sm:$0xf]
      %v6146 = vsel %vm804, %v6111, 0
      %v6149 = vsel %vm804, %v6112, 0
      %v6152 = vsel %vm804, %v6113, 0
      %v6155 = vsel %vm804, %v6114, 0
      %v6158 = vsel %vm804, %v6115, 0
      %v6161 = vsel %vm804, %v6116, 0
      %v6164 = vsel %vm804, %v6117, 0
      %v6167 = vsel %vm804, %v6118, 0
      %v6170 = vsel %vm804, %v6119, 0
      %v6173 = vsel %vm804, %v6120, 0
      %v6176 = vsel %vm804, %v6121, 0
      %v6179 = vsel %vm804, %v6122, 0
      %v6182 = vsel %vm804, %v6123, 0
      %v6185 = vsel %vm804, %v6124, 0
      %v6188 = vsel %vm804, %v6125, 0
      %v6191 = vsel %vm804, %v6126, 0
      %v6194 = vsel %vm804, %v6127, 0
      %v6197 = vsel %vm804, %v6128, 0
      %v6200 = vsel %vm804, %v6129, 0
      %v6203 = vsel %vm804, %v6130, 0
      %v6206 = vsel %vm804, %v6131, 0
      %v6209 = vsel %vm804, %v6132, 0
      %v6212 = vsel %vm804, %v6133, 0
      %v6215 = vsel %vm804, %v6134, 0
      %v6218 = vsel %vm804, %v6135, 0
      %v6221 = vsel %vm804, %v6136, 0
      %v6224 = vsel %vm804, %v6137, 0
      %v6227 = vsel %vm804, %v6138, 0
      %v6230 = vsel %vm804, %v6139, 0
      %v6233 = vsel %vm804, %v6140, 0
      %v6236 = vsel %vm804, %v6141, 0
      %v6239 = vsel %vm804, %v6142, 0
      %v6242 = vsel %vm4778, %v6144, 0
      %6244 = vmatprep.subr.mxu0 0.0
      %6245 = vmatpush1.msra.mxu0 0.0
      %6246 = vmatprep.subr.mxu0 0.0
      %6247 = vmatpush1.msra.mxu0 0.0
      %6248 = vmatprep.subr.mxu0 0.0
      %6249 = vmatpush1.msra.mxu0 0.0
      %6250 = vmatprep.subr.mxu0 0.0
      %6251 = vmatpush1.msra.mxu0 0.0
      %6252 = vmatprep.subr.mxu0 0.0
      %6253 = vmatpush1.msra.mxu0 0.0
      %6254 = vmatprep.subr.mxu0 0.0
      %6255 = vmatpush1.msra.mxu0 0.0
      %6256 = vmatprep.subr.mxu0 0.0
      %6257 = vmatpush1.msra.mxu0 0.0
      %6258 = vmatprep.subr.mxu0 0.0
      %6259 = vmatpush1.msra.mxu0 0.0
      %6260 = vmatprep.subr.mxu0 0.0
      %6261 = vmatpush1.msra.mxu0 0.0
      %6262 = vmatprep.subr.mxu0 0.0
      %6263 = vmatpush1.msra.mxu0 0.0
      %6264 = vmatprep.subr.mxu0 0.0
      %6265 = vmatpush1.msra.mxu0 0.0
      %6266 = vmatprep.subr.mxu0 0.0
      %6267 = vmatpush1.msra.mxu0 0.0
      %6268 = vmatprep.subr.mxu0 0.0
      %6269 = vmatpush1.msra.mxu0 0.0
      %6270 = vmatprep.subr.mxu0 0.0
      %6271 = vmatpush1.msra.mxu0 0.0
      %6272 = vmatprep.subr.mxu0 0.0
      %6273 = vmatpush1.msra.mxu0 0.0
      %6274 = vmatprep.subr.mxu0 0.0
      %6275 = vmatpush1.msra.mxu0 %v6242
      %6276 = vmatprep.subr.mxu0 0.0
      %6277 = vmatpush2.msra.mxu0 0.0
      %6278 = vmatprep.subr.mxu0 0.0
      %6279 = vmatpush2.msra.mxu0 0.0
      %6280 = vmatprep.subr.mxu0 0.0
      %6281 = vmatpush2.msra.mxu0 0.0
      %6282 = vmatprep.subr.mxu0 0.0
      %6283 = vmatpush2.msra.mxu0 0.0
      %6284 = vmatprep.subr.mxu0 0.0
      %6285 = vmatpush2.msra.mxu0 0.0
      %6286 = vmatprep.subr.mxu0 0.0
      %6287 = vmatpush2.msra.mxu0 0.0
      %6288 = vmatprep.subr.mxu0 0.0
      %6289 = vmatpush2.msra.mxu0 0.0
      %6290 = vmatprep.subr.mxu0 0.0
      %6291 = vmatpush2.msra.mxu0 0.0
      %6292 = vmatprep.subr.mxu0 0.0
      %6293 = vmatpush2.msra.mxu0 0.0
      %6294 = vmatprep.subr.mxu0 0.0
      %6295 = vmatpush2.msra.mxu0 0.0
      %6296 = vmatprep.subr.mxu0 0.0
      %6297 = vmatpush2.msra.mxu0 0.0
      %6298 = vmatprep.subr.mxu0 0.0
      %6299 = vmatpush2.msra.mxu0 0.0
      %6300 = vmatprep.subr.mxu0 0.0
      %6301 = vmatpush2.msra.mxu0 0.0
      %6302 = vmatprep.subr.mxu0 0.0
      %6303 = vmatpush2.msra.mxu0 0.0
      %6304 = vmatprep.subr.mxu0 0.0
      %6305 = vmatpush2.msra.mxu0 0.0
      %6306 = vmatprep.subr.mxu0 0.0
      %6307 = vmatpush2.msra.mxu0 0.0
      %6308 = vmatprep.mubr.f32.mxu0 0.0
      %6309 = vmatmul.mubr.f32.gmra.mxu0 %v6146
      %v6310 = vpop.f32.mrf.mxu0
      %v6311 = vadd.f32 0.0, %v6310
      %v6312 = vpop.f32.mrf.mxu0
      %6313 = vmatprep.mubr.f32.mxu0 0.0
      %6314 = vmatmul.mubr.f32.gmra.mxu0 %v6149
      %v6315 = vpop.f32.mrf.mxu0
      %v6316 = vadd.f32 0.0, %v6315
      %v6317 = vpop.f32.mrf.mxu0
      %6318 = vmatprep.mubr.f32.mxu0 0.0
      %6319 = vmatmul.mubr.f32.gmra.mxu0 %v6152
      %v6320 = vpop.f32.mrf.mxu0
      %v6321 = vadd.f32 0.0, %v6320
      %v6322 = vpop.f32.mrf.mxu0
      %6323 = vmatprep.mubr.f32.mxu0 0.0
      %6324 = vmatmul.mubr.f32.gmra.mxu0 %v6155
      %v6325 = vpop.f32.mrf.mxu0
      %v6326 = vadd.f32 0.0, %v6325
      %v6327 = vpop.f32.mrf.mxu0
      %6328 = vmatprep.mubr.f32.mxu0 0.0
      %6329 = vmatmul.mubr.f32.gmra.mxu0 %v6158
      %v6330 = vpop.f32.mrf.mxu0
      %v6331 = vadd.f32 0.0, %v6330
      %v6332 = vpop.f32.mrf.mxu0
      %6333 = vmatprep.mubr.f32.mxu0 0.0
      %6334 = vmatmul.mubr.f32.gmra.mxu0 %v6161
      %v6335 = vpop.f32.mrf.mxu0
      %v6336 = vadd.f32 0.0, %v6335
      %v6337 = vpop.f32.mrf.mxu0
      %6338 = vmatprep.mubr.f32.mxu0 0.0
      %6339 = vmatmul.mubr.f32.gmra.mxu0 %v6164
      %v6340 = vpop.f32.mrf.mxu0
      %v6341 = vadd.f32 0.0, %v6340
      %v6342 = vpop.f32.mrf.mxu0
      %6343 = vmatprep.mubr.f32.mxu0 0.0
      %6344 = vmatmul.mubr.f32.gmra.mxu0 %v6167
      %v6345 = vpop.f32.mrf.mxu0
      %v6346 = vadd.f32 0.0, %v6345
      %v6347 = vpop.f32.mrf.mxu0
      %6348 = vmatprep.mubr.f32.mxu0 0.0
      %6349 = vmatmul.mubr.f32.gmra.mxu0 %v6170
      %v6350 = vpop.f32.mrf.mxu0
      %v6351 = vadd.f32 0.0, %v6350
      %v6352 = vpop.f32.mrf.mxu0
      %6353 = vmatprep.mubr.f32.mxu0 0.0
      %6354 = vmatmul.mubr.f32.gmra.mxu0 %v6173
      %v6355 = vpop.f32.mrf.mxu0
      %v6356 = vadd.f32 0.0, %v6355
      %v6357 = vpop.f32.mrf.mxu0
      %6358 = vmatprep.mubr.f32.mxu0 0.0
      %6359 = vmatmul.mubr.f32.gmra.mxu0 %v6176
      %v6360 = vpop.f32.mrf.mxu0
      %v6361 = vadd.f32 0.0, %v6360
      %v6362 = vpop.f32.mrf.mxu0
      %6363 = vmatprep.mubr.f32.mxu0 0.0
      %6364 = vmatmul.mubr.f32.gmra.mxu0 %v6179
      %v6365 = vpop.f32.mrf.mxu0
      %v6366 = vadd.f32 0.0, %v6365
      %v6367 = vpop.f32.mrf.mxu0
      %6368 = vmatprep.mubr.f32.mxu0 0.0
      %6369 = vmatmul.mubr.f32.gmra.mxu0 %v6182
      %v6370 = vpop.f32.mrf.mxu0
      %v6371 = vadd.f32 0.0, %v6370
      %v6372 = vpop.f32.mrf.mxu0
      %6373 = vmatprep.mubr.f32.mxu0 0.0
      %6374 = vmatmul.mubr.f32.gmra.mxu0 %v6185
      %v6375 = vpop.f32.mrf.mxu0
      %v6376 = vadd.f32 0.0, %v6375
      %v6377 = vpop.f32.mrf.mxu0
      %6378 = vmatprep.mubr.f32.mxu0 0.0
      %6379 = vmatmul.mubr.f32.gmra.mxu0 %v6188
      %v6380 = vpop.f32.mrf.mxu0
      %v6381 = vadd.f32 0.0, %v6380
      %v6382 = vpop.f32.mrf.mxu0
      %6383 = vmatprep.mubr.f32.mxu0 0.0
      %6384 = vmatmul.mubr.f32.gmra.mxu0 %v6191
      %v6385 = vpop.f32.mrf.mxu0
      %v6386 = vadd.f32 0.0, %v6385
      %v6387 = vpop.f32.mrf.mxu0
      %6388 = vmatprep.mubr.f32.mxu0 0.0
      %6389 = vmatmul.mubr.f32.gmra.mxu0 %v6194
      %v6390 = vpop.f32.mrf.mxu0
      %v6391 = vadd.f32 0.0, %v6390
      %v6392 = vpop.f32.mrf.mxu0
      %6393 = vmatprep.mubr.f32.mxu0 0.0
      %6394 = vmatmul.mubr.f32.gmra.mxu0 %v6197
      %v6395 = vpop.f32.mrf.mxu0
      %v6396 = vadd.f32 0.0, %v6395
      %v6397 = vpop.f32.mrf.mxu0
      %6398 = vmatprep.mubr.f32.mxu0 0.0
      %6399 = vmatmul.mubr.f32.gmra.mxu0 %v6200
      %v6400 = vpop.f32.mrf.mxu0
      %v6401 = vadd.f32 0.0, %v6400
      %v6402 = vpop.f32.mrf.mxu0
      %6403 = vmatprep.mubr.f32.mxu0 0.0
      %6404 = vmatmul.mubr.f32.gmra.mxu0 %v6203
      %v6405 = vpop.f32.mrf.mxu0
      %v6406 = vadd.f32 0.0, %v6405
      %v6407 = vpop.f32.mrf.mxu0
      %6408 = vmatprep.mubr.f32.mxu0 0.0
      %6409 = vmatmul.mubr.f32.gmra.mxu0 %v6206
      %v6410 = vpop.f32.mrf.mxu0
      %v6411 = vadd.f32 0.0, %v6410
      %v6412 = vpop.f32.mrf.mxu0
      %6413 = vmatprep.mubr.f32.mxu0 0.0
      %6414 = vmatmul.mubr.f32.gmra.mxu0 %v6209
      %v6415 = vpop.f32.mrf.mxu0
      %v6416 = vadd.f32 0.0, %v6415
      %v6417 = vpop.f32.mrf.mxu0
      %6418 = vmatprep.mubr.f32.mxu0 0.0
      %6419 = vmatmul.mubr.f32.gmra.mxu0 %v6212
      %v6420 = vpop.f32.mrf.mxu0
      %v6421 = vadd.f32 0.0, %v6420
      %v6422 = vpop.f32.mrf.mxu0
      %6423 = vmatprep.mubr.f32.mxu0 0.0
      %6424 = vmatmul.mubr.f32.gmra.mxu0 %v6215
      %v6425 = vpop.f32.mrf.mxu0
      %v6426 = vadd.f32 0.0, %v6425
      %v6427 = vpop.f32.mrf.mxu0
      %6428 = vmatprep.mubr.f32.mxu0 0.0
      %6429 = vmatmul.mubr.f32.gmra.mxu0 %v6218
      %v6430 = vpop.f32.mrf.mxu0
      %v6431 = vadd.f32 0.0, %v6430
      %v6432 = vpop.f32.mrf.mxu0
      %6433 = vmatprep.mubr.f32.mxu0 0.0
      %6434 = vmatmul.mubr.f32.gmra.mxu0 %v6221
      %v6435 = vpop.f32.mrf.mxu0
      %v6436 = vadd.f32 0.0, %v6435
      %v6437 = vpop.f32.mrf.mxu0
      %6438 = vmatprep.mubr.f32.mxu0 0.0
      %6439 = vmatmul.mubr.f32.gmra.mxu0 %v6224
      %v6440 = vpop.f32.mrf.mxu0
      %v6441 = vadd.f32 0.0, %v6440
      %v6442 = vpop.f32.mrf.mxu0
      %6443 = vmatprep.mubr.f32.mxu0 0.0
      %6444 = vmatmul.mubr.f32.gmra.mxu0 %v6227
      %v6445 = vpop.f32.mrf.mxu0
      %v6446 = vadd.f32 0.0, %v6445
      %v6447 = vpop.f32.mrf.mxu0
      %6448 = vmatprep.mubr.f32.mxu0 0.0
      %6449 = vmatmul.mubr.f32.gmra.mxu0 %v6230
      %v6450 = vpop.f32.mrf.mxu0
      %v6451 = vadd.f32 0.0, %v6450
      %v6452 = vpop.f32.mrf.mxu0
      %6453 = vmatprep.mubr.f32.mxu0 0.0
      %6454 = vmatmul.mubr.f32.gmra.mxu0 %v6233
      %v6455 = vpop.f32.mrf.mxu0
      %v6456 = vadd.f32 0.0, %v6455
      %v6457 = vpop.f32.mrf.mxu0
      %6458 = vmatprep.mubr.f32.mxu0 0.0
      %6459 = vmatmul.mubr.f32.gmra.mxu0 %v6236
      %v6460 = vpop.f32.mrf.mxu0
      %v6461 = vadd.f32 0.0, %v6460
      %v6462 = vpop.f32.mrf.mxu0
      %6463 = vmatprep.mubr.f32.mxu0 0.0
      %6464 = vmatmul.mubr.f32.gmra.mxu0 %v6239
      %v6465 = vpop.f32.mrf.mxu0
      %v6466 = vadd.f32 0.0, %v6465
      %v6467 = vpop.f32.mrf.mxu0
      %6468 = vdwg.mxu0
      %v6469 = vadd.f32 %v6079, %v6311
      %v6470 = vadd.f32 %v6080, %v6316
      %v6471 = vadd.f32 %v6081, %v6321
      %v6472 = vadd.f32 %v6082, %v6326
      %v6473 = vadd.f32 %v6083, %v6331
      %v6474 = vadd.f32 %v6084, %v6336
      %v6475 = vadd.f32 %v6085, %v6341
      %v6476 = vadd.f32 %v6086, %v6346
      %v6477 = vadd.f32 %v6087, %v6351
      %v6478 = vadd.f32 %v6088, %v6356
      %v6479 = vadd.f32 %v6089, %v6361
      %v6480 = vadd.f32 %v6090, %v6366
      %v6481 = vadd.f32 %v6091, %v6371
      %v6482 = vadd.f32 %v6092, %v6376
      %v6483 = vadd.f32 %v6093, %v6381
      %v6484 = vadd.f32 %v6094, %v6386
      %v6485 = vadd.f32 %v6095, %v6391
      %v6486 = vadd.f32 %v6096, %v6396
      %v6487 = vadd.f32 %v6097, %v6401
      %v6488 = vadd.f32 %v6098, %v6406
      %v6489 = vadd.f32 %v6099, %v6411
      %v6490 = vadd.f32 %v6100, %v6416
      %v6491 = vadd.f32 %v6101, %v6421
      %v6492 = vadd.f32 %v6102, %v6426
      %v6493 = vadd.f32 %v6103, %v6431
      %v6494 = vadd.f32 %v6104, %v6436
      %v6495 = vadd.f32 %v6105, %v6441
      %v6496 = vadd.f32 %v6106, %v6446
      %v6497 = vadd.f32 %v6107, %v6451
      %v6498 = vadd.f32 %v6108, %v6456
      %v6499 = vadd.f32 %v6109, %v6461
      %v6500 = vadd.f32 %v6110, %v6466
      %v6501 = vld [vmem:[%s4582 + $0x2] sm:$0xff]
      %v6502 = vld [vmem:[%s4582 + $0xa] sm:$0xff]
      %v6503 = vld [vmem:[%s4582 + $0x1a] sm:$0xff]
      %v6504 = vld [vmem:[%s4582 + $0x22] sm:$0xff]
      %v6505 = vld [vmem:[%s4582 + $0x32] sm:$0xff]
      %v6506 = vld [vmem:[%s4582 + $0x3a] sm:$0xff]
      %v6507 = vld [vmem:[%s4582 + $0x4a] sm:$0xff]
      %v6508 = vld [vmem:[%s4582 + $0x52] sm:$0xff]
      %v6509 = vld [vmem:[%s4582 + $0x62] sm:$0xff]
      %v6510 = vld [vmem:[%s4582 + $0x6a] sm:$0xff]
      %v6511 = vld [vmem:[%s4582 + $0x7a] sm:$0xff]
      %v6512 = vld [vmem:[%s4582 + $0x82] sm:$0xff]
      %v6513 = vld [vmem:[%s4582 + $0x92] sm:$0xff]
      %v6514 = vld [vmem:[%s4582 + $0x9a] sm:$0xff]
      %v6515 = vld [vmem:[%s4582 + $0xaa] sm:$0xff]
      %v6516 = vld [vmem:[%s4582 + $0xb2] sm:$0xff]
      %v6517 = vld [vmem:[%s4582 + $0xc2] sm:$0xff]
      %v6518 = vld [vmem:[%s4582 + $0xca] sm:$0xff]
      %v6519 = vld [vmem:[%s4582 + $0xda] sm:$0xff]
      %v6520 = vld [vmem:[%s4582 + $0xe2] sm:$0xff]
      %v6521 = vld [vmem:[%s4582 + $0xf2] sm:$0xff]
      %v6522 = vld [vmem:[%s4582 + $0xfa] sm:$0xff]
      %v6523 = vld [vmem:[%s4582 + $0x10a] sm:$0xff]
      %v6524 = vld [vmem:[%s4582 + $0x112] sm:$0xff]
      %v6525 = vld [vmem:[%s4582 + $0x122] sm:$0xff]
      %v6526 = vld [vmem:[%s4582 + $0x12a] sm:$0xff]
      %v6527 = vld [vmem:[%s4582 + $0x13a] sm:$0xff]
      %v6528 = vld [vmem:[%s4582 + $0x142] sm:$0xff]
      %v6529 = vld [vmem:[%s4582 + $0x152] sm:$0xff]
      %v6530 = vld [vmem:[%s4582 + $0x15a] sm:$0xff]
      %v6531 = vld [vmem:[%s4582 + $0x16a] sm:$0xff]
      %v6532 = vld [vmem:[%s4582 + $0x172] sm:$0xff]
      %s6533 = scalar_lea.vmem %s6, 20
      %v6534 = vld [vmem:[%s6533] sm:$0xf]
      %v6536 = vsel %vm804, %v6501, 0
      %v6539 = vsel %vm804, %v6502, 0
      %v6542 = vsel %vm804, %v6503, 0
      %v6545 = vsel %vm804, %v6504, 0
      %v6548 = vsel %vm804, %v6505, 0
      %v6551 = vsel %vm804, %v6506, 0
      %v6554 = vsel %vm804, %v6507, 0
      %v6557 = vsel %vm804, %v6508, 0
      %v6560 = vsel %vm804, %v6509, 0
      %v6563 = vsel %vm804, %v6510, 0
      %v6566 = vsel %vm804, %v6511, 0
      %v6569 = vsel %vm804, %v6512, 0
      %v6572 = vsel %vm804, %v6513, 0
      %v6575 = vsel %vm804, %v6514, 0
      %v6578 = vsel %vm804, %v6515, 0
      %v6581 = vsel %vm804, %v6516, 0
      %v6584 = vsel %vm804, %v6517, 0
      %v6587 = vsel %vm804, %v6518, 0
      %v6590 = vsel %vm804, %v6519, 0
      %v6593 = vsel %vm804, %v6520, 0
      %v6596 = vsel %vm804, %v6521, 0
      %v6599 = vsel %vm804, %v6522, 0
      %v6602 = vsel %vm804, %v6523, 0
      %v6605 = vsel %vm804, %v6524, 0
      %v6608 = vsel %vm804, %v6525, 0
      %v6611 = vsel %vm804, %v6526, 0
      %v6614 = vsel %vm804, %v6527, 0
      %v6617 = vsel %vm804, %v6528, 0
      %v6620 = vsel %vm804, %v6529, 0
      %v6623 = vsel %vm804, %v6530, 0
      %v6626 = vsel %vm804, %v6531, 0
      %v6629 = vsel %vm804, %v6532, 0
      %v6632 = vsel %vm4778, %v6534, 0
      %6634 = vmatprep.subr.mxu0 0.0
      %6635 = vmatpush1.msra.mxu0 0.0
      %6636 = vmatprep.subr.mxu0 0.0
      %6637 = vmatpush1.msra.mxu0 0.0
      %6638 = vmatprep.subr.mxu0 0.0
      %6639 = vmatpush1.msra.mxu0 0.0
      %6640 = vmatprep.subr.mxu0 0.0
      %6641 = vmatpush1.msra.mxu0 0.0
      %6642 = vmatprep.subr.mxu0 0.0
      %6643 = vmatpush1.msra.mxu0 0.0
      %6644 = vmatprep.subr.mxu0 0.0
      %6645 = vmatpush1.msra.mxu0 0.0
      %6646 = vmatprep.subr.mxu0 0.0
      %6647 = vmatpush1.msra.mxu0 0.0
      %6648 = vmatprep.subr.mxu0 0.0
      %6649 = vmatpush1.msra.mxu0 0.0
      %6650 = vmatprep.subr.mxu0 0.0
      %6651 = vmatpush1.msra.mxu0 0.0
      %6652 = vmatprep.subr.mxu0 0.0
      %6653 = vmatpush1.msra.mxu0 0.0
      %6654 = vmatprep.subr.mxu0 0.0
      %6655 = vmatpush1.msra.mxu0 0.0
      %6656 = vmatprep.subr.mxu0 0.0
      %6657 = vmatpush1.msra.mxu0 0.0
      %6658 = vmatprep.subr.mxu0 0.0
      %6659 = vmatpush1.msra.mxu0 0.0
      %6660 = vmatprep.subr.mxu0 0.0
      %6661 = vmatpush1.msra.mxu0 0.0
      %6662 = vmatprep.subr.mxu0 0.0
      %6663 = vmatpush1.msra.mxu0 0.0
      %6664 = vmatprep.subr.mxu0 0.0
      %6665 = vmatpush1.msra.mxu0 %v6632
      %6666 = vmatprep.subr.mxu0 0.0
      %6667 = vmatpush2.msra.mxu0 0.0
      %6668 = vmatprep.subr.mxu0 0.0
      %6669 = vmatpush2.msra.mxu0 0.0
      %6670 = vmatprep.subr.mxu0 0.0
      %6671 = vmatpush2.msra.mxu0 0.0
      %6672 = vmatprep.subr.mxu0 0.0
      %6673 = vmatpush2.msra.mxu0 0.0
      %6674 = vmatprep.subr.mxu0 0.0
      %6675 = vmatpush2.msra.mxu0 0.0
      %6676 = vmatprep.subr.mxu0 0.0
      %6677 = vmatpush2.msra.mxu0 0.0
      %6678 = vmatprep.subr.mxu0 0.0
      %6679 = vmatpush2.msra.mxu0 0.0
      %6680 = vmatprep.subr.mxu0 0.0
      %6681 = vmatpush2.msra.mxu0 0.0
      %6682 = vmatprep.subr.mxu0 0.0
      %6683 = vmatpush2.msra.mxu0 0.0
      %6684 = vmatprep.subr.mxu0 0.0
      %6685 = vmatpush2.msra.mxu0 0.0
      %6686 = vmatprep.subr.mxu0 0.0
      %6687 = vmatpush2.msra.mxu0 0.0
      %6688 = vmatprep.subr.mxu0 0.0
      %6689 = vmatpush2.msra.mxu0 0.0
      %6690 = vmatprep.subr.mxu0 0.0
      %6691 = vmatpush2.msra.mxu0 0.0
      %6692 = vmatprep.subr.mxu0 0.0
      %6693 = vmatpush2.msra.mxu0 0.0
      %6694 = vmatprep.subr.mxu0 0.0
      %6695 = vmatpush2.msra.mxu0 0.0
      %6696 = vmatprep.subr.mxu0 0.0
      %6697 = vmatpush2.msra.mxu0 0.0
      %6698 = vmatprep.mubr.f32.mxu0 0.0
      %6699 = vmatmul.mubr.f32.gmra.mxu0 %v6536
      %v6700 = vpop.f32.mrf.mxu0
      %v6701 = vadd.f32 0.0, %v6700
      %v6702 = vpop.f32.mrf.mxu0
      %6703 = vmatprep.mubr.f32.mxu0 0.0
      %6704 = vmatmul.mubr.f32.gmra.mxu0 %v6539
      %v6705 = vpop.f32.mrf.mxu0
      %v6706 = vadd.f32 0.0, %v6705
      %v6707 = vpop.f32.mrf.mxu0
      %6708 = vmatprep.mubr.f32.mxu0 0.0
      %6709 = vmatmul.mubr.f32.gmra.mxu0 %v6542
      %v6710 = vpop.f32.mrf.mxu0
      %v6711 = vadd.f32 0.0, %v6710
      %v6712 = vpop.f32.mrf.mxu0
      %6713 = vmatprep.mubr.f32.mxu0 0.0
      %6714 = vmatmul.mubr.f32.gmra.mxu0 %v6545
      %v6715 = vpop.f32.mrf.mxu0
      %v6716 = vadd.f32 0.0, %v6715
      %v6717 = vpop.f32.mrf.mxu0
      %6718 = vmatprep.mubr.f32.mxu0 0.0
      %6719 = vmatmul.mubr.f32.gmra.mxu0 %v6548
      %v6720 = vpop.f32.mrf.mxu0
      %v6721 = vadd.f32 0.0, %v6720
      %v6722 = vpop.f32.mrf.mxu0
      %6723 = vmatprep.mubr.f32.mxu0 0.0
      %6724 = vmatmul.mubr.f32.gmra.mxu0 %v6551
      %v6725 = vpop.f32.mrf.mxu0
      %v6726 = vadd.f32 0.0, %v6725
      %v6727 = vpop.f32.mrf.mxu0
      %6728 = vmatprep.mubr.f32.mxu0 0.0
      %6729 = vmatmul.mubr.f32.gmra.mxu0 %v6554
      %v6730 = vpop.f32.mrf.mxu0
      %v6731 = vadd.f32 0.0, %v6730
      %v6732 = vpop.f32.mrf.mxu0
      %6733 = vmatprep.mubr.f32.mxu0 0.0
      %6734 = vmatmul.mubr.f32.gmra.mxu0 %v6557
      %v6735 = vpop.f32.mrf.mxu0
      %v6736 = vadd.f32 0.0, %v6735
      %v6737 = vpop.f32.mrf.mxu0
      %6738 = vmatprep.mubr.f32.mxu0 0.0
      %6739 = vmatmul.mubr.f32.gmra.mxu0 %v6560
      %v6740 = vpop.f32.mrf.mxu0
      %v6741 = vadd.f32 0.0, %v6740
      %v6742 = vpop.f32.mrf.mxu0
      %6743 = vmatprep.mubr.f32.mxu0 0.0
      %6744 = vmatmul.mubr.f32.gmra.mxu0 %v6563
      %v6745 = vpop.f32.mrf.mxu0
      %v6746 = vadd.f32 0.0, %v6745
      %v6747 = vpop.f32.mrf.mxu0
      %6748 = vmatprep.mubr.f32.mxu0 0.0
      %6749 = vmatmul.mubr.f32.gmra.mxu0 %v6566
      %v6750 = vpop.f32.mrf.mxu0
      %v6751 = vadd.f32 0.0, %v6750
      %v6752 = vpop.f32.mrf.mxu0
      %6753 = vmatprep.mubr.f32.mxu0 0.0
      %6754 = vmatmul.mubr.f32.gmra.mxu0 %v6569
      %v6755 = vpop.f32.mrf.mxu0
      %v6756 = vadd.f32 0.0, %v6755
      %v6757 = vpop.f32.mrf.mxu0
      %6758 = vmatprep.mubr.f32.mxu0 0.0
      %6759 = vmatmul.mubr.f32.gmra.mxu0 %v6572
      %v6760 = vpop.f32.mrf.mxu0
      %v6761 = vadd.f32 0.0, %v6760
      %v6762 = vpop.f32.mrf.mxu0
      %6763 = vmatprep.mubr.f32.mxu0 0.0
      %6764 = vmatmul.mubr.f32.gmra.mxu0 %v6575
      %v6765 = vpop.f32.mrf.mxu0
      %v6766 = vadd.f32 0.0, %v6765
      %v6767 = vpop.f32.mrf.mxu0
      %6768 = vmatprep.mubr.f32.mxu0 0.0
      %6769 = vmatmul.mubr.f32.gmra.mxu0 %v6578
      %v6770 = vpop.f32.mrf.mxu0
      %v6771 = vadd.f32 0.0, %v6770
      %v6772 = vpop.f32.mrf.mxu0
      %6773 = vmatprep.mubr.f32.mxu0 0.0
      %6774 = vmatmul.mubr.f32.gmra.mxu0 %v6581
      %v6775 = vpop.f32.mrf.mxu0
      %v6776 = vadd.f32 0.0, %v6775
      %v6777 = vpop.f32.mrf.mxu0
      %6778 = vmatprep.mubr.f32.mxu0 0.0
      %6779 = vmatmul.mubr.f32.gmra.mxu0 %v6584
      %v6780 = vpop.f32.mrf.mxu0
      %v6781 = vadd.f32 0.0, %v6780
      %v6782 = vpop.f32.mrf.mxu0
      %6783 = vmatprep.mubr.f32.mxu0 0.0
      %6784 = vmatmul.mubr.f32.gmra.mxu0 %v6587
      %v6785 = vpop.f32.mrf.mxu0
      %v6786 = vadd.f32 0.0, %v6785
      %v6787 = vpop.f32.mrf.mxu0
      %6788 = vmatprep.mubr.f32.mxu0 0.0
      %6789 = vmatmul.mubr.f32.gmra.mxu0 %v6590
      %v6790 = vpop.f32.mrf.mxu0
      %v6791 = vadd.f32 0.0, %v6790
      %v6792 = vpop.f32.mrf.mxu0
      %6793 = vmatprep.mubr.f32.mxu0 0.0
      %6794 = vmatmul.mubr.f32.gmra.mxu0 %v6593
      %v6795 = vpop.f32.mrf.mxu0
      %v6796 = vadd.f32 0.0, %v6795
      %v6797 = vpop.f32.mrf.mxu0
      %6798 = vmatprep.mubr.f32.mxu0 0.0
      %6799 = vmatmul.mubr.f32.gmra.mxu0 %v6596
      %v6800 = vpop.f32.mrf.mxu0
      %v6801 = vadd.f32 0.0, %v6800
      %v6802 = vpop.f32.mrf.mxu0
      %6803 = vmatprep.mubr.f32.mxu0 0.0
      %6804 = vmatmul.mubr.f32.gmra.mxu0 %v6599
      %v6805 = vpop.f32.mrf.mxu0
      %v6806 = vadd.f32 0.0, %v6805
      %v6807 = vpop.f32.mrf.mxu0
      %6808 = vmatprep.mubr.f32.mxu0 0.0
      %6809 = vmatmul.mubr.f32.gmra.mxu0 %v6602
      %v6810 = vpop.f32.mrf.mxu0
      %v6811 = vadd.f32 0.0, %v6810
      %v6812 = vpop.f32.mrf.mxu0
      %6813 = vmatprep.mubr.f32.mxu0 0.0
      %6814 = vmatmul.mubr.f32.gmra.mxu0 %v6605
      %v6815 = vpop.f32.mrf.mxu0
      %v6816 = vadd.f32 0.0, %v6815
      %v6817 = vpop.f32.mrf.mxu0
      %6818 = vmatprep.mubr.f32.mxu0 0.0
      %6819 = vmatmul.mubr.f32.gmra.mxu0 %v6608
      %v6820 = vpop.f32.mrf.mxu0
      %v6821 = vadd.f32 0.0, %v6820
      %v6822 = vpop.f32.mrf.mxu0
      %6823 = vmatprep.mubr.f32.mxu0 0.0
      %6824 = vmatmul.mubr.f32.gmra.mxu0 %v6611
      %v6825 = vpop.f32.mrf.mxu0
      %v6826 = vadd.f32 0.0, %v6825
      %v6827 = vpop.f32.mrf.mxu0
      %6828 = vmatprep.mubr.f32.mxu0 0.0
      %6829 = vmatmul.mubr.f32.gmra.mxu0 %v6614
      %v6830 = vpop.f32.mrf.mxu0
      %v6831 = vadd.f32 0.0, %v6830
      %v6832 = vpop.f32.mrf.mxu0
      %6833 = vmatprep.mubr.f32.mxu0 0.0
      %6834 = vmatmul.mubr.f32.gmra.mxu0 %v6617
      %v6835 = vpop.f32.mrf.mxu0
      %v6836 = vadd.f32 0.0, %v6835
      %v6837 = vpop.f32.mrf.mxu0
      %6838 = vmatprep.mubr.f32.mxu0 0.0
      %6839 = vmatmul.mubr.f32.gmra.mxu0 %v6620
      %v6840 = vpop.f32.mrf.mxu0
      %v6841 = vadd.f32 0.0, %v6840
      %v6842 = vpop.f32.mrf.mxu0
      %6843 = vmatprep.mubr.f32.mxu0 0.0
      %6844 = vmatmul.mubr.f32.gmra.mxu0 %v6623
      %v6845 = vpop.f32.mrf.mxu0
      %v6846 = vadd.f32 0.0, %v6845
      %v6847 = vpop.f32.mrf.mxu0
      %6848 = vmatprep.mubr.f32.mxu0 0.0
      %6849 = vmatmul.mubr.f32.gmra.mxu0 %v6626
      %v6850 = vpop.f32.mrf.mxu0
      %v6851 = vadd.f32 0.0, %v6850
      %v6852 = vpop.f32.mrf.mxu0
      %6853 = vmatprep.mubr.f32.mxu0 0.0
      %6854 = vmatmul.mubr.f32.gmra.mxu0 %v6629
      %v6855 = vpop.f32.mrf.mxu0
      %v6856 = vadd.f32 0.0, %v6855
      %v6857 = vpop.f32.mrf.mxu0
      %6858 = vdwg.mxu0
      %v6859 = vadd.f32 %v6469, %v6701
      %v6860 = vadd.f32 %v6470, %v6706
      %v6861 = vadd.f32 %v6471, %v6711
      %v6862 = vadd.f32 %v6472, %v6716
      %v6863 = vadd.f32 %v6473, %v6721
      %v6864 = vadd.f32 %v6474, %v6726
      %v6865 = vadd.f32 %v6475, %v6731
      %v6866 = vadd.f32 %v6476, %v6736
      %v6867 = vadd.f32 %v6477, %v6741
      %v6868 = vadd.f32 %v6478, %v6746
      %v6869 = vadd.f32 %v6479, %v6751
      %v6870 = vadd.f32 %v6480, %v6756
      %v6871 = vadd.f32 %v6481, %v6761
      %v6872 = vadd.f32 %v6482, %v6766
      %v6873 = vadd.f32 %v6483, %v6771
      %v6874 = vadd.f32 %v6484, %v6776
      %v6875 = vadd.f32 %v6485, %v6781
      %v6876 = vadd.f32 %v6486, %v6786
      %v6877 = vadd.f32 %v6487, %v6791
      %v6878 = vadd.f32 %v6488, %v6796
      %v6879 = vadd.f32 %v6489, %v6801
      %v6880 = vadd.f32 %v6490, %v6806
      %v6881 = vadd.f32 %v6491, %v6811
      %v6882 = vadd.f32 %v6492, %v6816
      %v6883 = vadd.f32 %v6493, %v6821
      %v6884 = vadd.f32 %v6494, %v6826
      %v6885 = vadd.f32 %v6495, %v6831
      %v6886 = vadd.f32 %v6496, %v6836
      %v6887 = vadd.f32 %v6497, %v6841
      %v6888 = vadd.f32 %v6498, %v6846
      %v6889 = vadd.f32 %v6499, %v6851
      %v6890 = vadd.f32 %v6500, %v6856
      %s6891 = scalar_lea.vmem [#allocation3], 48
      %v6892 = vld [vmem:[%s6891] sm:$0xff]
      %v6893 = vld [vmem:[%s6891 + $0x8] sm:$0xff]
      %v6894 = vld [vmem:[%s6891 + $0x18] sm:$0xff]
      %v6895 = vld [vmem:[%s6891 + $0x20] sm:$0xff]
      %v6896 = vld [vmem:[%s6891 + $0x30] sm:$0xff]
      %v6897 = vld [vmem:[%s6891 + $0x38] sm:$0xff]
      %v6898 = vld [vmem:[%s6891 + $0x48] sm:$0xff]
      %v6899 = vld [vmem:[%s6891 + $0x50] sm:$0xff]
      %v6900 = vld [vmem:[%s6891 + $0x60] sm:$0xff]
      %v6901 = vld [vmem:[%s6891 + $0x68] sm:$0xff]
      %v6902 = vld [vmem:[%s6891 + $0x78] sm:$0xff]
      %v6903 = vld [vmem:[%s6891 + $0x80] sm:$0xff]
      %v6904 = vld [vmem:[%s6891 + $0x90] sm:$0xff]
      %v6905 = vld [vmem:[%s6891 + $0x98] sm:$0xff]
      %v6906 = vld [vmem:[%s6891 + $0xa8] sm:$0xff]
      %v6907 = vld [vmem:[%s6891 + $0xb0] sm:$0xff]
      %v6908 = vld [vmem:[%s6891 + $0xc0] sm:$0xff]
      %v6909 = vld [vmem:[%s6891 + $0xc8] sm:$0xff]
      %v6910 = vld [vmem:[%s6891 + $0xd8] sm:$0xff]
      %v6911 = vld [vmem:[%s6891 + $0xe0] sm:$0xff]
      %v6912 = vld [vmem:[%s6891 + $0xf0] sm:$0xff]
      %v6913 = vld [vmem:[%s6891 + $0xf8] sm:$0xff]
      %v6914 = vld [vmem:[%s6891 + $0x108] sm:$0xff]
      %v6915 = vld [vmem:[%s6891 + $0x110] sm:$0xff]
      %v6916 = vld [vmem:[%s6891 + $0x120] sm:$0xff]
      %v6917 = vld [vmem:[%s6891 + $0x128] sm:$0xff]
      %v6918 = vld [vmem:[%s6891 + $0x138] sm:$0xff]
      %v6919 = vld [vmem:[%s6891 + $0x140] sm:$0xff]
      %v6920 = vld [vmem:[%s6891 + $0x150] sm:$0xff]
      %v6921 = vld [vmem:[%s6891 + $0x158] sm:$0xff]
      %v6922 = vld [vmem:[%s6891 + $0x168] sm:$0xff]
      %v6923 = vld [vmem:[%s6891 + $0x170] sm:$0xff]
      %s6924 = scalar_lea.vmem %s6, 24
      %v6925 = vld [vmem:[%s6924] sm:$0xf]
      %v6927 = vsel %vm804, %v6892, 0
      %v6930 = vsel %vm804, %v6893, 0
      %v6933 = vsel %vm804, %v6894, 0
      %v6936 = vsel %vm804, %v6895, 0
      %v6939 = vsel %vm804, %v6896, 0
      %v6942 = vsel %vm804, %v6897, 0
      %v6945 = vsel %vm804, %v6898, 0
      %v6948 = vsel %vm804, %v6899, 0
      %v6951 = vsel %vm804, %v6900, 0
      %v6954 = vsel %vm804, %v6901, 0
      %v6957 = vsel %vm804, %v6902, 0
      %v6960 = vsel %vm804, %v6903, 0
      %v6963 = vsel %vm804, %v6904, 0
      %v6966 = vsel %vm804, %v6905, 0
      %v6969 = vsel %vm804, %v6906, 0
      %v6972 = vsel %vm804, %v6907, 0
      %v6975 = vsel %vm804, %v6908, 0
      %v6978 = vsel %vm804, %v6909, 0
      %v6981 = vsel %vm804, %v6910, 0
      %v6984 = vsel %vm804, %v6911, 0
      %v6987 = vsel %vm804, %v6912, 0
      %v6990 = vsel %vm804, %v6913, 0
      %v6993 = vsel %vm804, %v6914, 0
      %v6996 = vsel %vm804, %v6915, 0
      %v6999 = vsel %vm804, %v6916, 0
      %v7002 = vsel %vm804, %v6917, 0
      %v7005 = vsel %vm804, %v6918, 0
      %v7008 = vsel %vm804, %v6919, 0
      %v7011 = vsel %vm804, %v6920, 0
      %v7014 = vsel %vm804, %v6921, 0
      %v7017 = vsel %vm804, %v6922, 0
      %v7020 = vsel %vm804, %v6923, 0
      %v7023 = vsel %vm4778, %v6925, 0
      %7025 = vmatprep.subr.mxu0 0.0
      %7026 = vmatpush1.msra.mxu0 0.0
      %7027 = vmatprep.subr.mxu0 0.0
      %7028 = vmatpush1.msra.mxu0 0.0
      %7029 = vmatprep.subr.mxu0 0.0
      %7030 = vmatpush1.msra.mxu0 0.0
      %7031 = vmatprep.subr.mxu0 0.0
      %7032 = vmatpush1.msra.mxu0 0.0
      %7033 = vmatprep.subr.mxu0 0.0
      %7034 = vmatpush1.msra.mxu0 0.0
      %7035 = vmatprep.subr.mxu0 0.0
      %7036 = vmatpush1.msra.mxu0 0.0
      %7037 = vmatprep.subr.mxu0 0.0
      %7038 = vmatpush1.msra.mxu0 0.0
      %7039 = vmatprep.subr.mxu0 0.0
      %7040 = vmatpush1.msra.mxu0 0.0
      %7041 = vmatprep.subr.mxu0 0.0
      %7042 = vmatpush1.msra.mxu0 0.0
      %7043 = vmatprep.subr.mxu0 0.0
      %7044 = vmatpush1.msra.mxu0 0.0
      %7045 = vmatprep.subr.mxu0 0.0
      %7046 = vmatpush1.msra.mxu0 0.0
      %7047 = vmatprep.subr.mxu0 0.0
      %7048 = vmatpush1.msra.mxu0 0.0
      %7049 = vmatprep.subr.mxu0 0.0
      %7050 = vmatpush1.msra.mxu0 0.0
      %7051 = vmatprep.subr.mxu0 0.0
      %7052 = vmatpush1.msra.mxu0 0.0
      %7053 = vmatprep.subr.mxu0 0.0
      %7054 = vmatpush1.msra.mxu0 0.0
      %7055 = vmatprep.subr.mxu0 0.0
      %7056 = vmatpush1.msra.mxu0 %v7023
      %7057 = vmatprep.subr.mxu0 0.0
      %7058 = vmatpush2.msra.mxu0 0.0
      %7059 = vmatprep.subr.mxu0 0.0
      %7060 = vmatpush2.msra.mxu0 0.0
      %7061 = vmatprep.subr.mxu0 0.0
      %7062 = vmatpush2.msra.mxu0 0.0
      %7063 = vmatprep.subr.mxu0 0.0
      %7064 = vmatpush2.msra.mxu0 0.0
      %7065 = vmatprep.subr.mxu0 0.0
      %7066 = vmatpush2.msra.mxu0 0.0
      %7067 = vmatprep.subr.mxu0 0.0
      %7068 = vmatpush2.msra.mxu0 0.0
      %7069 = vmatprep.subr.mxu0 0.0
      %7070 = vmatpush2.msra.mxu0 0.0
      %7071 = vmatprep.subr.mxu0 0.0
      %7072 = vmatpush2.msra.mxu0 0.0
      %7073 = vmatprep.subr.mxu0 0.0
      %7074 = vmatpush2.msra.mxu0 0.0
      %7075 = vmatprep.subr.mxu0 0.0
      %7076 = vmatpush2.msra.mxu0 0.0
      %7077 = vmatprep.subr.mxu0 0.0
      %7078 = vmatpush2.msra.mxu0 0.0
      %7079 = vmatprep.subr.mxu0 0.0
      %7080 = vmatpush2.msra.mxu0 0.0
      %7081 = vmatprep.subr.mxu0 0.0
      %7082 = vmatpush2.msra.mxu0 0.0
      %7083 = vmatprep.subr.mxu0 0.0
      %7084 = vmatpush2.msra.mxu0 0.0
      %7085 = vmatprep.subr.mxu0 0.0
      %7086 = vmatpush2.msra.mxu0 0.0
      %7087 = vmatprep.subr.mxu0 0.0
      %7088 = vmatpush2.msra.mxu0 0.0
      %7089 = vmatprep.mubr.f32.mxu0 0.0
      %7090 = vmatmul.mubr.f32.gmra.mxu0 %v6927
      %v7091 = vpop.f32.mrf.mxu0
      %v7092 = vadd.f32 0.0, %v7091
      %v7093 = vpop.f32.mrf.mxu0
      %7094 = vmatprep.mubr.f32.mxu0 0.0
      %7095 = vmatmul.mubr.f32.gmra.mxu0 %v6930
      %v7096 = vpop.f32.mrf.mxu0
      %v7097 = vadd.f32 0.0, %v7096
      %v7098 = vpop.f32.mrf.mxu0
      %7099 = vmatprep.mubr.f32.mxu0 0.0
      %7100 = vmatmul.mubr.f32.gmra.mxu0 %v6933
      %v7101 = vpop.f32.mrf.mxu0
      %v7102 = vadd.f32 0.0, %v7101
      %v7103 = vpop.f32.mrf.mxu0
      %7104 = vmatprep.mubr.f32.mxu0 0.0
      %7105 = vmatmul.mubr.f32.gmra.mxu0 %v6936
      %v7106 = vpop.f32.mrf.mxu0
      %v7107 = vadd.f32 0.0, %v7106
      %v7108 = vpop.f32.mrf.mxu0
      %7109 = vmatprep.mubr.f32.mxu0 0.0
      %7110 = vmatmul.mubr.f32.gmra.mxu0 %v6939
      %v7111 = vpop.f32.mrf.mxu0
      %v7112 = vadd.f32 0.0, %v7111
      %v7113 = vpop.f32.mrf.mxu0
      %7114 = vmatprep.mubr.f32.mxu0 0.0
      %7115 = vmatmul.mubr.f32.gmra.mxu0 %v6942
      %v7116 = vpop.f32.mrf.mxu0
      %v7117 = vadd.f32 0.0, %v7116
      %v7118 = vpop.f32.mrf.mxu0
      %7119 = vmatprep.mubr.f32.mxu0 0.0
      %7120 = vmatmul.mubr.f32.gmra.mxu0 %v6945
      %v7121 = vpop.f32.mrf.mxu0
      %v7122 = vadd.f32 0.0, %v7121
      %v7123 = vpop.f32.mrf.mxu0
      %7124 = vmatprep.mubr.f32.mxu0 0.0
      %7125 = vmatmul.mubr.f32.gmra.mxu0 %v6948
      %v7126 = vpop.f32.mrf.mxu0
      %v7127 = vadd.f32 0.0, %v7126
      %v7128 = vpop.f32.mrf.mxu0
      %7129 = vmatprep.mubr.f32.mxu0 0.0
      %7130 = vmatmul.mubr.f32.gmra.mxu0 %v6951
      %v7131 = vpop.f32.mrf.mxu0
      %v7132 = vadd.f32 0.0, %v7131
      %v7133 = vpop.f32.mrf.mxu0
      %7134 = vmatprep.mubr.f32.mxu0 0.0
      %7135 = vmatmul.mubr.f32.gmra.mxu0 %v6954
      %v7136 = vpop.f32.mrf.mxu0
      %v7137 = vadd.f32 0.0, %v7136
      %v7138 = vpop.f32.mrf.mxu0
      %7139 = vmatprep.mubr.f32.mxu0 0.0
      %7140 = vmatmul.mubr.f32.gmra.mxu0 %v6957
      %v7141 = vpop.f32.mrf.mxu0
      %v7142 = vadd.f32 0.0, %v7141
      %v7143 = vpop.f32.mrf.mxu0
      %7144 = vmatprep.mubr.f32.mxu0 0.0
      %7145 = vmatmul.mubr.f32.gmra.mxu0 %v6960
      %v7146 = vpop.f32.mrf.mxu0
      %v7147 = vadd.f32 0.0, %v7146
      %v7148 = vpop.f32.mrf.mxu0
      %7149 = vmatprep.mubr.f32.mxu0 0.0
      %7150 = vmatmul.mubr.f32.gmra.mxu0 %v6963
      %v7151 = vpop.f32.mrf.mxu0
      %v7152 = vadd.f32 0.0, %v7151
      %v7153 = vpop.f32.mrf.mxu0
      %7154 = vmatprep.mubr.f32.mxu0 0.0
      %7155 = vmatmul.mubr.f32.gmra.mxu0 %v6966
      %v7156 = vpop.f32.mrf.mxu0
      %v7157 = vadd.f32 0.0, %v7156
      %v7158 = vpop.f32.mrf.mxu0
      %7159 = vmatprep.mubr.f32.mxu0 0.0
      %7160 = vmatmul.mubr.f32.gmra.mxu0 %v6969
      %v7161 = vpop.f32.mrf.mxu0
      %v7162 = vadd.f32 0.0, %v7161
      %v7163 = vpop.f32.mrf.mxu0
      %7164 = vmatprep.mubr.f32.mxu0 0.0
      %7165 = vmatmul.mubr.f32.gmra.mxu0 %v6972
      %v7166 = vpop.f32.mrf.mxu0
      %v7167 = vadd.f32 0.0, %v7166
      %v7168 = vpop.f32.mrf.mxu0
      %7169 = vmatprep.mubr.f32.mxu0 0.0
      %7170 = vmatmul.mubr.f32.gmra.mxu0 %v6975
      %v7171 = vpop.f32.mrf.mxu0
      %v7172 = vadd.f32 0.0, %v7171
      %v7173 = vpop.f32.mrf.mxu0
      %7174 = vmatprep.mubr.f32.mxu0 0.0
      %7175 = vmatmul.mubr.f32.gmra.mxu0 %v6978
      %v7176 = vpop.f32.mrf.mxu0
      %v7177 = vadd.f32 0.0, %v7176
      %v7178 = vpop.f32.mrf.mxu0
      %7179 = vmatprep.mubr.f32.mxu0 0.0
      %7180 = vmatmul.mubr.f32.gmra.mxu0 %v6981
      %v7181 = vpop.f32.mrf.mxu0
      %v7182 = vadd.f32 0.0, %v7181
      %v7183 = vpop.f32.mrf.mxu0
      %7184 = vmatprep.mubr.f32.mxu0 0.0
      %7185 = vmatmul.mubr.f32.gmra.mxu0 %v6984
      %v7186 = vpop.f32.mrf.mxu0
      %v7187 = vadd.f32 0.0, %v7186
      %v7188 = vpop.f32.mrf.mxu0
      %7189 = vmatprep.mubr.f32.mxu0 0.0
      %7190 = vmatmul.mubr.f32.gmra.mxu0 %v6987
      %v7191 = vpop.f32.mrf.mxu0
      %v7192 = vadd.f32 0.0, %v7191
      %v7193 = vpop.f32.mrf.mxu0
      %7194 = vmatprep.mubr.f32.mxu0 0.0
      %7195 = vmatmul.mubr.f32.gmra.mxu0 %v6990
      %v7196 = vpop.f32.mrf.mxu0
      %v7197 = vadd.f32 0.0, %v7196
      %v7198 = vpop.f32.mrf.mxu0
      %7199 = vmatprep.mubr.f32.mxu0 0.0
      %7200 = vmatmul.mubr.f32.gmra.mxu0 %v6993
      %v7201 = vpop.f32.mrf.mxu0
      %v7202 = vadd.f32 0.0, %v7201
      %v7203 = vpop.f32.mrf.mxu0
      %7204 = vmatprep.mubr.f32.mxu0 0.0
      %7205 = vmatmul.mubr.f32.gmra.mxu0 %v6996
      %v7206 = vpop.f32.mrf.mxu0
      %v7207 = vadd.f32 0.0, %v7206
      %v7208 = vpop.f32.mrf.mxu0
      %7209 = vmatprep.mubr.f32.mxu0 0.0
      %7210 = vmatmul.mubr.f32.gmra.mxu0 %v6999
      %v7211 = vpop.f32.mrf.mxu0
      %v7212 = vadd.f32 0.0, %v7211
      %v7213 = vpop.f32.mrf.mxu0
      %7214 = vmatprep.mubr.f32.mxu0 0.0
      %7215 = vmatmul.mubr.f32.gmra.mxu0 %v7002
      %v7216 = vpop.f32.mrf.mxu0
      %v7217 = vadd.f32 0.0, %v7216
      %v7218 = vpop.f32.mrf.mxu0
      %7219 = vmatprep.mubr.f32.mxu0 0.0
      %7220 = vmatmul.mubr.f32.gmra.mxu0 %v7005
      %v7221 = vpop.f32.mrf.mxu0
      %v7222 = vadd.f32 0.0, %v7221
      %v7223 = vpop.f32.mrf.mxu0
      %7224 = vmatprep.mubr.f32.mxu0 0.0
      %7225 = vmatmul.mubr.f32.gmra.mxu0 %v7008
      %v7226 = vpop.f32.mrf.mxu0
      %v7227 = vadd.f32 0.0, %v7226
      %v7228 = vpop.f32.mrf.mxu0
      %7229 = vmatprep.mubr.f32.mxu0 0.0
      %7230 = vmatmul.mubr.f32.gmra.mxu0 %v7011
      %v7231 = vpop.f32.mrf.mxu0
      %v7232 = vadd.f32 0.0, %v7231
      %v7233 = vpop.f32.mrf.mxu0
      %7234 = vmatprep.mubr.f32.mxu0 0.0
      %7235 = vmatmul.mubr.f32.gmra.mxu0 %v7014
      %v7236 = vpop.f32.mrf.mxu0
      %v7237 = vadd.f32 0.0, %v7236
      %v7238 = vpop.f32.mrf.mxu0
      %7239 = vmatprep.mubr.f32.mxu0 0.0
      %7240 = vmatmul.mubr.f32.gmra.mxu0 %v7017
      %v7241 = vpop.f32.mrf.mxu0
      %v7242 = vadd.f32 0.0, %v7241
      %v7243 = vpop.f32.mrf.mxu0
      %7244 = vmatprep.mubr.f32.mxu0 0.0
      %7245 = vmatmul.mubr.f32.gmra.mxu0 %v7020
      %v7246 = vpop.f32.mrf.mxu0
      %v7247 = vadd.f32 0.0, %v7246
      %v7248 = vpop.f32.mrf.mxu0
      %7249 = vdwg.mxu0
      %v7250 = vadd.f32 %v6859, %v7092
      %v7251 = vadd.f32 %v6860, %v7097
      %v7252 = vadd.f32 %v6861, %v7102
      %v7253 = vadd.f32 %v6862, %v7107
      %v7254 = vadd.f32 %v6863, %v7112
      %v7255 = vadd.f32 %v6864, %v7117
      %v7256 = vadd.f32 %v6865, %v7122
      %v7257 = vadd.f32 %v6866, %v7127
      %v7258 = vadd.f32 %v6867, %v7132
      %v7259 = vadd.f32 %v6868, %v7137
      %v7260 = vadd.f32 %v6869, %v7142
      %v7261 = vadd.f32 %v6870, %v7147
      %v7262 = vadd.f32 %v6871, %v7152
      %v7263 = vadd.f32 %v6872, %v7157
      %v7264 = vadd.f32 %v6873, %v7162
      %v7265 = vadd.f32 %v6874, %v7167
      %v7266 = vadd.f32 %v6875, %v7172
      %v7267 = vadd.f32 %v6876, %v7177
      %v7268 = vadd.f32 %v6877, %v7182
      %v7269 = vadd.f32 %v6878, %v7187
      %v7270 = vadd.f32 %v6879, %v7192
      %v7271 = vadd.f32 %v6880, %v7197
      %v7272 = vadd.f32 %v6881, %v7202
      %v7273 = vadd.f32 %v6882, %v7207
      %v7274 = vadd.f32 %v6883, %v7212
      %v7275 = vadd.f32 %v6884, %v7217
      %v7276 = vadd.f32 %v6885, %v7222
      %v7277 = vadd.f32 %v6886, %v7227
      %v7278 = vadd.f32 %v6887, %v7232
      %v7279 = vadd.f32 %v6888, %v7237
      %v7280 = vadd.f32 %v6889, %v7242
      %v7281 = vadd.f32 %v6890, %v7247
      %v7282 = vld [vmem:[%s6891 + $0x1] sm:$0xff]
      %v7283 = vld [vmem:[%s6891 + $0x9] sm:$0xff]
      %v7284 = vld [vmem:[%s6891 + $0x19] sm:$0xff]
      %v7285 = vld [vmem:[%s6891 + $0x21] sm:$0xff]
      %v7286 = vld [vmem:[%s6891 + $0x31] sm:$0xff]
      %v7287 = vld [vmem:[%s6891 + $0x39] sm:$0xff]
      %v7288 = vld [vmem:[%s6891 + $0x49] sm:$0xff]
      %v7289 = vld [vmem:[%s6891 + $0x51] sm:$0xff]
      %v7290 = vld [vmem:[%s6891 + $0x61] sm:$0xff]
      %v7291 = vld [vmem:[%s6891 + $0x69] sm:$0xff]
      %v7292 = vld [vmem:[%s6891 + $0x79] sm:$0xff]
      %v7293 = vld [vmem:[%s6891 + $0x81] sm:$0xff]
      %v7294 = vld [vmem:[%s6891 + $0x91] sm:$0xff]
      %v7295 = vld [vmem:[%s6891 + $0x99] sm:$0xff]
      %v7296 = vld [vmem:[%s6891 + $0xa9] sm:$0xff]
      %v7297 = vld [vmem:[%s6891 + $0xb1] sm:$0xff]
      %v7298 = vld [vmem:[%s6891 + $0xc1] sm:$0xff]
      %v7299 = vld [vmem:[%s6891 + $0xc9] sm:$0xff]
      %v7300 = vld [vmem:[%s6891 + $0xd9] sm:$0xff]
      %v7301 = vld [vmem:[%s6891 + $0xe1] sm:$0xff]
      %v7302 = vld [vmem:[%s6891 + $0xf1] sm:$0xff]
      %v7303 = vld [vmem:[%s6891 + $0xf9] sm:$0xff]
      %v7304 = vld [vmem:[%s6891 + $0x109] sm:$0xff]
      %v7305 = vld [vmem:[%s6891 + $0x111] sm:$0xff]
      %v7306 = vld [vmem:[%s6891 + $0x121] sm:$0xff]
      %v7307 = vld [vmem:[%s6891 + $0x129] sm:$0xff]
      %v7308 = vld [vmem:[%s6891 + $0x139] sm:$0xff]
      %v7309 = vld [vmem:[%s6891 + $0x141] sm:$0xff]
      %v7310 = vld [vmem:[%s6891 + $0x151] sm:$0xff]
      %v7311 = vld [vmem:[%s6891 + $0x159] sm:$0xff]
      %v7312 = vld [vmem:[%s6891 + $0x169] sm:$0xff]
      %v7313 = vld [vmem:[%s6891 + $0x171] sm:$0xff]
      %s7314 = scalar_lea.vmem %s6, 28
      %v7315 = vld [vmem:[%s7314] sm:$0xf]
      %v7317 = vsel %vm804, %v7282, 0
      %v7320 = vsel %vm804, %v7283, 0
      %v7323 = vsel %vm804, %v7284, 0
      %v7326 = vsel %vm804, %v7285, 0
      %v7329 = vsel %vm804, %v7286, 0
      %v7332 = vsel %vm804, %v7287, 0
      %v7335 = vsel %vm804, %v7288, 0
      %v7338 = vsel %vm804, %v7289, 0
      %v7341 = vsel %vm804, %v7290, 0
      %v7344 = vsel %vm804, %v7291, 0
      %v7347 = vsel %vm804, %v7292, 0
      %v7350 = vsel %vm804, %v7293, 0
      %v7353 = vsel %vm804, %v7294, 0
      %v7356 = vsel %vm804, %v7295, 0
      %v7359 = vsel %vm804, %v7296, 0
      %v7362 = vsel %vm804, %v7297, 0
      %v7365 = vsel %vm804, %v7298, 0
      %v7368 = vsel %vm804, %v7299, 0
      %v7371 = vsel %vm804, %v7300, 0
      %v7374 = vsel %vm804, %v7301, 0
      %v7377 = vsel %vm804, %v7302, 0
      %v7380 = vsel %vm804, %v7303, 0
      %v7383 = vsel %vm804, %v7304, 0
      %v7386 = vsel %vm804, %v7305, 0
      %v7389 = vsel %vm804, %v7306, 0
      %v7392 = vsel %vm804, %v7307, 0
      %v7395 = vsel %vm804, %v7308, 0
      %v7398 = vsel %vm804, %v7309, 0
      %v7401 = vsel %vm804, %v7310, 0
      %v7404 = vsel %vm804, %v7311, 0
      %v7407 = vsel %vm804, %v7312, 0
      %v7410 = vsel %vm804, %v7313, 0
      %v7413 = vsel %vm4778, %v7315, 0
      %7415 = vmatprep.subr.mxu0 0.0
      %7416 = vmatpush1.msra.mxu0 0.0
      %7417 = vmatprep.subr.mxu0 0.0
      %7418 = vmatpush1.msra.mxu0 0.0
      %7419 = vmatprep.subr.mxu0 0.0
      %7420 = vmatpush1.msra.mxu0 0.0
      %7421 = vmatprep.subr.mxu0 0.0
      %7422 = vmatpush1.msra.mxu0 0.0
      %7423 = vmatprep.subr.mxu0 0.0
      %7424 = vmatpush1.msra.mxu0 0.0
      %7425 = vmatprep.subr.mxu0 0.0
      %7426 = vmatpush1.msra.mxu0 0.0
      %7427 = vmatprep.subr.mxu0 0.0
      %7428 = vmatpush1.msra.mxu0 0.0
      %7429 = vmatprep.subr.mxu0 0.0
      %7430 = vmatpush1.msra.mxu0 0.0
      %7431 = vmatprep.subr.mxu0 0.0
      %7432 = vmatpush1.msra.mxu0 0.0
      %7433 = vmatprep.subr.mxu0 0.0
      %7434 = vmatpush1.msra.mxu0 0.0
      %7435 = vmatprep.subr.mxu0 0.0
      %7436 = vmatpush1.msra.mxu0 0.0
      %7437 = vmatprep.subr.mxu0 0.0
      %7438 = vmatpush1.msra.mxu0 0.0
      %7439 = vmatprep.subr.mxu0 0.0
      %7440 = vmatpush1.msra.mxu0 0.0
      %7441 = vmatprep.subr.mxu0 0.0
      %7442 = vmatpush1.msra.mxu0 0.0
      %7443 = vmatprep.subr.mxu0 0.0
      %7444 = vmatpush1.msra.mxu0 0.0
      %7445 = vmatprep.subr.mxu0 0.0
      %7446 = vmatpush1.msra.mxu0 %v7413
      %7447 = vmatprep.subr.mxu0 0.0
      %7448 = vmatpush2.msra.mxu0 0.0
      %7449 = vmatprep.subr.mxu0 0.0
      %7450 = vmatpush2.msra.mxu0 0.0
      %7451 = vmatprep.subr.mxu0 0.0
      %7452 = vmatpush2.msra.mxu0 0.0
      %7453 = vmatprep.subr.mxu0 0.0
      %7454 = vmatpush2.msra.mxu0 0.0
      %7455 = vmatprep.subr.mxu0 0.0
      %7456 = vmatpush2.msra.mxu0 0.0
      %7457 = vmatprep.subr.mxu0 0.0
      %7458 = vmatpush2.msra.mxu0 0.0
      %7459 = vmatprep.subr.mxu0 0.0
      %7460 = vmatpush2.msra.mxu0 0.0
      %7461 = vmatprep.subr.mxu0 0.0
      %7462 = vmatpush2.msra.mxu0 0.0
      %7463 = vmatprep.subr.mxu0 0.0
      %7464 = vmatpush2.msra.mxu0 0.0
      %7465 = vmatprep.subr.mxu0 0.0
      %7466 = vmatpush2.msra.mxu0 0.0
      %7467 = vmatprep.subr.mxu0 0.0
      %7468 = vmatpush2.msra.mxu0 0.0
      %7469 = vmatprep.subr.mxu0 0.0
      %7470 = vmatpush2.msra.mxu0 0.0
      %7471 = vmatprep.subr.mxu0 0.0
      %7472 = vmatpush2.msra.mxu0 0.0
      %7473 = vmatprep.subr.mxu0 0.0
      %7474 = vmatpush2.msra.mxu0 0.0
      %7475 = vmatprep.subr.mxu0 0.0
      %7476 = vmatpush2.msra.mxu0 0.0
      %7477 = vmatprep.subr.mxu0 0.0
      %7478 = vmatpush2.msra.mxu0 0.0
      %7479 = vmatprep.mubr.f32.mxu0 0.0
      %7480 = vmatmul.mubr.f32.gmra.mxu0 %v7317
      %v7481 = vpop.f32.mrf.mxu0
      %v7482 = vadd.f32 0.0, %v7481
      %v7483 = vpop.f32.mrf.mxu0
      %7484 = vmatprep.mubr.f32.mxu0 0.0
      %7485 = vmatmul.mubr.f32.gmra.mxu0 %v7320
      %v7486 = vpop.f32.mrf.mxu0
      %v7487 = vadd.f32 0.0, %v7486
      %v7488 = vpop.f32.mrf.mxu0
      %7489 = vmatprep.mubr.f32.mxu0 0.0
      %7490 = vmatmul.mubr.f32.gmra.mxu0 %v7323
      %v7491 = vpop.f32.mrf.mxu0
      %v7492 = vadd.f32 0.0, %v7491
      %v7493 = vpop.f32.mrf.mxu0
      %7494 = vmatprep.mubr.f32.mxu0 0.0
      %7495 = vmatmul.mubr.f32.gmra.mxu0 %v7326
      %v7496 = vpop.f32.mrf.mxu0
      %v7497 = vadd.f32 0.0, %v7496
      %v7498 = vpop.f32.mrf.mxu0
      %7499 = vmatprep.mubr.f32.mxu0 0.0
      %7500 = vmatmul.mubr.f32.gmra.mxu0 %v7329
      %v7501 = vpop.f32.mrf.mxu0
      %v7502 = vadd.f32 0.0, %v7501
      %v7503 = vpop.f32.mrf.mxu0
      %7504 = vmatprep.mubr.f32.mxu0 0.0
      %7505 = vmatmul.mubr.f32.gmra.mxu0 %v7332
      %v7506 = vpop.f32.mrf.mxu0
      %v7507 = vadd.f32 0.0, %v7506
      %v7508 = vpop.f32.mrf.mxu0
      %7509 = vmatprep.mubr.f32.mxu0 0.0
      %7510 = vmatmul.mubr.f32.gmra.mxu0 %v7335
      %v7511 = vpop.f32.mrf.mxu0
      %v7512 = vadd.f32 0.0, %v7511
      %v7513 = vpop.f32.mrf.mxu0
      %7514 = vmatprep.mubr.f32.mxu0 0.0
      %7515 = vmatmul.mubr.f32.gmra.mxu0 %v7338
      %v7516 = vpop.f32.mrf.mxu0
      %v7517 = vadd.f32 0.0, %v7516
      %v7518 = vpop.f32.mrf.mxu0
      %7519 = vmatprep.mubr.f32.mxu0 0.0
      %7520 = vmatmul.mubr.f32.gmra.mxu0 %v7341
      %v7521 = vpop.f32.mrf.mxu0
      %v7522 = vadd.f32 0.0, %v7521
      %v7523 = vpop.f32.mrf.mxu0
      %7524 = vmatprep.mubr.f32.mxu0 0.0
      %7525 = vmatmul.mubr.f32.gmra.mxu0 %v7344
      %v7526 = vpop.f32.mrf.mxu0
      %v7527 = vadd.f32 0.0, %v7526
      %v7528 = vpop.f32.mrf.mxu0
      %7529 = vmatprep.mubr.f32.mxu0 0.0
      %7530 = vmatmul.mubr.f32.gmra.mxu0 %v7347
      %v7531 = vpop.f32.mrf.mxu0
      %v7532 = vadd.f32 0.0, %v7531
      %v7533 = vpop.f32.mrf.mxu0
      %7534 = vmatprep.mubr.f32.mxu0 0.0
      %7535 = vmatmul.mubr.f32.gmra.mxu0 %v7350
      %v7536 = vpop.f32.mrf.mxu0
      %v7537 = vadd.f32 0.0, %v7536
      %v7538 = vpop.f32.mrf.mxu0
      %7539 = vmatprep.mubr.f32.mxu0 0.0
      %7540 = vmatmul.mubr.f32.gmra.mxu0 %v7353
      %v7541 = vpop.f32.mrf.mxu0
      %v7542 = vadd.f32 0.0, %v7541
      %v7543 = vpop.f32.mrf.mxu0
      %7544 = vmatprep.mubr.f32.mxu0 0.0
      %7545 = vmatmul.mubr.f32.gmra.mxu0 %v7356
      %v7546 = vpop.f32.mrf.mxu0
      %v7547 = vadd.f32 0.0, %v7546
      %v7548 = vpop.f32.mrf.mxu0
      %7549 = vmatprep.mubr.f32.mxu0 0.0
      %7550 = vmatmul.mubr.f32.gmra.mxu0 %v7359
      %v7551 = vpop.f32.mrf.mxu0
      %v7552 = vadd.f32 0.0, %v7551
      %v7553 = vpop.f32.mrf.mxu0
      %7554 = vmatprep.mubr.f32.mxu0 0.0
      %7555 = vmatmul.mubr.f32.gmra.mxu0 %v7362
      %v7556 = vpop.f32.mrf.mxu0
      %v7557 = vadd.f32 0.0, %v7556
      %v7558 = vpop.f32.mrf.mxu0
      %7559 = vmatprep.mubr.f32.mxu0 0.0
      %7560 = vmatmul.mubr.f32.gmra.mxu0 %v7365
      %v7561 = vpop.f32.mrf.mxu0
      %v7562 = vadd.f32 0.0, %v7561
      %v7563 = vpop.f32.mrf.mxu0
      %7564 = vmatprep.mubr.f32.mxu0 0.0
      %7565 = vmatmul.mubr.f32.gmra.mxu0 %v7368
      %v7566 = vpop.f32.mrf.mxu0
      %v7567 = vadd.f32 0.0, %v7566
      %v7568 = vpop.f32.mrf.mxu0
      %7569 = vmatprep.mubr.f32.mxu0 0.0
      %7570 = vmatmul.mubr.f32.gmra.mxu0 %v7371
      %v7571 = vpop.f32.mrf.mxu0
      %v7572 = vadd.f32 0.0, %v7571
      %v7573 = vpop.f32.mrf.mxu0
      %7574 = vmatprep.mubr.f32.mxu0 0.0
      %7575 = vmatmul.mubr.f32.gmra.mxu0 %v7374
      %v7576 = vpop.f32.mrf.mxu0
      %v7577 = vadd.f32 0.0, %v7576
      %v7578 = vpop.f32.mrf.mxu0
      %7579 = vmatprep.mubr.f32.mxu0 0.0
      %7580 = vmatmul.mubr.f32.gmra.mxu0 %v7377
      %v7581 = vpop.f32.mrf.mxu0
      %v7582 = vadd.f32 0.0, %v7581
      %v7583 = vpop.f32.mrf.mxu0
      %7584 = vmatprep.mubr.f32.mxu0 0.0
      %7585 = vmatmul.mubr.f32.gmra.mxu0 %v7380
      %v7586 = vpop.f32.mrf.mxu0
      %v7587 = vadd.f32 0.0, %v7586
      %v7588 = vpop.f32.mrf.mxu0
      %7589 = vmatprep.mubr.f32.mxu0 0.0
      %7590 = vmatmul.mubr.f32.gmra.mxu0 %v7383
      %v7591 = vpop.f32.mrf.mxu0
      %v7592 = vadd.f32 0.0, %v7591
      %v7593 = vpop.f32.mrf.mxu0
      %7594 = vmatprep.mubr.f32.mxu0 0.0
      %7595 = vmatmul.mubr.f32.gmra.mxu0 %v7386
      %v7596 = vpop.f32.mrf.mxu0
      %v7597 = vadd.f32 0.0, %v7596
      %v7598 = vpop.f32.mrf.mxu0
      %7599 = vmatprep.mubr.f32.mxu0 0.0
      %7600 = vmatmul.mubr.f32.gmra.mxu0 %v7389
      %v7601 = vpop.f32.mrf.mxu0
      %v7602 = vadd.f32 0.0, %v7601
      %v7603 = vpop.f32.mrf.mxu0
      %7604 = vmatprep.mubr.f32.mxu0 0.0
      %7605 = vmatmul.mubr.f32.gmra.mxu0 %v7392
      %v7606 = vpop.f32.mrf.mxu0
      %v7607 = vadd.f32 0.0, %v7606
      %v7608 = vpop.f32.mrf.mxu0
      %7609 = vmatprep.mubr.f32.mxu0 0.0
      %7610 = vmatmul.mubr.f32.gmra.mxu0 %v7395
      %v7611 = vpop.f32.mrf.mxu0
      %v7612 = vadd.f32 0.0, %v7611
      %v7613 = vpop.f32.mrf.mxu0
      %7614 = vmatprep.mubr.f32.mxu0 0.0
      %7615 = vmatmul.mubr.f32.gmra.mxu0 %v7398
      %v7616 = vpop.f32.mrf.mxu0
      %v7617 = vadd.f32 0.0, %v7616
      %v7618 = vpop.f32.mrf.mxu0
      %7619 = vmatprep.mubr.f32.mxu0 0.0
      %7620 = vmatmul.mubr.f32.gmra.mxu0 %v7401
      %v7621 = vpop.f32.mrf.mxu0
      %v7622 = vadd.f32 0.0, %v7621
      %v7623 = vpop.f32.mrf.mxu0
      %7624 = vmatprep.mubr.f32.mxu0 0.0
      %7625 = vmatmul.mubr.f32.gmra.mxu0 %v7404
      %v7626 = vpop.f32.mrf.mxu0
      %v7627 = vadd.f32 0.0, %v7626
      %v7628 = vpop.f32.mrf.mxu0
      %7629 = vmatprep.mubr.f32.mxu0 0.0
      %7630 = vmatmul.mubr.f32.gmra.mxu0 %v7407
      %v7631 = vpop.f32.mrf.mxu0
      %v7632 = vadd.f32 0.0, %v7631
      %v7633 = vpop.f32.mrf.mxu0
      %7634 = vmatprep.mubr.f32.mxu0 0.0
      %7635 = vmatmul.mubr.f32.gmra.mxu0 %v7410
      %v7636 = vpop.f32.mrf.mxu0
      %v7637 = vadd.f32 0.0, %v7636
      %v7638 = vpop.f32.mrf.mxu0
      %7639 = vdwg.mxu0
      %v7640 = vadd.f32 %v7250, %v7482
      %v7641 = vadd.f32 %v7251, %v7487
      %v7642 = vadd.f32 %v7252, %v7492
      %v7643 = vadd.f32 %v7253, %v7497
      %v7644 = vadd.f32 %v7254, %v7502
      %v7645 = vadd.f32 %v7255, %v7507
      %v7646 = vadd.f32 %v7256, %v7512
      %v7647 = vadd.f32 %v7257, %v7517
      %v7648 = vadd.f32 %v7258, %v7522
      %v7649 = vadd.f32 %v7259, %v7527
      %v7650 = vadd.f32 %v7260, %v7532
      %v7651 = vadd.f32 %v7261, %v7537
      %v7652 = vadd.f32 %v7262, %v7542
      %v7653 = vadd.f32 %v7263, %v7547
      %v7654 = vadd.f32 %v7264, %v7552
      %v7655 = vadd.f32 %v7265, %v7557
      %v7656 = vadd.f32 %v7266, %v7562
      %v7657 = vadd.f32 %v7267, %v7567
      %v7658 = vadd.f32 %v7268, %v7572
      %v7659 = vadd.f32 %v7269, %v7577
      %v7660 = vadd.f32 %v7270, %v7582
      %v7661 = vadd.f32 %v7271, %v7587
      %v7662 = vadd.f32 %v7272, %v7592
      %v7663 = vadd.f32 %v7273, %v7597
      %v7664 = vadd.f32 %v7274, %v7602
      %v7665 = vadd.f32 %v7275, %v7607
      %v7666 = vadd.f32 %v7276, %v7612
      %v7667 = vadd.f32 %v7277, %v7617
      %v7668 = vadd.f32 %v7278, %v7622
      %v7669 = vadd.f32 %v7279, %v7627
      %v7670 = vadd.f32 %v7280, %v7632
      %v7671 = vadd.f32 %v7281, %v7637
      %v7672 = vld [vmem:[%s6891 + $0x2] sm:$0xff]
      %v7673 = vld [vmem:[%s6891 + $0xa] sm:$0xff]
      %v7674 = vld [vmem:[%s6891 + $0x1a] sm:$0xff]
      %v7675 = vld [vmem:[%s6891 + $0x22] sm:$0xff]
      %v7676 = vld [vmem:[%s6891 + $0x32] sm:$0xff]
      %v7677 = vld [vmem:[%s6891 + $0x3a] sm:$0xff]
      %v7678 = vld [vmem:[%s6891 + $0x4a] sm:$0xff]
      %v7679 = vld [vmem:[%s6891 + $0x52] sm:$0xff]
      %v7680 = vld [vmem:[%s6891 + $0x62] sm:$0xff]
      %v7681 = vld [vmem:[%s6891 + $0x6a] sm:$0xff]
      %v7682 = vld [vmem:[%s6891 + $0x7a] sm:$0xff]
      %v7683 = vld [vmem:[%s6891 + $0x82] sm:$0xff]
      %v7684 = vld [vmem:[%s6891 + $0x92] sm:$0xff]
      %v7685 = vld [vmem:[%s6891 + $0x9a] sm:$0xff]
      %v7686 = vld [vmem:[%s6891 + $0xaa] sm:$0xff]
      %v7687 = vld [vmem:[%s6891 + $0xb2] sm:$0xff]
      %v7688 = vld [vmem:[%s6891 + $0xc2] sm:$0xff]
      %v7689 = vld [vmem:[%s6891 + $0xca] sm:$0xff]
      %v7690 = vld [vmem:[%s6891 + $0xda] sm:$0xff]
      %v7691 = vld [vmem:[%s6891 + $0xe2] sm:$0xff]
      %v7692 = vld [vmem:[%s6891 + $0xf2] sm:$0xff]
      %v7693 = vld [vmem:[%s6891 + $0xfa] sm:$0xff]
      %v7694 = vld [vmem:[%s6891 + $0x10a] sm:$0xff]
      %v7695 = vld [vmem:[%s6891 + $0x112] sm:$0xff]
      %v7696 = vld [vmem:[%s6891 + $0x122] sm:$0xff]
      %v7697 = vld [vmem:[%s6891 + $0x12a] sm:$0xff]
      %v7698 = vld [vmem:[%s6891 + $0x13a] sm:$0xff]
      %v7699 = vld [vmem:[%s6891 + $0x142] sm:$0xff]
      %v7700 = vld [vmem:[%s6891 + $0x152] sm:$0xff]
      %v7701 = vld [vmem:[%s6891 + $0x15a] sm:$0xff]
      %v7702 = vld [vmem:[%s6891 + $0x16a] sm:$0xff]
      %v7703 = vld [vmem:[%s6891 + $0x172] sm:$0xff]
      %s7704 = scalar_lea.vmem %s6, 32
      %v7705 = vld [vmem:[%s7704] sm:$0xf]
      %v7707 = vsel %vm804, %v7672, 0
      %v7710 = vsel %vm804, %v7673, 0
      %v7713 = vsel %vm804, %v7674, 0
      %v7716 = vsel %vm804, %v7675, 0
      %v7719 = vsel %vm804, %v7676, 0
      %v7722 = vsel %vm804, %v7677, 0
      %v7725 = vsel %vm804, %v7678, 0
      %v7728 = vsel %vm804, %v7679, 0
      %v7731 = vsel %vm804, %v7680, 0
      %v7734 = vsel %vm804, %v7681, 0
      %v7737 = vsel %vm804, %v7682, 0
      %v7740 = vsel %vm804, %v7683, 0
      %v7743 = vsel %vm804, %v7684, 0
      %v7746 = vsel %vm804, %v7685, 0
      %v7749 = vsel %vm804, %v7686, 0
      %v7752 = vsel %vm804, %v7687, 0
      %v7755 = vsel %vm804, %v7688, 0
      %v7758 = vsel %vm804, %v7689, 0
      %v7761 = vsel %vm804, %v7690, 0
      %v7764 = vsel %vm804, %v7691, 0
      %v7767 = vsel %vm804, %v7692, 0
      %v7770 = vsel %vm804, %v7693, 0
      %v7773 = vsel %vm804, %v7694, 0
      %v7776 = vsel %vm804, %v7695, 0
      %v7779 = vsel %vm804, %v7696, 0
      %v7782 = vsel %vm804, %v7697, 0
      %v7785 = vsel %vm804, %v7698, 0
      %v7788 = vsel %vm804, %v7699, 0
      %v7791 = vsel %vm804, %v7700, 0
      %v7794 = vsel %vm804, %v7701, 0
      %v7797 = vsel %vm804, %v7702, 0
      %v7800 = vsel %vm804, %v7703, 0
      %v7803 = vsel %vm4778, %v7705, 0
      %7805 = vmatprep.subr.mxu0 0.0
      %7806 = vmatpush1.msra.mxu0 0.0
      %7807 = vmatprep.subr.mxu0 0.0
      %7808 = vmatpush1.msra.mxu0 0.0
      %7809 = vmatprep.subr.mxu0 0.0
      %7810 = vmatpush1.msra.mxu0 0.0
      %7811 = vmatprep.subr.mxu0 0.0
      %7812 = vmatpush1.msra.mxu0 0.0
      %7813 = vmatprep.subr.mxu0 0.0
      %7814 = vmatpush1.msra.mxu0 0.0
      %7815 = vmatprep.subr.mxu0 0.0
      %7816 = vmatpush1.msra.mxu0 0.0
      %7817 = vmatprep.subr.mxu0 0.0
      %7818 = vmatpush1.msra.mxu0 0.0
      %7819 = vmatprep.subr.mxu0 0.0
      %7820 = vmatpush1.msra.mxu0 0.0
      %7821 = vmatprep.subr.mxu0 0.0
      %7822 = vmatpush1.msra.mxu0 0.0
      %7823 = vmatprep.subr.mxu0 0.0
      %7824 = vmatpush1.msra.mxu0 0.0
      %7825 = vmatprep.subr.mxu0 0.0
      %7826 = vmatpush1.msra.mxu0 0.0
      %7827 = vmatprep.subr.mxu0 0.0
      %7828 = vmatpush1.msra.mxu0 0.0
      %7829 = vmatprep.subr.mxu0 0.0
      %7830 = vmatpush1.msra.mxu0 0.0
      %7831 = vmatprep.subr.mxu0 0.0
      %7832 = vmatpush1.msra.mxu0 0.0
      %7833 = vmatprep.subr.mxu0 0.0
      %7834 = vmatpush1.msra.mxu0 0.0
      %7835 = vmatprep.subr.mxu0 0.0
      %7836 = vmatpush1.msra.mxu0 %v7803
      %7837 = vmatprep.subr.mxu0 0.0
      %7838 = vmatpush2.msra.mxu0 0.0
      %7839 = vmatprep.subr.mxu0 0.0
      %7840 = vmatpush2.msra.mxu0 0.0
      %7841 = vmatprep.subr.mxu0 0.0
      %7842 = vmatpush2.msra.mxu0 0.0
      %7843 = vmatprep.subr.mxu0 0.0
      %7844 = vmatpush2.msra.mxu0 0.0
      %7845 = vmatprep.subr.mxu0 0.0
      %7846 = vmatpush2.msra.mxu0 0.0
      %7847 = vmatprep.subr.mxu0 0.0
      %7848 = vmatpush2.msra.mxu0 0.0
      %7849 = vmatprep.subr.mxu0 0.0
      %7850 = vmatpush2.msra.mxu0 0.0
      %7851 = vmatprep.subr.mxu0 0.0
      %7852 = vmatpush2.msra.mxu0 0.0
      %7853 = vmatprep.subr.mxu0 0.0
      %7854 = vmatpush2.msra.mxu0 0.0
      %7855 = vmatprep.subr.mxu0 0.0
      %7856 = vmatpush2.msra.mxu0 0.0
      %7857 = vmatprep.subr.mxu0 0.0
      %7858 = vmatpush2.msra.mxu0 0.0
      %7859 = vmatprep.subr.mxu0 0.0
      %7860 = vmatpush2.msra.mxu0 0.0
      %7861 = vmatprep.subr.mxu0 0.0
      %7862 = vmatpush2.msra.mxu0 0.0
      %7863 = vmatprep.subr.mxu0 0.0
      %7864 = vmatpush2.msra.mxu0 0.0
      %7865 = vmatprep.subr.mxu0 0.0
      %7866 = vmatpush2.msra.mxu0 0.0
      %7867 = vmatprep.subr.mxu0 0.0
      %7868 = vmatpush2.msra.mxu0 0.0
      %7869 = vmatprep.mubr.f32.mxu0 0.0
      %7870 = vmatmul.mubr.f32.gmra.mxu0 %v7707
      %v7871 = vpop.f32.mrf.mxu0
      %v7872 = vadd.f32 0.0, %v7871
      %v7873 = vpop.f32.mrf.mxu0
      %7874 = vmatprep.mubr.f32.mxu0 0.0
      %7875 = vmatmul.mubr.f32.gmra.mxu0 %v7710
      %v7876 = vpop.f32.mrf.mxu0
      %v7877 = vadd.f32 0.0, %v7876
      %v7878 = vpop.f32.mrf.mxu0
      %7879 = vmatprep.mubr.f32.mxu0 0.0
      %7880 = vmatmul.mubr.f32.gmra.mxu0 %v7713
      %v7881 = vpop.f32.mrf.mxu0
      %v7882 = vadd.f32 0.0, %v7881
      %v7883 = vpop.f32.mrf.mxu0
      %7884 = vmatprep.mubr.f32.mxu0 0.0
      %7885 = vmatmul.mubr.f32.gmra.mxu0 %v7716
      %v7886 = vpop.f32.mrf.mxu0
      %v7887 = vadd.f32 0.0, %v7886
      %v7888 = vpop.f32.mrf.mxu0
      %7889 = vmatprep.mubr.f32.mxu0 0.0
      %7890 = vmatmul.mubr.f32.gmra.mxu0 %v7719
      %v7891 = vpop.f32.mrf.mxu0
      %v7892 = vadd.f32 0.0, %v7891
      %v7893 = vpop.f32.mrf.mxu0
      %7894 = vmatprep.mubr.f32.mxu0 0.0
      %7895 = vmatmul.mubr.f32.gmra.mxu0 %v7722
      %v7896 = vpop.f32.mrf.mxu0
      %v7897 = vadd.f32 0.0, %v7896
      %v7898 = vpop.f32.mrf.mxu0
      %7899 = vmatprep.mubr.f32.mxu0 0.0
      %7900 = vmatmul.mubr.f32.gmra.mxu0 %v7725
      %v7901 = vpop.f32.mrf.mxu0
      %v7902 = vadd.f32 0.0, %v7901
      %v7903 = vpop.f32.mrf.mxu0
      %7904 = vmatprep.mubr.f32.mxu0 0.0
      %7905 = vmatmul.mubr.f32.gmra.mxu0 %v7728
      %v7906 = vpop.f32.mrf.mxu0
      %v7907 = vadd.f32 0.0, %v7906
      %v7908 = vpop.f32.mrf.mxu0
      %7909 = vmatprep.mubr.f32.mxu0 0.0
      %7910 = vmatmul.mubr.f32.gmra.mxu0 %v7731
      %v7911 = vpop.f32.mrf.mxu0
      %v7912 = vadd.f32 0.0, %v7911
      %v7913 = vpop.f32.mrf.mxu0
      %7914 = vmatprep.mubr.f32.mxu0 0.0
      %7915 = vmatmul.mubr.f32.gmra.mxu0 %v7734
      %v7916 = vpop.f32.mrf.mxu0
      %v7917 = vadd.f32 0.0, %v7916
      %v7918 = vpop.f32.mrf.mxu0
      %7919 = vmatprep.mubr.f32.mxu0 0.0
      %7920 = vmatmul.mubr.f32.gmra.mxu0 %v7737
      %v7921 = vpop.f32.mrf.mxu0
      %v7922 = vadd.f32 0.0, %v7921
      %v7923 = vpop.f32.mrf.mxu0
      %7924 = vmatprep.mubr.f32.mxu0 0.0
      %7925 = vmatmul.mubr.f32.gmra.mxu0 %v7740
      %v7926 = vpop.f32.mrf.mxu0
      %v7927 = vadd.f32 0.0, %v7926
      %v7928 = vpop.f32.mrf.mxu0
      %7929 = vmatprep.mubr.f32.mxu0 0.0
      %7930 = vmatmul.mubr.f32.gmra.mxu0 %v7743
      %v7931 = vpop.f32.mrf.mxu0
      %v7932 = vadd.f32 0.0, %v7931
      %v7933 = vpop.f32.mrf.mxu0
      %7934 = vmatprep.mubr.f32.mxu0 0.0
      %7935 = vmatmul.mubr.f32.gmra.mxu0 %v7746
      %v7936 = vpop.f32.mrf.mxu0
      %v7937 = vadd.f32 0.0, %v7936
      %v7938 = vpop.f32.mrf.mxu0
      %7939 = vmatprep.mubr.f32.mxu0 0.0
      %7940 = vmatmul.mubr.f32.gmra.mxu0 %v7749
      %v7941 = vpop.f32.mrf.mxu0
      %v7942 = vadd.f32 0.0, %v7941
      %v7943 = vpop.f32.mrf.mxu0
      %7944 = vmatprep.mubr.f32.mxu0 0.0
      %7945 = vmatmul.mubr.f32.gmra.mxu0 %v7752
      %v7946 = vpop.f32.mrf.mxu0
      %v7947 = vadd.f32 0.0, %v7946
      %v7948 = vpop.f32.mrf.mxu0
      %7949 = vmatprep.mubr.f32.mxu0 0.0
      %7950 = vmatmul.mubr.f32.gmra.mxu0 %v7755
      %v7951 = vpop.f32.mrf.mxu0
      %v7952 = vadd.f32 0.0, %v7951
      %v7953 = vpop.f32.mrf.mxu0
      %7954 = vmatprep.mubr.f32.mxu0 0.0
      %7955 = vmatmul.mubr.f32.gmra.mxu0 %v7758
      %v7956 = vpop.f32.mrf.mxu0
      %v7957 = vadd.f32 0.0, %v7956
      %v7958 = vpop.f32.mrf.mxu0
      %7959 = vmatprep.mubr.f32.mxu0 0.0
      %7960 = vmatmul.mubr.f32.gmra.mxu0 %v7761
      %v7961 = vpop.f32.mrf.mxu0
      %v7962 = vadd.f32 0.0, %v7961
      %v7963 = vpop.f32.mrf.mxu0
      %7964 = vmatprep.mubr.f32.mxu0 0.0
      %7965 = vmatmul.mubr.f32.gmra.mxu0 %v7764
      %v7966 = vpop.f32.mrf.mxu0
      %v7967 = vadd.f32 0.0, %v7966
      %v7968 = vpop.f32.mrf.mxu0
      %7969 = vmatprep.mubr.f32.mxu0 0.0
      %7970 = vmatmul.mubr.f32.gmra.mxu0 %v7767
      %v7971 = vpop.f32.mrf.mxu0
      %v7972 = vadd.f32 0.0, %v7971
      %v7973 = vpop.f32.mrf.mxu0
      %7974 = vmatprep.mubr.f32.mxu0 0.0
      %7975 = vmatmul.mubr.f32.gmra.mxu0 %v7770
      %v7976 = vpop.f32.mrf.mxu0
      %v7977 = vadd.f32 0.0, %v7976
      %v7978 = vpop.f32.mrf.mxu0
      %7979 = vmatprep.mubr.f32.mxu0 0.0
      %7980 = vmatmul.mubr.f32.gmra.mxu0 %v7773
      %v7981 = vpop.f32.mrf.mxu0
      %v7982 = vadd.f32 0.0, %v7981
      %v7983 = vpop.f32.mrf.mxu0
      %7984 = vmatprep.mubr.f32.mxu0 0.0
      %7985 = vmatmul.mubr.f32.gmra.mxu0 %v7776
      %v7986 = vpop.f32.mrf.mxu0
      %v7987 = vadd.f32 0.0, %v7986
      %v7988 = vpop.f32.mrf.mxu0
      %7989 = vmatprep.mubr.f32.mxu0 0.0
      %7990 = vmatmul.mubr.f32.gmra.mxu0 %v7779
      %v7991 = vpop.f32.mrf.mxu0
      %v7992 = vadd.f32 0.0, %v7991
      %v7993 = vpop.f32.mrf.mxu0
      %7994 = vmatprep.mubr.f32.mxu0 0.0
      %7995 = vmatmul.mubr.f32.gmra.mxu0 %v7782
      %v7996 = vpop.f32.mrf.mxu0
      %v7997 = vadd.f32 0.0, %v7996
      %v7998 = vpop.f32.mrf.mxu0
      %7999 = vmatprep.mubr.f32.mxu0 0.0
      %8000 = vmatmul.mubr.f32.gmra.mxu0 %v7785
      %v8001 = vpop.f32.mrf.mxu0
      %v8002 = vadd.f32 0.0, %v8001
      %v8003 = vpop.f32.mrf.mxu0
      %8004 = vmatprep.mubr.f32.mxu0 0.0
      %8005 = vmatmul.mubr.f32.gmra.mxu0 %v7788
      %v8006 = vpop.f32.mrf.mxu0
      %v8007 = vadd.f32 0.0, %v8006
      %v8008 = vpop.f32.mrf.mxu0
      %8009 = vmatprep.mubr.f32.mxu0 0.0
      %8010 = vmatmul.mubr.f32.gmra.mxu0 %v7791
      %v8011 = vpop.f32.mrf.mxu0
      %v8012 = vadd.f32 0.0, %v8011
      %v8013 = vpop.f32.mrf.mxu0
      %8014 = vmatprep.mubr.f32.mxu0 0.0
      %8015 = vmatmul.mubr.f32.gmra.mxu0 %v7794
      %v8016 = vpop.f32.mrf.mxu0
      %v8017 = vadd.f32 0.0, %v8016
      %v8018 = vpop.f32.mrf.mxu0
      %8019 = vmatprep.mubr.f32.mxu0 0.0
      %8020 = vmatmul.mubr.f32.gmra.mxu0 %v7797
      %v8021 = vpop.f32.mrf.mxu0
      %v8022 = vadd.f32 0.0, %v8021
      %v8023 = vpop.f32.mrf.mxu0
      %8024 = vmatprep.mubr.f32.mxu0 0.0
      %8025 = vmatmul.mubr.f32.gmra.mxu0 %v7800
      %v8026 = vpop.f32.mrf.mxu0
      %v8027 = vadd.f32 0.0, %v8026
      %v8028 = vpop.f32.mrf.mxu0
      %8029 = vdwg.mxu0
      %v8030 = vadd.f32 %v7640, %v7872
      %v8031 = vadd.f32 %v7641, %v7877
      %v8032 = vadd.f32 %v7642, %v7882
      %v8033 = vadd.f32 %v7643, %v7887
      %v8034 = vadd.f32 %v7644, %v7892
      %v8035 = vadd.f32 %v7645, %v7897
      %v8036 = vadd.f32 %v7646, %v7902
      %v8037 = vadd.f32 %v7647, %v7907
      %v8038 = vadd.f32 %v7648, %v7912
      %v8039 = vadd.f32 %v7649, %v7917
      %v8040 = vadd.f32 %v7650, %v7922
      %v8041 = vadd.f32 %v7651, %v7927
      %v8042 = vadd.f32 %v7652, %v7932
      %v8043 = vadd.f32 %v7653, %v7937
      %v8044 = vadd.f32 %v7654, %v7942
      %v8045 = vadd.f32 %v7655, %v7947
      %v8046 = vadd.f32 %v7656, %v7952
      %v8047 = vadd.f32 %v7657, %v7957
      %v8048 = vadd.f32 %v7658, %v7962
      %v8049 = vadd.f32 %v7659, %v7967
      %v8050 = vadd.f32 %v7660, %v7972
      %v8051 = vadd.f32 %v7661, %v7977
      %v8052 = vadd.f32 %v7662, %v7982
      %v8053 = vadd.f32 %v7663, %v7987
      %v8054 = vadd.f32 %v7664, %v7992
      %v8055 = vadd.f32 %v7665, %v7997
      %v8056 = vadd.f32 %v7666, %v8002
      %v8057 = vadd.f32 %v7667, %v8007
      %v8058 = vadd.f32 %v7668, %v8012
      %v8059 = vadd.f32 %v7669, %v8017
      %v8060 = vadd.f32 %v7670, %v8022
      %v8061 = vadd.f32 %v7671, %v8027
      %v8062 = vld [vmem:[%s7] sm:$0x1]
      %v8064 = vlaneseq
      %v8065 = vshrl.u32 %v8064, 7
      %v8066 = vsub.s32 0, %v8065
      %v8067 = vrot.slane %v8062, %v8066
      %v8069 = vmul.f32 %v8030, %v8067
      %v8070 = vmul.f32 %v8031, %v8067
      %v8071 = vmul.f32 %v8032, %v8067
      %v8072 = vmul.f32 %v8033, %v8067
      %v8073 = vmul.f32 %v8034, %v8067
      %v8074 = vmul.f32 %v8035, %v8067
      %v8075 = vmul.f32 %v8036, %v8067
      %v8076 = vmul.f32 %v8037, %v8067
      %v8077 = vmul.f32 %v8038, %v8067
      %v8078 = vmul.f32 %v8039, %v8067
      %v8079 = vmul.f32 %v8040, %v8067
      %v8080 = vmul.f32 %v8041, %v8067
      %v8081 = vmul.f32 %v8042, %v8067
      %v8082 = vmul.f32 %v8043, %v8067
      %v8083 = vmul.f32 %v8044, %v8067
      %v8084 = vmul.f32 %v8045, %v8067
      %v8085 = vmul.f32 %v8046, %v8067
      %v8086 = vmul.f32 %v8047, %v8067
      %v8087 = vmul.f32 %v8048, %v8067
      %v8088 = vmul.f32 %v8049, %v8067
      %v8089 = vmul.f32 %v8050, %v8067
      %v8090 = vmul.f32 %v8051, %v8067
      %v8091 = vmul.f32 %v8052, %v8067
      %v8092 = vmul.f32 %v8053, %v8067
      %v8093 = vmul.f32 %v8054, %v8067
      %v8094 = vmul.f32 %v8055, %v8067
      %v8095 = vmul.f32 %v8056, %v8067
      %v8096 = vmul.f32 %v8057, %v8067
      %v8097 = vmul.f32 %v8058, %v8067
      %v8098 = vmul.f32 %v8059, %v8067
      %v8099 = vmul.f32 %v8060, %v8067
      %v8100 = vmul.f32 %v8061, %v8067
      %v8101 = vld [vmem:[%s8] sm:$0x1]
      %v8103 = vlaneseq
      %v8104 = vshrl.u32 %v8103, 7
      %v8105 = vsub.s32 0, %v8104
      %v8106 = vrot.slane %v8101, %v8105
      %v8108 = vadd.f32 %v8069, %v8106
      %v8109 = vadd.f32 %v8070, %v8106
      %v8110 = vadd.f32 %v8071, %v8106
      %v8111 = vadd.f32 %v8072, %v8106
      %v8112 = vadd.f32 %v8073, %v8106
      %v8113 = vadd.f32 %v8074, %v8106
      %v8114 = vadd.f32 %v8075, %v8106
      %v8115 = vadd.f32 %v8076, %v8106
      %v8116 = vadd.f32 %v8077, %v8106
      %v8117 = vadd.f32 %v8078, %v8106
      %v8118 = vadd.f32 %v8079, %v8106
      %v8119 = vadd.f32 %v8080, %v8106
      %v8120 = vadd.f32 %v8081, %v8106
      %v8121 = vadd.f32 %v8082, %v8106
      %v8122 = vadd.f32 %v8083, %v8106
      %v8123 = vadd.f32 %v8084, %v8106
      %v8124 = vadd.f32 %v8085, %v8106
      %v8125 = vadd.f32 %v8086, %v8106
      %v8126 = vadd.f32 %v8087, %v8106
      %v8127 = vadd.f32 %v8088, %v8106
      %v8128 = vadd.f32 %v8089, %v8106
      %v8129 = vadd.f32 %v8090, %v8106
      %v8130 = vadd.f32 %v8091, %v8106
      %v8131 = vadd.f32 %v8092, %v8106
      %v8132 = vadd.f32 %v8093, %v8106
      %v8133 = vadd.f32 %v8094, %v8106
      %v8134 = vadd.f32 %v8095, %v8106
      %v8135 = vadd.f32 %v8096, %v8106
      %v8136 = vadd.f32 %v8097, %v8106
      %v8137 = vadd.f32 %v8098, %v8106
      %v8138 = vadd.f32 %v8099, %v8106
      %v8139 = vadd.f32 %v8100, %v8106
      %v8140 = vmax.f32 %v8108, 0.0
      %v8141 = vmax.f32 %v8109, 0.0
      %v8142 = vmax.f32 %v8110, 0.0
      %v8143 = vmax.f32 %v8111, 0.0
      %v8144 = vmax.f32 %v8112, 0.0
      %v8145 = vmax.f32 %v8113, 0.0
      %v8146 = vmax.f32 %v8114, 0.0
      %v8147 = vmax.f32 %v8115, 0.0
      %v8148 = vmax.f32 %v8116, 0.0
      %v8149 = vmax.f32 %v8117, 0.0
      %v8150 = vmax.f32 %v8118, 0.0
      %v8151 = vmax.f32 %v8119, 0.0
      %v8152 = vmax.f32 %v8120, 0.0
      %v8153 = vmax.f32 %v8121, 0.0
      %v8154 = vmax.f32 %v8122, 0.0
      %v8155 = vmax.f32 %v8123, 0.0
      %v8156 = vmax.f32 %v8124, 0.0
      %v8157 = vmax.f32 %v8125, 0.0
      %v8158 = vmax.f32 %v8126, 0.0
      %v8159 = vmax.f32 %v8127, 0.0
      %v8160 = vmax.f32 %v8128, 0.0
      %v8161 = vmax.f32 %v8129, 0.0
      %v8162 = vmax.f32 %v8130, 0.0
      %v8163 = vmax.f32 %v8131, 0.0
      %v8164 = vmax.f32 %v8132, 0.0
      %v8165 = vmax.f32 %v8133, 0.0
      %v8166 = vmax.f32 %v8134, 0.0
      %v8167 = vmax.f32 %v8135, 0.0
      %v8168 = vmax.f32 %v8136, 0.0
      %v8169 = vmax.f32 %v8137, 0.0
      %v8170 = vmax.f32 %v8138, 0.0
      %v8171 = vmax.f32 %v8139, 0.0
      %8172 = vst.msk [vmem:[%s352] sm:$0xff] %vm804, %v8140
      %8173 = vst.msk [vmem:[%s352 + $0x8] sm:$0xff] %vm804, %v8141
      %8174 = vst.msk [vmem:[%s352 + $0x10] sm:$0xff] %vm804, %v8142
      %8175 = vst.msk [vmem:[%s352 + $0x18] sm:$0xff] %vm804, %v8143
      %8176 = vst.msk [vmem:[%s352 + $0x20] sm:$0xff] %vm804, %v8144
      %8177 = vst.msk [vmem:[%s352 + $0x28] sm:$0xff] %vm804, %v8145
      %8178 = vst.msk [vmem:[%s352 + $0x30] sm:$0xff] %vm804, %v8146
      %8179 = vst.msk [vmem:[%s352 + $0x38] sm:$0xff] %vm804, %v8147
      %8180 = vst.msk [vmem:[%s352 + $0x40] sm:$0xff] %vm804, %v8148
      %8181 = vst.msk [vmem:[%s352 + $0x48] sm:$0xff] %vm804, %v8149
      %8182 = vst.msk [vmem:[%s352 + $0x50] sm:$0xff] %vm804, %v8150
      %8183 = vst.msk [vmem:[%s352 + $0x58] sm:$0xff] %vm804, %v8151
      %8184 = vst.msk [vmem:[%s352 + $0x60] sm:$0xff] %vm804, %v8152
      %8185 = vst.msk [vmem:[%s352 + $0x68] sm:$0xff] %vm804, %v8153
      %8186 = vst.msk [vmem:[%s352 + $0x70] sm:$0xff] %vm804, %v8154
      %8187 = vst.msk [vmem:[%s352 + $0x78] sm:$0xff] %vm804, %v8155
      %8188 = vst.msk [vmem:[%s352 + $0x80] sm:$0xff] %vm804, %v8156
      %8189 = vst.msk [vmem:[%s352 + $0x88] sm:$0xff] %vm804, %v8157
      %8190 = vst.msk [vmem:[%s352 + $0x90] sm:$0xff] %vm804, %v8158
      %8191 = vst.msk [vmem:[%s352 + $0x98] sm:$0xff] %vm804, %v8159
      %8192 = vst.msk [vmem:[%s352 + $0xa0] sm:$0xff] %vm804, %v8160
      %8193 = vst.msk [vmem:[%s352 + $0xa8] sm:$0xff] %vm804, %v8161
      %8194 = vst.msk [vmem:[%s352 + $0xb0] sm:$0xff] %vm804, %v8162
      %8195 = vst.msk [vmem:[%s352 + $0xb8] sm:$0xff] %vm804, %v8163
      %8196 = vst.msk [vmem:[%s352 + $0xc0] sm:$0xff] %vm804, %v8164
      %8197 = vst.msk [vmem:[%s352 + $0xc8] sm:$0xff] %vm804, %v8165
      %8198 = vst.msk [vmem:[%s352 + $0xd0] sm:$0xff] %vm804, %v8166
      %8199 = vst.msk [vmem:[%s352 + $0xd8] sm:$0xff] %vm804, %v8167
      %8200 = vst.msk [vmem:[%s352 + $0xe0] sm:$0xff] %vm804, %v8168
      %8201 = vst.msk [vmem:[%s352 + $0xe8] sm:$0xff] %vm804, %v8169
      %8202 = vst.msk [vmem:[%s352 + $0xf0] sm:$0xff] %vm804, %v8170
      %8203 = vst.msk [vmem:[%s352 + $0xf8] sm:$0xff] %vm804, %v8171
      %p8204 = scmp.lt.s32.totalorder %s20, 1
      %s8205 = scalar_select %p8204, %s20, 1
      %s8206 = smul.addr %s8205, 32
      %s8207 = smul.addr %s8206, 8
      %s8208 = scalar_lea.vmem %s9, %s8207
      // Predicated region
      $region57: #{tpu_custom_call.1} parent=55 // pred_check
        %p8209 = pneg %p237
      $region58: #{tpu_custom_call.1} parent=55 // pred_check_branch
        %8211 = sbr.rel (%p8209) target = $region60
      $region59: #{tpu_custom_call.1} parent=55 // pred_region
        _
      $region60: #{tpu_custom_call.1} parent=55 // pred_fallthru
        _
    $region56: #{tpu_custom_call.1} parent=5 // pred_fallthru
      _
    %p8212 = scmp.le.s32.totalorder 2, %s15
    // Predicated region
    $region61: #{tpu_custom_call.1} parent=5 // pred_check
      %p8213 = pneg %p8212
    $region62: #{tpu_custom_call.1} parent=5 // pred_check_branch
      %8215 = sbr.rel (%p8213) target = $region64
    $region63: #{tpu_custom_call.1} parent=5 // pred_region
      %s8216 = ssub.s32 %s15, 2
      // Predicated region
      $region65: #{tpu_custom_call.1} parent=63 // pred_check
        %p8217 = pneg %p243
      $region66: #{tpu_custom_call.1} parent=63 // pred_check_branch
        %8219 = sbr.rel (%p8217) target = $region68
      $region67: #{tpu_custom_call.1} parent=63 // pred_region
        %p8220 = scmp.lt.s32.totalorder %s21, 1
        %s8221 = scalar_select %p8220, %s21, 1
        %s8222 = smul.addr %s8221, 32
        %s8223 = smul.addr %s8222, 8
        %s8224 = scalar_lea.vmem %s9, %s8223
      $region68: #{tpu_custom_call.1} parent=63 // pred_fallthru
        _
    $region64: #{tpu_custom_call.1} parent=5 // pred_fallthru
      _
  $region6: #{tpu_custom_call.1} parent=0 // loop_footer
    %s19 = sadd.s32 1, %s15
  $region7: #{tpu_custom_call.1} parent=0 // loop_footer_branch
    %14 = sbr.rel target = $region3
  $region8: #{tpu_custom_call.1} parent=0 // loop_exit
    _

</llo_original>
